<compile_context>
chip_gen: v7x
topology: tpu7x:2x2x1
jax: 0.10.0
libtpu: 0.0.40
codegen_flags: <defaults>
</compile_context>

<pallas_src>
import functools

import jax
import jax.numpy as jnp
from jax import lax
from jax.experimental import pallas as pl
from jax.experimental.pallas import tpu as pltpu


def _round_up(x, m):
    return ((x + m - 1) // m) * m


def _vmem_limit_bytes():
    """~75% of physical per-core VMEM; conservative 48 MiB fallback."""
    cap = None
    try:
        cap = getattr(pltpu.get_tpu_info(), "vmem_capacity_bytes", None)
    except Exception:
        cap = None
    if not cap:
        cap = 64 * 1024 * 1024            # v7x physical VMEM (smallest listed)
    return int(min(cap * 3 // 4, 100 * 1024 * 1024))


# ---------------------------------------------------------------------------
# Fused dual-branch dilated-conv kernel
# ---------------------------------------------------------------------------
def _fused_classifier_kernel(x_hbm, w_ref, b_ref, o_ref, xbuf_ref, sem,
                             *staged_refs, th, wop, cin, ncp, taps,
                             col_offsets, tile_rows, chunk_th):
    """One grid step = one (image, output-row-tile) of the fused classifier.

    x_hbm       : (N, Hp, Wp, Cin) bf16, HBM (pl.ANY)   padded NHWC activation
    w_ref       : (18, Cin, ncp)   bf16, VMEM           branch0 taps 0..8, branch1 taps 9..17
    b_ref       : (1, ncp)         f32,  VMEM           bias0 + bias1 (lane padded)
    o_ref       : (th, wop, ncp)   bf16, VMEM           output row tile (lane dense)
    xbuf_ref    : (2, tile_rows, Wp, Cin) bf16 scratch  double-buffered halo tile
    sem         : (2,) DMA semaphores                   one per slot
    staged_refs : len(col_offsets) x (tile_rows, wop, Cin) bf16 scratch
                  column-realigned copies of the current halo tile
    """
    n = pl.program_id(0)
    i = pl.program_id(1)
    ni = pl.num_programs(1)
    slot = i % 2

    def tile_copy(row_tile, s):
        return pltpu.make_async_copy(
            x_hbm.at[n, pl.ds(row_tile * th, tile_rows)],
            xbuf_ref.at[s], sem.at[s])

    # Prime the pipeline at the first row tile of every image.  (Megacore-safe:
    # no cross-image state, so sharding the batch axis across cores is fine.)
    @pl.when(i == 0)
    def _():
        tile_copy(0, 0).start()

    # Prefetch the next row tile of the same image into the other slot BEFORE
    # computing on this one -> the HBM transfer overlaps the 18 matmuls.
    @pl.when(i + 1 < ni)
    def _():
        tile_copy(i + 1, 1 - slot).start()

    # Wait for the current tile (started by the prime above, or by the previous
    # step's prefetch with an identical descriptor).
    tile_copy(i, slot).wait()

    # Re-align once per distinct column offset (<= 5 strided VMEM copies)
    # instead of 18 per-tap sublane-misaligned relayouts.  Two static branches
    # keep every ref index below fully static.
    def _stage(src_slot):
        for k, co in enumerate(col_offsets):
            staged_refs[k][...] = xbuf_ref[src_slot, :, co:co + wop, :]

    @pl.when(slot == 0)
    def _():
        _stage(0)

    @pl.when(slot == 1)
    def _():
        _stage(1)

    # Chunked accumulation: bound the live f32 accumulator so large row tiles
    # do not spill the vreg file.  2 branches x 9 taps = 18 accumulating MXU
    # matmuls per chunk, f32 accumulation, fused bias, bf16 lane-dense store.
    def compute_chunk(row0, rows):
        acc = jnp.zeros((rows * wop, ncp), jnp.float32)
        for t, (ro, k) in enumerate(taps):            # static unroll (18 taps)
            tap = staged_refs[k][pl.ds(row0 + ro, rows), :, :]
            acc = acc + jnp.dot(tap.reshape(rows * wop, cin), w_ref[t],
                                preferred_element_type=jnp.float32)
        acc = acc + b_ref[...]
        o_ref[pl.ds(row0, rows), :, :] = (
            acc.reshape(rows, wop, ncp).astype(o_ref.dtype))

    n_full = th // chunk_th
    rem = th % chunk_th

    def chunk_body(c, carry):
        compute_chunk(c * chunk_th, chunk_th)
        return carry

    lax.fori_loop(0, n_full, chunk_body, 0, unroll=False)
    if rem:
        compute_chunk(n_full * chunk_th, rem)         # static tail chunk


# ---------------------------------------------------------------------------
# Host wrapper
# ---------------------------------------------------------------------------
def classifier_module_forward(x_nchw, branch_params, dilation_series,
                              padding_series, num_classes, *,
                              row_tile=None, m_chunk_rows=256):
    """Classifier_Module.forward: conv2d_list[0](x) + conv2d_list[1](x).

    x_nchw        : (N, Cin, H, W) f32
    branch_params : list of (w, b) with w: (3, 3, Cin, num_classes) f32 (HWIO;
                    PyTorch's (out,in,kh,kw) would need transpose (2,3,1,0)),
                    b: (num_classes,) f32.  Branches >= 2 are dead (early return).
    Returns (N, num_classes, Ho, Wo) f32.
    """
    assert len(branch_params) >= 2, "forward needs >= 2 branches (early return)"
    d0, d1 = int(dilation_series[0]), int(dilation_series[1])
    p0, p1 = int(padding_series[0]), int(padding_series[1])

    n, cin, h, w = x_nchw.shape
    ho = h + 2 * p0 - 2 * d0
    wo = w + 2 * p0 - 2 * d0
    assert h + 2 * p1 - 2 * d1 == ho and w + 2 * p1 - 2 * d1 == wo, (
        "branch outputs must have equal shape to be summed")
    assert ho > 0 and wo > 0

    pad = max(p0, p1)                               # shared top/left zero pad
    ncp = _round_up(max(num_classes, 128), 128)     # lane-dense output channels
    wop = _round_up(wo, 16)                         # sublane-friendly width

    # --- stack the two live branches: (18, Cin, ncp) bf16, fused f32 bias -----
    w_taps, raw_taps = [], []
    bias = jnp.zeros((ncp,), jnp.float32)
    for (wgt, b), d, p in ((branch_params[0], d0, p0),
                           (branch_params[1], d1, p1)):
        wr = wgt.reshape(9, cin, num_classes).astype(jnp.bfloat16)
        w_taps.append(jnp.pad(wr, ((0, 0), (0, 0), (0, ncp - num_classes))))
        bias = bias.at[:num_classes].add(b.astype(jnp.float32))
        for ih in range(3):
            for iw in range(3):
                raw_taps.append((pad - p + ih * d, pad - p + iw * d))
    w_all = jnp.concatenate(w_taps, axis=0)          # (18, Cin, ncp)
    b_all = bias.reshape(1, ncp)                     # (1, ncp)

    col_offsets = tuple(sorted({co for _, co in raw_taps}))
    taps = tuple((ro, col_offsets.index(co)) for ro, co in raw_taps)
    max_ro = max(ro for ro, _ in raw_taps)
    max_co = max(co for _, co in raw_taps)

    # --- host glue: NCHW -> NHWC bf16 + shared spatial zero pad ---------------
    # Pad enough on the bottom/right that every halo DMA and staged column
    # window stays in bounds (trace-time asserts below).
    hpad = max(h + 2 * pad, ho + max_ro)
    wpad = max(w + 2 * pad, wop + max_co)
    x = jnp.transpose(x_nchw, (0, 2, 3, 1)).astype(jnp.bfloat16)
    xp = jnp.pad(x, ((0, 0), (pad, hpad - h - pad), (pad, wpad - w - pad),
                     (0, 0)))

    # --- generation-aware VMEM budget & row-tile selection ---------------------
    vmem_limit = _vmem_limit_bytes()
    # weights + bias are double-buffered by the default pipeline; 2 MiB slack.
    fixed_bytes = 2 * (18 * cin * ncp * 2) + 2 * (ncp * 4) + (2 << 20)

    def vmem_needed(th_):
        tr = th_ + max_ro
        xbuf = 2 * tr * wpad * cin * 2                   # 2-slot halo tile
        staged = len(col_offsets) * tr * wop * cin * 2   # realigned copies
        outb = 2 * th_ * wop * ncp * 2                   # 2x bf16 output block
        return fixed_bytes + xbuf + staged + outb

    if row_tile is None:
        fits = [t for t in range(1, ho + 1)
                if ho % t == 0 and vmem_needed(t) <= vmem_limit]
        assert fits, (f"no row tile fits the VMEM limit ({vmem_limit} B); "
                      f"smallest need = {vmem_needed(1)} B")
        th = max(fits)                  # largest tile -> least halo re-read
    else:
        th = int(row_tile)
        assert ho % th == 0, f"row_tile {th} must divide output height {ho}"
        assert vmem_needed(th) <= vmem_limit, (
            f"row_tile {th} needs {vmem_needed(th)} B > VMEM limit {vmem_limit} B")
    tile_rows = th + max_ro

    # trace-time bounds checks for the manual halo DMA / staged column windows
    assert (ho // th - 1) * th + tile_rows <= hpad, "halo DMA would read OOB rows"
    assert max_co + wop <= wpad, "staged column window would read OOB columns"

    # f32 accumulator chunk: ~m_chunk_rows M-rows (<=~128 KiB) per loop step
    chunk_th = max(1, min(th, m_chunk_rows // max(1, wop)))

    kernel = functools.partial(
        _fused_classifier_kernel, th=th, wop=wop, cin=cin, ncp=ncp,
        taps=taps, col_offsets=col_offsets, tile_rows=tile_rows,
        chunk_th=chunk_th)

    out = pl.pallas_call(
        kernel,
        out_shape=jax.ShapeDtypeStruct((n, ho, wop, ncp), jnp.bfloat16),
        grid_spec=pltpu.PrefetchScalarGridSpec(
            num_scalar_prefetch=0,
            grid=(n, ho // th),
            in_specs=[
                pl.BlockSpec(memory_space=pl.ANY),                      # x in HBM
                pl.BlockSpec((18, cin, ncp), lambda b, r: (0, 0, 0)),   # weights
                pl.BlockSpec((1, ncp), lambda b, r: (0, 0)),            # fused bias
            ],
            out_specs=pl.BlockSpec((None, th, wop, ncp),
                                   lambda b, r: (b, r, 0, 0)),
            scratch_shapes=(
                [pltpu.VMEM((2, tile_rows, wpad, cin), jnp.bfloat16),   # halo x2
                 pltpu.SemaphoreType.DMA((2,))] +
                [pltpu.VMEM((tile_rows, wop, cin), jnp.bfloat16)        # staged
                 for _ in col_offsets]),
        ),
        compiler_params=pltpu.CompilerParams(
            dimension_semantics=("parallel", "arbitrary"),
            vmem_limit_bytes=vmem_limit,
        ),
    )(xp, w_all, b_all)

    # drop the width / lane padding, back to f32 NCHW like the PyTorch module
    out = out[:, :, :wo, :num_classes].astype(jnp.float32)
    return jnp.transpose(out, (0, 3, 1, 2))


# ---------------------------------------------------------------------------
# Pure-JAX reference (f32 conv on bf16-rounded inputs, matches MXU semantics)
# ---------------------------------------------------------------------------
def _reference_forward(x_nchw, branch_params, dils, pads, num_classes):
    x = x_nchw.astype(jnp.bfloat16).astype(jnp.float32)
    outs = []
    for bi in range(2):                     # early return -> only branches 0, 1
        wgt, b = branch_params[bi]
        wgt = wgt.astype(jnp.bfloat16).astype(jnp.float32)
        o = jax.lax.conv_general_dilated(
            x, wgt, window_strides=(1, 1),
            padding=((pads[bi], pads[bi]), (pads[bi], pads[bi])),
            rhs_dilation=(dils[bi], dils[bi]),
            dimension_numbers=("NCHW", "HWIO", "NCHW"),
            precision=jax.lax.Precision.HIGHEST)
        outs.append(o + b.reshape(1, num_classes, 1, 1))
    return outs[0] + outs[1]


if __name__ == "__main__":
    key = jax.random.PRNGKey(0)
    num_classes = 8
    dims_in = 128                      # small stand-in for the 1024-ch fc7 features
    dilation_series = [6, 12, 18, 24]
    padding_series = [6, 12, 18, 24]
    N, H, W = 2, 16, 16

    keys = jax.random.split(key, 1 + 2 * len(dilation_series))
    x = jax.random.normal(keys[0], (N, dims_in, H, W), jnp.float32)

    # Module init: weight ~ N(0, 0.01); bias keeps the default Conv2d init.
    # All 4 branches exist, but only 0 and 1 contribute (early return).
    branch_params = []
    bound = 1.0 / (9.0 * dims_in) ** 0.5
    for bi in range(len(dilation_series)):
        wk, bk = keys[1 + 2 * bi], keys[2 + 2 * bi]
        wgt = 0.01 * jax.random.normal(wk, (3, 3, dims_in, num_classes), jnp.float32)
        b = jax.random.uniform(bk, (num_classes,), jnp.float32, -bound, bound)
        branch_params.append((wgt, b))

    ref = _reference_forward(x, branch_params, dilation_series, padding_series,
                             num_classes)
    ref_bf16 = ref.astype(jnp.bfloat16).astype(jnp.float32)   # kernel stores bf16

    # Run A: explicit small row tile -> several row tiles per image, exercising
    # the cross-step double-buffered halo-DMA prefetch at runtime.
    out_a = classifier_module_forward(x, branch_params, dilation_series,
                                      padding_series, num_classes, row_tile=4)
    # Run B: auto row tile (whole image here) + small M-chunk so the chunked
    # accumulator fori_loop runs with trip count > 1 (dynamic row offsets).
    out_b = classifier_module_forward(x, branch_params, dilation_series,
                                      padding_series, num_classes,
                                      m_chunk_rows=64)
    jax.block_until_ready((out_a, out_b))
    assert out_a.shape == (N, num_classes, H, W), out_a.shape
    assert out_b.shape == (N, num_classes, H, W), out_b.shape

    err_a = float(jnp.max(jnp.abs(out_a - ref_bf16)))
    err_b = float(jnp.max(jnp.abs(out_b - ref_bf16)))
    assert err_a < 2e-2, f"run A max abs err vs reference: {err_a}"
    assert err_b < 2e-2, f"run B max abs err vs reference: {err_b}"

    print("KERNEL_OK")
</pallas_src>

<mosaic_0001>
module attributes {stable_mosaic.version = 11 : i64} {
  func.func @_fused_classifier_kernel(%arg0: i32, %arg1: i32, %arg2: memref<2x40x40x128xbf16, #tpu.memory_space<any>>, %arg3: memref<18x128x128xbf16, #tpu.memory_space<vmem>>, %arg4: memref<1x128xf32, #tpu.memory_space<vmem>>, %arg5: memref<1x4x16x128xbf16, #tpu.memory_space<vmem>>, %arg6: memref<2x28x40x128xbf16, #tpu.memory_space<vmem>>, %arg7: memref<2x!tpu.dma_semaphore, #tpu.memory_space<semaphore_mem>>, %arg8: memref<28x16x128xbf16, #tpu.memory_space<vmem>>, %arg9: memref<28x16x128xbf16, #tpu.memory_space<vmem>>, %arg10: memref<28x16x128xbf16, #tpu.memory_space<vmem>>, %arg11: memref<28x16x128xbf16, #tpu.memory_space<vmem>>, %arg12: memref<28x16x128xbf16, #tpu.memory_space<vmem>>) attributes {dimension_semantics = [#tpu.dimension_semantics<parallel>, #tpu.dimension_semantics<arbitrary>], iteration_bounds = array<i64: 2, 4>, scalar_prefetch = 0 : i64, scratch_operands = 7 : i64, tpu.core_type = #tpu.core_type<tc>, window_params = [{}, {pipeline_mode = #tpu.pipeline_mode<synchronous>, transform_indices = @transform_1, window_bounds = array<i64: 18, 128, 128>}, {pipeline_mode = #tpu.pipeline_mode<synchronous>, transform_indices = @transform_2, window_bounds = array<i64: 1, 128>}, {transform_indices = @transform_3, window_bounds = array<i64: 1, 4, 16, 128>}]} {
    %c2_i32 = arith.constant 2 : i32
    %c0_i32 = arith.constant 0 : i32
    %0 = arith.cmpi eq, %c2_i32, %c0_i32 : i32
    %c1_i32 = arith.constant 1 : i32
    %1 = arith.select %0, %c1_i32, %c2_i32 : i32
    %2 = arith.remsi %arg1, %1 : i32
    %c0_i32_0 = arith.constant 0 : i32
    %3 = arith.cmpi ne, %2, %c0_i32_0 : i32
    %c0_i32_1 = arith.constant 0 : i32
    %4 = arith.cmpi slt, %2, %c0_i32_1 : i32
    %c0_i32_2 = arith.constant 0 : i32
    %5 = arith.cmpi slt, %1, %c0_i32_2 : i32
    %6 = arith.xori %4, %5 : i1
    %7 = arith.andi %6, %3 : i1
    %8 = arith.addi %2, %1 : i32
    %9 = arith.select %7, %8, %2 : i32
    %c0_i32_3 = arith.constant 0 : i32
    %10 = arith.cmpi eq, %arg1, %c0_i32_3 : i32
    %11 = arith.extui %10 : i1 to i32
    %c0_i32_4 = arith.constant 0 : i32
    %12 = arith.cmpi ne, %11, %c0_i32_4 : i32
    scf.if %12 {
      %c0_i32_129 = arith.constant 0 : i32
      %c0_i32_130 = arith.constant 0 : i32
      %c0_i32_131 = arith.constant 0 : i32
      %c0_i32_132 = arith.constant 0 : i32
      %c0_i32_133 = arith.constant 0 : i32
      %185 = tpu.memref_slice %arg2[%arg0, %c0_i32_131, %c0_i32_132, %c0_i32_133] : memref<2x40x40x128xbf16, #tpu.memory_space<any>> -> memref<1x28x40x128xbf16, #tpu.memory_space<any>>
      %186 = tpu.memref_squeeze %185 : memref<1x28x40x128xbf16, #tpu.memory_space<any>> -> memref<28x40x128xbf16, #tpu.memory_space<any>>
      %c0_i32_134 = arith.constant 0 : i32
      %c0_i32_135 = arith.constant 0 : i32
      %c0_i32_136 = arith.constant 0 : i32
      %187 = tpu.memref_slice %arg6[%c0_i32_129, %c0_i32_134, %c0_i32_135, %c0_i32_136] : memref<2x28x40x128xbf16, #tpu.memory_space<vmem>> -> memref<1x28x40x128xbf16, #tpu.memory_space<vmem>>
      %188 = tpu.memref_squeeze %187 : memref<1x28x40x128xbf16, #tpu.memory_space<vmem>> -> memref<28x40x128xbf16, #tpu.memory_space<vmem>>
      %189 = tpu.memref_slice %arg7[%c0_i32_130] : memref<2x!tpu.dma_semaphore, #tpu.memory_space<semaphore_mem>> -> memref<1x!tpu.dma_semaphore, #tpu.memory_space<semaphore_mem>>
      %190 = tpu.memref_squeeze %189 : memref<1x!tpu.dma_semaphore, #tpu.memory_space<semaphore_mem>> -> memref<!tpu.dma_semaphore, #tpu.memory_space<semaphore_mem>>
      tpu.enqueue_dma source(%186 : memref<28x40x128xbf16, #tpu.memory_space<any>>) target(%188 : memref<28x40x128xbf16, #tpu.memory_space<vmem>>) target_semaphore(%190 : memref<!tpu.dma_semaphore, #tpu.memory_space<semaphore_mem>>)
    } else {
    }
    %c1_i32_5 = arith.constant 1 : i32
    %13 = arith.addi %arg1, %c1_i32_5 : i32
    %c4_i32 = arith.constant 4 : i32
    %14 = arith.cmpi slt, %13, %c4_i32 : i32
    %15 = arith.extui %14 : i1 to i32
    %c0_i32_6 = arith.constant 0 : i32
    %16 = arith.cmpi ne, %15, %c0_i32_6 : i32
    scf.if %16 {
      %c1_i32_129 = arith.constant 1 : i32
      %185 = arith.addi %arg1, %c1_i32_129 : i32
      %c1_i32_130 = arith.constant 1 : i32
      %186 = arith.subi %c1_i32_130, %9 : i32
      %c4_i32_131 = arith.constant 4 : i32
      %187 = arith.muli %185, %c4_i32_131 : i32
      %c0_i32_132 = arith.constant 0 : i32
      %c0_i32_133 = arith.constant 0 : i32
      %188 = tpu.memref_slice %arg2[%arg0, %187, %c0_i32_132, %c0_i32_133] : memref<2x40x40x128xbf16, #tpu.memory_space<any>> -> memref<1x28x40x128xbf16, #tpu.memory_space<any>>
      %189 = tpu.memref_squeeze %188 : memref<1x28x40x128xbf16, #tpu.memory_space<any>> -> memref<28x40x128xbf16, #tpu.memory_space<any>>
      %c0_i32_134 = arith.constant 0 : i32
      %c0_i32_135 = arith.constant 0 : i32
      %c0_i32_136 = arith.constant 0 : i32
      %190 = tpu.memref_slice %arg6[%186, %c0_i32_134, %c0_i32_135, %c0_i32_136] : memref<2x28x40x128xbf16, #tpu.memory_space<vmem>> -> memref<1x28x40x128xbf16, #tpu.memory_space<vmem>>
      %191 = tpu.memref_squeeze %190 : memref<1x28x40x128xbf16, #tpu.memory_space<vmem>> -> memref<28x40x128xbf16, #tpu.memory_space<vmem>>
      %192 = tpu.memref_slice %arg7[%186] : memref<2x!tpu.dma_semaphore, #tpu.memory_space<semaphore_mem>> -> memref<1x!tpu.dma_semaphore, #tpu.memory_space<semaphore_mem>>
      %193 = tpu.memref_squeeze %192 : memref<1x!tpu.dma_semaphore, #tpu.memory_space<semaphore_mem>> -> memref<!tpu.dma_semaphore, #tpu.memory_space<semaphore_mem>>
      tpu.enqueue_dma source(%189 : memref<28x40x128xbf16, #tpu.memory_space<any>>) target(%191 : memref<28x40x128xbf16, #tpu.memory_space<vmem>>) target_semaphore(%193 : memref<!tpu.dma_semaphore, #tpu.memory_space<semaphore_mem>>)
    } else {
    }
    %c4_i32_7 = arith.constant 4 : i32
    %17 = arith.muli %arg1, %c4_i32_7 : i32
    %c0_i32_8 = arith.constant 0 : i32
    %c0_i32_9 = arith.constant 0 : i32
    %18 = tpu.memref_slice %arg2[%arg0, %17, %c0_i32_8, %c0_i32_9] : memref<2x40x40x128xbf16, #tpu.memory_space<any>> -> memref<1x28x40x128xbf16, #tpu.memory_space<any>>
    %19 = tpu.memref_squeeze %18 : memref<1x28x40x128xbf16, #tpu.memory_space<any>> -> memref<28x40x128xbf16, #tpu.memory_space<any>>
    %c0_i32_10 = arith.constant 0 : i32
    %c0_i32_11 = arith.constant 0 : i32
    %c0_i32_12 = arith.constant 0 : i32
    %20 = tpu.memref_slice %arg6[%9, %c0_i32_10, %c0_i32_11, %c0_i32_12] : memref<2x28x40x128xbf16, #tpu.memory_space<vmem>> -> memref<1x28x40x128xbf16, #tpu.memory_space<vmem>>
    %21 = tpu.memref_squeeze %20 : memref<1x28x40x128xbf16, #tpu.memory_space<vmem>> -> memref<28x40x128xbf16, #tpu.memory_space<vmem>>
    %22 = tpu.memref_slice %arg7[%9] : memref<2x!tpu.dma_semaphore, #tpu.memory_space<semaphore_mem>> -> memref<1x!tpu.dma_semaphore, #tpu.memory_space<semaphore_mem>>
    %23 = tpu.memref_squeeze %22 : memref<1x!tpu.dma_semaphore, #tpu.memory_space<semaphore_mem>> -> memref<!tpu.dma_semaphore, #tpu.memory_space<semaphore_mem>>
    tpu.wait_dma2 semaphore(%23 : memref<!tpu.dma_semaphore, #tpu.memory_space<semaphore_mem>>) src(%19 : memref<28x40x128xbf16, #tpu.memory_space<any>>) dst(%21 : memref<28x40x128xbf16, #tpu.memory_space<vmem>>)
    %c0_i32_13 = arith.constant 0 : i32
    %24 = arith.cmpi eq, %9, %c0_i32_13 : i32
    %25 = arith.extui %24 : i1 to i32
    %c0_i32_14 = arith.constant 0 : i32
    %26 = arith.cmpi ne, %25, %c0_i32_14 : i32
    scf.if %26 {
      %c0_129 = arith.constant 0 : index
      %c0_130 = arith.constant 0 : index
      %c0_131 = arith.constant 0 : index
      %c0_132 = arith.constant 0 : index
      %185 = vector.load %arg6[%c0_129, %c0_130, %c0_131, %c0_132] : memref<2x28x40x128xbf16, #tpu.memory_space<vmem>>, vector<1x28x16x128xbf16>
      %186 = vector.shape_cast %185 : vector<1x28x16x128xbf16> to vector<28x16x128xbf16>
      %c0_133 = arith.constant 0 : index
      %c0_134 = arith.constant 0 : index
      %c0_135 = arith.constant 0 : index
      %187 = vector.load %arg8[%c0_133, %c0_134, %c0_135] : memref<28x16x128xbf16, #tpu.memory_space<vmem>>, vector<28x16x128xbf16>
      tpu.vector_store %arg8[%c0_133, %c0_134, %c0_135], %186 {strides = array<i32>} : memref<28x16x128xbf16, #tpu.memory_space<vmem>>, vector<28x16x128xbf16>,
      %c0_136 = arith.constant 0 : index
      %c0_137 = arith.constant 0 : index
      %c6_138 = arith.constant 6 : index
      %c0_139 = arith.constant 0 : index
      %188 = vector.load %arg6[%c0_136, %c0_137, %c6_138, %c0_139] : memref<2x28x40x128xbf16, #tpu.memory_space<vmem>>, vector<1x28x16x128xbf16>
      %189 = vector.shape_cast %188 : vector<1x28x16x128xbf16> to vector<28x16x128xbf16>
      %c0_140 = arith.constant 0 : index
      %c0_141 = arith.constant 0 : index
      %c0_142 = arith.constant 0 : index
      %190 = vector.load %arg9[%c0_140, %c0_141, %c0_142] : memref<28x16x128xbf16, #tpu.memory_space<vmem>>, vector<28x16x128xbf16>
      tpu.vector_store %arg9[%c0_140, %c0_141, %c0_142], %189 {strides = array<i32>} : memref<28x16x128xbf16, #tpu.memory_space<vmem>>, vector<28x16x128xbf16>,
      %c0_143 = arith.constant 0 : index
      %c0_144 = arith.constant 0 : index
      %c12_145 = arith.constant 12 : index
      %c0_146 = arith.constant 0 : index
      %191 = vector.load %arg6[%c0_143, %c0_144, %c12_145, %c0_146] : memref<2x28x40x128xbf16, #tpu.memory_space<vmem>>, vector<1x28x16x128xbf16>
      %192 = vector.shape_cast %191 : vector<1x28x16x128xbf16> to vector<28x16x128xbf16>
      %c0_147 = arith.constant 0 : index
      %c0_148 = arith.constant 0 : index
      %c0_149 = arith.constant 0 : index
      %193 = vector.load %arg10[%c0_147, %c0_148, %c0_149] : memref<28x16x128xbf16, #tpu.memory_space<vmem>>, vector<28x16x128xbf16>
      tpu.vector_store %arg10[%c0_147, %c0_148, %c0_149], %192 {strides = array<i32>} : memref<28x16x128xbf16, #tpu.memory_space<vmem>>, vector<28x16x128xbf16>,
      %c0_150 = arith.constant 0 : index
      %c0_151 = arith.constant 0 : index
      %c18 = arith.constant 18 : index
      %c0_152 = arith.constant 0 : index
      %194 = vector.load %arg6[%c0_150, %c0_151, %c18, %c0_152] : memref<2x28x40x128xbf16, #tpu.memory_space<vmem>>, vector<1x28x16x128xbf16>
      %195 = vector.shape_cast %194 : vector<1x28x16x128xbf16> to vector<28x16x128xbf16>
      %c0_153 = arith.constant 0 : index
      %c0_154 = arith.constant 0 : index
      %c0_155 = arith.constant 0 : index
      %196 = vector.load %arg11[%c0_153, %c0_154, %c0_155] : memref<28x16x128xbf16, #tpu.memory_space<vmem>>, vector<28x16x128xbf16>
      tpu.vector_store %arg11[%c0_153, %c0_154, %c0_155], %195 {strides = array<i32>} : memref<28x16x128xbf16, #tpu.memory_space<vmem>>, vector<28x16x128xbf16>,
      %c0_156 = arith.constant 0 : index
      %c0_157 = arith.constant 0 : index
      %c24 = arith.constant 24 : index
      %c0_158 = arith.constant 0 : index
      %197 = vector.load %arg6[%c0_156, %c0_157, %c24, %c0_158] : memref<2x28x40x128xbf16, #tpu.memory_space<vmem>>, vector<1x28x16x128xbf16>
      %198 = vector.shape_cast %197 : vector<1x28x16x128xbf16> to vector<28x16x128xbf16>
      %c0_159 = arith.constant 0 : index
      %c0_160 = arith.constant 0 : index
      %c0_161 = arith.constant 0 : index
      %199 = vector.load %arg12[%c0_159, %c0_160, %c0_161] : memref<28x16x128xbf16, #tpu.memory_space<vmem>>, vector<28x16x128xbf16>
      tpu.vector_store %arg12[%c0_159, %c0_160, %c0_161], %198 {strides = array<i32>} : memref<28x16x128xbf16, #tpu.memory_space<vmem>>, vector<28x16x128xbf16>,
    } else {
    }
    %c1_i32_15 = arith.constant 1 : i32
    %27 = arith.cmpi eq, %9, %c1_i32_15 : i32
    %28 = arith.extui %27 : i1 to i32
    %c0_i32_16 = arith.constant 0 : i32
    %29 = arith.cmpi ne, %28, %c0_i32_16 : i32
    scf.if %29 {
      %c1_129 = arith.constant 1 : index
      %c0_130 = arith.constant 0 : index
      %c0_131 = arith.constant 0 : index
      %c0_132 = arith.constant 0 : index
      %185 = vector.load %arg6[%c1_129, %c0_130, %c0_131, %c0_132] : memref<2x28x40x128xbf16, #tpu.memory_space<vmem>>, vector<1x28x16x128xbf16>
      %186 = vector.shape_cast %185 : vector<1x28x16x128xbf16> to vector<28x16x128xbf16>
      %c0_133 = arith.constant 0 : index
      %c0_134 = arith.constant 0 : index
      %c0_135 = arith.constant 0 : index
      %187 = vector.load %arg8[%c0_133, %c0_134, %c0_135] : memref<28x16x128xbf16, #tpu.memory_space<vmem>>, vector<28x16x128xbf16>
      tpu.vector_store %arg8[%c0_133, %c0_134, %c0_135], %186 {strides = array<i32>} : memref<28x16x128xbf16, #tpu.memory_space<vmem>>, vector<28x16x128xbf16>,
      %c1_136 = arith.constant 1 : index
      %c0_137 = arith.constant 0 : index
      %c6_138 = arith.constant 6 : index
      %c0_139 = arith.constant 0 : index
      %188 = vector.load %arg6[%c1_136, %c0_137, %c6_138, %c0_139] : memref<2x28x40x128xbf16, #tpu.memory_space<vmem>>, vector<1x28x16x128xbf16>
      %189 = vector.shape_cast %188 : vector<1x28x16x128xbf16> to vector<28x16x128xbf16>
      %c0_140 = arith.constant 0 : index
      %c0_141 = arith.constant 0 : index
      %c0_142 = arith.constant 0 : index
      %190 = vector.load %arg9[%c0_140, %c0_141, %c0_142] : memref<28x16x128xbf16, #tpu.memory_space<vmem>>, vector<28x16x128xbf16>
      tpu.vector_store %arg9[%c0_140, %c0_141, %c0_142], %189 {strides = array<i32>} : memref<28x16x128xbf16, #tpu.memory_space<vmem>>, vector<28x16x128xbf16>,
      %c1_143 = arith.constant 1 : index
      %c0_144 = arith.constant 0 : index
      %c12_145 = arith.constant 12 : index
      %c0_146 = arith.constant 0 : index
      %191 = vector.load %arg6[%c1_143, %c0_144, %c12_145, %c0_146] : memref<2x28x40x128xbf16, #tpu.memory_space<vmem>>, vector<1x28x16x128xbf16>
      %192 = vector.shape_cast %191 : vector<1x28x16x128xbf16> to vector<28x16x128xbf16>
      %c0_147 = arith.constant 0 : index
      %c0_148 = arith.constant 0 : index
      %c0_149 = arith.constant 0 : index
      %193 = vector.load %arg10[%c0_147, %c0_148, %c0_149] : memref<28x16x128xbf16, #tpu.memory_space<vmem>>, vector<28x16x128xbf16>
      tpu.vector_store %arg10[%c0_147, %c0_148, %c0_149], %192 {strides = array<i32>} : memref<28x16x128xbf16, #tpu.memory_space<vmem>>, vector<28x16x128xbf16>,
      %c1_150 = arith.constant 1 : index
      %c0_151 = arith.constant 0 : index
      %c18 = arith.constant 18 : index
      %c0_152 = arith.constant 0 : index
      %194 = vector.load %arg6[%c1_150, %c0_151, %c18, %c0_152] : memref<2x28x40x128xbf16, #tpu.memory_space<vmem>>, vector<1x28x16x128xbf16>
      %195 = vector.shape_cast %194 : vector<1x28x16x128xbf16> to vector<28x16x128xbf16>
      %c0_153 = arith.constant 0 : index
      %c0_154 = arith.constant 0 : index
      %c0_155 = arith.constant 0 : index
      %196 = vector.load %arg11[%c0_153, %c0_154, %c0_155] : memref<28x16x128xbf16, #tpu.memory_space<vmem>>, vector<28x16x128xbf16>
      tpu.vector_store %arg11[%c0_153, %c0_154, %c0_155], %195 {strides = array<i32>} : memref<28x16x128xbf16, #tpu.memory_space<vmem>>, vector<28x16x128xbf16>,
      %c1_156 = arith.constant 1 : index
      %c0_157 = arith.constant 0 : index
      %c24 = arith.constant 24 : index
      %c0_158 = arith.constant 0 : index
      %197 = vector.load %arg6[%c1_156, %c0_157, %c24, %c0_158] : memref<2x28x40x128xbf16, #tpu.memory_space<vmem>>, vector<1x28x16x128xbf16>
      %198 = vector.shape_cast %197 : vector<1x28x16x128xbf16> to vector<28x16x128xbf16>
      %c0_159 = arith.constant 0 : index
      %c0_160 = arith.constant 0 : index
      %c0_161 = arith.constant 0 : index
      %199 = vector.load %arg12[%c0_159, %c0_160, %c0_161] : memref<28x16x128xbf16, #tpu.memory_space<vmem>>, vector<28x16x128xbf16>
      tpu.vector_store %arg12[%c0_159, %c0_160, %c0_161], %198 {strides = array<i32>} : memref<28x16x128xbf16, #tpu.memory_space<vmem>>, vector<28x16x128xbf16>,
    } else {
    }
    %c0_i32_17 = arith.constant 0 : i32
    %c4_i32_18 = arith.constant 4 : i32
    %30 = arith.muli %c0_i32_17, %c4_i32_18 : i32
    %cst = arith.constant 0.000000e+00 : f32
    %31 = vector.broadcast %cst : f32 to vector<64x128xf32>
    %c6_i32 = arith.constant 6 : i32
    %32 = arith.addi %30, %c6_i32 : i32
    %33 = arith.index_cast %32 : i32 to index
    %c0 = arith.constant 0 : index
    %c0_19 = arith.constant 0 : index
    %34 = vector.load %arg9[%33, %c0, %c0_19] : memref<28x16x128xbf16, #tpu.memory_space<vmem>>, vector<4x16x128xbf16>
    %35 = vector.shape_cast %34 : vector<4x16x128xbf16> to vector<64x128xbf16>
    %c0_20 = arith.constant 0 : index
    %c0_21 = arith.constant 0 : index
    %c0_22 = arith.constant 0 : index
    %36 = vector.load %arg3[%c0_20, %c0_21, %c0_22] : memref<18x128x128xbf16, #tpu.memory_space<vmem>>, vector<1x128x128xbf16>
    %37 = vector.shape_cast %36 : vector<1x128x128xbf16> to vector<128x128xbf16>
    %cst_23 = arith.constant dense<0.000000e+00> : vector<64x128xf32>
    %38 = tpu.matmul %35, %37, %cst_23 {dimension_numbers = #tpu.dot_dimension_numbers<[1], [0], [0], [1], [0, 0, 1, 1], [], []>} : vector<64x128xbf16>, vector<128x128xbf16>, vector<64x128xf32> -> vector<64x128xf32>
    %39 = arith.addf %31, %38 : vector<64x128xf32>
    %c6_i32_24 = arith.constant 6 : i32
    %40 = arith.addi %30, %c6_i32_24 : i32
    %41 = arith.index_cast %40 : i32 to index
    %c0_25 = arith.constant 0 : index
    %c0_26 = arith.constant 0 : index
    %42 = vector.load %arg10[%41, %c0_25, %c0_26] : memref<28x16x128xbf16, #tpu.memory_space<vmem>>, vector<4x16x128xbf16>
    %43 = vector.shape_cast %42 : vector<4x16x128xbf16> to vector<64x128xbf16>
    %c1 = arith.constant 1 : index
    %c0_27 = arith.constant 0 : index
    %c0_28 = arith.constant 0 : index
    %44 = vector.load %arg3[%c1, %c0_27, %c0_28] : memref<18x128x128xbf16, #tpu.memory_space<vmem>>, vector<1x128x128xbf16>
    %45 = vector.shape_cast %44 : vector<1x128x128xbf16> to vector<128x128xbf16>
    %cst_29 = arith.constant dense<0.000000e+00> : vector<64x128xf32>
    %46 = tpu.matmul %43, %45, %cst_29 {dimension_numbers = #tpu.dot_dimension_numbers<[1], [0], [0], [1], [0, 0, 1, 1], [], []>} : vector<64x128xbf16>, vector<128x128xbf16>, vector<64x128xf32> -> vector<64x128xf32>
    %47 = arith.addf %39, %46 : vector<64x128xf32>
    %c6_i32_30 = arith.constant 6 : i32
    %48 = arith.addi %30, %c6_i32_30 : i32
    %49 = arith.index_cast %48 : i32 to index
    %c0_31 = arith.constant 0 : index
    %c0_32 = arith.constant 0 : index
    %50 = vector.load %arg11[%49, %c0_31, %c0_32] : memref<28x16x128xbf16, #tpu.memory_space<vmem>>, vector<4x16x128xbf16>
    %51 = vector.shape_cast %50 : vector<4x16x128xbf16> to vector<64x128xbf16>
    %c2 = arith.constant 2 : index
    %c0_33 = arith.constant 0 : index
    %c0_34 = arith.constant 0 : index
    %52 = vector.load %arg3[%c2, %c0_33, %c0_34] : memref<18x128x128xbf16, #tpu.memory_space<vmem>>, vector<1x128x128xbf16>
    %53 = vector.shape_cast %52 : vector<1x128x128xbf16> to vector<128x128xbf16>
    %cst_35 = arith.constant dense<0.000000e+00> : vector<64x128xf32>
    %54 = tpu.matmul %51, %53, %cst_35 {dimension_numbers = #tpu.dot_dimension_numbers<[1], [0], [0], [1], [0, 0, 1, 1], [], []>} : vector<64x128xbf16>, vector<128x128xbf16>, vector<64x128xf32> -> vector<64x128xf32>
    %55 = arith.addf %47, %54 : vector<64x128xf32>
    %c12_i32 = arith.constant 12 : i32
    %56 = arith.addi %30, %c12_i32 : i32
    %57 = arith.index_cast %56 : i32 to index
    %c0_36 = arith.constant 0 : index
    %c0_37 = arith.constant 0 : index
    %58 = vector.load %arg9[%57, %c0_36, %c0_37] : memref<28x16x128xbf16, #tpu.memory_space<vmem>>, vector<4x16x128xbf16>
    %59 = vector.shape_cast %58 : vector<4x16x128xbf16> to vector<64x128xbf16>
    %c3 = arith.constant 3 : index
    %c0_38 = arith.constant 0 : index
    %c0_39 = arith.constant 0 : index
    %60 = vector.load %arg3[%c3, %c0_38, %c0_39] : memref<18x128x128xbf16, #tpu.memory_space<vmem>>, vector<1x128x128xbf16>
    %61 = vector.shape_cast %60 : vector<1x128x128xbf16> to vector<128x128xbf16>
    %cst_40 = arith.constant dense<0.000000e+00> : vector<64x128xf32>
    %62 = tpu.matmul %59, %61, %cst_40 {dimension_numbers = #tpu.dot_dimension_numbers<[1], [0], [0], [1], [0, 0, 1, 1], [], []>} : vector<64x128xbf16>, vector<128x128xbf16>, vector<64x128xf32> -> vector<64x128xf32>
    %63 = arith.addf %55, %62 : vector<64x128xf32>
    %c12_i32_41 = arith.constant 12 : i32
    %64 = arith.addi %30, %c12_i32_41 : i32
    %65 = arith.index_cast %64 : i32 to index
    %c0_42 = arith.constant 0 : index
    %c0_43 = arith.constant 0 : index
    %66 = vector.load %arg10[%65, %c0_42, %c0_43] : memref<28x16x128xbf16, #tpu.memory_space<vmem>>, vector<4x16x128xbf16>
    %67 = vector.shape_cast %66 : vector<4x16x128xbf16> to vector<64x128xbf16>
    %c4 = arith.constant 4 : index
    %c0_44 = arith.constant 0 : index
    %c0_45 = arith.constant 0 : index
    %68 = vector.load %arg3[%c4, %c0_44, %c0_45] : memref<18x128x128xbf16, #tpu.memory_space<vmem>>, vector<1x128x128xbf16>
    %69 = vector.shape_cast %68 : vector<1x128x128xbf16> to vector<128x128xbf16>
    %cst_46 = arith.constant dense<0.000000e+00> : vector<64x128xf32>
    %70 = tpu.matmul %67, %69, %cst_46 {dimension_numbers = #tpu.dot_dimension_numbers<[1], [0], [0], [1], [0, 0, 1, 1], [], []>} : vector<64x128xbf16>, vector<128x128xbf16>, vector<64x128xf32> -> vector<64x128xf32>
    %71 = arith.addf %63, %70 : vector<64x128xf32>
    %c12_i32_47 = arith.constant 12 : i32
    %72 = arith.addi %30, %c12_i32_47 : i32
    %73 = arith.index_cast %72 : i32 to index
    %c0_48 = arith.constant 0 : index
    %c0_49 = arith.constant 0 : index
    %74 = vector.load %arg11[%73, %c0_48, %c0_49] : memref<28x16x128xbf16, #tpu.memory_space<vmem>>, vector<4x16x128xbf16>
    %75 = vector.shape_cast %74 : vector<4x16x128xbf16> to vector<64x128xbf16>
    %c5 = arith.constant 5 : index
    %c0_50 = arith.constant 0 : index
    %c0_51 = arith.constant 0 : index
    %76 = vector.load %arg3[%c5, %c0_50, %c0_51] : memref<18x128x128xbf16, #tpu.memory_space<vmem>>, vector<1x128x128xbf16>
    %77 = vector.shape_cast %76 : vector<1x128x128xbf16> to vector<128x128xbf16>
    %cst_52 = arith.constant dense<0.000000e+00> : vector<64x128xf32>
    %78 = tpu.matmul %75, %77, %cst_52 {dimension_numbers = #tpu.dot_dimension_numbers<[1], [0], [0], [1], [0, 0, 1, 1], [], []>} : vector<64x128xbf16>, vector<128x128xbf16>, vector<64x128xf32> -> vector<64x128xf32>
    %79 = arith.addf %71, %78 : vector<64x128xf32>
    %c18_i32 = arith.constant 18 : i32
    %80 = arith.addi %30, %c18_i32 : i32
    %81 = arith.index_cast %80 : i32 to index
    %c0_53 = arith.constant 0 : index
    %c0_54 = arith.constant 0 : index
    %82 = vector.load %arg9[%81, %c0_53, %c0_54] : memref<28x16x128xbf16, #tpu.memory_space<vmem>>, vector<4x16x128xbf16>
    %83 = vector.shape_cast %82 : vector<4x16x128xbf16> to vector<64x128xbf16>
    %c6 = arith.constant 6 : index
    %c0_55 = arith.constant 0 : index
    %c0_56 = arith.constant 0 : index
    %84 = vector.load %arg3[%c6, %c0_55, %c0_56] : memref<18x128x128xbf16, #tpu.memory_space<vmem>>, vector<1x128x128xbf16>
    %85 = vector.shape_cast %84 : vector<1x128x128xbf16> to vector<128x128xbf16>
    %cst_57 = arith.constant dense<0.000000e+00> : vector<64x128xf32>
    %86 = tpu.matmul %83, %85, %cst_57 {dimension_numbers = #tpu.dot_dimension_numbers<[1], [0], [0], [1], [0, 0, 1, 1], [], []>} : vector<64x128xbf16>, vector<128x128xbf16>, vector<64x128xf32> -> vector<64x128xf32>
    %87 = arith.addf %79, %86 : vector<64x128xf32>
    %c18_i32_58 = arith.constant 18 : i32
    %88 = arith.addi %30, %c18_i32_58 : i32
    %89 = arith.index_cast %88 : i32 to index
    %c0_59 = arith.constant 0 : index
    %c0_60 = arith.constant 0 : index
    %90 = vector.load %arg10[%89, %c0_59, %c0_60] : memref<28x16x128xbf16, #tpu.memory_space<vmem>>, vector<4x16x128xbf16>
    %91 = vector.shape_cast %90 : vector<4x16x128xbf16> to vector<64x128xbf16>
    %c7 = arith.constant 7 : index
    %c0_61 = arith.constant 0 : index
    %c0_62 = arith.constant 0 : index
    %92 = vector.load %arg3[%c7, %c0_61, %c0_62] : memref<18x128x128xbf16, #tpu.memory_space<vmem>>, vector<1x128x128xbf16>
    %93 = vector.shape_cast %92 : vector<1x128x128xbf16> to vector<128x128xbf16>
    %cst_63 = arith.constant dense<0.000000e+00> : vector<64x128xf32>
    %94 = tpu.matmul %91, %93, %cst_63 {dimension_numbers = #tpu.dot_dimension_numbers<[1], [0], [0], [1], [0, 0, 1, 1], [], []>} : vector<64x128xbf16>, vector<128x128xbf16>, vector<64x128xf32> -> vector<64x128xf32>
    %95 = arith.addf %87, %94 : vector<64x128xf32>
    %c18_i32_64 = arith.constant 18 : i32
    %96 = arith.addi %30, %c18_i32_64 : i32
    %97 = arith.index_cast %96 : i32 to index
    %c0_65 = arith.constant 0 : index
    %c0_66 = arith.constant 0 : index
    %98 = vector.load %arg11[%97, %c0_65, %c0_66] : memref<28x16x128xbf16, #tpu.memory_space<vmem>>, vector<4x16x128xbf16>
    %99 = vector.shape_cast %98 : vector<4x16x128xbf16> to vector<64x128xbf16>
    %c8 = arith.constant 8 : index
    %c0_67 = arith.constant 0 : index
    %c0_68 = arith.constant 0 : index
    %100 = vector.load %arg3[%c8, %c0_67, %c0_68] : memref<18x128x128xbf16, #tpu.memory_space<vmem>>, vector<1x128x128xbf16>
    %101 = vector.shape_cast %100 : vector<1x128x128xbf16> to vector<128x128xbf16>
    %cst_69 = arith.constant dense<0.000000e+00> : vector<64x128xf32>
    %102 = tpu.matmul %99, %101, %cst_69 {dimension_numbers = #tpu.dot_dimension_numbers<[1], [0], [0], [1], [0, 0, 1, 1], [], []>} : vector<64x128xbf16>, vector<128x128xbf16>, vector<64x128xf32> -> vector<64x128xf32>
    %103 = arith.addf %95, %102 : vector<64x128xf32>
    %c0_i32_70 = arith.constant 0 : i32
    %104 = arith.addi %30, %c0_i32_70 : i32
    %105 = arith.index_cast %104 : i32 to index
    %c0_71 = arith.constant 0 : index
    %c0_72 = arith.constant 0 : index
    %106 = vector.load %arg8[%105, %c0_71, %c0_72] : memref<28x16x128xbf16, #tpu.memory_space<vmem>>, vector<4x16x128xbf16>
    %107 = vector.shape_cast %106 : vector<4x16x128xbf16> to vector<64x128xbf16>
    %c9 = arith.constant 9 : index
    %c0_73 = arith.constant 0 : index
    %c0_74 = arith.constant 0 : index
    %108 = vector.load %arg3[%c9, %c0_73, %c0_74] : memref<18x128x128xbf16, #tpu.memory_space<vmem>>, vector<1x128x128xbf16>
    %109 = vector.shape_cast %108 : vector<1x128x128xbf16> to vector<128x128xbf16>
    %cst_75 = arith.constant dense<0.000000e+00> : vector<64x128xf32>
    %110 = tpu.matmul %107, %109, %cst_75 {dimension_numbers = #tpu.dot_dimension_numbers<[1], [0], [0], [1], [0, 0, 1, 1], [], []>} : vector<64x128xbf16>, vector<128x128xbf16>, vector<64x128xf32> -> vector<64x128xf32>
    %111 = arith.addf %103, %110 : vector<64x128xf32>
    %c0_i32_76 = arith.constant 0 : i32
    %112 = arith.addi %30, %c0_i32_76 : i32
    %113 = arith.index_cast %112 : i32 to index
    %c0_77 = arith.constant 0 : index
    %c0_78 = arith.constant 0 : index
    %114 = vector.load %arg10[%113, %c0_77, %c0_78] : memref<28x16x128xbf16, #tpu.memory_space<vmem>>, vector<4x16x128xbf16>
    %115 = vector.shape_cast %114 : vector<4x16x128xbf16> to vector<64x128xbf16>
    %c10 = arith.constant 10 : index
    %c0_79 = arith.constant 0 : index
    %c0_80 = arith.constant 0 : index
    %116 = vector.load %arg3[%c10, %c0_79, %c0_80] : memref<18x128x128xbf16, #tpu.memory_space<vmem>>, vector<1x128x128xbf16>
    %117 = vector.shape_cast %116 : vector<1x128x128xbf16> to vector<128x128xbf16>
    %cst_81 = arith.constant dense<0.000000e+00> : vector<64x128xf32>
    %118 = tpu.matmul %115, %117, %cst_81 {dimension_numbers = #tpu.dot_dimension_numbers<[1], [0], [0], [1], [0, 0, 1, 1], [], []>} : vector<64x128xbf16>, vector<128x128xbf16>, vector<64x128xf32> -> vector<64x128xf32>
    %119 = arith.addf %111, %118 : vector<64x128xf32>
    %c0_i32_82 = arith.constant 0 : i32
    %120 = arith.addi %30, %c0_i32_82 : i32
    %121 = arith.index_cast %120 : i32 to index
    %c0_83 = arith.constant 0 : index
    %c0_84 = arith.constant 0 : index
    %122 = vector.load %arg12[%121, %c0_83, %c0_84] : memref<28x16x128xbf16, #tpu.memory_space<vmem>>, vector<4x16x128xbf16>
    %123 = vector.shape_cast %122 : vector<4x16x128xbf16> to vector<64x128xbf16>
    %c11 = arith.constant 11 : index
    %c0_85 = arith.constant 0 : index
    %c0_86 = arith.constant 0 : index
    %124 = vector.load %arg3[%c11, %c0_85, %c0_86] : memref<18x128x128xbf16, #tpu.memory_space<vmem>>, vector<1x128x128xbf16>
    %125 = vector.shape_cast %124 : vector<1x128x128xbf16> to vector<128x128xbf16>
    %cst_87 = arith.constant dense<0.000000e+00> : vector<64x128xf32>
    %126 = tpu.matmul %123, %125, %cst_87 {dimension_numbers = #tpu.dot_dimension_numbers<[1], [0], [0], [1], [0, 0, 1, 1], [], []>} : vector<64x128xbf16>, vector<128x128xbf16>, vector<64x128xf32> -> vector<64x128xf32>
    %127 = arith.addf %119, %126 : vector<64x128xf32>
    %c12_i32_88 = arith.constant 12 : i32
    %128 = arith.addi %30, %c12_i32_88 : i32
    %129 = arith.index_cast %128 : i32 to index
    %c0_89 = arith.constant 0 : index
    %c0_90 = arith.constant 0 : index
    %130 = vector.load %arg8[%129, %c0_89, %c0_90] : memref<28x16x128xbf16, #tpu.memory_space<vmem>>, vector<4x16x128xbf16>
    %131 = vector.shape_cast %130 : vector<4x16x128xbf16> to vector<64x128xbf16>
    %c12 = arith.constant 12 : index
    %c0_91 = arith.constant 0 : index
    %c0_92 = arith.constant 0 : index
    %132 = vector.load %arg3[%c12, %c0_91, %c0_92] : memref<18x128x128xbf16, #tpu.memory_space<vmem>>, vector<1x128x128xbf16>
    %133 = vector.shape_cast %132 : vector<1x128x128xbf16> to vector<128x128xbf16>
    %cst_93 = arith.constant dense<0.000000e+00> : vector<64x128xf32>
    %134 = tpu.matmul %131, %133, %cst_93 {dimension_numbers = #tpu.dot_dimension_numbers<[1], [0], [0], [1], [0, 0, 1, 1], [], []>} : vector<64x128xbf16>, vector<128x128xbf16>, vector<64x128xf32> -> vector<64x128xf32>
    %135 = arith.addf %127, %134 : vector<64x128xf32>
    %c12_i32_94 = arith.constant 12 : i32
    %136 = arith.addi %30, %c12_i32_94 : i32
    %137 = arith.index_cast %136 : i32 to index
    %c0_95 = arith.constant 0 : index
    %c0_96 = arith.constant 0 : index
    %138 = vector.load %arg10[%137, %c0_95, %c0_96] : memref<28x16x128xbf16, #tpu.memory_space<vmem>>, vector<4x16x128xbf16>
    %139 = vector.shape_cast %138 : vector<4x16x128xbf16> to vector<64x128xbf16>
    %c13 = arith.constant 13 : index
    %c0_97 = arith.constant 0 : index
    %c0_98 = arith.constant 0 : index
    %140 = vector.load %arg3[%c13, %c0_97, %c0_98] : memref<18x128x128xbf16, #tpu.memory_space<vmem>>, vector<1x128x128xbf16>
    %141 = vector.shape_cast %140 : vector<1x128x128xbf16> to vector<128x128xbf16>
    %cst_99 = arith.constant dense<0.000000e+00> : vector<64x128xf32>
    %142 = tpu.matmul %139, %141, %cst_99 {dimension_numbers = #tpu.dot_dimension_numbers<[1], [0], [0], [1], [0, 0, 1, 1], [], []>} : vector<64x128xbf16>, vector<128x128xbf16>, vector<64x128xf32> -> vector<64x128xf32>
    %143 = arith.addf %135, %142 : vector<64x128xf32>
    %c12_i32_100 = arith.constant 12 : i32
    %144 = arith.addi %30, %c12_i32_100 : i32
    %145 = arith.index_cast %144 : i32 to index
    %c0_101 = arith.constant 0 : index
    %c0_102 = arith.constant 0 : index
    %146 = vector.load %arg12[%145, %c0_101, %c0_102] : memref<28x16x128xbf16, #tpu.memory_space<vmem>>, vector<4x16x128xbf16>
    %147 = vector.shape_cast %146 : vector<4x16x128xbf16> to vector<64x128xbf16>
    %c14 = arith.constant 14 : index
    %c0_103 = arith.constant 0 : index
    %c0_104 = arith.constant 0 : index
    %148 = vector.load %arg3[%c14, %c0_103, %c0_104] : memref<18x128x128xbf16, #tpu.memory_space<vmem>>, vector<1x128x128xbf16>
    %149 = vector.shape_cast %148 : vector<1x128x128xbf16> to vector<128x128xbf16>
    %cst_105 = arith.constant dense<0.000000e+00> : vector<64x128xf32>
    %150 = tpu.matmul %147, %149, %cst_105 {dimension_numbers = #tpu.dot_dimension_numbers<[1], [0], [0], [1], [0, 0, 1, 1], [], []>} : vector<64x128xbf16>, vector<128x128xbf16>, vector<64x128xf32> -> vector<64x128xf32>
    %151 = arith.addf %143, %150 : vector<64x128xf32>
    %c24_i32 = arith.constant 24 : i32
    %152 = arith.addi %30, %c24_i32 : i32
    %153 = arith.index_cast %152 : i32 to index
    %c0_106 = arith.constant 0 : index
    %c0_107 = arith.constant 0 : index
    %154 = vector.load %arg8[%153, %c0_106, %c0_107] : memref<28x16x128xbf16, #tpu.memory_space<vmem>>, vector<4x16x128xbf16>
    %155 = vector.shape_cast %154 : vector<4x16x128xbf16> to vector<64x128xbf16>
    %c15 = arith.constant 15 : index
    %c0_108 = arith.constant 0 : index
    %c0_109 = arith.constant 0 : index
    %156 = vector.load %arg3[%c15, %c0_108, %c0_109] : memref<18x128x128xbf16, #tpu.memory_space<vmem>>, vector<1x128x128xbf16>
    %157 = vector.shape_cast %156 : vector<1x128x128xbf16> to vector<128x128xbf16>
    %cst_110 = arith.constant dense<0.000000e+00> : vector<64x128xf32>
    %158 = tpu.matmul %155, %157, %cst_110 {dimension_numbers = #tpu.dot_dimension_numbers<[1], [0], [0], [1], [0, 0, 1, 1], [], []>} : vector<64x128xbf16>, vector<128x128xbf16>, vector<64x128xf32> -> vector<64x128xf32>
    %159 = arith.addf %151, %158 : vector<64x128xf32>
    %c24_i32_111 = arith.constant 24 : i32
    %160 = arith.addi %30, %c24_i32_111 : i32
    %161 = arith.index_cast %160 : i32 to index
    %c0_112 = arith.constant 0 : index
    %c0_113 = arith.constant 0 : index
    %162 = vector.load %arg10[%161, %c0_112, %c0_113] : memref<28x16x128xbf16, #tpu.memory_space<vmem>>, vector<4x16x128xbf16>
    %163 = vector.shape_cast %162 : vector<4x16x128xbf16> to vector<64x128xbf16>
    %c16 = arith.constant 16 : index
    %c0_114 = arith.constant 0 : index
    %c0_115 = arith.constant 0 : index
    %164 = vector.load %arg3[%c16, %c0_114, %c0_115] : memref<18x128x128xbf16, #tpu.memory_space<vmem>>, vector<1x128x128xbf16>
    %165 = vector.shape_cast %164 : vector<1x128x128xbf16> to vector<128x128xbf16>
    %cst_116 = arith.constant dense<0.000000e+00> : vector<64x128xf32>
    %166 = tpu.matmul %163, %165, %cst_116 {dimension_numbers = #tpu.dot_dimension_numbers<[1], [0], [0], [1], [0, 0, 1, 1], [], []>} : vector<64x128xbf16>, vector<128x128xbf16>, vector<64x128xf32> -> vector<64x128xf32>
    %167 = arith.addf %159, %166 : vector<64x128xf32>
    %c24_i32_117 = arith.constant 24 : i32
    %168 = arith.addi %30, %c24_i32_117 : i32
    %169 = arith.index_cast %168 : i32 to index
    %c0_118 = arith.constant 0 : index
    %c0_119 = arith.constant 0 : index
    %170 = vector.load %arg12[%169, %c0_118, %c0_119] : memref<28x16x128xbf16, #tpu.memory_space<vmem>>, vector<4x16x128xbf16>
    %171 = vector.shape_cast %170 : vector<4x16x128xbf16> to vector<64x128xbf16>
    %c17 = arith.constant 17 : index
    %c0_120 = arith.constant 0 : index
    %c0_121 = arith.constant 0 : index
    %172 = vector.load %arg3[%c17, %c0_120, %c0_121] : memref<18x128x128xbf16, #tpu.memory_space<vmem>>, vector<1x128x128xbf16>
    %173 = vector.shape_cast %172 : vector<1x128x128xbf16> to vector<128x128xbf16>
    %cst_122 = arith.constant dense<0.000000e+00> : vector<64x128xf32>
    %174 = tpu.matmul %171, %173, %cst_122 {dimension_numbers = #tpu.dot_dimension_numbers<[1], [0], [0], [1], [0, 0, 1, 1], [], []>} : vector<64x128xbf16>, vector<128x128xbf16>, vector<64x128xf32> -> vector<64x128xf32>
    %175 = arith.addf %167, %174 : vector<64x128xf32>
    %c0_123 = arith.constant 0 : index
    %c0_124 = arith.constant 0 : index
    %176 = vector.load %arg4[%c0_123, %c0_124] : memref<1x128xf32, #tpu.memory_space<vmem>>, vector<1x128xf32>
    %177 = vector.broadcast %176 : vector<1x128xf32> to vector<64x128xf32>
    %178 = arith.addf %175, %177 : vector<64x128xf32>
    %179 = vector.shape_cast %178 : vector<64x128xf32> to vector<4x16x128xf32>
    %180 = arith.truncf %179 : vector<4x16x128xf32> to vector<4x16x128xbf16>
    %c0_125 = arith.constant 0 : index
    %181 = arith.index_cast %30 : i32 to index
    %c0_126 = arith.constant 0 : index
    %c0_127 = arith.constant 0 : index
    %182 = vector.load %arg5[%c0_125, %181, %c0_126, %c0_127] : memref<1x4x16x128xbf16, #tpu.memory_space<vmem>>, vector<1x4x16x128xbf16>
    %183 = vector.shape_cast %182 : vector<1x4x16x128xbf16> to vector<4x16x128xbf16>
    %184 = vector.shape_cast %180 : vector<4x16x128xbf16> to vector<1x4x16x128xbf16>
    tpu.vector_store %arg5[%c0_125, %181, %c0_126, %c0_127], %184 {strides = array<i32>} : memref<1x4x16x128xbf16, #tpu.memory_space<vmem>>, vector<1x4x16x128xbf16>,
    %c1_i32_128 = arith.constant 1 : i32
    return
  }
  func.func @transform_1(%arg0: i32, %arg1: i32) -> (i32, i32, i32) {
    %c0_i32 = arith.constant 0 : i32
    %c0_i32_0 = arith.constant 0 : i32
    %c0_i32_1 = arith.constant 0 : i32
    %c0_i32_2 = arith.constant 0 : i32
    return %c0_i32, %c0_i32_0, %c0_i32_1 : i32, i32, i32
  }
  func.func @transform_2(%arg0: i32, %arg1: i32) -> (i32, i32) {
    %c0_i32 = arith.constant 0 : i32
    %c0_i32_0 = arith.constant 0 : i32
    %c0_i32_1 = arith.constant 0 : i32
    return %c0_i32, %c0_i32_0 : i32, i32
  }
  func.func @transform_3(%arg0: i32, %arg1: i32) -> (i32, i32, i32, i32) {
    %c0_i32 = arith.constant 0 : i32
    %c0_i32_0 = arith.constant 0 : i32
    %c0_i32_1 = arith.constant 0 : i32
    return %arg0, %arg1, %c0_i32, %c0_i32_0 : i32, i32, i32, i32
  }
}

</mosaic_0001>

<llo_original>
// kernel: tpu_custom_call.1
$region0: #{tpu_custom_call.1}
  #allocation0 [shape = 'u32[]', space=smem, size = 0x4, offset = 0x4, fixed_abs, tag = 'smem constant byte address 0x4 - core index']
  #allocation1 [shape = 'u32[144,128]{1,0:T(1,128)}', space=vmem, size = 0x12000, scoped, tag = 'internal scratch']
  #allocation2 [shape = 'bf16[2,28,40,128]{3,2,1,0:T(8,128)(2,1)}', space=vmem, size = 0x8c000, scoped, tag = 'scratch operand']
  #allocation3 [shape = 's32[2]{0}', space=sflag, size = 0x8, scoped, tag = 'scratch operand']
  #allocation4 [shape = 'bf16[28,16,128]{2,1,0:T(16,128)(2,1)}', space=vmem, size = 0x1c000, scoped, tag = 'scratch operand']
  #allocation5 [shape = 'bf16[28,16,128]{2,1,0:T(16,128)(2,1)}', space=vmem, size = 0x1c000, scoped, tag = 'scratch operand']
  #allocation6 [shape = 'bf16[28,16,128]{2,1,0:T(16,128)(2,1)}', space=vmem, size = 0x1c000, scoped, tag = 'scratch operand']
  #allocation7 [shape = 'bf16[28,16,128]{2,1,0:T(16,128)(2,1)}', space=vmem, size = 0x1c000, scoped, tag = 'scratch operand']
  #allocation8 [shape = 'bf16[28,16,128]{2,1,0:T(16,128)(2,1)}', space=vmem, size = 0x1c000, scoped, tag = 'scratch operand']
  #allocation13 [shape = 's32[]', space=sflag, size = 0x4, offset = 0, fixed_abs, tag = 'sflag constant byte address 0x0 - dummy sync flag']
  #allocation14 [shape = 's32[]', space=sflag, size = 0x4, offset = 0, fixed_abs, tag = 'sflag constant byte address 0x0 - dummy sync flag']
  #allocation15 [shape = 'u32[]', space=smem, size = 0x4, offset = 0x44, fixed_abs, tag = 'smem constant byte address 0x44 - assertion arg 0']
  #allocation16 [shape = 'u32[]', space=smem, size = 0x4, offset = 0x48, fixed_abs, tag = 'smem constant byte address 0x48 - assertion arg 1']
  #allocation17 [shape = 's32[]', space=sflag, size = 0x4, offset = 0, fixed_abs, tag = 'sflag constant byte address 0x0 - dummy sync flag']
  #allocation18 [shape = 's32[]', space=sflag, size = 0x4, offset = 0, fixed_abs, tag = 'sflag constant byte address 0x0 - dummy sync flag']
  %s0 = inlined_call_operand.hbm [shape: bf16[2,40,40,128], index: 0, kind: input, shape index: {}]
  %s1 = inlined_call_operand.hbm [shape: bf16[18,128,128], index: 1, kind: input, shape index: {}]
  %s2 = inlined_call_operand.vmem [shape: f32[1,128], index: 2, kind: input, shape index: {}]
  %s3 = inlined_call_operand.hbm [shape: bf16[2,16,16,128], index: 3, kind: output, shape index: {}]
  %s4 = sld [smem:[#allocation0]]
  $region69: #{tpu_custom_call.1} parent=0
    _
  %s6 = ssub.s32 1, %s4
  %s7 = scalar_select 0, %s6, %s4
  $region1: #{tpu_custom_call.1} parent=0
    #allocation9 [shape = 'u8[589824]{0}', space=vmem, size = 0x90000, scoped, tag = 'input window, operand 1, single buffered']
    #allocation10 [shape = 's32[2]{0}', space=sflag, size = 0x8, scoped, tag = 'scoped memory for tpu_custom_call.1']
    #allocation11 [shape = 's32[2]{0}', space=sflag, size = 0x8, scoped, tag = 'scoped memory for tpu_custom_call.1']
    #allocation12 [shape = 'u8[32768]{0}', space=vmem, size = 0x8000, scoped, tag = 'output window, operand 0']
    %8 = vsyncpa [#allocation10], 0
    %9 = vsyncpa [#allocation11], 0
    %s10 = scalar_lea.sflag [#allocation11], 1
    %11 = vsyncpa %s10, 0
    loop: start=0, step=1, limit=10
    $region2: #{tpu_custom_call.1} parent=1 // loop_pre_header
      _
    $region3: #{tpu_custom_call.1} parent=1 // loop_header
      %s13 = sphi 0, %s17
      %p14 = scmp.ge.s32.totalorder %s13, 10
      %s20 = sphi 0, %s32
      %s21 = sphi 0, %s28
      %s22 = sphi 0, %s20
      %s23 = sphi 0, %s21
      %s24 = sphi 0, %s22
      %s25 = sphi 0, %s23
      %s33 = sphi 0, %s33
      %s35 = sphi 0, %s33
      %s36 = sphi 0, %s35
      %s50 = sphi 0, %s36
      %s54 = sphi 0, %s54
      %s56 = sphi 0, %s54
      %s57 = sphi 0, %s56
      %s71 = sphi 0, %s57
      %s79 = sphi 0, %s81
      %s82 = sphi 0, %s79
      %s83 = sphi 0, %s82
      %s99 = sphi 0, %s83
    $region4: #{tpu_custom_call.1} parent=1 // loop_header_branch
      %16 = sbr.rel (%p14) target = $region8
    $region5: #{tpu_custom_call.1} parent=1 // loop_body
      %s18 = ssub.s32 %s13, 1
      %s19 = ssub.s32 %s13, 2
      %s26 = sadd.s32 1, %s21
      %p27 = scmp.ge.s32.totalorder %s26, 4
      %s28 = scalar_select %p27, 0, %s26
      %s29 = sadd.s32 1, %s20
      %s30 = scalar_select %p27, %s29, %s20
      %p31 = scmp.ge.s32.totalorder %s30, 2
      %s32 = scalar_select %p31, 0, %s30
      %s34 = sadd.s32 %s33, 1
      %p37 = scmp.eq.s32.totalorder %s13, 7
      %p38 = scmp.ne.s32.totalorder %s33, %s35
      %p39 = scmp.eq.s32.totalorder %s13, 0
      %p40 = por %p38, %p39
      %p41 = scmp.ne.s32.totalorder %s33, %s35
      %p42 = scmp.eq.s32.totalorder %s18, 7
      %p43 = por %p41, %p42
      %p44 = scmp.ne.s32.totalorder %s35, %s36
      %p45 = scmp.eq.s32.totalorder %s18, 0
      %p46 = por %p44, %p45
      %p47 = scmp.ne.s32.totalorder %s35, %s36
      %p48 = scmp.eq.s32.totalorder %s19, 7
      %p49 = por %p47, %p48
      %p51 = scmp.ne.s32.totalorder %s36, %s50
      %p52 = scmp.eq.s32.totalorder %s19, 0
      %p53 = por %p51, %p52
      %s55 = sadd.s32 %s54, 1
      %p58 = scmp.eq.s32.totalorder %s13, 7
      %p59 = scmp.ne.s32.totalorder %s54, %s56
      %p60 = scmp.eq.s32.totalorder %s13, 0
      %p61 = por %p59, %p60
      %p62 = scmp.ne.s32.totalorder %s54, %s56
      %p63 = scmp.eq.s32.totalorder %s18, 7
      %p64 = por %p62, %p63
      %p65 = scmp.ne.s32.totalorder %s56, %s57
      %p66 = scmp.eq.s32.totalorder %s18, 0
      %p67 = por %p65, %p66
      %p68 = scmp.ne.s32.totalorder %s56, %s57
      %p69 = scmp.eq.s32.totalorder %s19, 7
      %p70 = por %p68, %p69
      %p72 = scmp.ne.s32.totalorder %s57, %s71
      %p73 = scmp.eq.s32.totalorder %s19, 0
      %p74 = por %p72, %p73
      %s75 = ssub.s32 %s20, %s32
      %s76 = ssub.s32 %s21, %s28
      %s77 = sor.u32 %s75, %s76
      %p78 = scmp.eq.s32.totalorder %s77, 0
      %s80 = sadd.s32 %s79, 1
      %s81 = scalar_select %p78, %s79, %s80
      %p84 = pneg %p78
      %p85 = scmp.eq.s32.totalorder %s13, 7
      %p86 = por %p84, %p85
      %p87 = scmp.ne.s32.totalorder %s79, %s82
      %p88 = scmp.eq.s32.totalorder %s13, 0
      %p89 = por %p87, %p88
      %p90 = scmp.ne.s32.totalorder %s79, %s82
      %p91 = scmp.eq.s32.totalorder %s18, 7
      %p92 = por %p90, %p91
      %p93 = scmp.ne.s32.totalorder %s82, %s83
      %p94 = scmp.eq.s32.totalorder %s18, 0
      %p95 = por %p93, %p94
      %p96 = scmp.ne.s32.totalorder %s82, %s83
      %p97 = scmp.eq.s32.totalorder %s19, 7
      %p98 = por %p96, %p97
      %p100 = scmp.ne.s32.totalorder %s83, %s99
      %p101 = scmp.eq.s32.totalorder %s19, 0
      %p102 = por %p100, %p101
      %p103 = scmp.le.s32.totalorder 1, %s13
      %p104 = scmp.lt.s32.totalorder %s13, 9
      %p105 = pnand %p103, %p104
      %p106 = pneg %p105
      // Predicated region
      $region9: #{tpu_custom_call.1} parent=5 // pred_check
        _
      $region10: #{tpu_custom_call.1} parent=5 // pred_check_branch
        %108 = sbr.rel (%p105) target = $region12
      $region11: #{tpu_custom_call.1} parent=5 // pred_region
        %s109 = ssub.s32 %s13, 1
        // Predicated region
        $region13: #{tpu_custom_call.1} parent=11 // pred_check
          %p110 = pneg %p46
        $region14: #{tpu_custom_call.1} parent=11 // pred_check_branch
          %112 = sbr.rel (%p110) target = $region16
        $region15: #{tpu_custom_call.1} parent=11 // pred_region
          %s114 = ssub.s32 18432, 18432
          %115 = vsyncadd [#allocation10], %s114
          %s116 = sshll.u32 [#allocation9], 4
          %s117 = int_to_ptr.vmem [resolvable:$true] %s116
          %122 = dma.hbm_to_vmem [thread:$0]  %s1, 18432, %s117, [#allocation10], 64, 64, 4
        $region16: #{tpu_custom_call.1} parent=11 // pred_fallthru
          _
        // Predicated region
        $region17: #{tpu_custom_call.1} parent=11 // pred_check
          %p123 = pneg %p67
        $region18: #{tpu_custom_call.1} parent=11 // pred_check_branch
          %125 = sbr.rel (%p123) target = $region20
        $region19: #{tpu_custom_call.1} parent=11 // pred_region
          _
        $region20: #{tpu_custom_call.1} parent=11 // pred_fallthru
          _
      $region12: #{tpu_custom_call.1} parent=5 // pred_fallthru
        _
      %p126 = scmp.lt.s32.totalorder %s13, 8
      // Predicated region
      $region21: #{tpu_custom_call.1} parent=5 // pred_check
        %p127 = pneg %p126
      $region22: #{tpu_custom_call.1} parent=5 // pred_check_branch
        %129 = sbr.rel (%p127) target = $region24
      $region23: #{tpu_custom_call.1} parent=5 // pred_region
        _
      $region24: #{tpu_custom_call.1} parent=5 // pred_fallthru
        _
      %p130 = scmp.le.s32.totalorder 1, %s13
      %p131 = scmp.lt.s32.totalorder %s13, 9
      %p132 = pnand %p130, %p131
      %p133 = pneg %p132
      // Predicated region
      $region25: #{tpu_custom_call.1} parent=5 // pred_check
        _
      $region26: #{tpu_custom_call.1} parent=5 // pred_check_branch
        %135 = sbr.rel (%p132) target = $region28
      $region27: #{tpu_custom_call.1} parent=5 // pred_region
        %s136 = ssub.s32 %s13, 1
        // Predicated region
        $region29: #{tpu_custom_call.1} parent=27 // pred_check
          %p137 = pneg %p46
        $region30: #{tpu_custom_call.1} parent=27 // pred_check_branch
          %139 = sbr.rel (%p137) target = $region32
        $region31: #{tpu_custom_call.1} parent=27 // pred_region
          %140 = dma.done [#allocation10], 18432
        $region32: #{tpu_custom_call.1} parent=27 // pred_fallthru
          _
        %p141 = pneg %p46
        %p142 = pneg %p43
        %p143 = pneg %p67
        %p144 = pneg %p64
        %p145 = pneg %p95
        %p146 = pneg %p92
        %s147 = sand.u32 %s82, 1
        %s148 = scalar_lea.sflag [#allocation11], %s147
        %s149 = sand.u32 %s82, 1
        %s150 = smul.addr %s149, 32
        %s151 = scalar_lea.vmem [#allocation12], %s150
        %s152 = smul.u32 4, %s23
        %p154 = scmp.lt.s32.totalorder %s23, 0
        %s155 = ssub.s32 0, %s23
        %s156 = scalar_select %p154, %s155, %s23
        %s157 = sand.u32 %s156, 1
        %s158 = ssub.s32 0, %s157
        %s159 = scalar_select %p154, %s158, %s157
        %p160 = scmp.ne.s32.totalorder %s159, 0
        %p161 = scmp.lt.s32.totalorder %s159, 0
        %p162 = pnand %p161, %p160
        %p163 = pneg %p162
        %s164 = sadd.s32 %s159, 2
        %s165 = scalar_select %p163, %s164, %s159
        %p166 = scmp.eq.s32.totalorder %s23, 0
        // Predicated region
        $region33: #{tpu_custom_call.1} parent=27 // pred_check
          %p167 = pneg %p166
        $region34: #{tpu_custom_call.1} parent=27 // pred_check_branch
          %169 = sbr.rel (%p167) target = $region36
        $region35: #{tpu_custom_call.1} parent=27 // pred_region
          %s170 = smul.u32 %s22, 200
          %s171 = smul.addr %s170, 64
          %s172 = scalar_lea.hbm %s0, %s171
          // Predicated region
          $region37: #{tpu_custom_call.1} parent=35 // pred_check
            _
          $region38: #{tpu_custom_call.1} parent=35 // pred_check_branch
            %174 = sbr.rel target = $region40
          $region39: #{tpu_custom_call.1} parent=35 // pred_region
            %175 = sst [smem:[#allocation15]] [#allocation14]
            %176 = sst [smem:[#allocation16]] [#allocation13]
          $region40: #{tpu_custom_call.1} parent=35 // pred_fallthru
            _
          %178 = shalt.err (0)
          %s180 = sshll.u32 [#allocation2], 4
          %s181 = int_to_ptr.vmem [resolvable:$true] %s180
          %183 = dma.hbm_to_vmem [thread:$0]  %s172, 8960, %s181, [#allocation3]
        $region36: #{tpu_custom_call.1} parent=27 // pred_fallthru
          _
        %s184 = sadd.s32 %s23, 1
        %p185 = scmp.lt.s32.totalorder %s184, 4
        // Predicated region
        $region41: #{tpu_custom_call.1} parent=27 // pred_check
          %p186 = pneg %p185
        $region42: #{tpu_custom_call.1} parent=27 // pred_check_branch
          %188 = sbr.rel (%p186) target = $region44
        $region43: #{tpu_custom_call.1} parent=27 // pred_region
          %s189 = ssub.s32 1, %s165
          %s190 = smul.u32 %s184, 4
          %s191 = smul.u32 %s190, 5
          %s192 = smul.u32 %s22, 200
          %s193 = sadd.s32 %s191, %s192
          %s194 = smul.addr %s193, 64
          %s195 = scalar_lea.hbm %s0, %s194
          %s196 = smul.u32 %s189, 140
          %s197 = smul.addr %s196, 4
          %s198 = scalar_lea.vmem [#allocation2], %s197
          %s199 = scalar_lea.sflag [#allocation3], %s189
          // Predicated region
          $region45: #{tpu_custom_call.1} parent=43 // pred_check
            _
          $region46: #{tpu_custom_call.1} parent=43 // pred_check_branch
            %201 = sbr.rel target = $region48
          $region47: #{tpu_custom_call.1} parent=43 // pred_region
            %202 = sst [smem:[#allocation15]] [#allocation18]
            %203 = sst [smem:[#allocation16]] [#allocation17]
          $region48: #{tpu_custom_call.1} parent=43 // pred_fallthru
            _
          %205 = shalt.err (0)
          %s207 = sshll.u32 %s198, 4
          %s208 = int_to_ptr.vmem [resolvable:$true] %s207
          %210 = dma.hbm_to_vmem [thread:$0]  %s195, 8960, %s208, %s199
        $region44: #{tpu_custom_call.1} parent=27 // pred_fallthru
          _
        %s211 = scalar_lea.sflag [#allocation3], %s165
        %s212 = smul.u32 4, 28
        %s213 = smul.u32 %s212, 5
        %s214 = smul.u32 %s213, 1
        %s215 = sshll.u32 %s214, 4
        %216 = dma.done %s211, %s215
        %p217 = scmp.eq.s32.totalorder %s165, 0
        // Predicated region
        $region49: #{tpu_custom_call.1} parent=27 // pred_check
          %p218 = pneg %p217
        $region50: #{tpu_custom_call.1} parent=27 // pred_check_branch
          %220 = sbr.rel (%p218) target = $region52
        $region51: #{tpu_custom_call.1} parent=27 // pred_region
          %v221 = vld [vmem:[#allocation2] sm:$0xf]
          %v222 = vld [vmem:[#allocation2 + $0x4] sm:$0xf]
          %v223 = vld [vmem:[#allocation2 + $0x14] sm:$0xf]
          %v224 = vld [vmem:[#allocation2 + $0x18] sm:$0xf]
          %v225 = vld [vmem:[#allocation2 + $0x28] sm:$0xf]
          %v226 = vld [vmem:[#allocation2 + $0x2c] sm:$0xf]
          %v227 = vld [vmem:[#allocation2 + $0x3c] sm:$0xf]
          %v228 = vld [vmem:[#allocation2 + $0x40] sm:$0xf]
          %v229 = vld [vmem:[#allocation2 + $0x50] sm:$0xf]
          %v230 = vld [vmem:[#allocation2 + $0x54] sm:$0xf]
          %v231 = vld [vmem:[#allocation2 + $0x64] sm:$0xf]
          %v232 = vld [vmem:[#allocation2 + $0x68] sm:$0xf]
          %v233 = vld [vmem:[#allocation2 + $0x78] sm:$0xf]
          %v234 = vld [vmem:[#allocation2 + $0x7c] sm:$0xf]
          %v235 = vld [vmem:[#allocation2 + $0x8c] sm:$0xf]
          %v236 = vld [vmem:[#allocation2 + $0x90] sm:$0xf]
          %v237 = vld [vmem:[#allocation2 + $0xa0] sm:$0xf]
          %v238 = vld [vmem:[#allocation2 + $0xa4] sm:$0xf]
          %v239 = vld [vmem:[#allocation2 + $0xb4] sm:$0xf]
          %v240 = vld [vmem:[#allocation2 + $0xb8] sm:$0xf]
          %v241 = vld [vmem:[#allocation2 + $0xc8] sm:$0xf]
          %v242 = vld [vmem:[#allocation2 + $0xcc] sm:$0xf]
          %v243 = vld [vmem:[#allocation2 + $0xdc] sm:$0xf]
          %v244 = vld [vmem:[#allocation2 + $0xe0] sm:$0xf]
          %v245 = vld [vmem:[#allocation2 + $0xf0] sm:$0xf]
          %v246 = vld [vmem:[#allocation2 + $0xf4] sm:$0xf]
          %v247 = vld [vmem:[#allocation2 + $0x104] sm:$0xf]
          %v248 = vld [vmem:[#allocation2 + $0x108] sm:$0xf]
          %v249 = vld [vmem:[#allocation2 + $0x118] sm:$0xf]
          %v250 = vld [vmem:[#allocation2 + $0x11c] sm:$0xf]
          %v251 = vld [vmem:[#allocation2 + $0x12c] sm:$0xf]
          %v252 = vld [vmem:[#allocation2 + $0x130] sm:$0xf]
          %v253 = vld [vmem:[#allocation2 + $0x140] sm:$0xf]
          %v254 = vld [vmem:[#allocation2 + $0x144] sm:$0xf]
          %v255 = vld [vmem:[#allocation2 + $0x154] sm:$0xf]
          %v256 = vld [vmem:[#allocation2 + $0x158] sm:$0xf]
          %v257 = vld [vmem:[#allocation2 + $0x168] sm:$0xf]
          %v258 = vld [vmem:[#allocation2 + $0x16c] sm:$0xf]
          %v259 = vld [vmem:[#allocation2 + $0x17c] sm:$0xf]
          %v260 = vld [vmem:[#allocation2 + $0x180] sm:$0xf]
          %v261 = vld [vmem:[#allocation2 + $0x190] sm:$0xf]
          %v262 = vld [vmem:[#allocation2 + $0x194] sm:$0xf]
          %v263 = vld [vmem:[#allocation2 + $0x1a4] sm:$0xf]
          %v264 = vld [vmem:[#allocation2 + $0x1a8] sm:$0xf]
          %v265 = vld [vmem:[#allocation2 + $0x1b8] sm:$0xf]
          %v266 = vld [vmem:[#allocation2 + $0x1bc] sm:$0xf]
          %v267 = vld [vmem:[#allocation2 + $0x1cc] sm:$0xf]
          %v268 = vld [vmem:[#allocation2 + $0x1d0] sm:$0xf]
          %v269 = vld [vmem:[#allocation2 + $0x1e0] sm:$0xf]
          %v270 = vld [vmem:[#allocation2 + $0x1e4] sm:$0xf]
          %v271 = vld [vmem:[#allocation2 + $0x1f4] sm:$0xf]
          %v272 = vld [vmem:[#allocation2 + $0x1f8] sm:$0xf]
          %v273 = vld [vmem:[#allocation2 + $0x208] sm:$0xf]
          %v274 = vld [vmem:[#allocation2 + $0x20c] sm:$0xf]
          %v275 = vld [vmem:[#allocation2 + $0x21c] sm:$0xf]
          %v276 = vld [vmem:[#allocation2 + $0x220] sm:$0xf]
          %v333 = vunpack.c.l.b16 %v221
          %v334 = vunpack.c.l.b16 %v222
          %v335 = vunpack.c.l.b16 %v223
          %v336 = vunpack.c.l.b16 %v224
          %v337 = vunpack.c.l.b16 %v225
          %v338 = vunpack.c.l.b16 %v226
          %v339 = vunpack.c.l.b16 %v227
          %v340 = vunpack.c.l.b16 %v228
          %v341 = vunpack.c.l.b16 %v229
          %v342 = vunpack.c.l.b16 %v230
          %v343 = vunpack.c.l.b16 %v231
          %v344 = vunpack.c.l.b16 %v232
          %v345 = vunpack.c.l.b16 %v233
          %v346 = vunpack.c.l.b16 %v234
          %v347 = vunpack.c.l.b16 %v235
          %v348 = vunpack.c.l.b16 %v236
          %v349 = vunpack.c.l.b16 %v237
          %v350 = vunpack.c.l.b16 %v238
          %v351 = vunpack.c.l.b16 %v239
          %v352 = vunpack.c.l.b16 %v240
          %v353 = vunpack.c.l.b16 %v241
          %v354 = vunpack.c.l.b16 %v242
          %v355 = vunpack.c.l.b16 %v243
          %v356 = vunpack.c.l.b16 %v244
          %v357 = vunpack.c.l.b16 %v245
          %v358 = vunpack.c.l.b16 %v246
          %v359 = vunpack.c.l.b16 %v247
          %v360 = vunpack.c.l.b16 %v248
          %v361 = vunpack.c.l.b16 %v249
          %v362 = vunpack.c.l.b16 %v250
          %v363 = vunpack.c.l.b16 %v251
          %v364 = vunpack.c.l.b16 %v252
          %v365 = vunpack.c.l.b16 %v253
          %v366 = vunpack.c.l.b16 %v254
          %v367 = vunpack.c.l.b16 %v255
          %v368 = vunpack.c.l.b16 %v256
          %v369 = vunpack.c.l.b16 %v257
          %v370 = vunpack.c.l.b16 %v258
          %v371 = vunpack.c.l.b16 %v259
          %v372 = vunpack.c.l.b16 %v260
          %v373 = vunpack.c.l.b16 %v261
          %v374 = vunpack.c.l.b16 %v262
          %v375 = vunpack.c.l.b16 %v263
          %v376 = vunpack.c.l.b16 %v264
          %v377 = vunpack.c.l.b16 %v265
          %v378 = vunpack.c.l.b16 %v266
          %v379 = vunpack.c.l.b16 %v267
          %v380 = vunpack.c.l.b16 %v268
          %v381 = vunpack.c.l.b16 %v269
          %v382 = vunpack.c.l.b16 %v270
          %v383 = vunpack.c.l.b16 %v271
          %v384 = vunpack.c.l.b16 %v272
          %v385 = vunpack.c.l.b16 %v273
          %v386 = vunpack.c.l.b16 %v274
          %v387 = vunpack.c.l.b16 %v275
          %v388 = vunpack.c.l.b16 %v276
          %v389 = vpack.c.b16 %v334, %v333
          %v390 = vpack.c.b16 %v336, %v335
          %v391 = vpack.c.b16 %v338, %v337
          %v392 = vpack.c.b16 %v340, %v339
          %v393 = vpack.c.b16 %v342, %v341
          %v394 = vpack.c.b16 %v344, %v343
          %v395 = vpack.c.b16 %v346, %v345
          %v396 = vpack.c.b16 %v348, %v347
          %v397 = vpack.c.b16 %v350, %v349
          %v398 = vpack.c.b16 %v352, %v351
          %v399 = vpack.c.b16 %v354, %v353
          %v400 = vpack.c.b16 %v356, %v355
          %v401 = vpack.c.b16 %v358, %v357
          %v402 = vpack.c.b16 %v360, %v359
          %v403 = vpack.c.b16 %v362, %v361
          %v404 = vpack.c.b16 %v364, %v363
          %v405 = vpack.c.b16 %v366, %v365
          %v406 = vpack.c.b16 %v368, %v367
          %v407 = vpack.c.b16 %v370, %v369
          %v408 = vpack.c.b16 %v372, %v371
          %v409 = vpack.c.b16 %v374, %v373
          %v410 = vpack.c.b16 %v376, %v375
          %v411 = vpack.c.b16 %v378, %v377
          %v412 = vpack.c.b16 %v380, %v379
          %v413 = vpack.c.b16 %v382, %v381
          %v414 = vpack.c.b16 %v384, %v383
          %v415 = vpack.c.b16 %v386, %v385
          %v416 = vpack.c.b16 %v388, %v387
          %445 = vst [vmem:[#allocation4] sm:$0xff] %v389
          %446 = vst [vmem:[#allocation4 + $0x8] sm:$0xff] %v390
          %447 = vst [vmem:[#allocation4 + $0x10] sm:$0xff] %v391
          %448 = vst [vmem:[#allocation4 + $0x18] sm:$0xff] %v392
          %449 = vst [vmem:[#allocation4 + $0x20] sm:$0xff] %v393
          %450 = vst [vmem:[#allocation4 + $0x28] sm:$0xff] %v394
          %451 = vst [vmem:[#allocation4 + $0x30] sm:$0xff] %v395
          %452 = vst [vmem:[#allocation4 + $0x38] sm:$0xff] %v396
          %453 = vst [vmem:[#allocation4 + $0x40] sm:$0xff] %v397
          %454 = vst [vmem:[#allocation4 + $0x48] sm:$0xff] %v398
          %455 = vst [vmem:[#allocation4 + $0x50] sm:$0xff] %v399
          %456 = vst [vmem:[#allocation4 + $0x58] sm:$0xff] %v400
          %457 = vst [vmem:[#allocation4 + $0x60] sm:$0xff] %v401
          %458 = vst [vmem:[#allocation4 + $0x68] sm:$0xff] %v402
          %459 = vst [vmem:[#allocation4 + $0x70] sm:$0xff] %v403
          %460 = vst [vmem:[#allocation4 + $0x78] sm:$0xff] %v404
          %461 = vst [vmem:[#allocation4 + $0x80] sm:$0xff] %v405
          %462 = vst [vmem:[#allocation4 + $0x88] sm:$0xff] %v406
          %463 = vst [vmem:[#allocation4 + $0x90] sm:$0xff] %v407
          %464 = vst [vmem:[#allocation4 + $0x98] sm:$0xff] %v408
          %465 = vst [vmem:[#allocation4 + $0xa0] sm:$0xff] %v409
          %466 = vst [vmem:[#allocation4 + $0xa8] sm:$0xff] %v410
          %467 = vst [vmem:[#allocation4 + $0xb0] sm:$0xff] %v411
          %468 = vst [vmem:[#allocation4 + $0xb8] sm:$0xff] %v412
          %469 = vst [vmem:[#allocation4 + $0xc0] sm:$0xff] %v413
          %470 = vst [vmem:[#allocation4 + $0xc8] sm:$0xff] %v414
          %471 = vst [vmem:[#allocation4 + $0xd0] sm:$0xff] %v415
          %472 = vst [vmem:[#allocation4 + $0xd8] sm:$0xff] %v416
          %v473 = vld [vmem:[#allocation2] sm:$0x8]
          %v474 = vld [vmem:[#allocation2 + $0x4] sm:$0xf]
          %v475 = vld [vmem:[#allocation2 + $0x8] sm:$0x7]
          %v476 = vld [vmem:[#allocation2 + $0x14] sm:$0x8]
          %v477 = vld [vmem:[#allocation2 + $0x18] sm:$0xf]
          %v478 = vld [vmem:[#allocation2 + $0x1c] sm:$0x7]
          %v479 = vld [vmem:[#allocation2 + $0x28] sm:$0x8]
          %v480 = vld [vmem:[#allocation2 + $0x2c] sm:$0xf]
          %v481 = vld [vmem:[#allocation2 + $0x30] sm:$0x7]
          %v482 = vld [vmem:[#allocation2 + $0x3c] sm:$0x8]
          %v483 = vld [vmem:[#allocation2 + $0x40] sm:$0xf]
          %v484 = vld [vmem:[#allocation2 + $0x44] sm:$0x7]
          %v485 = vld [vmem:[#allocation2 + $0x50] sm:$0x8]
          %v486 = vld [vmem:[#allocation2 + $0x54] sm:$0xf]
          %v487 = vld [vmem:[#allocation2 + $0x58] sm:$0x7]
          %v488 = vld [vmem:[#allocation2 + $0x64] sm:$0x8]
          %v489 = vld [vmem:[#allocation2 + $0x68] sm:$0xf]
          %v490 = vld [vmem:[#allocation2 + $0x6c] sm:$0x7]
          %v491 = vld [vmem:[#allocation2 + $0x78] sm:$0x8]
          %v492 = vld [vmem:[#allocation2 + $0x7c] sm:$0xf]
          %v493 = vld [vmem:[#allocation2 + $0x80] sm:$0x7]
          %v494 = vld [vmem:[#allocation2 + $0x8c] sm:$0x8]
          %v495 = vld [vmem:[#allocation2 + $0x90] sm:$0xf]
          %v496 = vld [vmem:[#allocation2 + $0x94] sm:$0x7]
          %v497 = vld [vmem:[#allocation2 + $0xa0] sm:$0x8]
          %v498 = vld [vmem:[#allocation2 + $0xa4] sm:$0xf]
          %v499 = vld [vmem:[#allocation2 + $0xa8] sm:$0x7]
          %v500 = vld [vmem:[#allocation2 + $0xb4] sm:$0x8]
          %v501 = vld [vmem:[#allocation2 + $0xb8] sm:$0xf]
          %v502 = vld [vmem:[#allocation2 + $0xbc] sm:$0x7]
          %v503 = vld [vmem:[#allocation2 + $0xc8] sm:$0x8]
          %v504 = vld [vmem:[#allocation2 + $0xcc] sm:$0xf]
          %v505 = vld [vmem:[#allocation2 + $0xd0] sm:$0x7]
          %v506 = vld [vmem:[#allocation2 + $0xdc] sm:$0x8]
          %v507 = vld [vmem:[#allocation2 + $0xe0] sm:$0xf]
          %v508 = vld [vmem:[#allocation2 + $0xe4] sm:$0x7]
          %v509 = vld [vmem:[#allocation2 + $0xf0] sm:$0x8]
          %v510 = vld [vmem:[#allocation2 + $0xf4] sm:$0xf]
          %v511 = vld [vmem:[#allocation2 + $0xf8] sm:$0x7]
          %v512 = vld [vmem:[#allocation2 + $0x104] sm:$0x8]
          %v513 = vld [vmem:[#allocation2 + $0x108] sm:$0xf]
          %v514 = vld [vmem:[#allocation2 + $0x10c] sm:$0x7]
          %v515 = vld [vmem:[#allocation2 + $0x118] sm:$0x8]
          %v516 = vld [vmem:[#allocation2 + $0x11c] sm:$0xf]
          %v517 = vld [vmem:[#allocation2 + $0x120] sm:$0x7]
          %v518 = vld [vmem:[#allocation2 + $0x12c] sm:$0x8]
          %v519 = vld [vmem:[#allocation2 + $0x130] sm:$0xf]
          %v520 = vld [vmem:[#allocation2 + $0x134] sm:$0x7]
          %v521 = vld [vmem:[#allocation2 + $0x140] sm:$0x8]
          %v522 = vld [vmem:[#allocation2 + $0x144] sm:$0xf]
          %v523 = vld [vmem:[#allocation2 + $0x148] sm:$0x7]
          %v524 = vld [vmem:[#allocation2 + $0x154] sm:$0x8]
          %v525 = vld [vmem:[#allocation2 + $0x158] sm:$0xf]
          %v526 = vld [vmem:[#allocation2 + $0x15c] sm:$0x7]
          %v527 = vld [vmem:[#allocation2 + $0x168] sm:$0x8]
          %v528 = vld [vmem:[#allocation2 + $0x16c] sm:$0xf]
          %v529 = vld [vmem:[#allocation2 + $0x170] sm:$0x7]
          %v530 = vld [vmem:[#allocation2 + $0x17c] sm:$0x8]
          %v531 = vld [vmem:[#allocation2 + $0x180] sm:$0xf]
          %v532 = vld [vmem:[#allocation2 + $0x184] sm:$0x7]
          %v533 = vld [vmem:[#allocation2 + $0x190] sm:$0x8]
          %v534 = vld [vmem:[#allocation2 + $0x194] sm:$0xf]
          %v535 = vld [vmem:[#allocation2 + $0x198] sm:$0x7]
          %v536 = vld [vmem:[#allocation2 + $0x1a4] sm:$0x8]
          %v537 = vld [vmem:[#allocation2 + $0x1a8] sm:$0xf]
          %v538 = vld [vmem:[#allocation2 + $0x1ac] sm:$0x7]
          %v539 = vld [vmem:[#allocation2 + $0x1b8] sm:$0x8]
          %v540 = vld [vmem:[#allocation2 + $0x1bc] sm:$0xf]
          %v541 = vld [vmem:[#allocation2 + $0x1c0] sm:$0x7]
          %v542 = vld [vmem:[#allocation2 + $0x1cc] sm:$0x8]
          %v543 = vld [vmem:[#allocation2 + $0x1d0] sm:$0xf]
          %v544 = vld [vmem:[#allocation2 + $0x1d4] sm:$0x7]
          %v545 = vld [vmem:[#allocation2 + $0x1e0] sm:$0x8]
          %v546 = vld [vmem:[#allocation2 + $0x1e4] sm:$0xf]
          %v547 = vld [vmem:[#allocation2 + $0x1e8] sm:$0x7]
          %v548 = vld [vmem:[#allocation2 + $0x1f4] sm:$0x8]
          %v549 = vld [vmem:[#allocation2 + $0x1f8] sm:$0xf]
          %v550 = vld [vmem:[#allocation2 + $0x1fc] sm:$0x7]
          %v551 = vld [vmem:[#allocation2 + $0x208] sm:$0x8]
          %v552 = vld [vmem:[#allocation2 + $0x20c] sm:$0xf]
          %v553 = vld [vmem:[#allocation2 + $0x210] sm:$0x7]
          %v554 = vld [vmem:[#allocation2 + $0x21c] sm:$0x8]
          %v555 = vld [vmem:[#allocation2 + $0x220] sm:$0xf]
          %v556 = vld [vmem:[#allocation2 + $0x224] sm:$0x7]
          %v641 = vunpack.c.l.b16 %v473
          %v642 = vunpack.c.l.b16 %v474
          %v643 = vunpack.c.l.b16 %v475
          %v644 = vunpack.c.l.b16 %v476
          %v645 = vunpack.c.l.b16 %v477
          %v646 = vunpack.c.l.b16 %v478
          %v647 = vunpack.c.l.b16 %v479
          %v648 = vunpack.c.l.b16 %v480
          %v649 = vunpack.c.l.b16 %v481
          %v650 = vunpack.c.l.b16 %v482
          %v651 = vunpack.c.l.b16 %v483
          %v652 = vunpack.c.l.b16 %v484
          %v653 = vunpack.c.l.b16 %v485
          %v654 = vunpack.c.l.b16 %v486
          %v655 = vunpack.c.l.b16 %v487
          %v656 = vunpack.c.l.b16 %v488
          %v657 = vunpack.c.l.b16 %v489
          %v658 = vunpack.c.l.b16 %v490
          %v659 = vunpack.c.l.b16 %v491
          %v660 = vunpack.c.l.b16 %v492
          %v661 = vunpack.c.l.b16 %v493
          %v662 = vunpack.c.l.b16 %v494
          %v663 = vunpack.c.l.b16 %v495
          %v664 = vunpack.c.l.b16 %v496
          %v665 = vunpack.c.l.b16 %v497
          %v666 = vunpack.c.l.b16 %v498
          %v667 = vunpack.c.l.b16 %v499
          %v668 = vunpack.c.l.b16 %v500
          %v669 = vunpack.c.l.b16 %v501
          %v670 = vunpack.c.l.b16 %v502
          %v671 = vunpack.c.l.b16 %v503
          %v672 = vunpack.c.l.b16 %v504
          %v673 = vunpack.c.l.b16 %v505
          %v674 = vunpack.c.l.b16 %v506
          %v675 = vunpack.c.l.b16 %v507
          %v676 = vunpack.c.l.b16 %v508
          %v677 = vunpack.c.l.b16 %v509
          %v678 = vunpack.c.l.b16 %v510
          %v679 = vunpack.c.l.b16 %v511
          %v680 = vunpack.c.l.b16 %v512
          %v681 = vunpack.c.l.b16 %v513
          %v682 = vunpack.c.l.b16 %v514
          %v683 = vunpack.c.l.b16 %v515
          %v684 = vunpack.c.l.b16 %v516
          %v685 = vunpack.c.l.b16 %v517
          %v686 = vunpack.c.l.b16 %v518
          %v687 = vunpack.c.l.b16 %v519
          %v688 = vunpack.c.l.b16 %v520
          %v689 = vunpack.c.l.b16 %v521
          %v690 = vunpack.c.l.b16 %v522
          %v691 = vunpack.c.l.b16 %v523
          %v692 = vunpack.c.l.b16 %v524
          %v693 = vunpack.c.l.b16 %v525
          %v694 = vunpack.c.l.b16 %v526
          %v695 = vunpack.c.l.b16 %v527
          %v696 = vunpack.c.l.b16 %v528
          %v697 = vunpack.c.l.b16 %v529
          %v698 = vunpack.c.l.b16 %v530
          %v699 = vunpack.c.l.b16 %v531
          %v700 = vunpack.c.l.b16 %v532
          %v701 = vunpack.c.l.b16 %v533
          %v702 = vunpack.c.l.b16 %v534
          %v703 = vunpack.c.l.b16 %v535
          %v704 = vunpack.c.l.b16 %v536
          %v705 = vunpack.c.l.b16 %v537
          %v706 = vunpack.c.l.b16 %v538
          %v707 = vunpack.c.l.b16 %v539
          %v708 = vunpack.c.l.b16 %v540
          %v709 = vunpack.c.l.b16 %v541
          %v710 = vunpack.c.l.b16 %v542
          %v711 = vunpack.c.l.b16 %v543
          %v712 = vunpack.c.l.b16 %v544
          %v713 = vunpack.c.l.b16 %v545
          %v714 = vunpack.c.l.b16 %v546
          %v715 = vunpack.c.l.b16 %v547
          %v716 = vunpack.c.l.b16 %v548
          %v717 = vunpack.c.l.b16 %v549
          %v718 = vunpack.c.l.b16 %v550
          %v719 = vunpack.c.l.b16 %v551
          %v720 = vunpack.c.l.b16 %v552
          %v721 = vunpack.c.l.b16 %v553
          %v722 = vunpack.c.l.b16 %v554
          %v723 = vunpack.c.l.b16 %v555
          %v724 = vunpack.c.l.b16 %v556
          %v725 = vpack.c.b16 %v642, %v641
          %v726 = vpack.c.b16 %v643, %v643
          %v727 = vpack.c.b16 %v645, %v644
          %v728 = vpack.c.b16 %v646, %v646
          %v729 = vpack.c.b16 %v648, %v647
          %v730 = vpack.c.b16 %v649, %v649
          %v731 = vpack.c.b16 %v651, %v650
          %v732 = vpack.c.b16 %v652, %v652
          %v733 = vpack.c.b16 %v654, %v653
          %v734 = vpack.c.b16 %v655, %v655
          %v735 = vpack.c.b16 %v657, %v656
          %v736 = vpack.c.b16 %v658, %v658
          %v737 = vpack.c.b16 %v660, %v659
          %v738 = vpack.c.b16 %v661, %v661
          %v739 = vpack.c.b16 %v663, %v662
          %v740 = vpack.c.b16 %v664, %v664
          %v741 = vpack.c.b16 %v666, %v665
          %v742 = vpack.c.b16 %v667, %v667
          %v743 = vpack.c.b16 %v669, %v668
          %v744 = vpack.c.b16 %v670, %v670
          %v745 = vpack.c.b16 %v672, %v671
          %v746 = vpack.c.b16 %v673, %v673
          %v747 = vpack.c.b16 %v675, %v674
          %v748 = vpack.c.b16 %v676, %v676
          %v749 = vpack.c.b16 %v678, %v677
          %v750 = vpack.c.b16 %v679, %v679
          %v751 = vpack.c.b16 %v681, %v680
          %v752 = vpack.c.b16 %v682, %v682
          %v753 = vpack.c.b16 %v684, %v683
          %v754 = vpack.c.b16 %v685, %v685
          %v755 = vpack.c.b16 %v687, %v686
          %v756 = vpack.c.b16 %v688, %v688
          %v757 = vpack.c.b16 %v690, %v689
          %v758 = vpack.c.b16 %v691, %v691
          %v759 = vpack.c.b16 %v693, %v692
          %v760 = vpack.c.b16 %v694, %v694
          %v761 = vpack.c.b16 %v696, %v695
          %v762 = vpack.c.b16 %v697, %v697
          %v763 = vpack.c.b16 %v699, %v698
          %v764 = vpack.c.b16 %v700, %v700
          %v765 = vpack.c.b16 %v702, %v701
          %v766 = vpack.c.b16 %v703, %v703
          %v767 = vpack.c.b16 %v705, %v704
          %v768 = vpack.c.b16 %v706, %v706
          %v769 = vpack.c.b16 %v708, %v707
          %v770 = vpack.c.b16 %v709, %v709
          %v771 = vpack.c.b16 %v711, %v710
          %v772 = vpack.c.b16 %v712, %v712
          %v773 = vpack.c.b16 %v714, %v713
          %v774 = vpack.c.b16 %v715, %v715
          %v775 = vpack.c.b16 %v717, %v716
          %v776 = vpack.c.b16 %v718, %v718
          %v777 = vpack.c.b16 %v720, %v719
          %v778 = vpack.c.b16 %v721, %v721
          %v779 = vpack.c.b16 %v723, %v722
          %v780 = vpack.c.b16 %v724, %v724
          %vm781 = vcmask 1044480
          %v782 = vrot.slane %v725, 3
          %v783 = vrot.slane %v726, 3
          %v784 = vsel %vm781, %v782, %v783
          %v785 = vrot.slane %v727, 3
          %v786 = vrot.slane %v728, 3
          %v787 = vsel %vm781, %v785, %v786
          %v788 = vrot.slane %v729, 3
          %v789 = vrot.slane %v730, 3
          %v790 = vsel %vm781, %v788, %v789
          %v791 = vrot.slane %v731, 3
          %v792 = vrot.slane %v732, 3
          %v793 = vsel %vm781, %v791, %v792
          %v794 = vrot.slane %v733, 3
          %v795 = vrot.slane %v734, 3
          %v796 = vsel %vm781, %v794, %v795
          %v797 = vrot.slane %v735, 3
          %v798 = vrot.slane %v736, 3
          %v799 = vsel %vm781, %v797, %v798
          %v800 = vrot.slane %v737, 3
          %v801 = vrot.slane %v738, 3
          %v802 = vsel %vm781, %v800, %v801
          %v803 = vrot.slane %v739, 3
          %v804 = vrot.slane %v740, 3
          %v805 = vsel %vm781, %v803, %v804
          %v806 = vrot.slane %v741, 3
          %v807 = vrot.slane %v742, 3
          %v808 = vsel %vm781, %v806, %v807
          %v809 = vrot.slane %v743, 3
          %v810 = vrot.slane %v744, 3
          %v811 = vsel %vm781, %v809, %v810
          %v812 = vrot.slane %v745, 3
          %v813 = vrot.slane %v746, 3
          %v814 = vsel %vm781, %v812, %v813
          %v815 = vrot.slane %v747, 3
          %v816 = vrot.slane %v748, 3
          %v817 = vsel %vm781, %v815, %v816
          %v818 = vrot.slane %v749, 3
          %v819 = vrot.slane %v750, 3
          %v820 = vsel %vm781, %v818, %v819
          %v821 = vrot.slane %v751, 3
          %v822 = vrot.slane %v752, 3
          %v823 = vsel %vm781, %v821, %v822
          %v824 = vrot.slane %v753, 3
          %v825 = vrot.slane %v754, 3
          %v826 = vsel %vm781, %v824, %v825
          %v827 = vrot.slane %v755, 3
          %v828 = vrot.slane %v756, 3
          %v829 = vsel %vm781, %v827, %v828
          %v830 = vrot.slane %v757, 3
          %v831 = vrot.slane %v758, 3
          %v832 = vsel %vm781, %v830, %v831
          %v833 = vrot.slane %v759, 3
          %v834 = vrot.slane %v760, 3
          %v835 = vsel %vm781, %v833, %v834
          %v836 = vrot.slane %v761, 3
          %v837 = vrot.slane %v762, 3
          %v838 = vsel %vm781, %v836, %v837
          %v839 = vrot.slane %v763, 3
          %v840 = vrot.slane %v764, 3
          %v841 = vsel %vm781, %v839, %v840
          %v842 = vrot.slane %v765, 3
          %v843 = vrot.slane %v766, 3
          %v844 = vsel %vm781, %v842, %v843
          %v845 = vrot.slane %v767, 3
          %v846 = vrot.slane %v768, 3
          %v847 = vsel %vm781, %v845, %v846
          %v848 = vrot.slane %v769, 3
          %v849 = vrot.slane %v770, 3
          %v850 = vsel %vm781, %v848, %v849
          %v851 = vrot.slane %v771, 3
          %v852 = vrot.slane %v772, 3
          %v853 = vsel %vm781, %v851, %v852
          %v854 = vrot.slane %v773, 3
          %v855 = vrot.slane %v774, 3
          %v856 = vsel %vm781, %v854, %v855
          %v857 = vrot.slane %v775, 3
          %v858 = vrot.slane %v776, 3
          %v859 = vsel %vm781, %v857, %v858
          %v860 = vrot.slane %v777, 3
          %v861 = vrot.slane %v778, 3
          %v862 = vsel %vm781, %v860, %v861
          %v863 = vrot.slane %v779, 3
          %v864 = vrot.slane %v780, 3
          %v865 = vsel %vm781, %v863, %v864
          %894 = vst [vmem:[#allocation5] sm:$0xff] %v784
          %895 = vst [vmem:[#allocation5 + $0x8] sm:$0xff] %v787
          %896 = vst [vmem:[#allocation5 + $0x10] sm:$0xff] %v790
          %897 = vst [vmem:[#allocation5 + $0x18] sm:$0xff] %v793
          %898 = vst [vmem:[#allocation5 + $0x20] sm:$0xff] %v796
          %899 = vst [vmem:[#allocation5 + $0x28] sm:$0xff] %v799
          %900 = vst [vmem:[#allocation5 + $0x30] sm:$0xff] %v802
          %901 = vst [vmem:[#allocation5 + $0x38] sm:$0xff] %v805
          %902 = vst [vmem:[#allocation5 + $0x40] sm:$0xff] %v808
          %903 = vst [vmem:[#allocation5 + $0x48] sm:$0xff] %v811
          %904 = vst [vmem:[#allocation5 + $0x50] sm:$0xff] %v814
          %905 = vst [vmem:[#allocation5 + $0x58] sm:$0xff] %v817
          %906 = vst [vmem:[#allocation5 + $0x60] sm:$0xff] %v820
          %907 = vst [vmem:[#allocation5 + $0x68] sm:$0xff] %v823
          %908 = vst [vmem:[#allocation5 + $0x70] sm:$0xff] %v826
          %909 = vst [vmem:[#allocation5 + $0x78] sm:$0xff] %v829
          %910 = vst [vmem:[#allocation5 + $0x80] sm:$0xff] %v832
          %911 = vst [vmem:[#allocation5 + $0x88] sm:$0xff] %v835
          %912 = vst [vmem:[#allocation5 + $0x90] sm:$0xff] %v838
          %913 = vst [vmem:[#allocation5 + $0x98] sm:$0xff] %v841
          %914 = vst [vmem:[#allocation5 + $0xa0] sm:$0xff] %v844
          %915 = vst [vmem:[#allocation5 + $0xa8] sm:$0xff] %v847
          %916 = vst [vmem:[#allocation5 + $0xb0] sm:$0xff] %v850
          %917 = vst [vmem:[#allocation5 + $0xb8] sm:$0xff] %v853
          %918 = vst [vmem:[#allocation5 + $0xc0] sm:$0xff] %v856
          %919 = vst [vmem:[#allocation5 + $0xc8] sm:$0xff] %v859
          %920 = vst [vmem:[#allocation5 + $0xd0] sm:$0xff] %v862
          %921 = vst [vmem:[#allocation5 + $0xd8] sm:$0xff] %v865
          %v922 = vld [vmem:[#allocation2 + $0x4] sm:$0xc]
          %v923 = vld [vmem:[#allocation2 + $0x8] sm:$0xf]
          %v924 = vld [vmem:[#allocation2 + $0xc] sm:$0x3]
          %v925 = vld [vmem:[#allocation2 + $0x18] sm:$0xc]
          %v926 = vld [vmem:[#allocation2 + $0x1c] sm:$0xf]
          %v927 = vld [vmem:[#allocation2 + $0x20] sm:$0x3]
          %v928 = vld [vmem:[#allocation2 + $0x2c] sm:$0xc]
          %v929 = vld [vmem:[#allocation2 + $0x30] sm:$0xf]
          %v930 = vld [vmem:[#allocation2 + $0x34] sm:$0x3]
          %v931 = vld [vmem:[#allocation2 + $0x40] sm:$0xc]
          %v932 = vld [vmem:[#allocation2 + $0x44] sm:$0xf]
          %v933 = vld [vmem:[#allocation2 + $0x48] sm:$0x3]
          %v934 = vld [vmem:[#allocation2 + $0x54] sm:$0xc]
          %v935 = vld [vmem:[#allocation2 + $0x58] sm:$0xf]
          %v936 = vld [vmem:[#allocation2 + $0x5c] sm:$0x3]
          %v937 = vld [vmem:[#allocation2 + $0x68] sm:$0xc]
          %v938 = vld [vmem:[#allocation2 + $0x6c] sm:$0xf]
          %v939 = vld [vmem:[#allocation2 + $0x70] sm:$0x3]
          %v940 = vld [vmem:[#allocation2 + $0x7c] sm:$0xc]
          %v941 = vld [vmem:[#allocation2 + $0x80] sm:$0xf]
          %v942 = vld [vmem:[#allocation2 + $0x84] sm:$0x3]
          %v943 = vld [vmem:[#allocation2 + $0x90] sm:$0xc]
          %v944 = vld [vmem:[#allocation2 + $0x94] sm:$0xf]
          %v945 = vld [vmem:[#allocation2 + $0x98] sm:$0x3]
          %v946 = vld [vmem:[#allocation2 + $0xa4] sm:$0xc]
          %v947 = vld [vmem:[#allocation2 + $0xa8] sm:$0xf]
          %v948 = vld [vmem:[#allocation2 + $0xac] sm:$0x3]
          %v949 = vld [vmem:[#allocation2 + $0xb8] sm:$0xc]
          %v950 = vld [vmem:[#allocation2 + $0xbc] sm:$0xf]
          %v951 = vld [vmem:[#allocation2 + $0xc0] sm:$0x3]
          %v952 = vld [vmem:[#allocation2 + $0xcc] sm:$0xc]
          %v953 = vld [vmem:[#allocation2 + $0xd0] sm:$0xf]
          %v954 = vld [vmem:[#allocation2 + $0xd4] sm:$0x3]
          %v955 = vld [vmem:[#allocation2 + $0xe0] sm:$0xc]
          %v956 = vld [vmem:[#allocation2 + $0xe4] sm:$0xf]
          %v957 = vld [vmem:[#allocation2 + $0xe8] sm:$0x3]
          %v958 = vld [vmem:[#allocation2 + $0xf4] sm:$0xc]
          %v959 = vld [vmem:[#allocation2 + $0xf8] sm:$0xf]
          %v960 = vld [vmem:[#allocation2 + $0xfc] sm:$0x3]
          %v961 = vld [vmem:[#allocation2 + $0x108] sm:$0xc]
          %v962 = vld [vmem:[#allocation2 + $0x10c] sm:$0xf]
          %v963 = vld [vmem:[#allocation2 + $0x110] sm:$0x3]
          %v964 = vld [vmem:[#allocation2 + $0x11c] sm:$0xc]
          %v965 = vld [vmem:[#allocation2 + $0x120] sm:$0xf]
          %v966 = vld [vmem:[#allocation2 + $0x124] sm:$0x3]
          %v967 = vld [vmem:[#allocation2 + $0x130] sm:$0xc]
          %v968 = vld [vmem:[#allocation2 + $0x134] sm:$0xf]
          %v969 = vld [vmem:[#allocation2 + $0x138] sm:$0x3]
          %v970 = vld [vmem:[#allocation2 + $0x144] sm:$0xc]
          %v971 = vld [vmem:[#allocation2 + $0x148] sm:$0xf]
          %v972 = vld [vmem:[#allocation2 + $0x14c] sm:$0x3]
          %v973 = vld [vmem:[#allocation2 + $0x158] sm:$0xc]
          %v974 = vld [vmem:[#allocation2 + $0x15c] sm:$0xf]
          %v975 = vld [vmem:[#allocation2 + $0x160] sm:$0x3]
          %v976 = vld [vmem:[#allocation2 + $0x16c] sm:$0xc]
          %v977 = vld [vmem:[#allocation2 + $0x170] sm:$0xf]
          %v978 = vld [vmem:[#allocation2 + $0x174] sm:$0x3]
          %v979 = vld [vmem:[#allocation2 + $0x180] sm:$0xc]
          %v980 = vld [vmem:[#allocation2 + $0x184] sm:$0xf]
          %v981 = vld [vmem:[#allocation2 + $0x188] sm:$0x3]
          %v982 = vld [vmem:[#allocation2 + $0x194] sm:$0xc]
          %v983 = vld [vmem:[#allocation2 + $0x198] sm:$0xf]
          %v984 = vld [vmem:[#allocation2 + $0x19c] sm:$0x3]
          %v985 = vld [vmem:[#allocation2 + $0x1a8] sm:$0xc]
          %v986 = vld [vmem:[#allocation2 + $0x1ac] sm:$0xf]
          %v987 = vld [vmem:[#allocation2 + $0x1b0] sm:$0x3]
          %v988 = vld [vmem:[#allocation2 + $0x1bc] sm:$0xc]
          %v989 = vld [vmem:[#allocation2 + $0x1c0] sm:$0xf]
          %v990 = vld [vmem:[#allocation2 + $0x1c4] sm:$0x3]
          %v991 = vld [vmem:[#allocation2 + $0x1d0] sm:$0xc]
          %v992 = vld [vmem:[#allocation2 + $0x1d4] sm:$0xf]
          %v993 = vld [vmem:[#allocation2 + $0x1d8] sm:$0x3]
          %v994 = vld [vmem:[#allocation2 + $0x1e4] sm:$0xc]
          %v995 = vld [vmem:[#allocation2 + $0x1e8] sm:$0xf]
          %v996 = vld [vmem:[#allocation2 + $0x1ec] sm:$0x3]
          %v997 = vld [vmem:[#allocation2 + $0x1f8] sm:$0xc]
          %v998 = vld [vmem:[#allocation2 + $0x1fc] sm:$0xf]
          %v999 = vld [vmem:[#allocation2 + $0x200] sm:$0x3]
          %v1000 = vld [vmem:[#allocation2 + $0x20c] sm:$0xc]
          %v1001 = vld [vmem:[#allocation2 + $0x210] sm:$0xf]
          %v1002 = vld [vmem:[#allocation2 + $0x214] sm:$0x3]
          %v1003 = vld [vmem:[#allocation2 + $0x220] sm:$0xc]
          %v1004 = vld [vmem:[#allocation2 + $0x224] sm:$0xf]
          %v1005 = vld [vmem:[#allocation2 + $0x228] sm:$0x3]
          %v1090 = vunpack.c.l.b16 %v922
          %v1091 = vunpack.c.l.b16 %v923
          %v1092 = vunpack.c.l.b16 %v924
          %v1093 = vunpack.c.l.b16 %v925
          %v1094 = vunpack.c.l.b16 %v926
          %v1095 = vunpack.c.l.b16 %v927
          %v1096 = vunpack.c.l.b16 %v928
          %v1097 = vunpack.c.l.b16 %v929
          %v1098 = vunpack.c.l.b16 %v930
          %v1099 = vunpack.c.l.b16 %v931
          %v1100 = vunpack.c.l.b16 %v932
          %v1101 = vunpack.c.l.b16 %v933
          %v1102 = vunpack.c.l.b16 %v934
          %v1103 = vunpack.c.l.b16 %v935
          %v1104 = vunpack.c.l.b16 %v936
          %v1105 = vunpack.c.l.b16 %v937
          %v1106 = vunpack.c.l.b16 %v938
          %v1107 = vunpack.c.l.b16 %v939
          %v1108 = vunpack.c.l.b16 %v940
          %v1109 = vunpack.c.l.b16 %v941
          %v1110 = vunpack.c.l.b16 %v942
          %v1111 = vunpack.c.l.b16 %v943
          %v1112 = vunpack.c.l.b16 %v944
          %v1113 = vunpack.c.l.b16 %v945
          %v1114 = vunpack.c.l.b16 %v946
          %v1115 = vunpack.c.l.b16 %v947
          %v1116 = vunpack.c.l.b16 %v948
          %v1117 = vunpack.c.l.b16 %v949
          %v1118 = vunpack.c.l.b16 %v950
          %v1119 = vunpack.c.l.b16 %v951
          %v1120 = vunpack.c.l.b16 %v952
          %v1121 = vunpack.c.l.b16 %v953
          %v1122 = vunpack.c.l.b16 %v954
          %v1123 = vunpack.c.l.b16 %v955
          %v1124 = vunpack.c.l.b16 %v956
          %v1125 = vunpack.c.l.b16 %v957
          %v1126 = vunpack.c.l.b16 %v958
          %v1127 = vunpack.c.l.b16 %v959
          %v1128 = vunpack.c.l.b16 %v960
          %v1129 = vunpack.c.l.b16 %v961
          %v1130 = vunpack.c.l.b16 %v962
          %v1131 = vunpack.c.l.b16 %v963
          %v1132 = vunpack.c.l.b16 %v964
          %v1133 = vunpack.c.l.b16 %v965
          %v1134 = vunpack.c.l.b16 %v966
          %v1135 = vunpack.c.l.b16 %v967
          %v1136 = vunpack.c.l.b16 %v968
          %v1137 = vunpack.c.l.b16 %v969
          %v1138 = vunpack.c.l.b16 %v970
          %v1139 = vunpack.c.l.b16 %v971
          %v1140 = vunpack.c.l.b16 %v972
          %v1141 = vunpack.c.l.b16 %v973
          %v1142 = vunpack.c.l.b16 %v974
          %v1143 = vunpack.c.l.b16 %v975
          %v1144 = vunpack.c.l.b16 %v976
          %v1145 = vunpack.c.l.b16 %v977
          %v1146 = vunpack.c.l.b16 %v978
          %v1147 = vunpack.c.l.b16 %v979
          %v1148 = vunpack.c.l.b16 %v980
          %v1149 = vunpack.c.l.b16 %v981
          %v1150 = vunpack.c.l.b16 %v982
          %v1151 = vunpack.c.l.b16 %v983
          %v1152 = vunpack.c.l.b16 %v984
          %v1153 = vunpack.c.l.b16 %v985
          %v1154 = vunpack.c.l.b16 %v986
          %v1155 = vunpack.c.l.b16 %v987
          %v1156 = vunpack.c.l.b16 %v988
          %v1157 = vunpack.c.l.b16 %v989
          %v1158 = vunpack.c.l.b16 %v990
          %v1159 = vunpack.c.l.b16 %v991
          %v1160 = vunpack.c.l.b16 %v992
          %v1161 = vunpack.c.l.b16 %v993
          %v1162 = vunpack.c.l.b16 %v994
          %v1163 = vunpack.c.l.b16 %v995
          %v1164 = vunpack.c.l.b16 %v996
          %v1165 = vunpack.c.l.b16 %v997
          %v1166 = vunpack.c.l.b16 %v998
          %v1167 = vunpack.c.l.b16 %v999
          %v1168 = vunpack.c.l.b16 %v1000
          %v1169 = vunpack.c.l.b16 %v1001
          %v1170 = vunpack.c.l.b16 %v1002
          %v1171 = vunpack.c.l.b16 %v1003
          %v1172 = vunpack.c.l.b16 %v1004
          %v1173 = vunpack.c.l.b16 %v1005
          %v1174 = vpack.c.b16 %v1091, %v1090
          %v1175 = vpack.c.b16 %v1092, %v1092
          %v1176 = vpack.c.b16 %v1094, %v1093
          %v1177 = vpack.c.b16 %v1095, %v1095
          %v1178 = vpack.c.b16 %v1097, %v1096
          %v1179 = vpack.c.b16 %v1098, %v1098
          %v1180 = vpack.c.b16 %v1100, %v1099
          %v1181 = vpack.c.b16 %v1101, %v1101
          %v1182 = vpack.c.b16 %v1103, %v1102
          %v1183 = vpack.c.b16 %v1104, %v1104
          %v1184 = vpack.c.b16 %v1106, %v1105
          %v1185 = vpack.c.b16 %v1107, %v1107
          %v1186 = vpack.c.b16 %v1109, %v1108
          %v1187 = vpack.c.b16 %v1110, %v1110
          %v1188 = vpack.c.b16 %v1112, %v1111
          %v1189 = vpack.c.b16 %v1113, %v1113
          %v1190 = vpack.c.b16 %v1115, %v1114
          %v1191 = vpack.c.b16 %v1116, %v1116
          %v1192 = vpack.c.b16 %v1118, %v1117
          %v1193 = vpack.c.b16 %v1119, %v1119
          %v1194 = vpack.c.b16 %v1121, %v1120
          %v1195 = vpack.c.b16 %v1122, %v1122
          %v1196 = vpack.c.b16 %v1124, %v1123
          %v1197 = vpack.c.b16 %v1125, %v1125
          %v1198 = vpack.c.b16 %v1127, %v1126
          %v1199 = vpack.c.b16 %v1128, %v1128
          %v1200 = vpack.c.b16 %v1130, %v1129
          %v1201 = vpack.c.b16 %v1131, %v1131
          %v1202 = vpack.c.b16 %v1133, %v1132
          %v1203 = vpack.c.b16 %v1134, %v1134
          %v1204 = vpack.c.b16 %v1136, %v1135
          %v1205 = vpack.c.b16 %v1137, %v1137
          %v1206 = vpack.c.b16 %v1139, %v1138
          %v1207 = vpack.c.b16 %v1140, %v1140
          %v1208 = vpack.c.b16 %v1142, %v1141
          %v1209 = vpack.c.b16 %v1143, %v1143
          %v1210 = vpack.c.b16 %v1145, %v1144
          %v1211 = vpack.c.b16 %v1146, %v1146
          %v1212 = vpack.c.b16 %v1148, %v1147
          %v1213 = vpack.c.b16 %v1149, %v1149
          %v1214 = vpack.c.b16 %v1151, %v1150
          %v1215 = vpack.c.b16 %v1152, %v1152
          %v1216 = vpack.c.b16 %v1154, %v1153
          %v1217 = vpack.c.b16 %v1155, %v1155
          %v1218 = vpack.c.b16 %v1157, %v1156
          %v1219 = vpack.c.b16 %v1158, %v1158
          %v1220 = vpack.c.b16 %v1160, %v1159
          %v1221 = vpack.c.b16 %v1161, %v1161
          %v1222 = vpack.c.b16 %v1163, %v1162
          %v1223 = vpack.c.b16 %v1164, %v1164
          %v1224 = vpack.c.b16 %v1166, %v1165
          %v1225 = vpack.c.b16 %v1167, %v1167
          %v1226 = vpack.c.b16 %v1169, %v1168
          %v1227 = vpack.c.b16 %v1170, %v1170
          %v1228 = vpack.c.b16 %v1172, %v1171
          %v1229 = vpack.c.b16 %v1173, %v1173
          %vm1230 = vcmask 1045504
          %v1231 = vrot.slane %v1174, 2
          %v1232 = vrot.slane %v1175, 2
          %v1233 = vsel %vm1230, %v1231, %v1232
          %v1234 = vrot.slane %v1176, 2
          %v1235 = vrot.slane %v1177, 2
          %v1236 = vsel %vm1230, %v1234, %v1235
          %v1237 = vrot.slane %v1178, 2
          %v1238 = vrot.slane %v1179, 2
          %v1239 = vsel %vm1230, %v1237, %v1238
          %v1240 = vrot.slane %v1180, 2
          %v1241 = vrot.slane %v1181, 2
          %v1242 = vsel %vm1230, %v1240, %v1241
          %v1243 = vrot.slane %v1182, 2
          %v1244 = vrot.slane %v1183, 2
          %v1245 = vsel %vm1230, %v1243, %v1244
          %v1246 = vrot.slane %v1184, 2
          %v1247 = vrot.slane %v1185, 2
          %v1248 = vsel %vm1230, %v1246, %v1247
          %v1249 = vrot.slane %v1186, 2
          %v1250 = vrot.slane %v1187, 2
          %v1251 = vsel %vm1230, %v1249, %v1250
          %v1252 = vrot.slane %v1188, 2
          %v1253 = vrot.slane %v1189, 2
          %v1254 = vsel %vm1230, %v1252, %v1253
          %v1255 = vrot.slane %v1190, 2
          %v1256 = vrot.slane %v1191, 2
          %v1257 = vsel %vm1230, %v1255, %v1256
          %v1258 = vrot.slane %v1192, 2
          %v1259 = vrot.slane %v1193, 2
          %v1260 = vsel %vm1230, %v1258, %v1259
          %v1261 = vrot.slane %v1194, 2
          %v1262 = vrot.slane %v1195, 2
          %v1263 = vsel %vm1230, %v1261, %v1262
          %v1264 = vrot.slane %v1196, 2
          %v1265 = vrot.slane %v1197, 2
          %v1266 = vsel %vm1230, %v1264, %v1265
          %v1267 = vrot.slane %v1198, 2
          %v1268 = vrot.slane %v1199, 2
          %v1269 = vsel %vm1230, %v1267, %v1268
          %v1270 = vrot.slane %v1200, 2
          %v1271 = vrot.slane %v1201, 2
          %v1272 = vsel %vm1230, %v1270, %v1271
          %v1273 = vrot.slane %v1202, 2
          %v1274 = vrot.slane %v1203, 2
          %v1275 = vsel %vm1230, %v1273, %v1274
          %v1276 = vrot.slane %v1204, 2
          %v1277 = vrot.slane %v1205, 2
          %v1278 = vsel %vm1230, %v1276, %v1277
          %v1279 = vrot.slane %v1206, 2
          %v1280 = vrot.slane %v1207, 2
          %v1281 = vsel %vm1230, %v1279, %v1280
          %v1282 = vrot.slane %v1208, 2
          %v1283 = vrot.slane %v1209, 2
          %v1284 = vsel %vm1230, %v1282, %v1283
          %v1285 = vrot.slane %v1210, 2
          %v1286 = vrot.slane %v1211, 2
          %v1287 = vsel %vm1230, %v1285, %v1286
          %v1288 = vrot.slane %v1212, 2
          %v1289 = vrot.slane %v1213, 2
          %v1290 = vsel %vm1230, %v1288, %v1289
          %v1291 = vrot.slane %v1214, 2
          %v1292 = vrot.slane %v1215, 2
          %v1293 = vsel %vm1230, %v1291, %v1292
          %v1294 = vrot.slane %v1216, 2
          %v1295 = vrot.slane %v1217, 2
          %v1296 = vsel %vm1230, %v1294, %v1295
          %v1297 = vrot.slane %v1218, 2
          %v1298 = vrot.slane %v1219, 2
          %v1299 = vsel %vm1230, %v1297, %v1298
          %v1300 = vrot.slane %v1220, 2
          %v1301 = vrot.slane %v1221, 2
          %v1302 = vsel %vm1230, %v1300, %v1301
          %v1303 = vrot.slane %v1222, 2
          %v1304 = vrot.slane %v1223, 2
          %v1305 = vsel %vm1230, %v1303, %v1304
          %v1306 = vrot.slane %v1224, 2
          %v1307 = vrot.slane %v1225, 2
          %v1308 = vsel %vm1230, %v1306, %v1307
          %v1309 = vrot.slane %v1226, 2
          %v1310 = vrot.slane %v1227, 2
          %v1311 = vsel %vm1230, %v1309, %v1310
          %v1312 = vrot.slane %v1228, 2
          %v1313 = vrot.slane %v1229, 2
          %v1314 = vsel %vm1230, %v1312, %v1313
          %1343 = vst [vmem:[#allocation6] sm:$0xff] %v1233
          %1344 = vst [vmem:[#allocation6 + $0x8] sm:$0xff] %v1236
          %1345 = vst [vmem:[#allocation6 + $0x10] sm:$0xff] %v1239
          %1346 = vst [vmem:[#allocation6 + $0x18] sm:$0xff] %v1242
          %1347 = vst [vmem:[#allocation6 + $0x20] sm:$0xff] %v1245
          %1348 = vst [vmem:[#allocation6 + $0x28] sm:$0xff] %v1248
          %1349 = vst [vmem:[#allocation6 + $0x30] sm:$0xff] %v1251
          %1350 = vst [vmem:[#allocation6 + $0x38] sm:$0xff] %v1254
          %1351 = vst [vmem:[#allocation6 + $0x40] sm:$0xff] %v1257
          %1352 = vst [vmem:[#allocation6 + $0x48] sm:$0xff] %v1260
          %1353 = vst [vmem:[#allocation6 + $0x50] sm:$0xff] %v1263
          %1354 = vst [vmem:[#allocation6 + $0x58] sm:$0xff] %v1266
          %1355 = vst [vmem:[#allocation6 + $0x60] sm:$0xff] %v1269
          %1356 = vst [vmem:[#allocation6 + $0x68] sm:$0xff] %v1272
          %1357 = vst [vmem:[#allocation6 + $0x70] sm:$0xff] %v1275
          %1358 = vst [vmem:[#allocation6 + $0x78] sm:$0xff] %v1278
          %1359 = vst [vmem:[#allocation6 + $0x80] sm:$0xff] %v1281
          %1360 = vst [vmem:[#allocation6 + $0x88] sm:$0xff] %v1284
          %1361 = vst [vmem:[#allocation6 + $0x90] sm:$0xff] %v1287
          %1362 = vst [vmem:[#allocation6 + $0x98] sm:$0xff] %v1290
          %1363 = vst [vmem:[#allocation6 + $0xa0] sm:$0xff] %v1293
          %1364 = vst [vmem:[#allocation6 + $0xa8] sm:$0xff] %v1296
          %1365 = vst [vmem:[#allocation6 + $0xb0] sm:$0xff] %v1299
          %1366 = vst [vmem:[#allocation6 + $0xb8] sm:$0xff] %v1302
          %1367 = vst [vmem:[#allocation6 + $0xc0] sm:$0xff] %v1305
          %1368 = vst [vmem:[#allocation6 + $0xc8] sm:$0xff] %v1308
          %1369 = vst [vmem:[#allocation6 + $0xd0] sm:$0xff] %v1311
          %1370 = vst [vmem:[#allocation6 + $0xd8] sm:$0xff] %v1314
          %v1371 = vld [vmem:[#allocation2 + $0x8] sm:$0xe]
          %v1372 = vld [vmem:[#allocation2 + $0xc] sm:$0xf]
          %v1373 = vld [vmem:[#allocation2 + $0x10] sm:$0x1]
          %v1374 = vld [vmem:[#allocation2 + $0x1c] sm:$0xe]
          %v1375 = vld [vmem:[#allocation2 + $0x20] sm:$0xf]
          %v1376 = vld [vmem:[#allocation2 + $0x24] sm:$0x1]
          %v1377 = vld [vmem:[#allocation2 + $0x30] sm:$0xe]
          %v1378 = vld [vmem:[#allocation2 + $0x34] sm:$0xf]
          %v1379 = vld [vmem:[#allocation2 + $0x38] sm:$0x1]
          %v1380 = vld [vmem:[#allocation2 + $0x44] sm:$0xe]
          %v1381 = vld [vmem:[#allocation2 + $0x48] sm:$0xf]
          %v1382 = vld [vmem:[#allocation2 + $0x4c] sm:$0x1]
          %v1383 = vld [vmem:[#allocation2 + $0x58] sm:$0xe]
          %v1384 = vld [vmem:[#allocation2 + $0x5c] sm:$0xf]
          %v1385 = vld [vmem:[#allocation2 + $0x60] sm:$0x1]
          %v1386 = vld [vmem:[#allocation2 + $0x6c] sm:$0xe]
          %v1387 = vld [vmem:[#allocation2 + $0x70] sm:$0xf]
          %v1388 = vld [vmem:[#allocation2 + $0x74] sm:$0x1]
          %v1389 = vld [vmem:[#allocation2 + $0x80] sm:$0xe]
          %v1390 = vld [vmem:[#allocation2 + $0x84] sm:$0xf]
          %v1391 = vld [vmem:[#allocation2 + $0x88] sm:$0x1]
          %v1392 = vld [vmem:[#allocation2 + $0x94] sm:$0xe]
          %v1393 = vld [vmem:[#allocation2 + $0x98] sm:$0xf]
          %v1394 = vld [vmem:[#allocation2 + $0x9c] sm:$0x1]
          %v1395 = vld [vmem:[#allocation2 + $0xa8] sm:$0xe]
          %v1396 = vld [vmem:[#allocation2 + $0xac] sm:$0xf]
          %v1397 = vld [vmem:[#allocation2 + $0xb0] sm:$0x1]
          %v1398 = vld [vmem:[#allocation2 + $0xbc] sm:$0xe]
          %v1399 = vld [vmem:[#allocation2 + $0xc0] sm:$0xf]
          %v1400 = vld [vmem:[#allocation2 + $0xc4] sm:$0x1]
          %v1401 = vld [vmem:[#allocation2 + $0xd0] sm:$0xe]
          %v1402 = vld [vmem:[#allocation2 + $0xd4] sm:$0xf]
          %v1403 = vld [vmem:[#allocation2 + $0xd8] sm:$0x1]
          %v1404 = vld [vmem:[#allocation2 + $0xe4] sm:$0xe]
          %v1405 = vld [vmem:[#allocation2 + $0xe8] sm:$0xf]
          %v1406 = vld [vmem:[#allocation2 + $0xec] sm:$0x1]
          %v1407 = vld [vmem:[#allocation2 + $0xf8] sm:$0xe]
          %v1408 = vld [vmem:[#allocation2 + $0xfc] sm:$0xf]
          %v1409 = vld [vmem:[#allocation2 + $0x100] sm:$0x1]
          %v1410 = vld [vmem:[#allocation2 + $0x10c] sm:$0xe]
          %v1411 = vld [vmem:[#allocation2 + $0x110] sm:$0xf]
          %v1412 = vld [vmem:[#allocation2 + $0x114] sm:$0x1]
          %v1413 = vld [vmem:[#allocation2 + $0x120] sm:$0xe]
          %v1414 = vld [vmem:[#allocation2 + $0x124] sm:$0xf]
          %v1415 = vld [vmem:[#allocation2 + $0x128] sm:$0x1]
          %v1416 = vld [vmem:[#allocation2 + $0x134] sm:$0xe]
          %v1417 = vld [vmem:[#allocation2 + $0x138] sm:$0xf]
          %v1418 = vld [vmem:[#allocation2 + $0x13c] sm:$0x1]
          %v1419 = vld [vmem:[#allocation2 + $0x148] sm:$0xe]
          %v1420 = vld [vmem:[#allocation2 + $0x14c] sm:$0xf]
          %v1421 = vld [vmem:[#allocation2 + $0x150] sm:$0x1]
          %v1422 = vld [vmem:[#allocation2 + $0x15c] sm:$0xe]
          %v1423 = vld [vmem:[#allocation2 + $0x160] sm:$0xf]
          %v1424 = vld [vmem:[#allocation2 + $0x164] sm:$0x1]
          %v1425 = vld [vmem:[#allocation2 + $0x170] sm:$0xe]
          %v1426 = vld [vmem:[#allocation2 + $0x174] sm:$0xf]
          %v1427 = vld [vmem:[#allocation2 + $0x178] sm:$0x1]
          %v1428 = vld [vmem:[#allocation2 + $0x184] sm:$0xe]
          %v1429 = vld [vmem:[#allocation2 + $0x188] sm:$0xf]
          %v1430 = vld [vmem:[#allocation2 + $0x18c] sm:$0x1]
          %v1431 = vld [vmem:[#allocation2 + $0x198] sm:$0xe]
          %v1432 = vld [vmem:[#allocation2 + $0x19c] sm:$0xf]
          %v1433 = vld [vmem:[#allocation2 + $0x1a0] sm:$0x1]
          %v1434 = vld [vmem:[#allocation2 + $0x1ac] sm:$0xe]
          %v1435 = vld [vmem:[#allocation2 + $0x1b0] sm:$0xf]
          %v1436 = vld [vmem:[#allocation2 + $0x1b4] sm:$0x1]
          %v1437 = vld [vmem:[#allocation2 + $0x1c0] sm:$0xe]
          %v1438 = vld [vmem:[#allocation2 + $0x1c4] sm:$0xf]
          %v1439 = vld [vmem:[#allocation2 + $0x1c8] sm:$0x1]
          %v1440 = vld [vmem:[#allocation2 + $0x1d4] sm:$0xe]
          %v1441 = vld [vmem:[#allocation2 + $0x1d8] sm:$0xf]
          %v1442 = vld [vmem:[#allocation2 + $0x1dc] sm:$0x1]
          %v1443 = vld [vmem:[#allocation2 + $0x1e8] sm:$0xe]
          %v1444 = vld [vmem:[#allocation2 + $0x1ec] sm:$0xf]
          %v1445 = vld [vmem:[#allocation2 + $0x1f0] sm:$0x1]
          %v1446 = vld [vmem:[#allocation2 + $0x1fc] sm:$0xe]
          %v1447 = vld [vmem:[#allocation2 + $0x200] sm:$0xf]
          %v1448 = vld [vmem:[#allocation2 + $0x204] sm:$0x1]
          %v1449 = vld [vmem:[#allocation2 + $0x210] sm:$0xe]
          %v1450 = vld [vmem:[#allocation2 + $0x214] sm:$0xf]
          %v1451 = vld [vmem:[#allocation2 + $0x218] sm:$0x1]
          %v1452 = vld [vmem:[#allocation2 + $0x224] sm:$0xe]
          %v1453 = vld [vmem:[#allocation2 + $0x228] sm:$0xf]
          %v1454 = vld [vmem:[#allocation2 + $0x22c] sm:$0x1]
          %v1539 = vunpack.c.l.b16 %v1371
          %v1540 = vunpack.c.l.b16 %v1372
          %v1541 = vunpack.c.l.b16 %v1373
          %v1542 = vunpack.c.l.b16 %v1374
          %v1543 = vunpack.c.l.b16 %v1375
          %v1544 = vunpack.c.l.b16 %v1376
          %v1545 = vunpack.c.l.b16 %v1377
          %v1546 = vunpack.c.l.b16 %v1378
          %v1547 = vunpack.c.l.b16 %v1379
          %v1548 = vunpack.c.l.b16 %v1380
          %v1549 = vunpack.c.l.b16 %v1381
          %v1550 = vunpack.c.l.b16 %v1382
          %v1551 = vunpack.c.l.b16 %v1383
          %v1552 = vunpack.c.l.b16 %v1384
          %v1553 = vunpack.c.l.b16 %v1385
          %v1554 = vunpack.c.l.b16 %v1386
          %v1555 = vunpack.c.l.b16 %v1387
          %v1556 = vunpack.c.l.b16 %v1388
          %v1557 = vunpack.c.l.b16 %v1389
          %v1558 = vunpack.c.l.b16 %v1390
          %v1559 = vunpack.c.l.b16 %v1391
          %v1560 = vunpack.c.l.b16 %v1392
          %v1561 = vunpack.c.l.b16 %v1393
          %v1562 = vunpack.c.l.b16 %v1394
          %v1563 = vunpack.c.l.b16 %v1395
          %v1564 = vunpack.c.l.b16 %v1396
          %v1565 = vunpack.c.l.b16 %v1397
          %v1566 = vunpack.c.l.b16 %v1398
          %v1567 = vunpack.c.l.b16 %v1399
          %v1568 = vunpack.c.l.b16 %v1400
          %v1569 = vunpack.c.l.b16 %v1401
          %v1570 = vunpack.c.l.b16 %v1402
          %v1571 = vunpack.c.l.b16 %v1403
          %v1572 = vunpack.c.l.b16 %v1404
          %v1573 = vunpack.c.l.b16 %v1405
          %v1574 = vunpack.c.l.b16 %v1406
          %v1575 = vunpack.c.l.b16 %v1407
          %v1576 = vunpack.c.l.b16 %v1408
          %v1577 = vunpack.c.l.b16 %v1409
          %v1578 = vunpack.c.l.b16 %v1410
          %v1579 = vunpack.c.l.b16 %v1411
          %v1580 = vunpack.c.l.b16 %v1412
          %v1581 = vunpack.c.l.b16 %v1413
          %v1582 = vunpack.c.l.b16 %v1414
          %v1583 = vunpack.c.l.b16 %v1415
          %v1584 = vunpack.c.l.b16 %v1416
          %v1585 = vunpack.c.l.b16 %v1417
          %v1586 = vunpack.c.l.b16 %v1418
          %v1587 = vunpack.c.l.b16 %v1419
          %v1588 = vunpack.c.l.b16 %v1420
          %v1589 = vunpack.c.l.b16 %v1421
          %v1590 = vunpack.c.l.b16 %v1422
          %v1591 = vunpack.c.l.b16 %v1423
          %v1592 = vunpack.c.l.b16 %v1424
          %v1593 = vunpack.c.l.b16 %v1425
          %v1594 = vunpack.c.l.b16 %v1426
          %v1595 = vunpack.c.l.b16 %v1427
          %v1596 = vunpack.c.l.b16 %v1428
          %v1597 = vunpack.c.l.b16 %v1429
          %v1598 = vunpack.c.l.b16 %v1430
          %v1599 = vunpack.c.l.b16 %v1431
          %v1600 = vunpack.c.l.b16 %v1432
          %v1601 = vunpack.c.l.b16 %v1433
          %v1602 = vunpack.c.l.b16 %v1434
          %v1603 = vunpack.c.l.b16 %v1435
          %v1604 = vunpack.c.l.b16 %v1436
          %v1605 = vunpack.c.l.b16 %v1437
          %v1606 = vunpack.c.l.b16 %v1438
          %v1607 = vunpack.c.l.b16 %v1439
          %v1608 = vunpack.c.l.b16 %v1440
          %v1609 = vunpack.c.l.b16 %v1441
          %v1610 = vunpack.c.l.b16 %v1442
          %v1611 = vunpack.c.l.b16 %v1443
          %v1612 = vunpack.c.l.b16 %v1444
          %v1613 = vunpack.c.l.b16 %v1445
          %v1614 = vunpack.c.l.b16 %v1446
          %v1615 = vunpack.c.l.b16 %v1447
          %v1616 = vunpack.c.l.b16 %v1448
          %v1617 = vunpack.c.l.b16 %v1449
          %v1618 = vunpack.c.l.b16 %v1450
          %v1619 = vunpack.c.l.b16 %v1451
          %v1620 = vunpack.c.l.b16 %v1452
          %v1621 = vunpack.c.l.b16 %v1453
          %v1622 = vunpack.c.l.b16 %v1454
          %v1623 = vpack.c.b16 %v1540, %v1539
          %v1624 = vpack.c.b16 %v1541, %v1541
          %v1625 = vpack.c.b16 %v1543, %v1542
          %v1626 = vpack.c.b16 %v1544, %v1544
          %v1627 = vpack.c.b16 %v1546, %v1545
          %v1628 = vpack.c.b16 %v1547, %v1547
          %v1629 = vpack.c.b16 %v1549, %v1548
          %v1630 = vpack.c.b16 %v1550, %v1550
          %v1631 = vpack.c.b16 %v1552, %v1551
          %v1632 = vpack.c.b16 %v1553, %v1553
          %v1633 = vpack.c.b16 %v1555, %v1554
          %v1634 = vpack.c.b16 %v1556, %v1556
          %v1635 = vpack.c.b16 %v1558, %v1557
          %v1636 = vpack.c.b16 %v1559, %v1559
          %v1637 = vpack.c.b16 %v1561, %v1560
          %v1638 = vpack.c.b16 %v1562, %v1562
          %v1639 = vpack.c.b16 %v1564, %v1563
          %v1640 = vpack.c.b16 %v1565, %v1565
          %v1641 = vpack.c.b16 %v1567, %v1566
          %v1642 = vpack.c.b16 %v1568, %v1568
          %v1643 = vpack.c.b16 %v1570, %v1569
          %v1644 = vpack.c.b16 %v1571, %v1571
          %v1645 = vpack.c.b16 %v1573, %v1572
          %v1646 = vpack.c.b16 %v1574, %v1574
          %v1647 = vpack.c.b16 %v1576, %v1575
          %v1648 = vpack.c.b16 %v1577, %v1577
          %v1649 = vpack.c.b16 %v1579, %v1578
          %v1650 = vpack.c.b16 %v1580, %v1580
          %v1651 = vpack.c.b16 %v1582, %v1581
          %v1652 = vpack.c.b16 %v1583, %v1583
          %v1653 = vpack.c.b16 %v1585, %v1584
          %v1654 = vpack.c.b16 %v1586, %v1586
          %v1655 = vpack.c.b16 %v1588, %v1587
          %v1656 = vpack.c.b16 %v1589, %v1589
          %v1657 = vpack.c.b16 %v1591, %v1590
          %v1658 = vpack.c.b16 %v1592, %v1592
          %v1659 = vpack.c.b16 %v1594, %v1593
          %v1660 = vpack.c.b16 %v1595, %v1595
          %v1661 = vpack.c.b16 %v1597, %v1596
          %v1662 = vpack.c.b16 %v1598, %v1598
          %v1663 = vpack.c.b16 %v1600, %v1599
          %v1664 = vpack.c.b16 %v1601, %v1601
          %v1665 = vpack.c.b16 %v1603, %v1602
          %v1666 = vpack.c.b16 %v1604, %v1604
          %v1667 = vpack.c.b16 %v1606, %v1605
          %v1668 = vpack.c.b16 %v1607, %v1607
          %v1669 = vpack.c.b16 %v1609, %v1608
          %v1670 = vpack.c.b16 %v1610, %v1610
          %v1671 = vpack.c.b16 %v1612, %v1611
          %v1672 = vpack.c.b16 %v1613, %v1613
          %v1673 = vpack.c.b16 %v1615, %v1614
          %v1674 = vpack.c.b16 %v1616, %v1616
          %v1675 = vpack.c.b16 %v1618, %v1617
          %v1676 = vpack.c.b16 %v1619, %v1619
          %v1677 = vpack.c.b16 %v1621, %v1620
          %v1678 = vpack.c.b16 %v1622, %v1622
          %vm1679 = vcmask 1046528
          %v1680 = vrot.slane %v1623, 1
          %v1681 = vrot.slane %v1624, 1
          %v1682 = vsel %vm1679, %v1680, %v1681
          %v1683 = vrot.slane %v1625, 1
          %v1684 = vrot.slane %v1626, 1
          %v1685 = vsel %vm1679, %v1683, %v1684
          %v1686 = vrot.slane %v1627, 1
          %v1687 = vrot.slane %v1628, 1
          %v1688 = vsel %vm1679, %v1686, %v1687
          %v1689 = vrot.slane %v1629, 1
          %v1690 = vrot.slane %v1630, 1
          %v1691 = vsel %vm1679, %v1689, %v1690
          %v1692 = vrot.slane %v1631, 1
          %v1693 = vrot.slane %v1632, 1
          %v1694 = vsel %vm1679, %v1692, %v1693
          %v1695 = vrot.slane %v1633, 1
          %v1696 = vrot.slane %v1634, 1
          %v1697 = vsel %vm1679, %v1695, %v1696
          %v1698 = vrot.slane %v1635, 1
          %v1699 = vrot.slane %v1636, 1
          %v1700 = vsel %vm1679, %v1698, %v1699
          %v1701 = vrot.slane %v1637, 1
          %v1702 = vrot.slane %v1638, 1
          %v1703 = vsel %vm1679, %v1701, %v1702
          %v1704 = vrot.slane %v1639, 1
          %v1705 = vrot.slane %v1640, 1
          %v1706 = vsel %vm1679, %v1704, %v1705
          %v1707 = vrot.slane %v1641, 1
          %v1708 = vrot.slane %v1642, 1
          %v1709 = vsel %vm1679, %v1707, %v1708
          %v1710 = vrot.slane %v1643, 1
          %v1711 = vrot.slane %v1644, 1
          %v1712 = vsel %vm1679, %v1710, %v1711
          %v1713 = vrot.slane %v1645, 1
          %v1714 = vrot.slane %v1646, 1
          %v1715 = vsel %vm1679, %v1713, %v1714
          %v1716 = vrot.slane %v1647, 1
          %v1717 = vrot.slane %v1648, 1
          %v1718 = vsel %vm1679, %v1716, %v1717
          %v1719 = vrot.slane %v1649, 1
          %v1720 = vrot.slane %v1650, 1
          %v1721 = vsel %vm1679, %v1719, %v1720
          %v1722 = vrot.slane %v1651, 1
          %v1723 = vrot.slane %v1652, 1
          %v1724 = vsel %vm1679, %v1722, %v1723
          %v1725 = vrot.slane %v1653, 1
          %v1726 = vrot.slane %v1654, 1
          %v1727 = vsel %vm1679, %v1725, %v1726
          %v1728 = vrot.slane %v1655, 1
          %v1729 = vrot.slane %v1656, 1
          %v1730 = vsel %vm1679, %v1728, %v1729
          %v1731 = vrot.slane %v1657, 1
          %v1732 = vrot.slane %v1658, 1
          %v1733 = vsel %vm1679, %v1731, %v1732
          %v1734 = vrot.slane %v1659, 1
          %v1735 = vrot.slane %v1660, 1
          %v1736 = vsel %vm1679, %v1734, %v1735
          %v1737 = vrot.slane %v1661, 1
          %v1738 = vrot.slane %v1662, 1
          %v1739 = vsel %vm1679, %v1737, %v1738
          %v1740 = vrot.slane %v1663, 1
          %v1741 = vrot.slane %v1664, 1
          %v1742 = vsel %vm1679, %v1740, %v1741
          %v1743 = vrot.slane %v1665, 1
          %v1744 = vrot.slane %v1666, 1
          %v1745 = vsel %vm1679, %v1743, %v1744
          %v1746 = vrot.slane %v1667, 1
          %v1747 = vrot.slane %v1668, 1
          %v1748 = vsel %vm1679, %v1746, %v1747
          %v1749 = vrot.slane %v1669, 1
          %v1750 = vrot.slane %v1670, 1
          %v1751 = vsel %vm1679, %v1749, %v1750
          %v1752 = vrot.slane %v1671, 1
          %v1753 = vrot.slane %v1672, 1
          %v1754 = vsel %vm1679, %v1752, %v1753
          %v1755 = vrot.slane %v1673, 1
          %v1756 = vrot.slane %v1674, 1
          %v1757 = vsel %vm1679, %v1755, %v1756
          %v1758 = vrot.slane %v1675, 1
          %v1759 = vrot.slane %v1676, 1
          %v1760 = vsel %vm1679, %v1758, %v1759
          %v1761 = vrot.slane %v1677, 1
          %v1762 = vrot.slane %v1678, 1
          %v1763 = vsel %vm1679, %v1761, %v1762
          %1792 = vst [vmem:[#allocation7] sm:$0xff] %v1682
          %1793 = vst [vmem:[#allocation7 + $0x8] sm:$0xff] %v1685
          %1794 = vst [vmem:[#allocation7 + $0x10] sm:$0xff] %v1688
          %1795 = vst [vmem:[#allocation7 + $0x18] sm:$0xff] %v1691
          %1796 = vst [vmem:[#allocation7 + $0x20] sm:$0xff] %v1694
          %1797 = vst [vmem:[#allocation7 + $0x28] sm:$0xff] %v1697
          %1798 = vst [vmem:[#allocation7 + $0x30] sm:$0xff] %v1700
          %1799 = vst [vmem:[#allocation7 + $0x38] sm:$0xff] %v1703
          %1800 = vst [vmem:[#allocation7 + $0x40] sm:$0xff] %v1706
          %1801 = vst [vmem:[#allocation7 + $0x48] sm:$0xff] %v1709
          %1802 = vst [vmem:[#allocation7 + $0x50] sm:$0xff] %v1712
          %1803 = vst [vmem:[#allocation7 + $0x58] sm:$0xff] %v1715
          %1804 = vst [vmem:[#allocation7 + $0x60] sm:$0xff] %v1718
          %1805 = vst [vmem:[#allocation7 + $0x68] sm:$0xff] %v1721
          %1806 = vst [vmem:[#allocation7 + $0x70] sm:$0xff] %v1724
          %1807 = vst [vmem:[#allocation7 + $0x78] sm:$0xff] %v1727
          %1808 = vst [vmem:[#allocation7 + $0x80] sm:$0xff] %v1730
          %1809 = vst [vmem:[#allocation7 + $0x88] sm:$0xff] %v1733
          %1810 = vst [vmem:[#allocation7 + $0x90] sm:$0xff] %v1736
          %1811 = vst [vmem:[#allocation7 + $0x98] sm:$0xff] %v1739
          %1812 = vst [vmem:[#allocation7 + $0xa0] sm:$0xff] %v1742
          %1813 = vst [vmem:[#allocation7 + $0xa8] sm:$0xff] %v1745
          %1814 = vst [vmem:[#allocation7 + $0xb0] sm:$0xff] %v1748
          %1815 = vst [vmem:[#allocation7 + $0xb8] sm:$0xff] %v1751
          %1816 = vst [vmem:[#allocation7 + $0xc0] sm:$0xff] %v1754
          %1817 = vst [vmem:[#allocation7 + $0xc8] sm:$0xff] %v1757
          %1818 = vst [vmem:[#allocation7 + $0xd0] sm:$0xff] %v1760
          %1819 = vst [vmem:[#allocation7 + $0xd8] sm:$0xff] %v1763
          %v1820 = vld [vmem:[#allocation2 + $0xc] sm:$0xf]
          %v1821 = vld [vmem:[#allocation2 + $0x10] sm:$0xf]
          %v1822 = vld [vmem:[#allocation2 + $0x20] sm:$0xf]
          %v1823 = vld [vmem:[#allocation2 + $0x24] sm:$0xf]
          %v1824 = vld [vmem:[#allocation2 + $0x34] sm:$0xf]
          %v1825 = vld [vmem:[#allocation2 + $0x38] sm:$0xf]
          %v1826 = vld [vmem:[#allocation2 + $0x48] sm:$0xf]
          %v1827 = vld [vmem:[#allocation2 + $0x4c] sm:$0xf]
          %v1828 = vld [vmem:[#allocation2 + $0x5c] sm:$0xf]
          %v1829 = vld [vmem:[#allocation2 + $0x60] sm:$0xf]
          %v1830 = vld [vmem:[#allocation2 + $0x70] sm:$0xf]
          %v1831 = vld [vmem:[#allocation2 + $0x74] sm:$0xf]
          %v1832 = vld [vmem:[#allocation2 + $0x84] sm:$0xf]
          %v1833 = vld [vmem:[#allocation2 + $0x88] sm:$0xf]
          %v1834 = vld [vmem:[#allocation2 + $0x98] sm:$0xf]
          %v1835 = vld [vmem:[#allocation2 + $0x9c] sm:$0xf]
          %v1836 = vld [vmem:[#allocation2 + $0xac] sm:$0xf]
          %v1837 = vld [vmem:[#allocation2 + $0xb0] sm:$0xf]
          %v1838 = vld [vmem:[#allocation2 + $0xc0] sm:$0xf]
          %v1839 = vld [vmem:[#allocation2 + $0xc4] sm:$0xf]
          %v1840 = vld [vmem:[#allocation2 + $0xd4] sm:$0xf]
          %v1841 = vld [vmem:[#allocation2 + $0xd8] sm:$0xf]
          %v1842 = vld [vmem:[#allocation2 + $0xe8] sm:$0xf]
          %v1843 = vld [vmem:[#allocation2 + $0xec] sm:$0xf]
          %v1844 = vld [vmem:[#allocation2 + $0xfc] sm:$0xf]
          %v1845 = vld [vmem:[#allocation2 + $0x100] sm:$0xf]
          %v1846 = vld [vmem:[#allocation2 + $0x110] sm:$0xf]
          %v1847 = vld [vmem:[#allocation2 + $0x114] sm:$0xf]
          %v1848 = vld [vmem:[#allocation2 + $0x124] sm:$0xf]
          %v1849 = vld [vmem:[#allocation2 + $0x128] sm:$0xf]
          %v1850 = vld [vmem:[#allocation2 + $0x138] sm:$0xf]
          %v1851 = vld [vmem:[#allocation2 + $0x13c] sm:$0xf]
          %v1852 = vld [vmem:[#allocation2 + $0x14c] sm:$0xf]
          %v1853 = vld [vmem:[#allocation2 + $0x150] sm:$0xf]
          %v1854 = vld [vmem:[#allocation2 + $0x160] sm:$0xf]
          %v1855 = vld [vmem:[#allocation2 + $0x164] sm:$0xf]
          %v1856 = vld [vmem:[#allocation2 + $0x174] sm:$0xf]
          %v1857 = vld [vmem:[#allocation2 + $0x178] sm:$0xf]
          %v1858 = vld [vmem:[#allocation2 + $0x188] sm:$0xf]
          %v1859 = vld [vmem:[#allocation2 + $0x18c] sm:$0xf]
          %v1860 = vld [vmem:[#allocation2 + $0x19c] sm:$0xf]
          %v1861 = vld [vmem:[#allocation2 + $0x1a0] sm:$0xf]
          %v1862 = vld [vmem:[#allocation2 + $0x1b0] sm:$0xf]
          %v1863 = vld [vmem:[#allocation2 + $0x1b4] sm:$0xf]
          %v1864 = vld [vmem:[#allocation2 + $0x1c4] sm:$0xf]
          %v1865 = vld [vmem:[#allocation2 + $0x1c8] sm:$0xf]
          %v1866 = vld [vmem:[#allocation2 + $0x1d8] sm:$0xf]
          %v1867 = vld [vmem:[#allocation2 + $0x1dc] sm:$0xf]
          %v1868 = vld [vmem:[#allocation2 + $0x1ec] sm:$0xf]
          %v1869 = vld [vmem:[#allocation2 + $0x1f0] sm:$0xf]
          %v1870 = vld [vmem:[#allocation2 + $0x200] sm:$0xf]
          %v1871 = vld [vmem:[#allocation2 + $0x204] sm:$0xf]
          %v1872 = vld [vmem:[#allocation2 + $0x214] sm:$0xf]
          %v1873 = vld [vmem:[#allocation2 + $0x218] sm:$0xf]
          %v1874 = vld [vmem:[#allocation2 + $0x228] sm:$0xf]
          %v1875 = vld [vmem:[#allocation2 + $0x22c] sm:$0xf]
          %v1932 = vunpack.c.l.b16 %v1820
          %v1933 = vunpack.c.l.b16 %v1821
          %v1934 = vunpack.c.l.b16 %v1822
          %v1935 = vunpack.c.l.b16 %v1823
          %v1936 = vunpack.c.l.b16 %v1824
          %v1937 = vunpack.c.l.b16 %v1825
          %v1938 = vunpack.c.l.b16 %v1826
          %v1939 = vunpack.c.l.b16 %v1827
          %v1940 = vunpack.c.l.b16 %v1828
          %v1941 = vunpack.c.l.b16 %v1829
          %v1942 = vunpack.c.l.b16 %v1830
          %v1943 = vunpack.c.l.b16 %v1831
          %v1944 = vunpack.c.l.b16 %v1832
          %v1945 = vunpack.c.l.b16 %v1833
          %v1946 = vunpack.c.l.b16 %v1834
          %v1947 = vunpack.c.l.b16 %v1835
          %v1948 = vunpack.c.l.b16 %v1836
          %v1949 = vunpack.c.l.b16 %v1837
          %v1950 = vunpack.c.l.b16 %v1838
          %v1951 = vunpack.c.l.b16 %v1839
          %v1952 = vunpack.c.l.b16 %v1840
          %v1953 = vunpack.c.l.b16 %v1841
          %v1954 = vunpack.c.l.b16 %v1842
          %v1955 = vunpack.c.l.b16 %v1843
          %v1956 = vunpack.c.l.b16 %v1844
          %v1957 = vunpack.c.l.b16 %v1845
          %v1958 = vunpack.c.l.b16 %v1846
          %v1959 = vunpack.c.l.b16 %v1847
          %v1960 = vunpack.c.l.b16 %v1848
          %v1961 = vunpack.c.l.b16 %v1849
          %v1962 = vunpack.c.l.b16 %v1850
          %v1963 = vunpack.c.l.b16 %v1851
          %v1964 = vunpack.c.l.b16 %v1852
          %v1965 = vunpack.c.l.b16 %v1853
          %v1966 = vunpack.c.l.b16 %v1854
          %v1967 = vunpack.c.l.b16 %v1855
          %v1968 = vunpack.c.l.b16 %v1856
          %v1969 = vunpack.c.l.b16 %v1857
          %v1970 = vunpack.c.l.b16 %v1858
          %v1971 = vunpack.c.l.b16 %v1859
          %v1972 = vunpack.c.l.b16 %v1860
          %v1973 = vunpack.c.l.b16 %v1861
          %v1974 = vunpack.c.l.b16 %v1862
          %v1975 = vunpack.c.l.b16 %v1863
          %v1976 = vunpack.c.l.b16 %v1864
          %v1977 = vunpack.c.l.b16 %v1865
          %v1978 = vunpack.c.l.b16 %v1866
          %v1979 = vunpack.c.l.b16 %v1867
          %v1980 = vunpack.c.l.b16 %v1868
          %v1981 = vunpack.c.l.b16 %v1869
          %v1982 = vunpack.c.l.b16 %v1870
          %v1983 = vunpack.c.l.b16 %v1871
          %v1984 = vunpack.c.l.b16 %v1872
          %v1985 = vunpack.c.l.b16 %v1873
          %v1986 = vunpack.c.l.b16 %v1874
          %v1987 = vunpack.c.l.b16 %v1875
          %v1988 = vpack.c.b16 %v1933, %v1932
          %v1989 = vpack.c.b16 %v1935, %v1934
          %v1990 = vpack.c.b16 %v1937, %v1936
          %v1991 = vpack.c.b16 %v1939, %v1938
          %v1992 = vpack.c.b16 %v1941, %v1940
          %v1993 = vpack.c.b16 %v1943, %v1942
          %v1994 = vpack.c.b16 %v1945, %v1944
          %v1995 = vpack.c.b16 %v1947, %v1946
          %v1996 = vpack.c.b16 %v1949, %v1948
          %v1997 = vpack.c.b16 %v1951, %v1950
          %v1998 = vpack.c.b16 %v1953, %v1952
          %v1999 = vpack.c.b16 %v1955, %v1954
          %v2000 = vpack.c.b16 %v1957, %v1956
          %v2001 = vpack.c.b16 %v1959, %v1958
          %v2002 = vpack.c.b16 %v1961, %v1960
          %v2003 = vpack.c.b16 %v1963, %v1962
          %v2004 = vpack.c.b16 %v1965, %v1964
          %v2005 = vpack.c.b16 %v1967, %v1966
          %v2006 = vpack.c.b16 %v1969, %v1968
          %v2007 = vpack.c.b16 %v1971, %v1970
          %v2008 = vpack.c.b16 %v1973, %v1972
          %v2009 = vpack.c.b16 %v1975, %v1974
          %v2010 = vpack.c.b16 %v1977, %v1976
          %v2011 = vpack.c.b16 %v1979, %v1978
          %v2012 = vpack.c.b16 %v1981, %v1980
          %v2013 = vpack.c.b16 %v1983, %v1982
          %v2014 = vpack.c.b16 %v1985, %v1984
          %v2015 = vpack.c.b16 %v1987, %v1986
          %2044 = vst [vmem:[#allocation8] sm:$0xff] %v1988
          %2045 = vst [vmem:[#allocation8 + $0x8] sm:$0xff] %v1989
          %2046 = vst [vmem:[#allocation8 + $0x10] sm:$0xff] %v1990
          %2047 = vst [vmem:[#allocation8 + $0x18] sm:$0xff] %v1991
          %2048 = vst [vmem:[#allocation8 + $0x20] sm:$0xff] %v1992
          %2049 = vst [vmem:[#allocation8 + $0x28] sm:$0xff] %v1993
          %2050 = vst [vmem:[#allocation8 + $0x30] sm:$0xff] %v1994
          %2051 = vst [vmem:[#allocation8 + $0x38] sm:$0xff] %v1995
          %2052 = vst [vmem:[#allocation8 + $0x40] sm:$0xff] %v1996
          %2053 = vst [vmem:[#allocation8 + $0x48] sm:$0xff] %v1997
          %2054 = vst [vmem:[#allocation8 + $0x50] sm:$0xff] %v1998
          %2055 = vst [vmem:[#allocation8 + $0x58] sm:$0xff] %v1999
          %2056 = vst [vmem:[#allocation8 + $0x60] sm:$0xff] %v2000
          %2057 = vst [vmem:[#allocation8 + $0x68] sm:$0xff] %v2001
          %2058 = vst [vmem:[#allocation8 + $0x70] sm:$0xff] %v2002
          %2059 = vst [vmem:[#allocation8 + $0x78] sm:$0xff] %v2003
          %2060 = vst [vmem:[#allocation8 + $0x80] sm:$0xff] %v2004
          %2061 = vst [vmem:[#allocation8 + $0x88] sm:$0xff] %v2005
          %2062 = vst [vmem:[#allocation8 + $0x90] sm:$0xff] %v2006
          %2063 = vst [vmem:[#allocation8 + $0x98] sm:$0xff] %v2007
          %2064 = vst [vmem:[#allocation8 + $0xa0] sm:$0xff] %v2008
          %2065 = vst [vmem:[#allocation8 + $0xa8] sm:$0xff] %v2009
          %2066 = vst [vmem:[#allocation8 + $0xb0] sm:$0xff] %v2010
          %2067 = vst [vmem:[#allocation8 + $0xb8] sm:$0xff] %v2011
          %2068 = vst [vmem:[#allocation8 + $0xc0] sm:$0xff] %v2012
          %2069 = vst [vmem:[#allocation8 + $0xc8] sm:$0xff] %v2013
          %2070 = vst [vmem:[#allocation8 + $0xd0] sm:$0xff] %v2014
          %2071 = vst [vmem:[#allocation8 + $0xd8] sm:$0xff] %v2015
        $region52: #{tpu_custom_call.1} parent=27 // pred_fallthru
          _
        %p2072 = scmp.eq.s32.totalorder %s165, 1
        // Predicated region
        $region53: #{tpu_custom_call.1} parent=27 // pred_check
          %p2073 = pneg %p2072
        $region54: #{tpu_custom_call.1} parent=27 // pred_check_branch
          %2075 = sbr.rel (%p2073) target = $region56
        $region55: #{tpu_custom_call.1} parent=27 // pred_region
          %s2076 = scalar_lea.vmem [#allocation2], 560
          %v2077 = vld [vmem:[%s2076] sm:$0xf]
          %v2078 = vld [vmem:[%s2076 + $0x4] sm:$0xf]
          %v2079 = vld [vmem:[%s2076 + $0x14] sm:$0xf]
          %v2080 = vld [vmem:[%s2076 + $0x18] sm:$0xf]
          %v2081 = vld [vmem:[%s2076 + $0x28] sm:$0xf]
          %v2082 = vld [vmem:[%s2076 + $0x2c] sm:$0xf]
          %v2083 = vld [vmem:[%s2076 + $0x3c] sm:$0xf]
          %v2084 = vld [vmem:[%s2076 + $0x40] sm:$0xf]
          %v2085 = vld [vmem:[%s2076 + $0x50] sm:$0xf]
          %v2086 = vld [vmem:[%s2076 + $0x54] sm:$0xf]
          %v2087 = vld [vmem:[%s2076 + $0x64] sm:$0xf]
          %v2088 = vld [vmem:[%s2076 + $0x68] sm:$0xf]
          %v2089 = vld [vmem:[%s2076 + $0x78] sm:$0xf]
          %v2090 = vld [vmem:[%s2076 + $0x7c] sm:$0xf]
          %v2091 = vld [vmem:[%s2076 + $0x8c] sm:$0xf]
          %v2092 = vld [vmem:[%s2076 + $0x90] sm:$0xf]
          %v2093 = vld [vmem:[%s2076 + $0xa0] sm:$0xf]
          %v2094 = vld [vmem:[%s2076 + $0xa4] sm:$0xf]
          %v2095 = vld [vmem:[%s2076 + $0xb4] sm:$0xf]
          %v2096 = vld [vmem:[%s2076 + $0xb8] sm:$0xf]
          %v2097 = vld [vmem:[%s2076 + $0xc8] sm:$0xf]
          %v2098 = vld [vmem:[%s2076 + $0xcc] sm:$0xf]
          %v2099 = vld [vmem:[%s2076 + $0xdc] sm:$0xf]
          %v2100 = vld [vmem:[%s2076 + $0xe0] sm:$0xf]
          %v2101 = vld [vmem:[%s2076 + $0xf0] sm:$0xf]
          %v2102 = vld [vmem:[%s2076 + $0xf4] sm:$0xf]
          %v2103 = vld [vmem:[%s2076 + $0x104] sm:$0xf]
          %v2104 = vld [vmem:[%s2076 + $0x108] sm:$0xf]
          %v2105 = vld [vmem:[%s2076 + $0x118] sm:$0xf]
          %v2106 = vld [vmem:[%s2076 + $0x11c] sm:$0xf]
          %v2107 = vld [vmem:[%s2076 + $0x12c] sm:$0xf]
          %v2108 = vld [vmem:[%s2076 + $0x130] sm:$0xf]
          %v2109 = vld [vmem:[%s2076 + $0x140] sm:$0xf]
          %v2110 = vld [vmem:[%s2076 + $0x144] sm:$0xf]
          %v2111 = vld [vmem:[%s2076 + $0x154] sm:$0xf]
          %v2112 = vld [vmem:[%s2076 + $0x158] sm:$0xf]
          %v2113 = vld [vmem:[%s2076 + $0x168] sm:$0xf]
          %v2114 = vld [vmem:[%s2076 + $0x16c] sm:$0xf]
          %v2115 = vld [vmem:[%s2076 + $0x17c] sm:$0xf]
          %v2116 = vld [vmem:[%s2076 + $0x180] sm:$0xf]
          %v2117 = vld [vmem:[%s2076 + $0x190] sm:$0xf]
          %v2118 = vld [vmem:[%s2076 + $0x194] sm:$0xf]
          %v2119 = vld [vmem:[%s2076 + $0x1a4] sm:$0xf]
          %v2120 = vld [vmem:[%s2076 + $0x1a8] sm:$0xf]
          %v2121 = vld [vmem:[%s2076 + $0x1b8] sm:$0xf]
          %v2122 = vld [vmem:[%s2076 + $0x1bc] sm:$0xf]
          %v2123 = vld [vmem:[%s2076 + $0x1cc] sm:$0xf]
          %v2124 = vld [vmem:[%s2076 + $0x1d0] sm:$0xf]
          %v2125 = vld [vmem:[%s2076 + $0x1e0] sm:$0xf]
          %v2126 = vld [vmem:[%s2076 + $0x1e4] sm:$0xf]
          %v2127 = vld [vmem:[%s2076 + $0x1f4] sm:$0xf]
          %v2128 = vld [vmem:[%s2076 + $0x1f8] sm:$0xf]
          %v2129 = vld [vmem:[%s2076 + $0x208] sm:$0xf]
          %v2130 = vld [vmem:[%s2076 + $0x20c] sm:$0xf]
          %v2131 = vld [vmem:[%s2076 + $0x21c] sm:$0xf]
          %v2132 = vld [vmem:[%s2076 + $0x220] sm:$0xf]
          %v2189 = vunpack.c.l.b16 %v2077
          %v2190 = vunpack.c.l.b16 %v2078
          %v2191 = vunpack.c.l.b16 %v2079
          %v2192 = vunpack.c.l.b16 %v2080
          %v2193 = vunpack.c.l.b16 %v2081
          %v2194 = vunpack.c.l.b16 %v2082
          %v2195 = vunpack.c.l.b16 %v2083
          %v2196 = vunpack.c.l.b16 %v2084
          %v2197 = vunpack.c.l.b16 %v2085
          %v2198 = vunpack.c.l.b16 %v2086
          %v2199 = vunpack.c.l.b16 %v2087
          %v2200 = vunpack.c.l.b16 %v2088
          %v2201 = vunpack.c.l.b16 %v2089
          %v2202 = vunpack.c.l.b16 %v2090
          %v2203 = vunpack.c.l.b16 %v2091
          %v2204 = vunpack.c.l.b16 %v2092
          %v2205 = vunpack.c.l.b16 %v2093
          %v2206 = vunpack.c.l.b16 %v2094
          %v2207 = vunpack.c.l.b16 %v2095
          %v2208 = vunpack.c.l.b16 %v2096
          %v2209 = vunpack.c.l.b16 %v2097
          %v2210 = vunpack.c.l.b16 %v2098
          %v2211 = vunpack.c.l.b16 %v2099
          %v2212 = vunpack.c.l.b16 %v2100
          %v2213 = vunpack.c.l.b16 %v2101
          %v2214 = vunpack.c.l.b16 %v2102
          %v2215 = vunpack.c.l.b16 %v2103
          %v2216 = vunpack.c.l.b16 %v2104
          %v2217 = vunpack.c.l.b16 %v2105
          %v2218 = vunpack.c.l.b16 %v2106
          %v2219 = vunpack.c.l.b16 %v2107
          %v2220 = vunpack.c.l.b16 %v2108
          %v2221 = vunpack.c.l.b16 %v2109
          %v2222 = vunpack.c.l.b16 %v2110
          %v2223 = vunpack.c.l.b16 %v2111
          %v2224 = vunpack.c.l.b16 %v2112
          %v2225 = vunpack.c.l.b16 %v2113
          %v2226 = vunpack.c.l.b16 %v2114
          %v2227 = vunpack.c.l.b16 %v2115
          %v2228 = vunpack.c.l.b16 %v2116
          %v2229 = vunpack.c.l.b16 %v2117
          %v2230 = vunpack.c.l.b16 %v2118
          %v2231 = vunpack.c.l.b16 %v2119
          %v2232 = vunpack.c.l.b16 %v2120
          %v2233 = vunpack.c.l.b16 %v2121
          %v2234 = vunpack.c.l.b16 %v2122
          %v2235 = vunpack.c.l.b16 %v2123
          %v2236 = vunpack.c.l.b16 %v2124
          %v2237 = vunpack.c.l.b16 %v2125
          %v2238 = vunpack.c.l.b16 %v2126
          %v2239 = vunpack.c.l.b16 %v2127
          %v2240 = vunpack.c.l.b16 %v2128
          %v2241 = vunpack.c.l.b16 %v2129
          %v2242 = vunpack.c.l.b16 %v2130
          %v2243 = vunpack.c.l.b16 %v2131
          %v2244 = vunpack.c.l.b16 %v2132
          %v2245 = vpack.c.b16 %v2190, %v2189
          %v2246 = vpack.c.b16 %v2192, %v2191
          %v2247 = vpack.c.b16 %v2194, %v2193
          %v2248 = vpack.c.b16 %v2196, %v2195
          %v2249 = vpack.c.b16 %v2198, %v2197
          %v2250 = vpack.c.b16 %v2200, %v2199
          %v2251 = vpack.c.b16 %v2202, %v2201
          %v2252 = vpack.c.b16 %v2204, %v2203
          %v2253 = vpack.c.b16 %v2206, %v2205
          %v2254 = vpack.c.b16 %v2208, %v2207
          %v2255 = vpack.c.b16 %v2210, %v2209
          %v2256 = vpack.c.b16 %v2212, %v2211
          %v2257 = vpack.c.b16 %v2214, %v2213
          %v2258 = vpack.c.b16 %v2216, %v2215
          %v2259 = vpack.c.b16 %v2218, %v2217
          %v2260 = vpack.c.b16 %v2220, %v2219
          %v2261 = vpack.c.b16 %v2222, %v2221
          %v2262 = vpack.c.b16 %v2224, %v2223
          %v2263 = vpack.c.b16 %v2226, %v2225
          %v2264 = vpack.c.b16 %v2228, %v2227
          %v2265 = vpack.c.b16 %v2230, %v2229
          %v2266 = vpack.c.b16 %v2232, %v2231
          %v2267 = vpack.c.b16 %v2234, %v2233
          %v2268 = vpack.c.b16 %v2236, %v2235
          %v2269 = vpack.c.b16 %v2238, %v2237
          %v2270 = vpack.c.b16 %v2240, %v2239
          %v2271 = vpack.c.b16 %v2242, %v2241
          %v2272 = vpack.c.b16 %v2244, %v2243
          %2301 = vst [vmem:[#allocation4] sm:$0xff] %v2245
          %2302 = vst [vmem:[#allocation4 + $0x8] sm:$0xff] %v2246
          %2303 = vst [vmem:[#allocation4 + $0x10] sm:$0xff] %v2247
          %2304 = vst [vmem:[#allocation4 + $0x18] sm:$0xff] %v2248
          %2305 = vst [vmem:[#allocation4 + $0x20] sm:$0xff] %v2249
          %2306 = vst [vmem:[#allocation4 + $0x28] sm:$0xff] %v2250
          %2307 = vst [vmem:[#allocation4 + $0x30] sm:$0xff] %v2251
          %2308 = vst [vmem:[#allocation4 + $0x38] sm:$0xff] %v2252
          %2309 = vst [vmem:[#allocation4 + $0x40] sm:$0xff] %v2253
          %2310 = vst [vmem:[#allocation4 + $0x48] sm:$0xff] %v2254
          %2311 = vst [vmem:[#allocation4 + $0x50] sm:$0xff] %v2255
          %2312 = vst [vmem:[#allocation4 + $0x58] sm:$0xff] %v2256
          %2313 = vst [vmem:[#allocation4 + $0x60] sm:$0xff] %v2257
          %2314 = vst [vmem:[#allocation4 + $0x68] sm:$0xff] %v2258
          %2315 = vst [vmem:[#allocation4 + $0x70] sm:$0xff] %v2259
          %2316 = vst [vmem:[#allocation4 + $0x78] sm:$0xff] %v2260
          %2317 = vst [vmem:[#allocation4 + $0x80] sm:$0xff] %v2261
          %2318 = vst [vmem:[#allocation4 + $0x88] sm:$0xff] %v2262
          %2319 = vst [vmem:[#allocation4 + $0x90] sm:$0xff] %v2263
          %2320 = vst [vmem:[#allocation4 + $0x98] sm:$0xff] %v2264
          %2321 = vst [vmem:[#allocation4 + $0xa0] sm:$0xff] %v2265
          %2322 = vst [vmem:[#allocation4 + $0xa8] sm:$0xff] %v2266
          %2323 = vst [vmem:[#allocation4 + $0xb0] sm:$0xff] %v2267
          %2324 = vst [vmem:[#allocation4 + $0xb8] sm:$0xff] %v2268
          %2325 = vst [vmem:[#allocation4 + $0xc0] sm:$0xff] %v2269
          %2326 = vst [vmem:[#allocation4 + $0xc8] sm:$0xff] %v2270
          %2327 = vst [vmem:[#allocation4 + $0xd0] sm:$0xff] %v2271
          %2328 = vst [vmem:[#allocation4 + $0xd8] sm:$0xff] %v2272
          %v2329 = vld [vmem:[%s2076] sm:$0x8]
          %v2330 = vld [vmem:[%s2076 + $0x4] sm:$0xf]
          %v2331 = vld [vmem:[%s2076 + $0x8] sm:$0x7]
          %v2332 = vld [vmem:[%s2076 + $0x14] sm:$0x8]
          %v2333 = vld [vmem:[%s2076 + $0x18] sm:$0xf]
          %v2334 = vld [vmem:[%s2076 + $0x1c] sm:$0x7]
          %v2335 = vld [vmem:[%s2076 + $0x28] sm:$0x8]
          %v2336 = vld [vmem:[%s2076 + $0x2c] sm:$0xf]
          %v2337 = vld [vmem:[%s2076 + $0x30] sm:$0x7]
          %v2338 = vld [vmem:[%s2076 + $0x3c] sm:$0x8]
          %v2339 = vld [vmem:[%s2076 + $0x40] sm:$0xf]
          %v2340 = vld [vmem:[%s2076 + $0x44] sm:$0x7]
          %v2341 = vld [vmem:[%s2076 + $0x50] sm:$0x8]
          %v2342 = vld [vmem:[%s2076 + $0x54] sm:$0xf]
          %v2343 = vld [vmem:[%s2076 + $0x58] sm:$0x7]
          %v2344 = vld [vmem:[%s2076 + $0x64] sm:$0x8]
          %v2345 = vld [vmem:[%s2076 + $0x68] sm:$0xf]
          %v2346 = vld [vmem:[%s2076 + $0x6c] sm:$0x7]
          %v2347 = vld [vmem:[%s2076 + $0x78] sm:$0x8]
          %v2348 = vld [vmem:[%s2076 + $0x7c] sm:$0xf]
          %v2349 = vld [vmem:[%s2076 + $0x80] sm:$0x7]
          %v2350 = vld [vmem:[%s2076 + $0x8c] sm:$0x8]
          %v2351 = vld [vmem:[%s2076 + $0x90] sm:$0xf]
          %v2352 = vld [vmem:[%s2076 + $0x94] sm:$0x7]
          %v2353 = vld [vmem:[%s2076 + $0xa0] sm:$0x8]
          %v2354 = vld [vmem:[%s2076 + $0xa4] sm:$0xf]
          %v2355 = vld [vmem:[%s2076 + $0xa8] sm:$0x7]
          %v2356 = vld [vmem:[%s2076 + $0xb4] sm:$0x8]
          %v2357 = vld [vmem:[%s2076 + $0xb8] sm:$0xf]
          %v2358 = vld [vmem:[%s2076 + $0xbc] sm:$0x7]
          %v2359 = vld [vmem:[%s2076 + $0xc8] sm:$0x8]
          %v2360 = vld [vmem:[%s2076 + $0xcc] sm:$0xf]
          %v2361 = vld [vmem:[%s2076 + $0xd0] sm:$0x7]
          %v2362 = vld [vmem:[%s2076 + $0xdc] sm:$0x8]
          %v2363 = vld [vmem:[%s2076 + $0xe0] sm:$0xf]
          %v2364 = vld [vmem:[%s2076 + $0xe4] sm:$0x7]
          %v2365 = vld [vmem:[%s2076 + $0xf0] sm:$0x8]
          %v2366 = vld [vmem:[%s2076 + $0xf4] sm:$0xf]
          %v2367 = vld [vmem:[%s2076 + $0xf8] sm:$0x7]
          %v2368 = vld [vmem:[%s2076 + $0x104] sm:$0x8]
          %v2369 = vld [vmem:[%s2076 + $0x108] sm:$0xf]
          %v2370 = vld [vmem:[%s2076 + $0x10c] sm:$0x7]
          %v2371 = vld [vmem:[%s2076 + $0x118] sm:$0x8]
          %v2372 = vld [vmem:[%s2076 + $0x11c] sm:$0xf]
          %v2373 = vld [vmem:[%s2076 + $0x120] sm:$0x7]
          %v2374 = vld [vmem:[%s2076 + $0x12c] sm:$0x8]
          %v2375 = vld [vmem:[%s2076 + $0x130] sm:$0xf]
          %v2376 = vld [vmem:[%s2076 + $0x134] sm:$0x7]
          %v2377 = vld [vmem:[%s2076 + $0x140] sm:$0x8]
          %v2378 = vld [vmem:[%s2076 + $0x144] sm:$0xf]
          %v2379 = vld [vmem:[%s2076 + $0x148] sm:$0x7]
          %v2380 = vld [vmem:[%s2076 + $0x154] sm:$0x8]
          %v2381 = vld [vmem:[%s2076 + $0x158] sm:$0xf]
          %v2382 = vld [vmem:[%s2076 + $0x15c] sm:$0x7]
          %v2383 = vld [vmem:[%s2076 + $0x168] sm:$0x8]
          %v2384 = vld [vmem:[%s2076 + $0x16c] sm:$0xf]
          %v2385 = vld [vmem:[%s2076 + $0x170] sm:$0x7]
          %v2386 = vld [vmem:[%s2076 + $0x17c] sm:$0x8]
          %v2387 = vld [vmem:[%s2076 + $0x180] sm:$0xf]
          %v2388 = vld [vmem:[%s2076 + $0x184] sm:$0x7]
          %v2389 = vld [vmem:[%s2076 + $0x190] sm:$0x8]
          %v2390 = vld [vmem:[%s2076 + $0x194] sm:$0xf]
          %v2391 = vld [vmem:[%s2076 + $0x198] sm:$0x7]
          %v2392 = vld [vmem:[%s2076 + $0x1a4] sm:$0x8]
          %v2393 = vld [vmem:[%s2076 + $0x1a8] sm:$0xf]
          %v2394 = vld [vmem:[%s2076 + $0x1ac] sm:$0x7]
          %v2395 = vld [vmem:[%s2076 + $0x1b8] sm:$0x8]
          %v2396 = vld [vmem:[%s2076 + $0x1bc] sm:$0xf]
          %v2397 = vld [vmem:[%s2076 + $0x1c0] sm:$0x7]
          %v2398 = vld [vmem:[%s2076 + $0x1cc] sm:$0x8]
          %v2399 = vld [vmem:[%s2076 + $0x1d0] sm:$0xf]
          %v2400 = vld [vmem:[%s2076 + $0x1d4] sm:$0x7]
          %v2401 = vld [vmem:[%s2076 + $0x1e0] sm:$0x8]
          %v2402 = vld [vmem:[%s2076 + $0x1e4] sm:$0xf]
          %v2403 = vld [vmem:[%s2076 + $0x1e8] sm:$0x7]
          %v2404 = vld [vmem:[%s2076 + $0x1f4] sm:$0x8]
          %v2405 = vld [vmem:[%s2076 + $0x1f8] sm:$0xf]
          %v2406 = vld [vmem:[%s2076 + $0x1fc] sm:$0x7]
          %v2407 = vld [vmem:[%s2076 + $0x208] sm:$0x8]
          %v2408 = vld [vmem:[%s2076 + $0x20c] sm:$0xf]
          %v2409 = vld [vmem:[%s2076 + $0x210] sm:$0x7]
          %v2410 = vld [vmem:[%s2076 + $0x21c] sm:$0x8]
          %v2411 = vld [vmem:[%s2076 + $0x220] sm:$0xf]
          %v2412 = vld [vmem:[%s2076 + $0x224] sm:$0x7]
          %v2497 = vunpack.c.l.b16 %v2329
          %v2498 = vunpack.c.l.b16 %v2330
          %v2499 = vunpack.c.l.b16 %v2331
          %v2500 = vunpack.c.l.b16 %v2332
          %v2501 = vunpack.c.l.b16 %v2333
          %v2502 = vunpack.c.l.b16 %v2334
          %v2503 = vunpack.c.l.b16 %v2335
          %v2504 = vunpack.c.l.b16 %v2336
          %v2505 = vunpack.c.l.b16 %v2337
          %v2506 = vunpack.c.l.b16 %v2338
          %v2507 = vunpack.c.l.b16 %v2339
          %v2508 = vunpack.c.l.b16 %v2340
          %v2509 = vunpack.c.l.b16 %v2341
          %v2510 = vunpack.c.l.b16 %v2342
          %v2511 = vunpack.c.l.b16 %v2343
          %v2512 = vunpack.c.l.b16 %v2344
          %v2513 = vunpack.c.l.b16 %v2345
          %v2514 = vunpack.c.l.b16 %v2346
          %v2515 = vunpack.c.l.b16 %v2347
          %v2516 = vunpack.c.l.b16 %v2348
          %v2517 = vunpack.c.l.b16 %v2349
          %v2518 = vunpack.c.l.b16 %v2350
          %v2519 = vunpack.c.l.b16 %v2351
          %v2520 = vunpack.c.l.b16 %v2352
          %v2521 = vunpack.c.l.b16 %v2353
          %v2522 = vunpack.c.l.b16 %v2354
          %v2523 = vunpack.c.l.b16 %v2355
          %v2524 = vunpack.c.l.b16 %v2356
          %v2525 = vunpack.c.l.b16 %v2357
          %v2526 = vunpack.c.l.b16 %v2358
          %v2527 = vunpack.c.l.b16 %v2359
          %v2528 = vunpack.c.l.b16 %v2360
          %v2529 = vunpack.c.l.b16 %v2361
          %v2530 = vunpack.c.l.b16 %v2362
          %v2531 = vunpack.c.l.b16 %v2363
          %v2532 = vunpack.c.l.b16 %v2364
          %v2533 = vunpack.c.l.b16 %v2365
          %v2534 = vunpack.c.l.b16 %v2366
          %v2535 = vunpack.c.l.b16 %v2367
          %v2536 = vunpack.c.l.b16 %v2368
          %v2537 = vunpack.c.l.b16 %v2369
          %v2538 = vunpack.c.l.b16 %v2370
          %v2539 = vunpack.c.l.b16 %v2371
          %v2540 = vunpack.c.l.b16 %v2372
          %v2541 = vunpack.c.l.b16 %v2373
          %v2542 = vunpack.c.l.b16 %v2374
          %v2543 = vunpack.c.l.b16 %v2375
          %v2544 = vunpack.c.l.b16 %v2376
          %v2545 = vunpack.c.l.b16 %v2377
          %v2546 = vunpack.c.l.b16 %v2378
          %v2547 = vunpack.c.l.b16 %v2379
          %v2548 = vunpack.c.l.b16 %v2380
          %v2549 = vunpack.c.l.b16 %v2381
          %v2550 = vunpack.c.l.b16 %v2382
          %v2551 = vunpack.c.l.b16 %v2383
          %v2552 = vunpack.c.l.b16 %v2384
          %v2553 = vunpack.c.l.b16 %v2385
          %v2554 = vunpack.c.l.b16 %v2386
          %v2555 = vunpack.c.l.b16 %v2387
          %v2556 = vunpack.c.l.b16 %v2388
          %v2557 = vunpack.c.l.b16 %v2389
          %v2558 = vunpack.c.l.b16 %v2390
          %v2559 = vunpack.c.l.b16 %v2391
          %v2560 = vunpack.c.l.b16 %v2392
          %v2561 = vunpack.c.l.b16 %v2393
          %v2562 = vunpack.c.l.b16 %v2394
          %v2563 = vunpack.c.l.b16 %v2395
          %v2564 = vunpack.c.l.b16 %v2396
          %v2565 = vunpack.c.l.b16 %v2397
          %v2566 = vunpack.c.l.b16 %v2398
          %v2567 = vunpack.c.l.b16 %v2399
          %v2568 = vunpack.c.l.b16 %v2400
          %v2569 = vunpack.c.l.b16 %v2401
          %v2570 = vunpack.c.l.b16 %v2402
          %v2571 = vunpack.c.l.b16 %v2403
          %v2572 = vunpack.c.l.b16 %v2404
          %v2573 = vunpack.c.l.b16 %v2405
          %v2574 = vunpack.c.l.b16 %v2406
          %v2575 = vunpack.c.l.b16 %v2407
          %v2576 = vunpack.c.l.b16 %v2408
          %v2577 = vunpack.c.l.b16 %v2409
          %v2578 = vunpack.c.l.b16 %v2410
          %v2579 = vunpack.c.l.b16 %v2411
          %v2580 = vunpack.c.l.b16 %v2412
          %v2581 = vpack.c.b16 %v2498, %v2497
          %v2582 = vpack.c.b16 %v2499, %v2499
          %v2583 = vpack.c.b16 %v2501, %v2500
          %v2584 = vpack.c.b16 %v2502, %v2502
          %v2585 = vpack.c.b16 %v2504, %v2503
          %v2586 = vpack.c.b16 %v2505, %v2505
          %v2587 = vpack.c.b16 %v2507, %v2506
          %v2588 = vpack.c.b16 %v2508, %v2508
          %v2589 = vpack.c.b16 %v2510, %v2509
          %v2590 = vpack.c.b16 %v2511, %v2511
          %v2591 = vpack.c.b16 %v2513, %v2512
          %v2592 = vpack.c.b16 %v2514, %v2514
          %v2593 = vpack.c.b16 %v2516, %v2515
          %v2594 = vpack.c.b16 %v2517, %v2517
          %v2595 = vpack.c.b16 %v2519, %v2518
          %v2596 = vpack.c.b16 %v2520, %v2520
          %v2597 = vpack.c.b16 %v2522, %v2521
          %v2598 = vpack.c.b16 %v2523, %v2523
          %v2599 = vpack.c.b16 %v2525, %v2524
          %v2600 = vpack.c.b16 %v2526, %v2526
          %v2601 = vpack.c.b16 %v2528, %v2527
          %v2602 = vpack.c.b16 %v2529, %v2529
          %v2603 = vpack.c.b16 %v2531, %v2530
          %v2604 = vpack.c.b16 %v2532, %v2532
          %v2605 = vpack.c.b16 %v2534, %v2533
          %v2606 = vpack.c.b16 %v2535, %v2535
          %v2607 = vpack.c.b16 %v2537, %v2536
          %v2608 = vpack.c.b16 %v2538, %v2538
          %v2609 = vpack.c.b16 %v2540, %v2539
          %v2610 = vpack.c.b16 %v2541, %v2541
          %v2611 = vpack.c.b16 %v2543, %v2542
          %v2612 = vpack.c.b16 %v2544, %v2544
          %v2613 = vpack.c.b16 %v2546, %v2545
          %v2614 = vpack.c.b16 %v2547, %v2547
          %v2615 = vpack.c.b16 %v2549, %v2548
          %v2616 = vpack.c.b16 %v2550, %v2550
          %v2617 = vpack.c.b16 %v2552, %v2551
          %v2618 = vpack.c.b16 %v2553, %v2553
          %v2619 = vpack.c.b16 %v2555, %v2554
          %v2620 = vpack.c.b16 %v2556, %v2556
          %v2621 = vpack.c.b16 %v2558, %v2557
          %v2622 = vpack.c.b16 %v2559, %v2559
          %v2623 = vpack.c.b16 %v2561, %v2560
          %v2624 = vpack.c.b16 %v2562, %v2562
          %v2625 = vpack.c.b16 %v2564, %v2563
          %v2626 = vpack.c.b16 %v2565, %v2565
          %v2627 = vpack.c.b16 %v2567, %v2566
          %v2628 = vpack.c.b16 %v2568, %v2568
          %v2629 = vpack.c.b16 %v2570, %v2569
          %v2630 = vpack.c.b16 %v2571, %v2571
          %v2631 = vpack.c.b16 %v2573, %v2572
          %v2632 = vpack.c.b16 %v2574, %v2574
          %v2633 = vpack.c.b16 %v2576, %v2575
          %v2634 = vpack.c.b16 %v2577, %v2577
          %v2635 = vpack.c.b16 %v2579, %v2578
          %v2636 = vpack.c.b16 %v2580, %v2580
          %vm2637 = vcmask 1044480
          %v2638 = vrot.slane %v2581, 3
          %v2639 = vrot.slane %v2582, 3
          %v2640 = vsel %vm2637, %v2638, %v2639
          %v2641 = vrot.slane %v2583, 3
          %v2642 = vrot.slane %v2584, 3
          %v2643 = vsel %vm2637, %v2641, %v2642
          %v2644 = vrot.slane %v2585, 3
          %v2645 = vrot.slane %v2586, 3
          %v2646 = vsel %vm2637, %v2644, %v2645
          %v2647 = vrot.slane %v2587, 3
          %v2648 = vrot.slane %v2588, 3
          %v2649 = vsel %vm2637, %v2647, %v2648
          %v2650 = vrot.slane %v2589, 3
          %v2651 = vrot.slane %v2590, 3
          %v2652 = vsel %vm2637, %v2650, %v2651
          %v2653 = vrot.slane %v2591, 3
          %v2654 = vrot.slane %v2592, 3
          %v2655 = vsel %vm2637, %v2653, %v2654
          %v2656 = vrot.slane %v2593, 3
          %v2657 = vrot.slane %v2594, 3
          %v2658 = vsel %vm2637, %v2656, %v2657
          %v2659 = vrot.slane %v2595, 3
          %v2660 = vrot.slane %v2596, 3
          %v2661 = vsel %vm2637, %v2659, %v2660
          %v2662 = vrot.slane %v2597, 3
          %v2663 = vrot.slane %v2598, 3
          %v2664 = vsel %vm2637, %v2662, %v2663
          %v2665 = vrot.slane %v2599, 3
          %v2666 = vrot.slane %v2600, 3
          %v2667 = vsel %vm2637, %v2665, %v2666
          %v2668 = vrot.slane %v2601, 3
          %v2669 = vrot.slane %v2602, 3
          %v2670 = vsel %vm2637, %v2668, %v2669
          %v2671 = vrot.slane %v2603, 3
          %v2672 = vrot.slane %v2604, 3
          %v2673 = vsel %vm2637, %v2671, %v2672
          %v2674 = vrot.slane %v2605, 3
          %v2675 = vrot.slane %v2606, 3
          %v2676 = vsel %vm2637, %v2674, %v2675
          %v2677 = vrot.slane %v2607, 3
          %v2678 = vrot.slane %v2608, 3
          %v2679 = vsel %vm2637, %v2677, %v2678
          %v2680 = vrot.slane %v2609, 3
          %v2681 = vrot.slane %v2610, 3
          %v2682 = vsel %vm2637, %v2680, %v2681
          %v2683 = vrot.slane %v2611, 3
          %v2684 = vrot.slane %v2612, 3
          %v2685 = vsel %vm2637, %v2683, %v2684
          %v2686 = vrot.slane %v2613, 3
          %v2687 = vrot.slane %v2614, 3
          %v2688 = vsel %vm2637, %v2686, %v2687
          %v2689 = vrot.slane %v2615, 3
          %v2690 = vrot.slane %v2616, 3
          %v2691 = vsel %vm2637, %v2689, %v2690
          %v2692 = vrot.slane %v2617, 3
          %v2693 = vrot.slane %v2618, 3
          %v2694 = vsel %vm2637, %v2692, %v2693
          %v2695 = vrot.slane %v2619, 3
          %v2696 = vrot.slane %v2620, 3
          %v2697 = vsel %vm2637, %v2695, %v2696
          %v2698 = vrot.slane %v2621, 3
          %v2699 = vrot.slane %v2622, 3
          %v2700 = vsel %vm2637, %v2698, %v2699
          %v2701 = vrot.slane %v2623, 3
          %v2702 = vrot.slane %v2624, 3
          %v2703 = vsel %vm2637, %v2701, %v2702
          %v2704 = vrot.slane %v2625, 3
          %v2705 = vrot.slane %v2626, 3
          %v2706 = vsel %vm2637, %v2704, %v2705
          %v2707 = vrot.slane %v2627, 3
          %v2708 = vrot.slane %v2628, 3
          %v2709 = vsel %vm2637, %v2707, %v2708
          %v2710 = vrot.slane %v2629, 3
          %v2711 = vrot.slane %v2630, 3
          %v2712 = vsel %vm2637, %v2710, %v2711
          %v2713 = vrot.slane %v2631, 3
          %v2714 = vrot.slane %v2632, 3
          %v2715 = vsel %vm2637, %v2713, %v2714
          %v2716 = vrot.slane %v2633, 3
          %v2717 = vrot.slane %v2634, 3
          %v2718 = vsel %vm2637, %v2716, %v2717
          %v2719 = vrot.slane %v2635, 3
          %v2720 = vrot.slane %v2636, 3
          %v2721 = vsel %vm2637, %v2719, %v2720
          %2750 = vst [vmem:[#allocation5] sm:$0xff] %v2640
          %2751 = vst [vmem:[#allocation5 + $0x8] sm:$0xff] %v2643
          %2752 = vst [vmem:[#allocation5 + $0x10] sm:$0xff] %v2646
          %2753 = vst [vmem:[#allocation5 + $0x18] sm:$0xff] %v2649
          %2754 = vst [vmem:[#allocation5 + $0x20] sm:$0xff] %v2652
          %2755 = vst [vmem:[#allocation5 + $0x28] sm:$0xff] %v2655
          %2756 = vst [vmem:[#allocation5 + $0x30] sm:$0xff] %v2658
          %2757 = vst [vmem:[#allocation5 + $0x38] sm:$0xff] %v2661
          %2758 = vst [vmem:[#allocation5 + $0x40] sm:$0xff] %v2664
          %2759 = vst [vmem:[#allocation5 + $0x48] sm:$0xff] %v2667
          %2760 = vst [vmem:[#allocation5 + $0x50] sm:$0xff] %v2670
          %2761 = vst [vmem:[#allocation5 + $0x58] sm:$0xff] %v2673
          %2762 = vst [vmem:[#allocation5 + $0x60] sm:$0xff] %v2676
          %2763 = vst [vmem:[#allocation5 + $0x68] sm:$0xff] %v2679
          %2764 = vst [vmem:[#allocation5 + $0x70] sm:$0xff] %v2682
          %2765 = vst [vmem:[#allocation5 + $0x78] sm:$0xff] %v2685
          %2766 = vst [vmem:[#allocation5 + $0x80] sm:$0xff] %v2688
          %2767 = vst [vmem:[#allocation5 + $0x88] sm:$0xff] %v2691
          %2768 = vst [vmem:[#allocation5 + $0x90] sm:$0xff] %v2694
          %2769 = vst [vmem:[#allocation5 + $0x98] sm:$0xff] %v2697
          %2770 = vst [vmem:[#allocation5 + $0xa0] sm:$0xff] %v2700
          %2771 = vst [vmem:[#allocation5 + $0xa8] sm:$0xff] %v2703
          %2772 = vst [vmem:[#allocation5 + $0xb0] sm:$0xff] %v2706
          %2773 = vst [vmem:[#allocation5 + $0xb8] sm:$0xff] %v2709
          %2774 = vst [vmem:[#allocation5 + $0xc0] sm:$0xff] %v2712
          %2775 = vst [vmem:[#allocation5 + $0xc8] sm:$0xff] %v2715
          %2776 = vst [vmem:[#allocation5 + $0xd0] sm:$0xff] %v2718
          %2777 = vst [vmem:[#allocation5 + $0xd8] sm:$0xff] %v2721
          %v2778 = vld [vmem:[%s2076 + $0x4] sm:$0xc]
          %v2779 = vld [vmem:[%s2076 + $0x8] sm:$0xf]
          %v2780 = vld [vmem:[%s2076 + $0xc] sm:$0x3]
          %v2781 = vld [vmem:[%s2076 + $0x18] sm:$0xc]
          %v2782 = vld [vmem:[%s2076 + $0x1c] sm:$0xf]
          %v2783 = vld [vmem:[%s2076 + $0x20] sm:$0x3]
          %v2784 = vld [vmem:[%s2076 + $0x2c] sm:$0xc]
          %v2785 = vld [vmem:[%s2076 + $0x30] sm:$0xf]
          %v2786 = vld [vmem:[%s2076 + $0x34] sm:$0x3]
          %v2787 = vld [vmem:[%s2076 + $0x40] sm:$0xc]
          %v2788 = vld [vmem:[%s2076 + $0x44] sm:$0xf]
          %v2789 = vld [vmem:[%s2076 + $0x48] sm:$0x3]
          %v2790 = vld [vmem:[%s2076 + $0x54] sm:$0xc]
          %v2791 = vld [vmem:[%s2076 + $0x58] sm:$0xf]
          %v2792 = vld [vmem:[%s2076 + $0x5c] sm:$0x3]
          %v2793 = vld [vmem:[%s2076 + $0x68] sm:$0xc]
          %v2794 = vld [vmem:[%s2076 + $0x6c] sm:$0xf]
          %v2795 = vld [vmem:[%s2076 + $0x70] sm:$0x3]
          %v2796 = vld [vmem:[%s2076 + $0x7c] sm:$0xc]
          %v2797 = vld [vmem:[%s2076 + $0x80] sm:$0xf]
          %v2798 = vld [vmem:[%s2076 + $0x84] sm:$0x3]
          %v2799 = vld [vmem:[%s2076 + $0x90] sm:$0xc]
          %v2800 = vld [vmem:[%s2076 + $0x94] sm:$0xf]
          %v2801 = vld [vmem:[%s2076 + $0x98] sm:$0x3]
          %v2802 = vld [vmem:[%s2076 + $0xa4] sm:$0xc]
          %v2803 = vld [vmem:[%s2076 + $0xa8] sm:$0xf]
          %v2804 = vld [vmem:[%s2076 + $0xac] sm:$0x3]
          %v2805 = vld [vmem:[%s2076 + $0xb8] sm:$0xc]
          %v2806 = vld [vmem:[%s2076 + $0xbc] sm:$0xf]
          %v2807 = vld [vmem:[%s2076 + $0xc0] sm:$0x3]
          %v2808 = vld [vmem:[%s2076 + $0xcc] sm:$0xc]
          %v2809 = vld [vmem:[%s2076 + $0xd0] sm:$0xf]
          %v2810 = vld [vmem:[%s2076 + $0xd4] sm:$0x3]
          %v2811 = vld [vmem:[%s2076 + $0xe0] sm:$0xc]
          %v2812 = vld [vmem:[%s2076 + $0xe4] sm:$0xf]
          %v2813 = vld [vmem:[%s2076 + $0xe8] sm:$0x3]
          %v2814 = vld [vmem:[%s2076 + $0xf4] sm:$0xc]
          %v2815 = vld [vmem:[%s2076 + $0xf8] sm:$0xf]
          %v2816 = vld [vmem:[%s2076 + $0xfc] sm:$0x3]
          %v2817 = vld [vmem:[%s2076 + $0x108] sm:$0xc]
          %v2818 = vld [vmem:[%s2076 + $0x10c] sm:$0xf]
          %v2819 = vld [vmem:[%s2076 + $0x110] sm:$0x3]
          %v2820 = vld [vmem:[%s2076 + $0x11c] sm:$0xc]
          %v2821 = vld [vmem:[%s2076 + $0x120] sm:$0xf]
          %v2822 = vld [vmem:[%s2076 + $0x124] sm:$0x3]
          %v2823 = vld [vmem:[%s2076 + $0x130] sm:$0xc]
          %v2824 = vld [vmem:[%s2076 + $0x134] sm:$0xf]
          %v2825 = vld [vmem:[%s2076 + $0x138] sm:$0x3]
          %v2826 = vld [vmem:[%s2076 + $0x144] sm:$0xc]
          %v2827 = vld [vmem:[%s2076 + $0x148] sm:$0xf]
          %v2828 = vld [vmem:[%s2076 + $0x14c] sm:$0x3]
          %v2829 = vld [vmem:[%s2076 + $0x158] sm:$0xc]
          %v2830 = vld [vmem:[%s2076 + $0x15c] sm:$0xf]
          %v2831 = vld [vmem:[%s2076 + $0x160] sm:$0x3]
          %v2832 = vld [vmem:[%s2076 + $0x16c] sm:$0xc]
          %v2833 = vld [vmem:[%s2076 + $0x170] sm:$0xf]
          %v2834 = vld [vmem:[%s2076 + $0x174] sm:$0x3]
          %v2835 = vld [vmem:[%s2076 + $0x180] sm:$0xc]
          %v2836 = vld [vmem:[%s2076 + $0x184] sm:$0xf]
          %v2837 = vld [vmem:[%s2076 + $0x188] sm:$0x3]
          %v2838 = vld [vmem:[%s2076 + $0x194] sm:$0xc]
          %v2839 = vld [vmem:[%s2076 + $0x198] sm:$0xf]
          %v2840 = vld [vmem:[%s2076 + $0x19c] sm:$0x3]
          %v2841 = vld [vmem:[%s2076 + $0x1a8] sm:$0xc]
          %v2842 = vld [vmem:[%s2076 + $0x1ac] sm:$0xf]
          %v2843 = vld [vmem:[%s2076 + $0x1b0] sm:$0x3]
          %v2844 = vld [vmem:[%s2076 + $0x1bc] sm:$0xc]
          %v2845 = vld [vmem:[%s2076 + $0x1c0] sm:$0xf]
          %v2846 = vld [vmem:[%s2076 + $0x1c4] sm:$0x3]
          %v2847 = vld [vmem:[%s2076 + $0x1d0] sm:$0xc]
          %v2848 = vld [vmem:[%s2076 + $0x1d4] sm:$0xf]
          %v2849 = vld [vmem:[%s2076 + $0x1d8] sm:$0x3]
          %v2850 = vld [vmem:[%s2076 + $0x1e4] sm:$0xc]
          %v2851 = vld [vmem:[%s2076 + $0x1e8] sm:$0xf]
          %v2852 = vld [vmem:[%s2076 + $0x1ec] sm:$0x3]
          %v2853 = vld [vmem:[%s2076 + $0x1f8] sm:$0xc]
          %v2854 = vld [vmem:[%s2076 + $0x1fc] sm:$0xf]
          %v2855 = vld [vmem:[%s2076 + $0x200] sm:$0x3]
          %v2856 = vld [vmem:[%s2076 + $0x20c] sm:$0xc]
          %v2857 = vld [vmem:[%s2076 + $0x210] sm:$0xf]
          %v2858 = vld [vmem:[%s2076 + $0x214] sm:$0x3]
          %v2859 = vld [vmem:[%s2076 + $0x220] sm:$0xc]
          %v2860 = vld [vmem:[%s2076 + $0x224] sm:$0xf]
          %v2861 = vld [vmem:[%s2076 + $0x228] sm:$0x3]
          %v2946 = vunpack.c.l.b16 %v2778
          %v2947 = vunpack.c.l.b16 %v2779
          %v2948 = vunpack.c.l.b16 %v2780
          %v2949 = vunpack.c.l.b16 %v2781
          %v2950 = vunpack.c.l.b16 %v2782
          %v2951 = vunpack.c.l.b16 %v2783
          %v2952 = vunpack.c.l.b16 %v2784
          %v2953 = vunpack.c.l.b16 %v2785
          %v2954 = vunpack.c.l.b16 %v2786
          %v2955 = vunpack.c.l.b16 %v2787
          %v2956 = vunpack.c.l.b16 %v2788
          %v2957 = vunpack.c.l.b16 %v2789
          %v2958 = vunpack.c.l.b16 %v2790
          %v2959 = vunpack.c.l.b16 %v2791
          %v2960 = vunpack.c.l.b16 %v2792
          %v2961 = vunpack.c.l.b16 %v2793
          %v2962 = vunpack.c.l.b16 %v2794
          %v2963 = vunpack.c.l.b16 %v2795
          %v2964 = vunpack.c.l.b16 %v2796
          %v2965 = vunpack.c.l.b16 %v2797
          %v2966 = vunpack.c.l.b16 %v2798
          %v2967 = vunpack.c.l.b16 %v2799
          %v2968 = vunpack.c.l.b16 %v2800
          %v2969 = vunpack.c.l.b16 %v2801
          %v2970 = vunpack.c.l.b16 %v2802
          %v2971 = vunpack.c.l.b16 %v2803
          %v2972 = vunpack.c.l.b16 %v2804
          %v2973 = vunpack.c.l.b16 %v2805
          %v2974 = vunpack.c.l.b16 %v2806
          %v2975 = vunpack.c.l.b16 %v2807
          %v2976 = vunpack.c.l.b16 %v2808
          %v2977 = vunpack.c.l.b16 %v2809
          %v2978 = vunpack.c.l.b16 %v2810
          %v2979 = vunpack.c.l.b16 %v2811
          %v2980 = vunpack.c.l.b16 %v2812
          %v2981 = vunpack.c.l.b16 %v2813
          %v2982 = vunpack.c.l.b16 %v2814
          %v2983 = vunpack.c.l.b16 %v2815
          %v2984 = vunpack.c.l.b16 %v2816
          %v2985 = vunpack.c.l.b16 %v2817
          %v2986 = vunpack.c.l.b16 %v2818
          %v2987 = vunpack.c.l.b16 %v2819
          %v2988 = vunpack.c.l.b16 %v2820
          %v2989 = vunpack.c.l.b16 %v2821
          %v2990 = vunpack.c.l.b16 %v2822
          %v2991 = vunpack.c.l.b16 %v2823
          %v2992 = vunpack.c.l.b16 %v2824
          %v2993 = vunpack.c.l.b16 %v2825
          %v2994 = vunpack.c.l.b16 %v2826
          %v2995 = vunpack.c.l.b16 %v2827
          %v2996 = vunpack.c.l.b16 %v2828
          %v2997 = vunpack.c.l.b16 %v2829
          %v2998 = vunpack.c.l.b16 %v2830
          %v2999 = vunpack.c.l.b16 %v2831
          %v3000 = vunpack.c.l.b16 %v2832
          %v3001 = vunpack.c.l.b16 %v2833
          %v3002 = vunpack.c.l.b16 %v2834
          %v3003 = vunpack.c.l.b16 %v2835
          %v3004 = vunpack.c.l.b16 %v2836
          %v3005 = vunpack.c.l.b16 %v2837
          %v3006 = vunpack.c.l.b16 %v2838
          %v3007 = vunpack.c.l.b16 %v2839
          %v3008 = vunpack.c.l.b16 %v2840
          %v3009 = vunpack.c.l.b16 %v2841
          %v3010 = vunpack.c.l.b16 %v2842
          %v3011 = vunpack.c.l.b16 %v2843
          %v3012 = vunpack.c.l.b16 %v2844
          %v3013 = vunpack.c.l.b16 %v2845
          %v3014 = vunpack.c.l.b16 %v2846
          %v3015 = vunpack.c.l.b16 %v2847
          %v3016 = vunpack.c.l.b16 %v2848
          %v3017 = vunpack.c.l.b16 %v2849
          %v3018 = vunpack.c.l.b16 %v2850
          %v3019 = vunpack.c.l.b16 %v2851
          %v3020 = vunpack.c.l.b16 %v2852
          %v3021 = vunpack.c.l.b16 %v2853
          %v3022 = vunpack.c.l.b16 %v2854
          %v3023 = vunpack.c.l.b16 %v2855
          %v3024 = vunpack.c.l.b16 %v2856
          %v3025 = vunpack.c.l.b16 %v2857
          %v3026 = vunpack.c.l.b16 %v2858
          %v3027 = vunpack.c.l.b16 %v2859
          %v3028 = vunpack.c.l.b16 %v2860
          %v3029 = vunpack.c.l.b16 %v2861
          %v3030 = vpack.c.b16 %v2947, %v2946
          %v3031 = vpack.c.b16 %v2948, %v2948
          %v3032 = vpack.c.b16 %v2950, %v2949
          %v3033 = vpack.c.b16 %v2951, %v2951
          %v3034 = vpack.c.b16 %v2953, %v2952
          %v3035 = vpack.c.b16 %v2954, %v2954
          %v3036 = vpack.c.b16 %v2956, %v2955
          %v3037 = vpack.c.b16 %v2957, %v2957
          %v3038 = vpack.c.b16 %v2959, %v2958
          %v3039 = vpack.c.b16 %v2960, %v2960
          %v3040 = vpack.c.b16 %v2962, %v2961
          %v3041 = vpack.c.b16 %v2963, %v2963
          %v3042 = vpack.c.b16 %v2965, %v2964
          %v3043 = vpack.c.b16 %v2966, %v2966
          %v3044 = vpack.c.b16 %v2968, %v2967
          %v3045 = vpack.c.b16 %v2969, %v2969
          %v3046 = vpack.c.b16 %v2971, %v2970
          %v3047 = vpack.c.b16 %v2972, %v2972
          %v3048 = vpack.c.b16 %v2974, %v2973
          %v3049 = vpack.c.b16 %v2975, %v2975
          %v3050 = vpack.c.b16 %v2977, %v2976
          %v3051 = vpack.c.b16 %v2978, %v2978
          %v3052 = vpack.c.b16 %v2980, %v2979
          %v3053 = vpack.c.b16 %v2981, %v2981
          %v3054 = vpack.c.b16 %v2983, %v2982
          %v3055 = vpack.c.b16 %v2984, %v2984
          %v3056 = vpack.c.b16 %v2986, %v2985
          %v3057 = vpack.c.b16 %v2987, %v2987
          %v3058 = vpack.c.b16 %v2989, %v2988
          %v3059 = vpack.c.b16 %v2990, %v2990
          %v3060 = vpack.c.b16 %v2992, %v2991
          %v3061 = vpack.c.b16 %v2993, %v2993
          %v3062 = vpack.c.b16 %v2995, %v2994
          %v3063 = vpack.c.b16 %v2996, %v2996
          %v3064 = vpack.c.b16 %v2998, %v2997
          %v3065 = vpack.c.b16 %v2999, %v2999
          %v3066 = vpack.c.b16 %v3001, %v3000
          %v3067 = vpack.c.b16 %v3002, %v3002
          %v3068 = vpack.c.b16 %v3004, %v3003
          %v3069 = vpack.c.b16 %v3005, %v3005
          %v3070 = vpack.c.b16 %v3007, %v3006
          %v3071 = vpack.c.b16 %v3008, %v3008
          %v3072 = vpack.c.b16 %v3010, %v3009
          %v3073 = vpack.c.b16 %v3011, %v3011
          %v3074 = vpack.c.b16 %v3013, %v3012
          %v3075 = vpack.c.b16 %v3014, %v3014
          %v3076 = vpack.c.b16 %v3016, %v3015
          %v3077 = vpack.c.b16 %v3017, %v3017
          %v3078 = vpack.c.b16 %v3019, %v3018
          %v3079 = vpack.c.b16 %v3020, %v3020
          %v3080 = vpack.c.b16 %v3022, %v3021
          %v3081 = vpack.c.b16 %v3023, %v3023
          %v3082 = vpack.c.b16 %v3025, %v3024
          %v3083 = vpack.c.b16 %v3026, %v3026
          %v3084 = vpack.c.b16 %v3028, %v3027
          %v3085 = vpack.c.b16 %v3029, %v3029
          %vm3086 = vcmask 1045504
          %v3087 = vrot.slane %v3030, 2
          %v3088 = vrot.slane %v3031, 2
          %v3089 = vsel %vm3086, %v3087, %v3088
          %v3090 = vrot.slane %v3032, 2
          %v3091 = vrot.slane %v3033, 2
          %v3092 = vsel %vm3086, %v3090, %v3091
          %v3093 = vrot.slane %v3034, 2
          %v3094 = vrot.slane %v3035, 2
          %v3095 = vsel %vm3086, %v3093, %v3094
          %v3096 = vrot.slane %v3036, 2
          %v3097 = vrot.slane %v3037, 2
          %v3098 = vsel %vm3086, %v3096, %v3097
          %v3099 = vrot.slane %v3038, 2
          %v3100 = vrot.slane %v3039, 2
          %v3101 = vsel %vm3086, %v3099, %v3100
          %v3102 = vrot.slane %v3040, 2
          %v3103 = vrot.slane %v3041, 2
          %v3104 = vsel %vm3086, %v3102, %v3103
          %v3105 = vrot.slane %v3042, 2
          %v3106 = vrot.slane %v3043, 2
          %v3107 = vsel %vm3086, %v3105, %v3106
          %v3108 = vrot.slane %v3044, 2
          %v3109 = vrot.slane %v3045, 2
          %v3110 = vsel %vm3086, %v3108, %v3109
          %v3111 = vrot.slane %v3046, 2
          %v3112 = vrot.slane %v3047, 2
          %v3113 = vsel %vm3086, %v3111, %v3112
          %v3114 = vrot.slane %v3048, 2
          %v3115 = vrot.slane %v3049, 2
          %v3116 = vsel %vm3086, %v3114, %v3115
          %v3117 = vrot.slane %v3050, 2
          %v3118 = vrot.slane %v3051, 2
          %v3119 = vsel %vm3086, %v3117, %v3118
          %v3120 = vrot.slane %v3052, 2
          %v3121 = vrot.slane %v3053, 2
          %v3122 = vsel %vm3086, %v3120, %v3121
          %v3123 = vrot.slane %v3054, 2
          %v3124 = vrot.slane %v3055, 2
          %v3125 = vsel %vm3086, %v3123, %v3124
          %v3126 = vrot.slane %v3056, 2
          %v3127 = vrot.slane %v3057, 2
          %v3128 = vsel %vm3086, %v3126, %v3127
          %v3129 = vrot.slane %v3058, 2
          %v3130 = vrot.slane %v3059, 2
          %v3131 = vsel %vm3086, %v3129, %v3130
          %v3132 = vrot.slane %v3060, 2
          %v3133 = vrot.slane %v3061, 2
          %v3134 = vsel %vm3086, %v3132, %v3133
          %v3135 = vrot.slane %v3062, 2
          %v3136 = vrot.slane %v3063, 2
          %v3137 = vsel %vm3086, %v3135, %v3136
          %v3138 = vrot.slane %v3064, 2
          %v3139 = vrot.slane %v3065, 2
          %v3140 = vsel %vm3086, %v3138, %v3139
          %v3141 = vrot.slane %v3066, 2
          %v3142 = vrot.slane %v3067, 2
          %v3143 = vsel %vm3086, %v3141, %v3142
          %v3144 = vrot.slane %v3068, 2
          %v3145 = vrot.slane %v3069, 2
          %v3146 = vsel %vm3086, %v3144, %v3145
          %v3147 = vrot.slane %v3070, 2
          %v3148 = vrot.slane %v3071, 2
          %v3149 = vsel %vm3086, %v3147, %v3148
          %v3150 = vrot.slane %v3072, 2
          %v3151 = vrot.slane %v3073, 2
          %v3152 = vsel %vm3086, %v3150, %v3151
          %v3153 = vrot.slane %v3074, 2
          %v3154 = vrot.slane %v3075, 2
          %v3155 = vsel %vm3086, %v3153, %v3154
          %v3156 = vrot.slane %v3076, 2
          %v3157 = vrot.slane %v3077, 2
          %v3158 = vsel %vm3086, %v3156, %v3157
          %v3159 = vrot.slane %v3078, 2
          %v3160 = vrot.slane %v3079, 2
          %v3161 = vsel %vm3086, %v3159, %v3160
          %v3162 = vrot.slane %v3080, 2
          %v3163 = vrot.slane %v3081, 2
          %v3164 = vsel %vm3086, %v3162, %v3163
          %v3165 = vrot.slane %v3082, 2
          %v3166 = vrot.slane %v3083, 2
          %v3167 = vsel %vm3086, %v3165, %v3166
          %v3168 = vrot.slane %v3084, 2
          %v3169 = vrot.slane %v3085, 2
          %v3170 = vsel %vm3086, %v3168, %v3169
          %3199 = vst [vmem:[#allocation6] sm:$0xff] %v3089
          %3200 = vst [vmem:[#allocation6 + $0x8] sm:$0xff] %v3092
          %3201 = vst [vmem:[#allocation6 + $0x10] sm:$0xff] %v3095
          %3202 = vst [vmem:[#allocation6 + $0x18] sm:$0xff] %v3098
          %3203 = vst [vmem:[#allocation6 + $0x20] sm:$0xff] %v3101
          %3204 = vst [vmem:[#allocation6 + $0x28] sm:$0xff] %v3104
          %3205 = vst [vmem:[#allocation6 + $0x30] sm:$0xff] %v3107
          %3206 = vst [vmem:[#allocation6 + $0x38] sm:$0xff] %v3110
          %3207 = vst [vmem:[#allocation6 + $0x40] sm:$0xff] %v3113
          %3208 = vst [vmem:[#allocation6 + $0x48] sm:$0xff] %v3116
          %3209 = vst [vmem:[#allocation6 + $0x50] sm:$0xff] %v3119
          %3210 = vst [vmem:[#allocation6 + $0x58] sm:$0xff] %v3122
          %3211 = vst [vmem:[#allocation6 + $0x60] sm:$0xff] %v3125
          %3212 = vst [vmem:[#allocation6 + $0x68] sm:$0xff] %v3128
          %3213 = vst [vmem:[#allocation6 + $0x70] sm:$0xff] %v3131
          %3214 = vst [vmem:[#allocation6 + $0x78] sm:$0xff] %v3134
          %3215 = vst [vmem:[#allocation6 + $0x80] sm:$0xff] %v3137
          %3216 = vst [vmem:[#allocation6 + $0x88] sm:$0xff] %v3140
          %3217 = vst [vmem:[#allocation6 + $0x90] sm:$0xff] %v3143
          %3218 = vst [vmem:[#allocation6 + $0x98] sm:$0xff] %v3146
          %3219 = vst [vmem:[#allocation6 + $0xa0] sm:$0xff] %v3149
          %3220 = vst [vmem:[#allocation6 + $0xa8] sm:$0xff] %v3152
          %3221 = vst [vmem:[#allocation6 + $0xb0] sm:$0xff] %v3155
          %3222 = vst [vmem:[#allocation6 + $0xb8] sm:$0xff] %v3158
          %3223 = vst [vmem:[#allocation6 + $0xc0] sm:$0xff] %v3161
          %3224 = vst [vmem:[#allocation6 + $0xc8] sm:$0xff] %v3164
          %3225 = vst [vmem:[#allocation6 + $0xd0] sm:$0xff] %v3167
          %3226 = vst [vmem:[#allocation6 + $0xd8] sm:$0xff] %v3170
          %v3227 = vld [vmem:[%s2076 + $0x8] sm:$0xe]
          %v3228 = vld [vmem:[%s2076 + $0xc] sm:$0xf]
          %v3229 = vld [vmem:[%s2076 + $0x10] sm:$0x1]
          %v3230 = vld [vmem:[%s2076 + $0x1c] sm:$0xe]
          %v3231 = vld [vmem:[%s2076 + $0x20] sm:$0xf]
          %v3232 = vld [vmem:[%s2076 + $0x24] sm:$0x1]
          %v3233 = vld [vmem:[%s2076 + $0x30] sm:$0xe]
          %v3234 = vld [vmem:[%s2076 + $0x34] sm:$0xf]
          %v3235 = vld [vmem:[%s2076 + $0x38] sm:$0x1]
          %v3236 = vld [vmem:[%s2076 + $0x44] sm:$0xe]
          %v3237 = vld [vmem:[%s2076 + $0x48] sm:$0xf]
          %v3238 = vld [vmem:[%s2076 + $0x4c] sm:$0x1]
          %v3239 = vld [vmem:[%s2076 + $0x58] sm:$0xe]
          %v3240 = vld [vmem:[%s2076 + $0x5c] sm:$0xf]
          %v3241 = vld [vmem:[%s2076 + $0x60] sm:$0x1]
          %v3242 = vld [vmem:[%s2076 + $0x6c] sm:$0xe]
          %v3243 = vld [vmem:[%s2076 + $0x70] sm:$0xf]
          %v3244 = vld [vmem:[%s2076 + $0x74] sm:$0x1]
          %v3245 = vld [vmem:[%s2076 + $0x80] sm:$0xe]
          %v3246 = vld [vmem:[%s2076 + $0x84] sm:$0xf]
          %v3247 = vld [vmem:[%s2076 + $0x88] sm:$0x1]
          %v3248 = vld [vmem:[%s2076 + $0x94] sm:$0xe]
          %v3249 = vld [vmem:[%s2076 + $0x98] sm:$0xf]
          %v3250 = vld [vmem:[%s2076 + $0x9c] sm:$0x1]
          %v3251 = vld [vmem:[%s2076 + $0xa8] sm:$0xe]
          %v3252 = vld [vmem:[%s2076 + $0xac] sm:$0xf]
          %v3253 = vld [vmem:[%s2076 + $0xb0] sm:$0x1]
          %v3254 = vld [vmem:[%s2076 + $0xbc] sm:$0xe]
          %v3255 = vld [vmem:[%s2076 + $0xc0] sm:$0xf]
          %v3256 = vld [vmem:[%s2076 + $0xc4] sm:$0x1]
          %v3257 = vld [vmem:[%s2076 + $0xd0] sm:$0xe]
          %v3258 = vld [vmem:[%s2076 + $0xd4] sm:$0xf]
          %v3259 = vld [vmem:[%s2076 + $0xd8] sm:$0x1]
          %v3260 = vld [vmem:[%s2076 + $0xe4] sm:$0xe]
          %v3261 = vld [vmem:[%s2076 + $0xe8] sm:$0xf]
          %v3262 = vld [vmem:[%s2076 + $0xec] sm:$0x1]
          %v3263 = vld [vmem:[%s2076 + $0xf8] sm:$0xe]
          %v3264 = vld [vmem:[%s2076 + $0xfc] sm:$0xf]
          %v3265 = vld [vmem:[%s2076 + $0x100] sm:$0x1]
          %v3266 = vld [vmem:[%s2076 + $0x10c] sm:$0xe]
          %v3267 = vld [vmem:[%s2076 + $0x110] sm:$0xf]
          %v3268 = vld [vmem:[%s2076 + $0x114] sm:$0x1]
          %v3269 = vld [vmem:[%s2076 + $0x120] sm:$0xe]
          %v3270 = vld [vmem:[%s2076 + $0x124] sm:$0xf]
          %v3271 = vld [vmem:[%s2076 + $0x128] sm:$0x1]
          %v3272 = vld [vmem:[%s2076 + $0x134] sm:$0xe]
          %v3273 = vld [vmem:[%s2076 + $0x138] sm:$0xf]
          %v3274 = vld [vmem:[%s2076 + $0x13c] sm:$0x1]
          %v3275 = vld [vmem:[%s2076 + $0x148] sm:$0xe]
          %v3276 = vld [vmem:[%s2076 + $0x14c] sm:$0xf]
          %v3277 = vld [vmem:[%s2076 + $0x150] sm:$0x1]
          %v3278 = vld [vmem:[%s2076 + $0x15c] sm:$0xe]
          %v3279 = vld [vmem:[%s2076 + $0x160] sm:$0xf]
          %v3280 = vld [vmem:[%s2076 + $0x164] sm:$0x1]
          %v3281 = vld [vmem:[%s2076 + $0x170] sm:$0xe]
          %v3282 = vld [vmem:[%s2076 + $0x174] sm:$0xf]
          %v3283 = vld [vmem:[%s2076 + $0x178] sm:$0x1]
          %v3284 = vld [vmem:[%s2076 + $0x184] sm:$0xe]
          %v3285 = vld [vmem:[%s2076 + $0x188] sm:$0xf]
          %v3286 = vld [vmem:[%s2076 + $0x18c] sm:$0x1]
          %v3287 = vld [vmem:[%s2076 + $0x198] sm:$0xe]
          %v3288 = vld [vmem:[%s2076 + $0x19c] sm:$0xf]
          %v3289 = vld [vmem:[%s2076 + $0x1a0] sm:$0x1]
          %v3290 = vld [vmem:[%s2076 + $0x1ac] sm:$0xe]
          %v3291 = vld [vmem:[%s2076 + $0x1b0] sm:$0xf]
          %v3292 = vld [vmem:[%s2076 + $0x1b4] sm:$0x1]
          %v3293 = vld [vmem:[%s2076 + $0x1c0] sm:$0xe]
          %v3294 = vld [vmem:[%s2076 + $0x1c4] sm:$0xf]
          %v3295 = vld [vmem:[%s2076 + $0x1c8] sm:$0x1]
          %v3296 = vld [vmem:[%s2076 + $0x1d4] sm:$0xe]
          %v3297 = vld [vmem:[%s2076 + $0x1d8] sm:$0xf]
          %v3298 = vld [vmem:[%s2076 + $0x1dc] sm:$0x1]
          %v3299 = vld [vmem:[%s2076 + $0x1e8] sm:$0xe]
          %v3300 = vld [vmem:[%s2076 + $0x1ec] sm:$0xf]
          %v3301 = vld [vmem:[%s2076 + $0x1f0] sm:$0x1]
          %v3302 = vld [vmem:[%s2076 + $0x1fc] sm:$0xe]
          %v3303 = vld [vmem:[%s2076 + $0x200] sm:$0xf]
          %v3304 = vld [vmem:[%s2076 + $0x204] sm:$0x1]
          %v3305 = vld [vmem:[%s2076 + $0x210] sm:$0xe]
          %v3306 = vld [vmem:[%s2076 + $0x214] sm:$0xf]
          %v3307 = vld [vmem:[%s2076 + $0x218] sm:$0x1]
          %v3308 = vld [vmem:[%s2076 + $0x224] sm:$0xe]
          %v3309 = vld [vmem:[%s2076 + $0x228] sm:$0xf]
          %v3310 = vld [vmem:[%s2076 + $0x22c] sm:$0x1]
          %v3395 = vunpack.c.l.b16 %v3227
          %v3396 = vunpack.c.l.b16 %v3228
          %v3397 = vunpack.c.l.b16 %v3229
          %v3398 = vunpack.c.l.b16 %v3230
          %v3399 = vunpack.c.l.b16 %v3231
          %v3400 = vunpack.c.l.b16 %v3232
          %v3401 = vunpack.c.l.b16 %v3233
          %v3402 = vunpack.c.l.b16 %v3234
          %v3403 = vunpack.c.l.b16 %v3235
          %v3404 = vunpack.c.l.b16 %v3236
          %v3405 = vunpack.c.l.b16 %v3237
          %v3406 = vunpack.c.l.b16 %v3238
          %v3407 = vunpack.c.l.b16 %v3239
          %v3408 = vunpack.c.l.b16 %v3240
          %v3409 = vunpack.c.l.b16 %v3241
          %v3410 = vunpack.c.l.b16 %v3242
          %v3411 = vunpack.c.l.b16 %v3243
          %v3412 = vunpack.c.l.b16 %v3244
          %v3413 = vunpack.c.l.b16 %v3245
          %v3414 = vunpack.c.l.b16 %v3246
          %v3415 = vunpack.c.l.b16 %v3247
          %v3416 = vunpack.c.l.b16 %v3248
          %v3417 = vunpack.c.l.b16 %v3249
          %v3418 = vunpack.c.l.b16 %v3250
          %v3419 = vunpack.c.l.b16 %v3251
          %v3420 = vunpack.c.l.b16 %v3252
          %v3421 = vunpack.c.l.b16 %v3253
          %v3422 = vunpack.c.l.b16 %v3254
          %v3423 = vunpack.c.l.b16 %v3255
          %v3424 = vunpack.c.l.b16 %v3256
          %v3425 = vunpack.c.l.b16 %v3257
          %v3426 = vunpack.c.l.b16 %v3258
          %v3427 = vunpack.c.l.b16 %v3259
          %v3428 = vunpack.c.l.b16 %v3260
          %v3429 = vunpack.c.l.b16 %v3261
          %v3430 = vunpack.c.l.b16 %v3262
          %v3431 = vunpack.c.l.b16 %v3263
          %v3432 = vunpack.c.l.b16 %v3264
          %v3433 = vunpack.c.l.b16 %v3265
          %v3434 = vunpack.c.l.b16 %v3266
          %v3435 = vunpack.c.l.b16 %v3267
          %v3436 = vunpack.c.l.b16 %v3268
          %v3437 = vunpack.c.l.b16 %v3269
          %v3438 = vunpack.c.l.b16 %v3270
          %v3439 = vunpack.c.l.b16 %v3271
          %v3440 = vunpack.c.l.b16 %v3272
          %v3441 = vunpack.c.l.b16 %v3273
          %v3442 = vunpack.c.l.b16 %v3274
          %v3443 = vunpack.c.l.b16 %v3275
          %v3444 = vunpack.c.l.b16 %v3276
          %v3445 = vunpack.c.l.b16 %v3277
          %v3446 = vunpack.c.l.b16 %v3278
          %v3447 = vunpack.c.l.b16 %v3279
          %v3448 = vunpack.c.l.b16 %v3280
          %v3449 = vunpack.c.l.b16 %v3281
          %v3450 = vunpack.c.l.b16 %v3282
          %v3451 = vunpack.c.l.b16 %v3283
          %v3452 = vunpack.c.l.b16 %v3284
          %v3453 = vunpack.c.l.b16 %v3285
          %v3454 = vunpack.c.l.b16 %v3286
          %v3455 = vunpack.c.l.b16 %v3287
          %v3456 = vunpack.c.l.b16 %v3288
          %v3457 = vunpack.c.l.b16 %v3289
          %v3458 = vunpack.c.l.b16 %v3290
          %v3459 = vunpack.c.l.b16 %v3291
          %v3460 = vunpack.c.l.b16 %v3292
          %v3461 = vunpack.c.l.b16 %v3293
          %v3462 = vunpack.c.l.b16 %v3294
          %v3463 = vunpack.c.l.b16 %v3295
          %v3464 = vunpack.c.l.b16 %v3296
          %v3465 = vunpack.c.l.b16 %v3297
          %v3466 = vunpack.c.l.b16 %v3298
          %v3467 = vunpack.c.l.b16 %v3299
          %v3468 = vunpack.c.l.b16 %v3300
          %v3469 = vunpack.c.l.b16 %v3301
          %v3470 = vunpack.c.l.b16 %v3302
          %v3471 = vunpack.c.l.b16 %v3303
          %v3472 = vunpack.c.l.b16 %v3304
          %v3473 = vunpack.c.l.b16 %v3305
          %v3474 = vunpack.c.l.b16 %v3306
          %v3475 = vunpack.c.l.b16 %v3307
          %v3476 = vunpack.c.l.b16 %v3308
          %v3477 = vunpack.c.l.b16 %v3309
          %v3478 = vunpack.c.l.b16 %v3310
          %v3479 = vpack.c.b16 %v3396, %v3395
          %v3480 = vpack.c.b16 %v3397, %v3397
          %v3481 = vpack.c.b16 %v3399, %v3398
          %v3482 = vpack.c.b16 %v3400, %v3400
          %v3483 = vpack.c.b16 %v3402, %v3401
          %v3484 = vpack.c.b16 %v3403, %v3403
          %v3485 = vpack.c.b16 %v3405, %v3404
          %v3486 = vpack.c.b16 %v3406, %v3406
          %v3487 = vpack.c.b16 %v3408, %v3407
          %v3488 = vpack.c.b16 %v3409, %v3409
          %v3489 = vpack.c.b16 %v3411, %v3410
          %v3490 = vpack.c.b16 %v3412, %v3412
          %v3491 = vpack.c.b16 %v3414, %v3413
          %v3492 = vpack.c.b16 %v3415, %v3415
          %v3493 = vpack.c.b16 %v3417, %v3416
          %v3494 = vpack.c.b16 %v3418, %v3418
          %v3495 = vpack.c.b16 %v3420, %v3419
          %v3496 = vpack.c.b16 %v3421, %v3421
          %v3497 = vpack.c.b16 %v3423, %v3422
          %v3498 = vpack.c.b16 %v3424, %v3424
          %v3499 = vpack.c.b16 %v3426, %v3425
          %v3500 = vpack.c.b16 %v3427, %v3427
          %v3501 = vpack.c.b16 %v3429, %v3428
          %v3502 = vpack.c.b16 %v3430, %v3430
          %v3503 = vpack.c.b16 %v3432, %v3431
          %v3504 = vpack.c.b16 %v3433, %v3433
          %v3505 = vpack.c.b16 %v3435, %v3434
          %v3506 = vpack.c.b16 %v3436, %v3436
          %v3507 = vpack.c.b16 %v3438, %v3437
          %v3508 = vpack.c.b16 %v3439, %v3439
          %v3509 = vpack.c.b16 %v3441, %v3440
          %v3510 = vpack.c.b16 %v3442, %v3442
          %v3511 = vpack.c.b16 %v3444, %v3443
          %v3512 = vpack.c.b16 %v3445, %v3445
          %v3513 = vpack.c.b16 %v3447, %v3446
          %v3514 = vpack.c.b16 %v3448, %v3448
          %v3515 = vpack.c.b16 %v3450, %v3449
          %v3516 = vpack.c.b16 %v3451, %v3451
          %v3517 = vpack.c.b16 %v3453, %v3452
          %v3518 = vpack.c.b16 %v3454, %v3454
          %v3519 = vpack.c.b16 %v3456, %v3455
          %v3520 = vpack.c.b16 %v3457, %v3457
          %v3521 = vpack.c.b16 %v3459, %v3458
          %v3522 = vpack.c.b16 %v3460, %v3460
          %v3523 = vpack.c.b16 %v3462, %v3461
          %v3524 = vpack.c.b16 %v3463, %v3463
          %v3525 = vpack.c.b16 %v3465, %v3464
          %v3526 = vpack.c.b16 %v3466, %v3466
          %v3527 = vpack.c.b16 %v3468, %v3467
          %v3528 = vpack.c.b16 %v3469, %v3469
          %v3529 = vpack.c.b16 %v3471, %v3470
          %v3530 = vpack.c.b16 %v3472, %v3472
          %v3531 = vpack.c.b16 %v3474, %v3473
          %v3532 = vpack.c.b16 %v3475, %v3475
          %v3533 = vpack.c.b16 %v3477, %v3476
          %v3534 = vpack.c.b16 %v3478, %v3478
          %vm3535 = vcmask 1046528
          %v3536 = vrot.slane %v3479, 1
          %v3537 = vrot.slane %v3480, 1
          %v3538 = vsel %vm3535, %v3536, %v3537
          %v3539 = vrot.slane %v3481, 1
          %v3540 = vrot.slane %v3482, 1
          %v3541 = vsel %vm3535, %v3539, %v3540
          %v3542 = vrot.slane %v3483, 1
          %v3543 = vrot.slane %v3484, 1
          %v3544 = vsel %vm3535, %v3542, %v3543
          %v3545 = vrot.slane %v3485, 1
          %v3546 = vrot.slane %v3486, 1
          %v3547 = vsel %vm3535, %v3545, %v3546
          %v3548 = vrot.slane %v3487, 1
          %v3549 = vrot.slane %v3488, 1
          %v3550 = vsel %vm3535, %v3548, %v3549
          %v3551 = vrot.slane %v3489, 1
          %v3552 = vrot.slane %v3490, 1
          %v3553 = vsel %vm3535, %v3551, %v3552
          %v3554 = vrot.slane %v3491, 1
          %v3555 = vrot.slane %v3492, 1
          %v3556 = vsel %vm3535, %v3554, %v3555
          %v3557 = vrot.slane %v3493, 1
          %v3558 = vrot.slane %v3494, 1
          %v3559 = vsel %vm3535, %v3557, %v3558
          %v3560 = vrot.slane %v3495, 1
          %v3561 = vrot.slane %v3496, 1
          %v3562 = vsel %vm3535, %v3560, %v3561
          %v3563 = vrot.slane %v3497, 1
          %v3564 = vrot.slane %v3498, 1
          %v3565 = vsel %vm3535, %v3563, %v3564
          %v3566 = vrot.slane %v3499, 1
          %v3567 = vrot.slane %v3500, 1
          %v3568 = vsel %vm3535, %v3566, %v3567
          %v3569 = vrot.slane %v3501, 1
          %v3570 = vrot.slane %v3502, 1
          %v3571 = vsel %vm3535, %v3569, %v3570
          %v3572 = vrot.slane %v3503, 1
          %v3573 = vrot.slane %v3504, 1
          %v3574 = vsel %vm3535, %v3572, %v3573
          %v3575 = vrot.slane %v3505, 1
          %v3576 = vrot.slane %v3506, 1
          %v3577 = vsel %vm3535, %v3575, %v3576
          %v3578 = vrot.slane %v3507, 1
          %v3579 = vrot.slane %v3508, 1
          %v3580 = vsel %vm3535, %v3578, %v3579
          %v3581 = vrot.slane %v3509, 1
          %v3582 = vrot.slane %v3510, 1
          %v3583 = vsel %vm3535, %v3581, %v3582
          %v3584 = vrot.slane %v3511, 1
          %v3585 = vrot.slane %v3512, 1
          %v3586 = vsel %vm3535, %v3584, %v3585
          %v3587 = vrot.slane %v3513, 1
          %v3588 = vrot.slane %v3514, 1
          %v3589 = vsel %vm3535, %v3587, %v3588
          %v3590 = vrot.slane %v3515, 1
          %v3591 = vrot.slane %v3516, 1
          %v3592 = vsel %vm3535, %v3590, %v3591
          %v3593 = vrot.slane %v3517, 1
          %v3594 = vrot.slane %v3518, 1
          %v3595 = vsel %vm3535, %v3593, %v3594
          %v3596 = vrot.slane %v3519, 1
          %v3597 = vrot.slane %v3520, 1
          %v3598 = vsel %vm3535, %v3596, %v3597
          %v3599 = vrot.slane %v3521, 1
          %v3600 = vrot.slane %v3522, 1
          %v3601 = vsel %vm3535, %v3599, %v3600
          %v3602 = vrot.slane %v3523, 1
          %v3603 = vrot.slane %v3524, 1
          %v3604 = vsel %vm3535, %v3602, %v3603
          %v3605 = vrot.slane %v3525, 1
          %v3606 = vrot.slane %v3526, 1
          %v3607 = vsel %vm3535, %v3605, %v3606
          %v3608 = vrot.slane %v3527, 1
          %v3609 = vrot.slane %v3528, 1
          %v3610 = vsel %vm3535, %v3608, %v3609
          %v3611 = vrot.slane %v3529, 1
          %v3612 = vrot.slane %v3530, 1
          %v3613 = vsel %vm3535, %v3611, %v3612
          %v3614 = vrot.slane %v3531, 1
          %v3615 = vrot.slane %v3532, 1
          %v3616 = vsel %vm3535, %v3614, %v3615
          %v3617 = vrot.slane %v3533, 1
          %v3618 = vrot.slane %v3534, 1
          %v3619 = vsel %vm3535, %v3617, %v3618
          %3648 = vst [vmem:[#allocation7] sm:$0xff] %v3538
          %3649 = vst [vmem:[#allocation7 + $0x8] sm:$0xff] %v3541
          %3650 = vst [vmem:[#allocation7 + $0x10] sm:$0xff] %v3544
          %3651 = vst [vmem:[#allocation7 + $0x18] sm:$0xff] %v3547
          %3652 = vst [vmem:[#allocation7 + $0x20] sm:$0xff] %v3550
          %3653 = vst [vmem:[#allocation7 + $0x28] sm:$0xff] %v3553
          %3654 = vst [vmem:[#allocation7 + $0x30] sm:$0xff] %v3556
          %3655 = vst [vmem:[#allocation7 + $0x38] sm:$0xff] %v3559
          %3656 = vst [vmem:[#allocation7 + $0x40] sm:$0xff] %v3562
          %3657 = vst [vmem:[#allocation7 + $0x48] sm:$0xff] %v3565
          %3658 = vst [vmem:[#allocation7 + $0x50] sm:$0xff] %v3568
          %3659 = vst [vmem:[#allocation7 + $0x58] sm:$0xff] %v3571
          %3660 = vst [vmem:[#allocation7 + $0x60] sm:$0xff] %v3574
          %3661 = vst [vmem:[#allocation7 + $0x68] sm:$0xff] %v3577
          %3662 = vst [vmem:[#allocation7 + $0x70] sm:$0xff] %v3580
          %3663 = vst [vmem:[#allocation7 + $0x78] sm:$0xff] %v3583
          %3664 = vst [vmem:[#allocation7 + $0x80] sm:$0xff] %v3586
          %3665 = vst [vmem:[#allocation7 + $0x88] sm:$0xff] %v3589
          %3666 = vst [vmem:[#allocation7 + $0x90] sm:$0xff] %v3592
          %3667 = vst [vmem:[#allocation7 + $0x98] sm:$0xff] %v3595
          %3668 = vst [vmem:[#allocation7 + $0xa0] sm:$0xff] %v3598
          %3669 = vst [vmem:[#allocation7 + $0xa8] sm:$0xff] %v3601
          %3670 = vst [vmem:[#allocation7 + $0xb0] sm:$0xff] %v3604
          %3671 = vst [vmem:[#allocation7 + $0xb8] sm:$0xff] %v3607
          %3672 = vst [vmem:[#allocation7 + $0xc0] sm:$0xff] %v3610
          %3673 = vst [vmem:[#allocation7 + $0xc8] sm:$0xff] %v3613
          %3674 = vst [vmem:[#allocation7 + $0xd0] sm:$0xff] %v3616
          %3675 = vst [vmem:[#allocation7 + $0xd8] sm:$0xff] %v3619
          %v3676 = vld [vmem:[%s2076 + $0xc] sm:$0xf]
          %v3677 = vld [vmem:[%s2076 + $0x10] sm:$0xf]
          %v3678 = vld [vmem:[%s2076 + $0x20] sm:$0xf]
          %v3679 = vld [vmem:[%s2076 + $0x24] sm:$0xf]
          %v3680 = vld [vmem:[%s2076 + $0x34] sm:$0xf]
          %v3681 = vld [vmem:[%s2076 + $0x38] sm:$0xf]
          %v3682 = vld [vmem:[%s2076 + $0x48] sm:$0xf]
          %v3683 = vld [vmem:[%s2076 + $0x4c] sm:$0xf]
          %v3684 = vld [vmem:[%s2076 + $0x5c] sm:$0xf]
          %v3685 = vld [vmem:[%s2076 + $0x60] sm:$0xf]
          %v3686 = vld [vmem:[%s2076 + $0x70] sm:$0xf]
          %v3687 = vld [vmem:[%s2076 + $0x74] sm:$0xf]
          %v3688 = vld [vmem:[%s2076 + $0x84] sm:$0xf]
          %v3689 = vld [vmem:[%s2076 + $0x88] sm:$0xf]
          %v3690 = vld [vmem:[%s2076 + $0x98] sm:$0xf]
          %v3691 = vld [vmem:[%s2076 + $0x9c] sm:$0xf]
          %v3692 = vld [vmem:[%s2076 + $0xac] sm:$0xf]
          %v3693 = vld [vmem:[%s2076 + $0xb0] sm:$0xf]
          %v3694 = vld [vmem:[%s2076 + $0xc0] sm:$0xf]
          %v3695 = vld [vmem:[%s2076 + $0xc4] sm:$0xf]
          %v3696 = vld [vmem:[%s2076 + $0xd4] sm:$0xf]
          %v3697 = vld [vmem:[%s2076 + $0xd8] sm:$0xf]
          %v3698 = vld [vmem:[%s2076 + $0xe8] sm:$0xf]
          %v3699 = vld [vmem:[%s2076 + $0xec] sm:$0xf]
          %v3700 = vld [vmem:[%s2076 + $0xfc] sm:$0xf]
          %v3701 = vld [vmem:[%s2076 + $0x100] sm:$0xf]
          %v3702 = vld [vmem:[%s2076 + $0x110] sm:$0xf]
          %v3703 = vld [vmem:[%s2076 + $0x114] sm:$0xf]
          %v3704 = vld [vmem:[%s2076 + $0x124] sm:$0xf]
          %v3705 = vld [vmem:[%s2076 + $0x128] sm:$0xf]
          %v3706 = vld [vmem:[%s2076 + $0x138] sm:$0xf]
          %v3707 = vld [vmem:[%s2076 + $0x13c] sm:$0xf]
          %v3708 = vld [vmem:[%s2076 + $0x14c] sm:$0xf]
          %v3709 = vld [vmem:[%s2076 + $0x150] sm:$0xf]
          %v3710 = vld [vmem:[%s2076 + $0x160] sm:$0xf]
          %v3711 = vld [vmem:[%s2076 + $0x164] sm:$0xf]
          %v3712 = vld [vmem:[%s2076 + $0x174] sm:$0xf]
          %v3713 = vld [vmem:[%s2076 + $0x178] sm:$0xf]
          %v3714 = vld [vmem:[%s2076 + $0x188] sm:$0xf]
          %v3715 = vld [vmem:[%s2076 + $0x18c] sm:$0xf]
          %v3716 = vld [vmem:[%s2076 + $0x19c] sm:$0xf]
          %v3717 = vld [vmem:[%s2076 + $0x1a0] sm:$0xf]
          %v3718 = vld [vmem:[%s2076 + $0x1b0] sm:$0xf]
          %v3719 = vld [vmem:[%s2076 + $0x1b4] sm:$0xf]
          %v3720 = vld [vmem:[%s2076 + $0x1c4] sm:$0xf]
          %v3721 = vld [vmem:[%s2076 + $0x1c8] sm:$0xf]
          %v3722 = vld [vmem:[%s2076 + $0x1d8] sm:$0xf]
          %v3723 = vld [vmem:[%s2076 + $0x1dc] sm:$0xf]
          %v3724 = vld [vmem:[%s2076 + $0x1ec] sm:$0xf]
          %v3725 = vld [vmem:[%s2076 + $0x1f0] sm:$0xf]
          %v3726 = vld [vmem:[%s2076 + $0x200] sm:$0xf]
          %v3727 = vld [vmem:[%s2076 + $0x204] sm:$0xf]
          %v3728 = vld [vmem:[%s2076 + $0x214] sm:$0xf]
          %v3729 = vld [vmem:[%s2076 + $0x218] sm:$0xf]
          %v3730 = vld [vmem:[%s2076 + $0x228] sm:$0xf]
          %v3731 = vld [vmem:[%s2076 + $0x22c] sm:$0xf]
          %v3788 = vunpack.c.l.b16 %v3676
          %v3789 = vunpack.c.l.b16 %v3677
          %v3790 = vunpack.c.l.b16 %v3678
          %v3791 = vunpack.c.l.b16 %v3679
          %v3792 = vunpack.c.l.b16 %v3680
          %v3793 = vunpack.c.l.b16 %v3681
          %v3794 = vunpack.c.l.b16 %v3682
          %v3795 = vunpack.c.l.b16 %v3683
          %v3796 = vunpack.c.l.b16 %v3684
          %v3797 = vunpack.c.l.b16 %v3685
          %v3798 = vunpack.c.l.b16 %v3686
          %v3799 = vunpack.c.l.b16 %v3687
          %v3800 = vunpack.c.l.b16 %v3688
          %v3801 = vunpack.c.l.b16 %v3689
          %v3802 = vunpack.c.l.b16 %v3690
          %v3803 = vunpack.c.l.b16 %v3691
          %v3804 = vunpack.c.l.b16 %v3692
          %v3805 = vunpack.c.l.b16 %v3693
          %v3806 = vunpack.c.l.b16 %v3694
          %v3807 = vunpack.c.l.b16 %v3695
          %v3808 = vunpack.c.l.b16 %v3696
          %v3809 = vunpack.c.l.b16 %v3697
          %v3810 = vunpack.c.l.b16 %v3698
          %v3811 = vunpack.c.l.b16 %v3699
          %v3812 = vunpack.c.l.b16 %v3700
          %v3813 = vunpack.c.l.b16 %v3701
          %v3814 = vunpack.c.l.b16 %v3702
          %v3815 = vunpack.c.l.b16 %v3703
          %v3816 = vunpack.c.l.b16 %v3704
          %v3817 = vunpack.c.l.b16 %v3705
          %v3818 = vunpack.c.l.b16 %v3706
          %v3819 = vunpack.c.l.b16 %v3707
          %v3820 = vunpack.c.l.b16 %v3708
          %v3821 = vunpack.c.l.b16 %v3709
          %v3822 = vunpack.c.l.b16 %v3710
          %v3823 = vunpack.c.l.b16 %v3711
          %v3824 = vunpack.c.l.b16 %v3712
          %v3825 = vunpack.c.l.b16 %v3713
          %v3826 = vunpack.c.l.b16 %v3714
          %v3827 = vunpack.c.l.b16 %v3715
          %v3828 = vunpack.c.l.b16 %v3716
          %v3829 = vunpack.c.l.b16 %v3717
          %v3830 = vunpack.c.l.b16 %v3718
          %v3831 = vunpack.c.l.b16 %v3719
          %v3832 = vunpack.c.l.b16 %v3720
          %v3833 = vunpack.c.l.b16 %v3721
          %v3834 = vunpack.c.l.b16 %v3722
          %v3835 = vunpack.c.l.b16 %v3723
          %v3836 = vunpack.c.l.b16 %v3724
          %v3837 = vunpack.c.l.b16 %v3725
          %v3838 = vunpack.c.l.b16 %v3726
          %v3839 = vunpack.c.l.b16 %v3727
          %v3840 = vunpack.c.l.b16 %v3728
          %v3841 = vunpack.c.l.b16 %v3729
          %v3842 = vunpack.c.l.b16 %v3730
          %v3843 = vunpack.c.l.b16 %v3731
          %v3844 = vpack.c.b16 %v3789, %v3788
          %v3845 = vpack.c.b16 %v3791, %v3790
          %v3846 = vpack.c.b16 %v3793, %v3792
          %v3847 = vpack.c.b16 %v3795, %v3794
          %v3848 = vpack.c.b16 %v3797, %v3796
          %v3849 = vpack.c.b16 %v3799, %v3798
          %v3850 = vpack.c.b16 %v3801, %v3800
          %v3851 = vpack.c.b16 %v3803, %v3802
          %v3852 = vpack.c.b16 %v3805, %v3804
          %v3853 = vpack.c.b16 %v3807, %v3806
          %v3854 = vpack.c.b16 %v3809, %v3808
          %v3855 = vpack.c.b16 %v3811, %v3810
          %v3856 = vpack.c.b16 %v3813, %v3812
          %v3857 = vpack.c.b16 %v3815, %v3814
          %v3858 = vpack.c.b16 %v3817, %v3816
          %v3859 = vpack.c.b16 %v3819, %v3818
          %v3860 = vpack.c.b16 %v3821, %v3820
          %v3861 = vpack.c.b16 %v3823, %v3822
          %v3862 = vpack.c.b16 %v3825, %v3824
          %v3863 = vpack.c.b16 %v3827, %v3826
          %v3864 = vpack.c.b16 %v3829, %v3828
          %v3865 = vpack.c.b16 %v3831, %v3830
          %v3866 = vpack.c.b16 %v3833, %v3832
          %v3867 = vpack.c.b16 %v3835, %v3834
          %v3868 = vpack.c.b16 %v3837, %v3836
          %v3869 = vpack.c.b16 %v3839, %v3838
          %v3870 = vpack.c.b16 %v3841, %v3840
          %v3871 = vpack.c.b16 %v3843, %v3842
          %3900 = vst [vmem:[#allocation8] sm:$0xff] %v3844
          %3901 = vst [vmem:[#allocation8 + $0x8] sm:$0xff] %v3845
          %3902 = vst [vmem:[#allocation8 + $0x10] sm:$0xff] %v3846
          %3903 = vst [vmem:[#allocation8 + $0x18] sm:$0xff] %v3847
          %3904 = vst [vmem:[#allocation8 + $0x20] sm:$0xff] %v3848
          %3905 = vst [vmem:[#allocation8 + $0x28] sm:$0xff] %v3849
          %3906 = vst [vmem:[#allocation8 + $0x30] sm:$0xff] %v3850
          %3907 = vst [vmem:[#allocation8 + $0x38] sm:$0xff] %v3851
          %3908 = vst [vmem:[#allocation8 + $0x40] sm:$0xff] %v3852
          %3909 = vst [vmem:[#allocation8 + $0x48] sm:$0xff] %v3853
          %3910 = vst [vmem:[#allocation8 + $0x50] sm:$0xff] %v3854
          %3911 = vst [vmem:[#allocation8 + $0x58] sm:$0xff] %v3855
          %3912 = vst [vmem:[#allocation8 + $0x60] sm:$0xff] %v3856
          %3913 = vst [vmem:[#allocation8 + $0x68] sm:$0xff] %v3857
          %3914 = vst [vmem:[#allocation8 + $0x70] sm:$0xff] %v3858
          %3915 = vst [vmem:[#allocation8 + $0x78] sm:$0xff] %v3859
          %3916 = vst [vmem:[#allocation8 + $0x80] sm:$0xff] %v3860
          %3917 = vst [vmem:[#allocation8 + $0x88] sm:$0xff] %v3861
          %3918 = vst [vmem:[#allocation8 + $0x90] sm:$0xff] %v3862
          %3919 = vst [vmem:[#allocation8 + $0x98] sm:$0xff] %v3863
          %3920 = vst [vmem:[#allocation8 + $0xa0] sm:$0xff] %v3864
          %3921 = vst [vmem:[#allocation8 + $0xa8] sm:$0xff] %v3865
          %3922 = vst [vmem:[#allocation8 + $0xb0] sm:$0xff] %v3866
          %3923 = vst [vmem:[#allocation8 + $0xb8] sm:$0xff] %v3867
          %3924 = vst [vmem:[#allocation8 + $0xc0] sm:$0xff] %v3868
          %3925 = vst [vmem:[#allocation8 + $0xc8] sm:$0xff] %v3869
          %3926 = vst [vmem:[#allocation8 + $0xd0] sm:$0xff] %v3870
          %3927 = vst [vmem:[#allocation8 + $0xd8] sm:$0xff] %v3871
        $region56: #{tpu_custom_call.1} parent=27 // pred_fallthru
          _
        %s3928 = scalar_lea.vmem [#allocation5], 48
        %v3929 = vld [vmem:[%s3928] sm:$0xff]
        %v3930 = vld [vmem:[%s3928 + $0x8] sm:$0xff]
        %v3931 = vld [vmem:[%s3928 + $0x10] sm:$0xff]
        %v3932 = vld [vmem:[%s3928 + $0x18] sm:$0xff]
        %v3933 = vld [vmem:[#allocation9] sm:$0xf]
        %v3934 = vld [vmem:[#allocation9 + $0x4] sm:$0xf]
        %v3935 = vld [vmem:[#allocation9 + $0x8] sm:$0xf]
        %v3936 = vld [vmem:[#allocation9 + $0xc] sm:$0xf]
        %v3937 = vld [vmem:[#allocation9 + $0x10] sm:$0xf]
        %v3938 = vld [vmem:[#allocation9 + $0x14] sm:$0xf]
        %v3939 = vld [vmem:[#allocation9 + $0x18] sm:$0xf]
        %v3940 = vld [vmem:[#allocation9 + $0x1c] sm:$0xf]
        %v3941 = vld [vmem:[#allocation9 + $0x20] sm:$0xf]
        %v3942 = vld [vmem:[#allocation9 + $0x24] sm:$0xf]
        %v3943 = vld [vmem:[#allocation9 + $0x28] sm:$0xf]
        %v3944 = vld [vmem:[#allocation9 + $0x2c] sm:$0xf]
        %v3945 = vld [vmem:[#allocation9 + $0x30] sm:$0xf]
        %v3946 = vld [vmem:[#allocation9 + $0x34] sm:$0xf]
        %v3947 = vld [vmem:[#allocation9 + $0x38] sm:$0xf]
        %v3948 = vld [vmem:[#allocation9 + $0x3c] sm:$0xf]
        %s3949 = scalar_lea.vmem [#allocation6], 48
        %v3950 = vld [vmem:[%s3949] sm:$0xff]
        %v3951 = vld [vmem:[%s3949 + $0x8] sm:$0xff]
        %v3952 = vld [vmem:[%s3949 + $0x10] sm:$0xff]
        %v3953 = vld [vmem:[%s3949 + $0x18] sm:$0xff]
        %s3954 = scalar_lea.vmem [#allocation9], 64
        %v3955 = vld [vmem:[%s3954] sm:$0xf]
        %v3956 = vld [vmem:[%s3954 + $0x4] sm:$0xf]
        %v3957 = vld [vmem:[%s3954 + $0x8] sm:$0xf]
        %v3958 = vld [vmem:[%s3954 + $0xc] sm:$0xf]
        %v3959 = vld [vmem:[%s3954 + $0x10] sm:$0xf]
        %v3960 = vld [vmem:[%s3954 + $0x14] sm:$0xf]
        %v3961 = vld [vmem:[%s3954 + $0x18] sm:$0xf]
        %v3962 = vld [vmem:[%s3954 + $0x1c] sm:$0xf]
        %v3963 = vld [vmem:[%s3954 + $0x20] sm:$0xf]
        %v3964 = vld [vmem:[%s3954 + $0x24] sm:$0xf]
        %v3965 = vld [vmem:[%s3954 + $0x28] sm:$0xf]
        %v3966 = vld [vmem:[%s3954 + $0x2c] sm:$0xf]
        %v3967 = vld [vmem:[%s3954 + $0x30] sm:$0xf]
        %v3968 = vld [vmem:[%s3954 + $0x34] sm:$0xf]
        %v3969 = vld [vmem:[%s3954 + $0x38] sm:$0xf]
        %v3970 = vld [vmem:[%s3954 + $0x3c] sm:$0xf]
        %v3987 = vunpack.c.l.b16 %v3955
        %v3988 = vunpack.c.l.b16 %v3956
        %v3989 = vunpack.c.l.b16 %v3957
        %v3990 = vunpack.c.l.b16 %v3958
        %v3991 = vunpack.c.l.b16 %v3959
        %v3992 = vunpack.c.l.b16 %v3960
        %v3993 = vunpack.c.l.b16 %v3961
        %v3994 = vunpack.c.l.b16 %v3962
        %v3995 = vunpack.c.l.b16 %v3963
        %v3996 = vunpack.c.l.b16 %v3964
        %v3997 = vunpack.c.l.b16 %v3965
        %v3998 = vunpack.c.l.b16 %v3966
        %v3999 = vunpack.c.l.b16 %v3967
        %v4000 = vunpack.c.l.b16 %v3968
        %v4001 = vunpack.c.l.b16 %v3969
        %v4002 = vunpack.c.l.b16 %v3970
        %v4003 = vpack.c.b16 %v3988, %v3987
        %v4004 = vpack.c.b16 %v3990, %v3989
        %v4005 = vpack.c.b16 %v3992, %v3991
        %v4006 = vpack.c.b16 %v3994, %v3993
        %v4007 = vpack.c.b16 %v3996, %v3995
        %v4008 = vpack.c.b16 %v3998, %v3997
        %v4009 = vpack.c.b16 %v4000, %v3999
        %v4010 = vpack.c.b16 %v4002, %v4001
        %4019 = vmatprep.subr.bf16.mxu0 0
        %4020 = vmatpush1.bf16.msra.mxu0 %v4003
        %4021 = vmatprep.subr.bf16.mxu0 0
        %4022 = vmatpush1.bf16.msra.mxu0 %v4004
        %4023 = vmatprep.subr.bf16.mxu0 0
        %4024 = vmatpush1.bf16.msra.mxu0 %v4005
        %4025 = vmatprep.subr.bf16.mxu0 0
        %4026 = vmatpush1.bf16.msra.mxu0 %v4006
        %4027 = vmatprep.subr.bf16.mxu0 0
        %4028 = vmatpush1.bf16.msra.mxu0 %v4007
        %4029 = vmatprep.subr.bf16.mxu0 0
        %4030 = vmatpush1.bf16.msra.mxu0 %v4008
        %4031 = vmatprep.subr.bf16.mxu0 0
        %4032 = vmatpush1.bf16.msra.mxu0 %v4009
        %4033 = vmatprep.subr.bf16.mxu0 0
        %4034 = vmatpush1.bf16.msra.mxu0 %v4010
        %4035 = vmatprep.subr.bf16.mxu0 0
        %4036 = vmatpush1.bf16.msra.mxu0 0
        %4037 = vmatprep.subr.bf16.mxu0 0
        %4038 = vmatpush1.bf16.msra.mxu0 0
        %4039 = vmatprep.subr.bf16.mxu0 0
        %4040 = vmatpush1.bf16.msra.mxu0 0
        %4041 = vmatprep.subr.bf16.mxu0 0
        %4042 = vmatpush1.bf16.msra.mxu0 0
        %4043 = vmatprep.subr.bf16.mxu0 0
        %4044 = vmatpush1.bf16.msra.mxu0 0
        %4045 = vmatprep.subr.bf16.mxu0 0
        %4046 = vmatpush1.bf16.msra.mxu0 0
        %4047 = vmatprep.subr.bf16.mxu0 0
        %4048 = vmatpush1.bf16.msra.mxu0 0
        %4049 = vmatprep.subr.bf16.mxu0 0
        %4050 = vmatpush1.bf16.msra.mxu0 0
        %4051 = vmatprep.mubr.bf16.mxu0 0
        %4052 = vmatmul.mubr.bf16.gmra.mrb[0].mxu0 %v3950
        %v4053 = vpop.f32.mrb[0].mxu0
        %v4054 = vadd.f32 0.0, %v4053
        %v4055 = vpop.f32.mrb[0].mxu0
        %v4056 = vpop.f32.mrb[0].mxu0
        %v4057 = vadd.f32 0.0, %v4056
        %v4058 = vpop.f32.mrb[0].mxu0
        %4059 = vmatprep.mubr.bf16.mxu0 0
        %4060 = vmatmul.mubr.bf16.gmra.mrb[0].mxu0 %v3951
        %v4061 = vpop.f32.mrb[0].mxu0
        %v4062 = vadd.f32 0.0, %v4061
        %v4063 = vpop.f32.mrb[0].mxu0
        %v4064 = vpop.f32.mrb[0].mxu0
        %v4065 = vadd.f32 0.0, %v4064
        %v4066 = vpop.f32.mrb[0].mxu0
        %4067 = vmatprep.mubr.bf16.mxu0 0
        %4068 = vmatmul.mubr.bf16.gmra.mrb[0].mxu0 %v3952
        %v4069 = vpop.f32.mrb[0].mxu0
        %v4070 = vadd.f32 0.0, %v4069
        %v4071 = vpop.f32.mrb[0].mxu0
        %v4072 = vpop.f32.mrb[0].mxu0
        %v4073 = vadd.f32 0.0, %v4072
        %v4074 = vpop.f32.mrb[0].mxu0
        %4075 = vmatprep.mubr.bf16.mxu0 0
        %4076 = vmatmul.mubr.bf16.gmra.mrb[0].mxu0 %v3953
        %v4077 = vpop.f32.mrb[0].mxu0
        %v4078 = vadd.f32 0.0, %v4077
        %v4079 = vpop.f32.mrb[0].mxu0
        %v4080 = vpop.f32.mrb[0].mxu0
        %v4081 = vadd.f32 0.0, %v4080
        %v4082 = vpop.f32.mrb[0].mxu0
        %4083 = vdwg.mxu0
        %v4100 = vunpack.c.l.b16 %v3933
        %v4101 = vunpack.c.l.b16 %v3934
        %v4102 = vunpack.c.l.b16 %v3935
        %v4103 = vunpack.c.l.b16 %v3936
        %v4104 = vunpack.c.l.b16 %v3937
        %v4105 = vunpack.c.l.b16 %v3938
        %v4106 = vunpack.c.l.b16 %v3939
        %v4107 = vunpack.c.l.b16 %v3940
        %v4108 = vunpack.c.l.b16 %v3941
        %v4109 = vunpack.c.l.b16 %v3942
        %v4110 = vunpack.c.l.b16 %v3943
        %v4111 = vunpack.c.l.b16 %v3944
        %v4112 = vunpack.c.l.b16 %v3945
        %v4113 = vunpack.c.l.b16 %v3946
        %v4114 = vunpack.c.l.b16 %v3947
        %v4115 = vunpack.c.l.b16 %v3948
        %v4116 = vpack.c.b16 %v4101, %v4100
        %v4117 = vpack.c.b16 %v4103, %v4102
        %v4118 = vpack.c.b16 %v4105, %v4104
        %v4119 = vpack.c.b16 %v4107, %v4106
        %v4120 = vpack.c.b16 %v4109, %v4108
        %v4121 = vpack.c.b16 %v4111, %v4110
        %v4122 = vpack.c.b16 %v4113, %v4112
        %v4123 = vpack.c.b16 %v4115, %v4114
        %4132 = vmatprep.subr.bf16.mxu0 0
        %4133 = vmatpush1.bf16.msra.mxu0 %v4116
        %4134 = vmatprep.subr.bf16.mxu0 0
        %4135 = vmatpush1.bf16.msra.mxu0 %v4117
        %4136 = vmatprep.subr.bf16.mxu0 0
        %4137 = vmatpush1.bf16.msra.mxu0 %v4118
        %4138 = vmatprep.subr.bf16.mxu0 0
        %4139 = vmatpush1.bf16.msra.mxu0 %v4119
        %4140 = vmatprep.subr.bf16.mxu0 0
        %4141 = vmatpush1.bf16.msra.mxu0 %v4120
        %4142 = vmatprep.subr.bf16.mxu0 0
        %4143 = vmatpush1.bf16.msra.mxu0 %v4121
        %4144 = vmatprep.subr.bf16.mxu0 0
        %4145 = vmatpush1.bf16.msra.mxu0 %v4122
        %4146 = vmatprep.subr.bf16.mxu0 0
        %4147 = vmatpush1.bf16.msra.mxu0 %v4123
        %4148 = vmatprep.subr.bf16.mxu0 0
        %4149 = vmatpush1.bf16.msra.mxu0 0
        %4150 = vmatprep.subr.bf16.mxu0 0
        %4151 = vmatpush1.bf16.msra.mxu0 0
        %4152 = vmatprep.subr.bf16.mxu0 0
        %4153 = vmatpush1.bf16.msra.mxu0 0
        %4154 = vmatprep.subr.bf16.mxu0 0
        %4155 = vmatpush1.bf16.msra.mxu0 0
        %4156 = vmatprep.subr.bf16.mxu0 0
        %4157 = vmatpush1.bf16.msra.mxu0 0
        %4158 = vmatprep.subr.bf16.mxu0 0
        %4159 = vmatpush1.bf16.msra.mxu0 0
        %4160 = vmatprep.subr.bf16.mxu0 0
        %4161 = vmatpush1.bf16.msra.mxu0 0
        %4162 = vmatprep.subr.bf16.mxu0 0
        %4163 = vmatpush1.bf16.msra.mxu0 0
        %4164 = vmatprep.mubr.bf16.mxu0 0
        %4165 = vmatmul.mubr.bf16.gmra.mrb[0].mxu0 %v3929
        %v4166 = vpop.f32.mrb[0].mxu0
        %v4167 = vadd.f32 %v4054, %v4166
        %v4168 = vpop.f32.mrb[0].mxu0
        %v4169 = vpop.f32.mrb[0].mxu0
        %v4170 = vadd.f32 %v4057, %v4169
        %v4171 = vpop.f32.mrb[0].mxu0
        %4172 = vmatprep.mubr.bf16.mxu0 0
        %4173 = vmatmul.mubr.bf16.gmra.mrb[0].mxu0 %v3930
        %v4174 = vpop.f32.mrb[0].mxu0
        %v4175 = vadd.f32 %v4062, %v4174
        %v4176 = vpop.f32.mrb[0].mxu0
        %v4177 = vpop.f32.mrb[0].mxu0
        %v4178 = vadd.f32 %v4065, %v4177
        %v4179 = vpop.f32.mrb[0].mxu0
        %4180 = vmatprep.mubr.bf16.mxu0 0
        %4181 = vmatmul.mubr.bf16.gmra.mrb[0].mxu0 %v3931
        %v4182 = vpop.f32.mrb[0].mxu0
        %v4183 = vadd.f32 %v4070, %v4182
        %v4184 = vpop.f32.mrb[0].mxu0
        %v4185 = vpop.f32.mrb[0].mxu0
        %v4186 = vadd.f32 %v4073, %v4185
        %v4187 = vpop.f32.mrb[0].mxu0
        %4188 = vmatprep.mubr.bf16.mxu0 0
        %4189 = vmatmul.mubr.bf16.gmra.mrb[0].mxu0 %v3932
        %v4190 = vpop.f32.mrb[0].mxu0
        %v4191 = vadd.f32 %v4078, %v4190
        %v4192 = vpop.f32.mrb[0].mxu0
        %v4193 = vpop.f32.mrb[0].mxu0
        %v4194 = vadd.f32 %v4081, %v4193
        %v4195 = vpop.f32.mrb[0].mxu0
        %4196 = vdwg.mxu0
        %s4197 = scalar_lea.vmem [#allocation7], 48
        %v4198 = vld [vmem:[%s4197] sm:$0xff]
        %v4199 = vld [vmem:[%s4197 + $0x8] sm:$0xff]
        %v4200 = vld [vmem:[%s4197 + $0x10] sm:$0xff]
        %v4201 = vld [vmem:[%s4197 + $0x18] sm:$0xff]
        %s4202 = scalar_lea.vmem [#allocation9], 128
        %v4203 = vld [vmem:[%s4202] sm:$0xf]
        %v4204 = vld [vmem:[%s4202 + $0x4] sm:$0xf]
        %v4205 = vld [vmem:[%s4202 + $0x8] sm:$0xf]
        %v4206 = vld [vmem:[%s4202 + $0xc] sm:$0xf]
        %v4207 = vld [vmem:[%s4202 + $0x10] sm:$0xf]
        %v4208 = vld [vmem:[%s4202 + $0x14] sm:$0xf]
        %v4209 = vld [vmem:[%s4202 + $0x18] sm:$0xf]
        %v4210 = vld [vmem:[%s4202 + $0x1c] sm:$0xf]
        %v4211 = vld [vmem:[%s4202 + $0x20] sm:$0xf]
        %v4212 = vld [vmem:[%s4202 + $0x24] sm:$0xf]
        %v4213 = vld [vmem:[%s4202 + $0x28] sm:$0xf]
        %v4214 = vld [vmem:[%s4202 + $0x2c] sm:$0xf]
        %v4215 = vld [vmem:[%s4202 + $0x30] sm:$0xf]
        %v4216 = vld [vmem:[%s4202 + $0x34] sm:$0xf]
        %v4217 = vld [vmem:[%s4202 + $0x38] sm:$0xf]
        %v4218 = vld [vmem:[%s4202 + $0x3c] sm:$0xf]
        %v4235 = vunpack.c.l.b16 %v4203
        %v4236 = vunpack.c.l.b16 %v4204
        %v4237 = vunpack.c.l.b16 %v4205
        %v4238 = vunpack.c.l.b16 %v4206
        %v4239 = vunpack.c.l.b16 %v4207
        %v4240 = vunpack.c.l.b16 %v4208
        %v4241 = vunpack.c.l.b16 %v4209
        %v4242 = vunpack.c.l.b16 %v4210
        %v4243 = vunpack.c.l.b16 %v4211
        %v4244 = vunpack.c.l.b16 %v4212
        %v4245 = vunpack.c.l.b16 %v4213
        %v4246 = vunpack.c.l.b16 %v4214
        %v4247 = vunpack.c.l.b16 %v4215
        %v4248 = vunpack.c.l.b16 %v4216
        %v4249 = vunpack.c.l.b16 %v4217
        %v4250 = vunpack.c.l.b16 %v4218
        %v4251 = vpack.c.b16 %v4236, %v4235
        %v4252 = vpack.c.b16 %v4238, %v4237
        %v4253 = vpack.c.b16 %v4240, %v4239
        %v4254 = vpack.c.b16 %v4242, %v4241
        %v4255 = vpack.c.b16 %v4244, %v4243
        %v4256 = vpack.c.b16 %v4246, %v4245
        %v4257 = vpack.c.b16 %v4248, %v4247
        %v4258 = vpack.c.b16 %v4250, %v4249
        %4267 = vmatprep.subr.bf16.mxu0 0
        %4268 = vmatpush1.bf16.msra.mxu0 %v4251
        %4269 = vmatprep.subr.bf16.mxu0 0
        %4270 = vmatpush1.bf16.msra.mxu0 %v4252
        %4271 = vmatprep.subr.bf16.mxu0 0
        %4272 = vmatpush1.bf16.msra.mxu0 %v4253
        %4273 = vmatprep.subr.bf16.mxu0 0
        %4274 = vmatpush1.bf16.msra.mxu0 %v4254
        %4275 = vmatprep.subr.bf16.mxu0 0
        %4276 = vmatpush1.bf16.msra.mxu0 %v4255
        %4277 = vmatprep.subr.bf16.mxu0 0
        %4278 = vmatpush1.bf16.msra.mxu0 %v4256
        %4279 = vmatprep.subr.bf16.mxu0 0
        %4280 = vmatpush1.bf16.msra.mxu0 %v4257
        %4281 = vmatprep.subr.bf16.mxu0 0
        %4282 = vmatpush1.bf16.msra.mxu0 %v4258
        %4283 = vmatprep.subr.bf16.mxu0 0
        %4284 = vmatpush1.bf16.msra.mxu0 0
        %4285 = vmatprep.subr.bf16.mxu0 0
        %4286 = vmatpush1.bf16.msra.mxu0 0
        %4287 = vmatprep.subr.bf16.mxu0 0
        %4288 = vmatpush1.bf16.msra.mxu0 0
        %4289 = vmatprep.subr.bf16.mxu0 0
        %4290 = vmatpush1.bf16.msra.mxu0 0
        %4291 = vmatprep.subr.bf16.mxu0 0
        %4292 = vmatpush1.bf16.msra.mxu0 0
        %4293 = vmatprep.subr.bf16.mxu0 0
        %4294 = vmatpush1.bf16.msra.mxu0 0
        %4295 = vmatprep.subr.bf16.mxu0 0
        %4296 = vmatpush1.bf16.msra.mxu0 0
        %4297 = vmatprep.subr.bf16.mxu0 0
        %4298 = vmatpush1.bf16.msra.mxu0 0
        %4299 = vmatprep.mubr.bf16.mxu0 0
        %4300 = vmatmul.mubr.bf16.gmra.mrb[0].mxu0 %v4198
        %v4301 = vpop.f32.mrb[0].mxu0
        %v4302 = vadd.f32 0.0, %v4301
        %v4303 = vpop.f32.mrb[0].mxu0
        %v4304 = vpop.f32.mrb[0].mxu0
        %v4305 = vadd.f32 0.0, %v4304
        %v4306 = vpop.f32.mrb[0].mxu0
        %4307 = vmatprep.mubr.bf16.mxu0 0
        %4308 = vmatmul.mubr.bf16.gmra.mrb[0].mxu0 %v4199
        %v4309 = vpop.f32.mrb[0].mxu0
        %v4310 = vadd.f32 0.0, %v4309
        %v4311 = vpop.f32.mrb[0].mxu0
        %v4312 = vpop.f32.mrb[0].mxu0
        %v4313 = vadd.f32 0.0, %v4312
        %v4314 = vpop.f32.mrb[0].mxu0
        %4315 = vmatprep.mubr.bf16.mxu0 0
        %4316 = vmatmul.mubr.bf16.gmra.mrb[0].mxu0 %v4200
        %v4317 = vpop.f32.mrb[0].mxu0
        %v4318 = vadd.f32 0.0, %v4317
        %v4319 = vpop.f32.mrb[0].mxu0
        %v4320 = vpop.f32.mrb[0].mxu0
        %v4321 = vadd.f32 0.0, %v4320
        %v4322 = vpop.f32.mrb[0].mxu0
        %4323 = vmatprep.mubr.bf16.mxu0 0
        %4324 = vmatmul.mubr.bf16.gmra.mrb[0].mxu0 %v4201
        %v4325 = vpop.f32.mrb[0].mxu0
        %v4326 = vadd.f32 0.0, %v4325
        %v4327 = vpop.f32.mrb[0].mxu0
        %v4328 = vpop.f32.mrb[0].mxu0
        %v4329 = vadd.f32 0.0, %v4328
        %v4330 = vpop.f32.mrb[0].mxu0
        %4331 = vdwg.mxu0
        %v4332 = vadd.f32 %v4167, %v4302
        %v4333 = vadd.f32 %v4170, %v4305
        %v4334 = vadd.f32 %v4175, %v4310
        %v4335 = vadd.f32 %v4178, %v4313
        %v4336 = vadd.f32 %v4183, %v4318
        %v4337 = vadd.f32 %v4186, %v4321
        %v4338 = vadd.f32 %v4191, %v4326
        %v4339 = vadd.f32 %v4194, %v4329
        %s4340 = scalar_lea.vmem [#allocation5], 96
        %v4341 = vld [vmem:[%s4340] sm:$0xff]
        %v4342 = vld [vmem:[%s4340 + $0x8] sm:$0xff]
        %v4343 = vld [vmem:[%s4340 + $0x10] sm:$0xff]
        %v4344 = vld [vmem:[%s4340 + $0x18] sm:$0xff]
        %s4345 = scalar_lea.vmem [#allocation9], 192
        %v4346 = vld [vmem:[%s4345] sm:$0xf]
        %v4347 = vld [vmem:[%s4345 + $0x4] sm:$0xf]
        %v4348 = vld [vmem:[%s4345 + $0x8] sm:$0xf]
        %v4349 = vld [vmem:[%s4345 + $0xc] sm:$0xf]
        %v4350 = vld [vmem:[%s4345 + $0x10] sm:$0xf]
        %v4351 = vld [vmem:[%s4345 + $0x14] sm:$0xf]
        %v4352 = vld [vmem:[%s4345 + $0x18] sm:$0xf]
        %v4353 = vld [vmem:[%s4345 + $0x1c] sm:$0xf]
        %v4354 = vld [vmem:[%s4345 + $0x20] sm:$0xf]
        %v4355 = vld [vmem:[%s4345 + $0x24] sm:$0xf]
        %v4356 = vld [vmem:[%s4345 + $0x28] sm:$0xf]
        %v4357 = vld [vmem:[%s4345 + $0x2c] sm:$0xf]
        %v4358 = vld [vmem:[%s4345 + $0x30] sm:$0xf]
        %v4359 = vld [vmem:[%s4345 + $0x34] sm:$0xf]
        %v4360 = vld [vmem:[%s4345 + $0x38] sm:$0xf]
        %v4361 = vld [vmem:[%s4345 + $0x3c] sm:$0xf]
        %v4378 = vunpack.c.l.b16 %v4346
        %v4379 = vunpack.c.l.b16 %v4347
        %v4380 = vunpack.c.l.b16 %v4348
        %v4381 = vunpack.c.l.b16 %v4349
        %v4382 = vunpack.c.l.b16 %v4350
        %v4383 = vunpack.c.l.b16 %v4351
        %v4384 = vunpack.c.l.b16 %v4352
        %v4385 = vunpack.c.l.b16 %v4353
        %v4386 = vunpack.c.l.b16 %v4354
        %v4387 = vunpack.c.l.b16 %v4355
        %v4388 = vunpack.c.l.b16 %v4356
        %v4389 = vunpack.c.l.b16 %v4357
        %v4390 = vunpack.c.l.b16 %v4358
        %v4391 = vunpack.c.l.b16 %v4359
        %v4392 = vunpack.c.l.b16 %v4360
        %v4393 = vunpack.c.l.b16 %v4361
        %v4394 = vpack.c.b16 %v4379, %v4378
        %v4395 = vpack.c.b16 %v4381, %v4380
        %v4396 = vpack.c.b16 %v4383, %v4382
        %v4397 = vpack.c.b16 %v4385, %v4384
        %v4398 = vpack.c.b16 %v4387, %v4386
        %v4399 = vpack.c.b16 %v4389, %v4388
        %v4400 = vpack.c.b16 %v4391, %v4390
        %v4401 = vpack.c.b16 %v4393, %v4392
        %4410 = vmatprep.subr.bf16.mxu0 0
        %4411 = vmatpush1.bf16.msra.mxu0 %v4394
        %4412 = vmatprep.subr.bf16.mxu0 0
        %4413 = vmatpush1.bf16.msra.mxu0 %v4395
        %4414 = vmatprep.subr.bf16.mxu0 0
        %4415 = vmatpush1.bf16.msra.mxu0 %v4396
        %4416 = vmatprep.subr.bf16.mxu0 0
        %4417 = vmatpush1.bf16.msra.mxu0 %v4397
        %4418 = vmatprep.subr.bf16.mxu0 0
        %4419 = vmatpush1.bf16.msra.mxu0 %v4398
        %4420 = vmatprep.subr.bf16.mxu0 0
        %4421 = vmatpush1.bf16.msra.mxu0 %v4399
        %4422 = vmatprep.subr.bf16.mxu0 0
        %4423 = vmatpush1.bf16.msra.mxu0 %v4400
        %4424 = vmatprep.subr.bf16.mxu0 0
        %4425 = vmatpush1.bf16.msra.mxu0 %v4401
        %4426 = vmatprep.subr.bf16.mxu0 0
        %4427 = vmatpush1.bf16.msra.mxu0 0
        %4428 = vmatprep.subr.bf16.mxu0 0
        %4429 = vmatpush1.bf16.msra.mxu0 0
        %4430 = vmatprep.subr.bf16.mxu0 0
        %4431 = vmatpush1.bf16.msra.mxu0 0
        %4432 = vmatprep.subr.bf16.mxu0 0
        %4433 = vmatpush1.bf16.msra.mxu0 0
        %4434 = vmatprep.subr.bf16.mxu0 0
        %4435 = vmatpush1.bf16.msra.mxu0 0
        %4436 = vmatprep.subr.bf16.mxu0 0
        %4437 = vmatpush1.bf16.msra.mxu0 0
        %4438 = vmatprep.subr.bf16.mxu0 0
        %4439 = vmatpush1.bf16.msra.mxu0 0
        %4440 = vmatprep.subr.bf16.mxu0 0
        %4441 = vmatpush1.bf16.msra.mxu0 0
        %4442 = vmatprep.mubr.bf16.mxu0 0
        %4443 = vmatmul.mubr.bf16.gmra.mrb[0].mxu0 %v4341
        %v4444 = vpop.f32.mrb[0].mxu0
        %v4445 = vadd.f32 0.0, %v4444
        %v4446 = vpop.f32.mrb[0].mxu0
        %v4447 = vpop.f32.mrb[0].mxu0
        %v4448 = vadd.f32 0.0, %v4447
        %v4449 = vpop.f32.mrb[0].mxu0
        %4450 = vmatprep.mubr.bf16.mxu0 0
        %4451 = vmatmul.mubr.bf16.gmra.mrb[0].mxu0 %v4342
        %v4452 = vpop.f32.mrb[0].mxu0
        %v4453 = vadd.f32 0.0, %v4452
        %v4454 = vpop.f32.mrb[0].mxu0
        %v4455 = vpop.f32.mrb[0].mxu0
        %v4456 = vadd.f32 0.0, %v4455
        %v4457 = vpop.f32.mrb[0].mxu0
        %4458 = vmatprep.mubr.bf16.mxu0 0
        %4459 = vmatmul.mubr.bf16.gmra.mrb[0].mxu0 %v4343
        %v4460 = vpop.f32.mrb[0].mxu0
        %v4461 = vadd.f32 0.0, %v4460
        %v4462 = vpop.f32.mrb[0].mxu0
        %v4463 = vpop.f32.mrb[0].mxu0
        %v4464 = vadd.f32 0.0, %v4463
        %v4465 = vpop.f32.mrb[0].mxu0
        %4466 = vmatprep.mubr.bf16.mxu0 0
        %4467 = vmatmul.mubr.bf16.gmra.mrb[0].mxu0 %v4344
        %v4468 = vpop.f32.mrb[0].mxu0
        %v4469 = vadd.f32 0.0, %v4468
        %v4470 = vpop.f32.mrb[0].mxu0
        %v4471 = vpop.f32.mrb[0].mxu0
        %v4472 = vadd.f32 0.0, %v4471
        %v4473 = vpop.f32.mrb[0].mxu0
        %4474 = vdwg.mxu0
        %v4475 = vadd.f32 %v4332, %v4445
        %v4476 = vadd.f32 %v4333, %v4448
        %v4477 = vadd.f32 %v4334, %v4453
        %v4478 = vadd.f32 %v4335, %v4456
        %v4479 = vadd.f32 %v4336, %v4461
        %v4480 = vadd.f32 %v4337, %v4464
        %v4481 = vadd.f32 %v4338, %v4469
        %v4482 = vadd.f32 %v4339, %v4472
        %s4483 = scalar_lea.vmem [#allocation6], 96
        %v4484 = vld [vmem:[%s4483] sm:$0xff]
        %v4485 = vld [vmem:[%s4483 + $0x8] sm:$0xff]
        %v4486 = vld [vmem:[%s4483 + $0x10] sm:$0xff]
        %v4487 = vld [vmem:[%s4483 + $0x18] sm:$0xff]
        %s4488 = scalar_lea.vmem [#allocation9], 256
        %v4489 = vld [vmem:[%s4488] sm:$0xf]
        %v4490 = vld [vmem:[%s4488 + $0x4] sm:$0xf]
        %v4491 = vld [vmem:[%s4488 + $0x8] sm:$0xf]
        %v4492 = vld [vmem:[%s4488 + $0xc] sm:$0xf]
        %v4493 = vld [vmem:[%s4488 + $0x10] sm:$0xf]
        %v4494 = vld [vmem:[%s4488 + $0x14] sm:$0xf]
        %v4495 = vld [vmem:[%s4488 + $0x18] sm:$0xf]
        %v4496 = vld [vmem:[%s4488 + $0x1c] sm:$0xf]
        %v4497 = vld [vmem:[%s4488 + $0x20] sm:$0xf]
        %v4498 = vld [vmem:[%s4488 + $0x24] sm:$0xf]
        %v4499 = vld [vmem:[%s4488 + $0x28] sm:$0xf]
        %v4500 = vld [vmem:[%s4488 + $0x2c] sm:$0xf]
        %v4501 = vld [vmem:[%s4488 + $0x30] sm:$0xf]
        %v4502 = vld [vmem:[%s4488 + $0x34] sm:$0xf]
        %v4503 = vld [vmem:[%s4488 + $0x38] sm:$0xf]
        %v4504 = vld [vmem:[%s4488 + $0x3c] sm:$0xf]
        %v4521 = vunpack.c.l.b16 %v4489
        %v4522 = vunpack.c.l.b16 %v4490
        %v4523 = vunpack.c.l.b16 %v4491
        %v4524 = vunpack.c.l.b16 %v4492
        %v4525 = vunpack.c.l.b16 %v4493
        %v4526 = vunpack.c.l.b16 %v4494
        %v4527 = vunpack.c.l.b16 %v4495
        %v4528 = vunpack.c.l.b16 %v4496
        %v4529 = vunpack.c.l.b16 %v4497
        %v4530 = vunpack.c.l.b16 %v4498
        %v4531 = vunpack.c.l.b16 %v4499
        %v4532 = vunpack.c.l.b16 %v4500
        %v4533 = vunpack.c.l.b16 %v4501
        %v4534 = vunpack.c.l.b16 %v4502
        %v4535 = vunpack.c.l.b16 %v4503
        %v4536 = vunpack.c.l.b16 %v4504
        %v4537 = vpack.c.b16 %v4522, %v4521
        %v4538 = vpack.c.b16 %v4524, %v4523
        %v4539 = vpack.c.b16 %v4526, %v4525
        %v4540 = vpack.c.b16 %v4528, %v4527
        %v4541 = vpack.c.b16 %v4530, %v4529
        %v4542 = vpack.c.b16 %v4532, %v4531
        %v4543 = vpack.c.b16 %v4534, %v4533
        %v4544 = vpack.c.b16 %v4536, %v4535
        %4553 = vmatprep.subr.bf16.mxu0 0
        %4554 = vmatpush1.bf16.msra.mxu0 %v4537
        %4555 = vmatprep.subr.bf16.mxu0 0
        %4556 = vmatpush1.bf16.msra.mxu0 %v4538
        %4557 = vmatprep.subr.bf16.mxu0 0
        %4558 = vmatpush1.bf16.msra.mxu0 %v4539
        %4559 = vmatprep.subr.bf16.mxu0 0
        %4560 = vmatpush1.bf16.msra.mxu0 %v4540
        %4561 = vmatprep.subr.bf16.mxu0 0
        %4562 = vmatpush1.bf16.msra.mxu0 %v4541
        %4563 = vmatprep.subr.bf16.mxu0 0
        %4564 = vmatpush1.bf16.msra.mxu0 %v4542
        %4565 = vmatprep.subr.bf16.mxu0 0
        %4566 = vmatpush1.bf16.msra.mxu0 %v4543
        %4567 = vmatprep.subr.bf16.mxu0 0
        %4568 = vmatpush1.bf16.msra.mxu0 %v4544
        %4569 = vmatprep.subr.bf16.mxu0 0
        %4570 = vmatpush1.bf16.msra.mxu0 0
        %4571 = vmatprep.subr.bf16.mxu0 0
        %4572 = vmatpush1.bf16.msra.mxu0 0
        %4573 = vmatprep.subr.bf16.mxu0 0
        %4574 = vmatpush1.bf16.msra.mxu0 0
        %4575 = vmatprep.subr.bf16.mxu0 0
        %4576 = vmatpush1.bf16.msra.mxu0 0
        %4577 = vmatprep.subr.bf16.mxu0 0
        %4578 = vmatpush1.bf16.msra.mxu0 0
        %4579 = vmatprep.subr.bf16.mxu0 0
        %4580 = vmatpush1.bf16.msra.mxu0 0
        %4581 = vmatprep.subr.bf16.mxu0 0
        %4582 = vmatpush1.bf16.msra.mxu0 0
        %4583 = vmatprep.subr.bf16.mxu0 0
        %4584 = vmatpush1.bf16.msra.mxu0 0
        %4585 = vmatprep.mubr.bf16.mxu0 0
        %4586 = vmatmul.mubr.bf16.gmra.mrb[0].mxu0 %v4484
        %v4587 = vpop.f32.mrb[0].mxu0
        %v4588 = vadd.f32 0.0, %v4587
        %v4589 = vpop.f32.mrb[0].mxu0
        %v4590 = vpop.f32.mrb[0].mxu0
        %v4591 = vadd.f32 0.0, %v4590
        %v4592 = vpop.f32.mrb[0].mxu0
        %4593 = vmatprep.mubr.bf16.mxu0 0
        %4594 = vmatmul.mubr.bf16.gmra.mrb[0].mxu0 %v4485
        %v4595 = vpop.f32.mrb[0].mxu0
        %v4596 = vadd.f32 0.0, %v4595
        %v4597 = vpop.f32.mrb[0].mxu0
        %v4598 = vpop.f32.mrb[0].mxu0
        %v4599 = vadd.f32 0.0, %v4598
        %v4600 = vpop.f32.mrb[0].mxu0
        %4601 = vmatprep.mubr.bf16.mxu0 0
        %4602 = vmatmul.mubr.bf16.gmra.mrb[0].mxu0 %v4486
        %v4603 = vpop.f32.mrb[0].mxu0
        %v4604 = vadd.f32 0.0, %v4603
        %v4605 = vpop.f32.mrb[0].mxu0
        %v4606 = vpop.f32.mrb[0].mxu0
        %v4607 = vadd.f32 0.0, %v4606
        %v4608 = vpop.f32.mrb[0].mxu0
        %4609 = vmatprep.mubr.bf16.mxu0 0
        %4610 = vmatmul.mubr.bf16.gmra.mrb[0].mxu0 %v4487
        %v4611 = vpop.f32.mrb[0].mxu0
        %v4612 = vadd.f32 0.0, %v4611
        %v4613 = vpop.f32.mrb[0].mxu0
        %v4614 = vpop.f32.mrb[0].mxu0
        %v4615 = vadd.f32 0.0, %v4614
        %v4616 = vpop.f32.mrb[0].mxu0
        %4617 = vdwg.mxu0
        %v4618 = vadd.f32 %v4475, %v4588
        %v4619 = vadd.f32 %v4476, %v4591
        %v4620 = vadd.f32 %v4477, %v4596
        %v4621 = vadd.f32 %v4478, %v4599
        %v4622 = vadd.f32 %v4479, %v4604
        %v4623 = vadd.f32 %v4480, %v4607
        %v4624 = vadd.f32 %v4481, %v4612
        %v4625 = vadd.f32 %v4482, %v4615
        %s4626 = scalar_lea.vmem [#allocation7], 96
        %v4627 = vld [vmem:[%s4626] sm:$0xff]
        %v4628 = vld [vmem:[%s4626 + $0x8] sm:$0xff]
        %v4629 = vld [vmem:[%s4626 + $0x10] sm:$0xff]
        %v4630 = vld [vmem:[%s4626 + $0x18] sm:$0xff]
        %s4631 = scalar_lea.vmem [#allocation9], 320
        %v4632 = vld [vmem:[%s4631] sm:$0xf]
        %v4633 = vld [vmem:[%s4631 + $0x4] sm:$0xf]
        %v4634 = vld [vmem:[%s4631 + $0x8] sm:$0xf]
        %v4635 = vld [vmem:[%s4631 + $0xc] sm:$0xf]
        %v4636 = vld [vmem:[%s4631 + $0x10] sm:$0xf]
        %v4637 = vld [vmem:[%s4631 + $0x14] sm:$0xf]
        %v4638 = vld [vmem:[%s4631 + $0x18] sm:$0xf]
        %v4639 = vld [vmem:[%s4631 + $0x1c] sm:$0xf]
        %v4640 = vld [vmem:[%s4631 + $0x20] sm:$0xf]
        %v4641 = vld [vmem:[%s4631 + $0x24] sm:$0xf]
        %v4642 = vld [vmem:[%s4631 + $0x28] sm:$0xf]
        %v4643 = vld [vmem:[%s4631 + $0x2c] sm:$0xf]
        %v4644 = vld [vmem:[%s4631 + $0x30] sm:$0xf]
        %v4645 = vld [vmem:[%s4631 + $0x34] sm:$0xf]
        %v4646 = vld [vmem:[%s4631 + $0x38] sm:$0xf]
        %v4647 = vld [vmem:[%s4631 + $0x3c] sm:$0xf]
        %v4664 = vunpack.c.l.b16 %v4632
        %v4665 = vunpack.c.l.b16 %v4633
        %v4666 = vunpack.c.l.b16 %v4634
        %v4667 = vunpack.c.l.b16 %v4635
        %v4668 = vunpack.c.l.b16 %v4636
        %v4669 = vunpack.c.l.b16 %v4637
        %v4670 = vunpack.c.l.b16 %v4638
        %v4671 = vunpack.c.l.b16 %v4639
        %v4672 = vunpack.c.l.b16 %v4640
        %v4673 = vunpack.c.l.b16 %v4641
        %v4674 = vunpack.c.l.b16 %v4642
        %v4675 = vunpack.c.l.b16 %v4643
        %v4676 = vunpack.c.l.b16 %v4644
        %v4677 = vunpack.c.l.b16 %v4645
        %v4678 = vunpack.c.l.b16 %v4646
        %v4679 = vunpack.c.l.b16 %v4647
        %v4680 = vpack.c.b16 %v4665, %v4664
        %v4681 = vpack.c.b16 %v4667, %v4666
        %v4682 = vpack.c.b16 %v4669, %v4668
        %v4683 = vpack.c.b16 %v4671, %v4670
        %v4684 = vpack.c.b16 %v4673, %v4672
        %v4685 = vpack.c.b16 %v4675, %v4674
        %v4686 = vpack.c.b16 %v4677, %v4676
        %v4687 = vpack.c.b16 %v4679, %v4678
        %4696 = vmatprep.subr.bf16.mxu0 0
        %4697 = vmatpush1.bf16.msra.mxu0 %v4680
        %4698 = vmatprep.subr.bf16.mxu0 0
        %4699 = vmatpush1.bf16.msra.mxu0 %v4681
        %4700 = vmatprep.subr.bf16.mxu0 0
        %4701 = vmatpush1.bf16.msra.mxu0 %v4682
        %4702 = vmatprep.subr.bf16.mxu0 0
        %4703 = vmatpush1.bf16.msra.mxu0 %v4683
        %4704 = vmatprep.subr.bf16.mxu0 0
        %4705 = vmatpush1.bf16.msra.mxu0 %v4684
        %4706 = vmatprep.subr.bf16.mxu0 0
        %4707 = vmatpush1.bf16.msra.mxu0 %v4685
        %4708 = vmatprep.subr.bf16.mxu0 0
        %4709 = vmatpush1.bf16.msra.mxu0 %v4686
        %4710 = vmatprep.subr.bf16.mxu0 0
        %4711 = vmatpush1.bf16.msra.mxu0 %v4687
        %4712 = vmatprep.subr.bf16.mxu0 0
        %4713 = vmatpush1.bf16.msra.mxu0 0
        %4714 = vmatprep.subr.bf16.mxu0 0
        %4715 = vmatpush1.bf16.msra.mxu0 0
        %4716 = vmatprep.subr.bf16.mxu0 0
        %4717 = vmatpush1.bf16.msra.mxu0 0
        %4718 = vmatprep.subr.bf16.mxu0 0
        %4719 = vmatpush1.bf16.msra.mxu0 0
        %4720 = vmatprep.subr.bf16.mxu0 0
        %4721 = vmatpush1.bf16.msra.mxu0 0
        %4722 = vmatprep.subr.bf16.mxu0 0
        %4723 = vmatpush1.bf16.msra.mxu0 0
        %4724 = vmatprep.subr.bf16.mxu0 0
        %4725 = vmatpush1.bf16.msra.mxu0 0
        %4726 = vmatprep.subr.bf16.mxu0 0
        %4727 = vmatpush1.bf16.msra.mxu0 0
        %4728 = vmatprep.mubr.bf16.mxu0 0
        %4729 = vmatmul.mubr.bf16.gmra.mrb[0].mxu0 %v4627
        %v4730 = vpop.f32.mrb[0].mxu0
        %v4731 = vadd.f32 0.0, %v4730
        %v4732 = vpop.f32.mrb[0].mxu0
        %v4733 = vpop.f32.mrb[0].mxu0
        %v4734 = vadd.f32 0.0, %v4733
        %v4735 = vpop.f32.mrb[0].mxu0
        %4736 = vmatprep.mubr.bf16.mxu0 0
        %4737 = vmatmul.mubr.bf16.gmra.mrb[0].mxu0 %v4628
        %v4738 = vpop.f32.mrb[0].mxu0
        %v4739 = vadd.f32 0.0, %v4738
        %v4740 = vpop.f32.mrb[0].mxu0
        %v4741 = vpop.f32.mrb[0].mxu0
        %v4742 = vadd.f32 0.0, %v4741
        %v4743 = vpop.f32.mrb[0].mxu0
        %4744 = vmatprep.mubr.bf16.mxu0 0
        %4745 = vmatmul.mubr.bf16.gmra.mrb[0].mxu0 %v4629
        %v4746 = vpop.f32.mrb[0].mxu0
        %v4747 = vadd.f32 0.0, %v4746
        %v4748 = vpop.f32.mrb[0].mxu0
        %v4749 = vpop.f32.mrb[0].mxu0
        %v4750 = vadd.f32 0.0, %v4749
        %v4751 = vpop.f32.mrb[0].mxu0
        %4752 = vmatprep.mubr.bf16.mxu0 0
        %4753 = vmatmul.mubr.bf16.gmra.mrb[0].mxu0 %v4630
        %v4754 = vpop.f32.mrb[0].mxu0
        %v4755 = vadd.f32 0.0, %v4754
        %v4756 = vpop.f32.mrb[0].mxu0
        %v4757 = vpop.f32.mrb[0].mxu0
        %v4758 = vadd.f32 0.0, %v4757
        %v4759 = vpop.f32.mrb[0].mxu0
        %4760 = vdwg.mxu0
        %v4761 = vadd.f32 %v4618, %v4731
        %v4762 = vadd.f32 %v4619, %v4734
        %v4763 = vadd.f32 %v4620, %v4739
        %v4764 = vadd.f32 %v4621, %v4742
        %v4765 = vadd.f32 %v4622, %v4747
        %v4766 = vadd.f32 %v4623, %v4750
        %v4767 = vadd.f32 %v4624, %v4755
        %v4768 = vadd.f32 %v4625, %v4758
        %s4769 = scalar_lea.vmem [#allocation5], 144
        %v4770 = vld [vmem:[%s4769] sm:$0xff]
        %v4771 = vld [vmem:[%s4769 + $0x8] sm:$0xff]
        %v4772 = vld [vmem:[%s4769 + $0x10] sm:$0xff]
        %v4773 = vld [vmem:[%s4769 + $0x18] sm:$0xff]
        %s4774 = scalar_lea.vmem [#allocation9], 384
        %v4775 = vld [vmem:[%s4774] sm:$0xf]
        %v4776 = vld [vmem:[%s4774 + $0x4] sm:$0xf]
        %v4777 = vld [vmem:[%s4774 + $0x8] sm:$0xf]
        %v4778 = vld [vmem:[%s4774 + $0xc] sm:$0xf]
        %v4779 = vld [vmem:[%s4774 + $0x10] sm:$0xf]
        %v4780 = vld [vmem:[%s4774 + $0x14] sm:$0xf]
        %v4781 = vld [vmem:[%s4774 + $0x18] sm:$0xf]
        %v4782 = vld [vmem:[%s4774 + $0x1c] sm:$0xf]
        %v4783 = vld [vmem:[%s4774 + $0x20] sm:$0xf]
        %v4784 = vld [vmem:[%s4774 + $0x24] sm:$0xf]
        %v4785 = vld [vmem:[%s4774 + $0x28] sm:$0xf]
        %v4786 = vld [vmem:[%s4774 + $0x2c] sm:$0xf]
        %v4787 = vld [vmem:[%s4774 + $0x30] sm:$0xf]
        %v4788 = vld [vmem:[%s4774 + $0x34] sm:$0xf]
        %v4789 = vld [vmem:[%s4774 + $0x38] sm:$0xf]
        %v4790 = vld [vmem:[%s4774 + $0x3c] sm:$0xf]
        %v4807 = vunpack.c.l.b16 %v4775
        %v4808 = vunpack.c.l.b16 %v4776
        %v4809 = vunpack.c.l.b16 %v4777
        %v4810 = vunpack.c.l.b16 %v4778
        %v4811 = vunpack.c.l.b16 %v4779
        %v4812 = vunpack.c.l.b16 %v4780
        %v4813 = vunpack.c.l.b16 %v4781
        %v4814 = vunpack.c.l.b16 %v4782
        %v4815 = vunpack.c.l.b16 %v4783
        %v4816 = vunpack.c.l.b16 %v4784
        %v4817 = vunpack.c.l.b16 %v4785
        %v4818 = vunpack.c.l.b16 %v4786
        %v4819 = vunpack.c.l.b16 %v4787
        %v4820 = vunpack.c.l.b16 %v4788
        %v4821 = vunpack.c.l.b16 %v4789
        %v4822 = vunpack.c.l.b16 %v4790
        %v4823 = vpack.c.b16 %v4808, %v4807
        %v4824 = vpack.c.b16 %v4810, %v4809
        %v4825 = vpack.c.b16 %v4812, %v4811
        %v4826 = vpack.c.b16 %v4814, %v4813
        %v4827 = vpack.c.b16 %v4816, %v4815
        %v4828 = vpack.c.b16 %v4818, %v4817
        %v4829 = vpack.c.b16 %v4820, %v4819
        %v4830 = vpack.c.b16 %v4822, %v4821
        %4839 = vmatprep.subr.bf16.mxu0 0
        %4840 = vmatpush1.bf16.msra.mxu0 %v4823
        %4841 = vmatprep.subr.bf16.mxu0 0
        %4842 = vmatpush1.bf16.msra.mxu0 %v4824
        %4843 = vmatprep.subr.bf16.mxu0 0
        %4844 = vmatpush1.bf16.msra.mxu0 %v4825
        %4845 = vmatprep.subr.bf16.mxu0 0
        %4846 = vmatpush1.bf16.msra.mxu0 %v4826
        %4847 = vmatprep.subr.bf16.mxu0 0
        %4848 = vmatpush1.bf16.msra.mxu0 %v4827
        %4849 = vmatprep.subr.bf16.mxu0 0
        %4850 = vmatpush1.bf16.msra.mxu0 %v4828
        %4851 = vmatprep.subr.bf16.mxu0 0
        %4852 = vmatpush1.bf16.msra.mxu0 %v4829
        %4853 = vmatprep.subr.bf16.mxu0 0
        %4854 = vmatpush1.bf16.msra.mxu0 %v4830
        %4855 = vmatprep.subr.bf16.mxu0 0
        %4856 = vmatpush1.bf16.msra.mxu0 0
        %4857 = vmatprep.subr.bf16.mxu0 0
        %4858 = vmatpush1.bf16.msra.mxu0 0
        %4859 = vmatprep.subr.bf16.mxu0 0
        %4860 = vmatpush1.bf16.msra.mxu0 0
        %4861 = vmatprep.subr.bf16.mxu0 0
        %4862 = vmatpush1.bf16.msra.mxu0 0
        %4863 = vmatprep.subr.bf16.mxu0 0
        %4864 = vmatpush1.bf16.msra.mxu0 0
        %4865 = vmatprep.subr.bf16.mxu0 0
        %4866 = vmatpush1.bf16.msra.mxu0 0
        %4867 = vmatprep.subr.bf16.mxu0 0
        %4868 = vmatpush1.bf16.msra.mxu0 0
        %4869 = vmatprep.subr.bf16.mxu0 0
        %4870 = vmatpush1.bf16.msra.mxu0 0
        %4871 = vmatprep.mubr.bf16.mxu0 0
        %4872 = vmatmul.mubr.bf16.gmra.mrb[0].mxu0 %v4770
        %v4873 = vpop.f32.mrb[0].mxu0
        %v4874 = vadd.f32 0.0, %v4873
        %v4875 = vpop.f32.mrb[0].mxu0
        %v4876 = vpop.f32.mrb[0].mxu0
        %v4877 = vadd.f32 0.0, %v4876
        %v4878 = vpop.f32.mrb[0].mxu0
        %4879 = vmatprep.mubr.bf16.mxu0 0
        %4880 = vmatmul.mubr.bf16.gmra.mrb[0].mxu0 %v4771
        %v4881 = vpop.f32.mrb[0].mxu0
        %v4882 = vadd.f32 0.0, %v4881
        %v4883 = vpop.f32.mrb[0].mxu0
        %v4884 = vpop.f32.mrb[0].mxu0
        %v4885 = vadd.f32 0.0, %v4884
        %v4886 = vpop.f32.mrb[0].mxu0
        %4887 = vmatprep.mubr.bf16.mxu0 0
        %4888 = vmatmul.mubr.bf16.gmra.mrb[0].mxu0 %v4772
        %v4889 = vpop.f32.mrb[0].mxu0
        %v4890 = vadd.f32 0.0, %v4889
        %v4891 = vpop.f32.mrb[0].mxu0
        %v4892 = vpop.f32.mrb[0].mxu0
        %v4893 = vadd.f32 0.0, %v4892
        %v4894 = vpop.f32.mrb[0].mxu0
        %4895 = vmatprep.mubr.bf16.mxu0 0
        %4896 = vmatmul.mubr.bf16.gmra.mrb[0].mxu0 %v4773
        %v4897 = vpop.f32.mrb[0].mxu0
        %v4898 = vadd.f32 0.0, %v4897
        %v4899 = vpop.f32.mrb[0].mxu0
        %v4900 = vpop.f32.mrb[0].mxu0
        %v4901 = vadd.f32 0.0, %v4900
        %v4902 = vpop.f32.mrb[0].mxu0
        %4903 = vdwg.mxu0
        %v4904 = vadd.f32 %v4761, %v4874
        %v4905 = vadd.f32 %v4762, %v4877
        %v4906 = vadd.f32 %v4763, %v4882
        %v4907 = vadd.f32 %v4764, %v4885
        %v4908 = vadd.f32 %v4765, %v4890
        %v4909 = vadd.f32 %v4766, %v4893
        %v4910 = vadd.f32 %v4767, %v4898
        %v4911 = vadd.f32 %v4768, %v4901
        %s4912 = scalar_lea.vmem [#allocation6], 144
        %v4913 = vld [vmem:[%s4912] sm:$0xff]
        %v4914 = vld [vmem:[%s4912 + $0x8] sm:$0xff]
        %v4915 = vld [vmem:[%s4912 + $0x10] sm:$0xff]
        %v4916 = vld [vmem:[%s4912 + $0x18] sm:$0xff]
        %s4917 = scalar_lea.vmem [#allocation9], 448
        %v4918 = vld [vmem:[%s4917] sm:$0xf]
        %v4919 = vld [vmem:[%s4917 + $0x4] sm:$0xf]
        %v4920 = vld [vmem:[%s4917 + $0x8] sm:$0xf]
        %v4921 = vld [vmem:[%s4917 + $0xc] sm:$0xf]
        %v4922 = vld [vmem:[%s4917 + $0x10] sm:$0xf]
        %v4923 = vld [vmem:[%s4917 + $0x14] sm:$0xf]
        %v4924 = vld [vmem:[%s4917 + $0x18] sm:$0xf]
        %v4925 = vld [vmem:[%s4917 + $0x1c] sm:$0xf]
        %v4926 = vld [vmem:[%s4917 + $0x20] sm:$0xf]
        %v4927 = vld [vmem:[%s4917 + $0x24] sm:$0xf]
        %v4928 = vld [vmem:[%s4917 + $0x28] sm:$0xf]
        %v4929 = vld [vmem:[%s4917 + $0x2c] sm:$0xf]
        %v4930 = vld [vmem:[%s4917 + $0x30] sm:$0xf]
        %v4931 = vld [vmem:[%s4917 + $0x34] sm:$0xf]
        %v4932 = vld [vmem:[%s4917 + $0x38] sm:$0xf]
        %v4933 = vld [vmem:[%s4917 + $0x3c] sm:$0xf]
        %v4950 = vunpack.c.l.b16 %v4918
        %v4951 = vunpack.c.l.b16 %v4919
        %v4952 = vunpack.c.l.b16 %v4920
        %v4953 = vunpack.c.l.b16 %v4921
        %v4954 = vunpack.c.l.b16 %v4922
        %v4955 = vunpack.c.l.b16 %v4923
        %v4956 = vunpack.c.l.b16 %v4924
        %v4957 = vunpack.c.l.b16 %v4925
        %v4958 = vunpack.c.l.b16 %v4926
        %v4959 = vunpack.c.l.b16 %v4927
        %v4960 = vunpack.c.l.b16 %v4928
        %v4961 = vunpack.c.l.b16 %v4929
        %v4962 = vunpack.c.l.b16 %v4930
        %v4963 = vunpack.c.l.b16 %v4931
        %v4964 = vunpack.c.l.b16 %v4932
        %v4965 = vunpack.c.l.b16 %v4933
        %v4966 = vpack.c.b16 %v4951, %v4950
        %v4967 = vpack.c.b16 %v4953, %v4952
        %v4968 = vpack.c.b16 %v4955, %v4954
        %v4969 = vpack.c.b16 %v4957, %v4956
        %v4970 = vpack.c.b16 %v4959, %v4958
        %v4971 = vpack.c.b16 %v4961, %v4960
        %v4972 = vpack.c.b16 %v4963, %v4962
        %v4973 = vpack.c.b16 %v4965, %v4964
        %4982 = vmatprep.subr.bf16.mxu0 0
        %4983 = vmatpush1.bf16.msra.mxu0 %v4966
        %4984 = vmatprep.subr.bf16.mxu0 0
        %4985 = vmatpush1.bf16.msra.mxu0 %v4967
        %4986 = vmatprep.subr.bf16.mxu0 0
        %4987 = vmatpush1.bf16.msra.mxu0 %v4968
        %4988 = vmatprep.subr.bf16.mxu0 0
        %4989 = vmatpush1.bf16.msra.mxu0 %v4969
        %4990 = vmatprep.subr.bf16.mxu0 0
        %4991 = vmatpush1.bf16.msra.mxu0 %v4970
        %4992 = vmatprep.subr.bf16.mxu0 0
        %4993 = vmatpush1.bf16.msra.mxu0 %v4971
        %4994 = vmatprep.subr.bf16.mxu0 0
        %4995 = vmatpush1.bf16.msra.mxu0 %v4972
        %4996 = vmatprep.subr.bf16.mxu0 0
        %4997 = vmatpush1.bf16.msra.mxu0 %v4973
        %4998 = vmatprep.subr.bf16.mxu0 0
        %4999 = vmatpush1.bf16.msra.mxu0 0
        %5000 = vmatprep.subr.bf16.mxu0 0
        %5001 = vmatpush1.bf16.msra.mxu0 0
        %5002 = vmatprep.subr.bf16.mxu0 0
        %5003 = vmatpush1.bf16.msra.mxu0 0
        %5004 = vmatprep.subr.bf16.mxu0 0
        %5005 = vmatpush1.bf16.msra.mxu0 0
        %5006 = vmatprep.subr.bf16.mxu0 0
        %5007 = vmatpush1.bf16.msra.mxu0 0
        %5008 = vmatprep.subr.bf16.mxu0 0
        %5009 = vmatpush1.bf16.msra.mxu0 0
        %5010 = vmatprep.subr.bf16.mxu0 0
        %5011 = vmatpush1.bf16.msra.mxu0 0
        %5012 = vmatprep.subr.bf16.mxu0 0
        %5013 = vmatpush1.bf16.msra.mxu0 0
        %5014 = vmatprep.mubr.bf16.mxu0 0
        %5015 = vmatmul.mubr.bf16.gmra.mrb[0].mxu0 %v4913
        %v5016 = vpop.f32.mrb[0].mxu0
        %v5017 = vadd.f32 0.0, %v5016
        %v5018 = vpop.f32.mrb[0].mxu0
        %v5019 = vpop.f32.mrb[0].mxu0
        %v5020 = vadd.f32 0.0, %v5019
        %v5021 = vpop.f32.mrb[0].mxu0
        %5022 = vmatprep.mubr.bf16.mxu0 0
        %5023 = vmatmul.mubr.bf16.gmra.mrb[0].mxu0 %v4914
        %v5024 = vpop.f32.mrb[0].mxu0
        %v5025 = vadd.f32 0.0, %v5024
        %v5026 = vpop.f32.mrb[0].mxu0
        %v5027 = vpop.f32.mrb[0].mxu0
        %v5028 = vadd.f32 0.0, %v5027
        %v5029 = vpop.f32.mrb[0].mxu0
        %5030 = vmatprep.mubr.bf16.mxu0 0
        %5031 = vmatmul.mubr.bf16.gmra.mrb[0].mxu0 %v4915
        %v5032 = vpop.f32.mrb[0].mxu0
        %v5033 = vadd.f32 0.0, %v5032
        %v5034 = vpop.f32.mrb[0].mxu0
        %v5035 = vpop.f32.mrb[0].mxu0
        %v5036 = vadd.f32 0.0, %v5035
        %v5037 = vpop.f32.mrb[0].mxu0
        %5038 = vmatprep.mubr.bf16.mxu0 0
        %5039 = vmatmul.mubr.bf16.gmra.mrb[0].mxu0 %v4916
        %v5040 = vpop.f32.mrb[0].mxu0
        %v5041 = vadd.f32 0.0, %v5040
        %v5042 = vpop.f32.mrb[0].mxu0
        %v5043 = vpop.f32.mrb[0].mxu0
        %v5044 = vadd.f32 0.0, %v5043
        %v5045 = vpop.f32.mrb[0].mxu0
        %5046 = vdwg.mxu0
        %v5047 = vadd.f32 %v4904, %v5017
        %v5048 = vadd.f32 %v4905, %v5020
        %v5049 = vadd.f32 %v4906, %v5025
        %v5050 = vadd.f32 %v4907, %v5028
        %v5051 = vadd.f32 %v4908, %v5033
        %v5052 = vadd.f32 %v4909, %v5036
        %v5053 = vadd.f32 %v4910, %v5041
        %v5054 = vadd.f32 %v4911, %v5044
        %s5055 = scalar_lea.vmem [#allocation7], 144
        %v5056 = vld [vmem:[%s5055] sm:$0xff]
        %v5057 = vld [vmem:[%s5055 + $0x8] sm:$0xff]
        %v5058 = vld [vmem:[%s5055 + $0x10] sm:$0xff]
        %v5059 = vld [vmem:[%s5055 + $0x18] sm:$0xff]
        %s5060 = scalar_lea.vmem [#allocation9], 512
        %v5061 = vld [vmem:[%s5060] sm:$0xf]
        %v5062 = vld [vmem:[%s5060 + $0x4] sm:$0xf]
        %v5063 = vld [vmem:[%s5060 + $0x8] sm:$0xf]
        %v5064 = vld [vmem:[%s5060 + $0xc] sm:$0xf]
        %v5065 = vld [vmem:[%s5060 + $0x10] sm:$0xf]
        %v5066 = vld [vmem:[%s5060 + $0x14] sm:$0xf]
        %v5067 = vld [vmem:[%s5060 + $0x18] sm:$0xf]
        %v5068 = vld [vmem:[%s5060 + $0x1c] sm:$0xf]
        %v5069 = vld [vmem:[%s5060 + $0x20] sm:$0xf]
        %v5070 = vld [vmem:[%s5060 + $0x24] sm:$0xf]
        %v5071 = vld [vmem:[%s5060 + $0x28] sm:$0xf]
        %v5072 = vld [vmem:[%s5060 + $0x2c] sm:$0xf]
        %v5073 = vld [vmem:[%s5060 + $0x30] sm:$0xf]
        %v5074 = vld [vmem:[%s5060 + $0x34] sm:$0xf]
        %v5075 = vld [vmem:[%s5060 + $0x38] sm:$0xf]
        %v5076 = vld [vmem:[%s5060 + $0x3c] sm:$0xf]
        %v5093 = vunpack.c.l.b16 %v5061
        %v5094 = vunpack.c.l.b16 %v5062
        %v5095 = vunpack.c.l.b16 %v5063
        %v5096 = vunpack.c.l.b16 %v5064
        %v5097 = vunpack.c.l.b16 %v5065
        %v5098 = vunpack.c.l.b16 %v5066
        %v5099 = vunpack.c.l.b16 %v5067
        %v5100 = vunpack.c.l.b16 %v5068
        %v5101 = vunpack.c.l.b16 %v5069
        %v5102 = vunpack.c.l.b16 %v5070
        %v5103 = vunpack.c.l.b16 %v5071
        %v5104 = vunpack.c.l.b16 %v5072
        %v5105 = vunpack.c.l.b16 %v5073
        %v5106 = vunpack.c.l.b16 %v5074
        %v5107 = vunpack.c.l.b16 %v5075
        %v5108 = vunpack.c.l.b16 %v5076
        %v5109 = vpack.c.b16 %v5094, %v5093
        %v5110 = vpack.c.b16 %v5096, %v5095
        %v5111 = vpack.c.b16 %v5098, %v5097
        %v5112 = vpack.c.b16 %v5100, %v5099
        %v5113 = vpack.c.b16 %v5102, %v5101
        %v5114 = vpack.c.b16 %v5104, %v5103
        %v5115 = vpack.c.b16 %v5106, %v5105
        %v5116 = vpack.c.b16 %v5108, %v5107
        %5125 = vmatprep.subr.bf16.mxu0 0
        %5126 = vmatpush1.bf16.msra.mxu0 %v5109
        %5127 = vmatprep.subr.bf16.mxu0 0
        %5128 = vmatpush1.bf16.msra.mxu0 %v5110
        %5129 = vmatprep.subr.bf16.mxu0 0
        %5130 = vmatpush1.bf16.msra.mxu0 %v5111
        %5131 = vmatprep.subr.bf16.mxu0 0
        %5132 = vmatpush1.bf16.msra.mxu0 %v5112
        %5133 = vmatprep.subr.bf16.mxu0 0
        %5134 = vmatpush1.bf16.msra.mxu0 %v5113
        %5135 = vmatprep.subr.bf16.mxu0 0
        %5136 = vmatpush1.bf16.msra.mxu0 %v5114
        %5137 = vmatprep.subr.bf16.mxu0 0
        %5138 = vmatpush1.bf16.msra.mxu0 %v5115
        %5139 = vmatprep.subr.bf16.mxu0 0
        %5140 = vmatpush1.bf16.msra.mxu0 %v5116
        %5141 = vmatprep.subr.bf16.mxu0 0
        %5142 = vmatpush1.bf16.msra.mxu0 0
        %5143 = vmatprep.subr.bf16.mxu0 0
        %5144 = vmatpush1.bf16.msra.mxu0 0
        %5145 = vmatprep.subr.bf16.mxu0 0
        %5146 = vmatpush1.bf16.msra.mxu0 0
        %5147 = vmatprep.subr.bf16.mxu0 0
        %5148 = vmatpush1.bf16.msra.mxu0 0
        %5149 = vmatprep.subr.bf16.mxu0 0
        %5150 = vmatpush1.bf16.msra.mxu0 0
        %5151 = vmatprep.subr.bf16.mxu0 0
        %5152 = vmatpush1.bf16.msra.mxu0 0
        %5153 = vmatprep.subr.bf16.mxu0 0
        %5154 = vmatpush1.bf16.msra.mxu0 0
        %5155 = vmatprep.subr.bf16.mxu0 0
        %5156 = vmatpush1.bf16.msra.mxu0 0
        %5157 = vmatprep.mubr.bf16.mxu0 0
        %5158 = vmatmul.mubr.bf16.gmra.mrb[0].mxu0 %v5056
        %v5159 = vpop.f32.mrb[0].mxu0
        %v5160 = vadd.f32 0.0, %v5159
        %v5161 = vpop.f32.mrb[0].mxu0
        %v5162 = vpop.f32.mrb[0].mxu0
        %v5163 = vadd.f32 0.0, %v5162
        %v5164 = vpop.f32.mrb[0].mxu0
        %5165 = vmatprep.mubr.bf16.mxu0 0
        %5166 = vmatmul.mubr.bf16.gmra.mrb[0].mxu0 %v5057
        %v5167 = vpop.f32.mrb[0].mxu0
        %v5168 = vadd.f32 0.0, %v5167
        %v5169 = vpop.f32.mrb[0].mxu0
        %v5170 = vpop.f32.mrb[0].mxu0
        %v5171 = vadd.f32 0.0, %v5170
        %v5172 = vpop.f32.mrb[0].mxu0
        %5173 = vmatprep.mubr.bf16.mxu0 0
        %5174 = vmatmul.mubr.bf16.gmra.mrb[0].mxu0 %v5058
        %v5175 = vpop.f32.mrb[0].mxu0
        %v5176 = vadd.f32 0.0, %v5175
        %v5177 = vpop.f32.mrb[0].mxu0
        %v5178 = vpop.f32.mrb[0].mxu0
        %v5179 = vadd.f32 0.0, %v5178
        %v5180 = vpop.f32.mrb[0].mxu0
        %5181 = vmatprep.mubr.bf16.mxu0 0
        %5182 = vmatmul.mubr.bf16.gmra.mrb[0].mxu0 %v5059
        %v5183 = vpop.f32.mrb[0].mxu0
        %v5184 = vadd.f32 0.0, %v5183
        %v5185 = vpop.f32.mrb[0].mxu0
        %v5186 = vpop.f32.mrb[0].mxu0
        %v5187 = vadd.f32 0.0, %v5186
        %v5188 = vpop.f32.mrb[0].mxu0
        %5189 = vdwg.mxu0
        %v5190 = vadd.f32 %v5047, %v5160
        %v5191 = vadd.f32 %v5048, %v5163
        %v5192 = vadd.f32 %v5049, %v5168
        %v5193 = vadd.f32 %v5050, %v5171
        %v5194 = vadd.f32 %v5051, %v5176
        %v5195 = vadd.f32 %v5052, %v5179
        %v5196 = vadd.f32 %v5053, %v5184
        %v5197 = vadd.f32 %v5054, %v5187
        %v5198 = vld [vmem:[#allocation4] sm:$0xff]
        %v5199 = vld [vmem:[#allocation4 + $0x8] sm:$0xff]
        %v5200 = vld [vmem:[#allocation4 + $0x10] sm:$0xff]
        %v5201 = vld [vmem:[#allocation4 + $0x18] sm:$0xff]
        %s5202 = scalar_lea.vmem [#allocation9], 576
        %v5203 = vld [vmem:[%s5202] sm:$0xf]
        %v5204 = vld [vmem:[%s5202 + $0x4] sm:$0xf]
        %v5205 = vld [vmem:[%s5202 + $0x8] sm:$0xf]
        %v5206 = vld [vmem:[%s5202 + $0xc] sm:$0xf]
        %v5207 = vld [vmem:[%s5202 + $0x10] sm:$0xf]
        %v5208 = vld [vmem:[%s5202 + $0x14] sm:$0xf]
        %v5209 = vld [vmem:[%s5202 + $0x18] sm:$0xf]
        %v5210 = vld [vmem:[%s5202 + $0x1c] sm:$0xf]
        %v5211 = vld [vmem:[%s5202 + $0x20] sm:$0xf]
        %v5212 = vld [vmem:[%s5202 + $0x24] sm:$0xf]
        %v5213 = vld [vmem:[%s5202 + $0x28] sm:$0xf]
        %v5214 = vld [vmem:[%s5202 + $0x2c] sm:$0xf]
        %v5215 = vld [vmem:[%s5202 + $0x30] sm:$0xf]
        %v5216 = vld [vmem:[%s5202 + $0x34] sm:$0xf]
        %v5217 = vld [vmem:[%s5202 + $0x38] sm:$0xf]
        %v5218 = vld [vmem:[%s5202 + $0x3c] sm:$0xf]
        %v5235 = vunpack.c.l.b16 %v5203
        %v5236 = vunpack.c.l.b16 %v5204
        %v5237 = vunpack.c.l.b16 %v5205
        %v5238 = vunpack.c.l.b16 %v5206
        %v5239 = vunpack.c.l.b16 %v5207
        %v5240 = vunpack.c.l.b16 %v5208
        %v5241 = vunpack.c.l.b16 %v5209
        %v5242 = vunpack.c.l.b16 %v5210
        %v5243 = vunpack.c.l.b16 %v5211
        %v5244 = vunpack.c.l.b16 %v5212
        %v5245 = vunpack.c.l.b16 %v5213
        %v5246 = vunpack.c.l.b16 %v5214
        %v5247 = vunpack.c.l.b16 %v5215
        %v5248 = vunpack.c.l.b16 %v5216
        %v5249 = vunpack.c.l.b16 %v5217
        %v5250 = vunpack.c.l.b16 %v5218
        %v5251 = vpack.c.b16 %v5236, %v5235
        %v5252 = vpack.c.b16 %v5238, %v5237
        %v5253 = vpack.c.b16 %v5240, %v5239
        %v5254 = vpack.c.b16 %v5242, %v5241
        %v5255 = vpack.c.b16 %v5244, %v5243
        %v5256 = vpack.c.b16 %v5246, %v5245
        %v5257 = vpack.c.b16 %v5248, %v5247
        %v5258 = vpack.c.b16 %v5250, %v5249
        %5267 = vmatprep.subr.bf16.mxu0 0
        %5268 = vmatpush1.bf16.msra.mxu0 %v5251
        %5269 = vmatprep.subr.bf16.mxu0 0
        %5270 = vmatpush1.bf16.msra.mxu0 %v5252
        %5271 = vmatprep.subr.bf16.mxu0 0
        %5272 = vmatpush1.bf16.msra.mxu0 %v5253
        %5273 = vmatprep.subr.bf16.mxu0 0
        %5274 = vmatpush1.bf16.msra.mxu0 %v5254
        %5275 = vmatprep.subr.bf16.mxu0 0
        %5276 = vmatpush1.bf16.msra.mxu0 %v5255
        %5277 = vmatprep.subr.bf16.mxu0 0
        %5278 = vmatpush1.bf16.msra.mxu0 %v5256
        %5279 = vmatprep.subr.bf16.mxu0 0
        %5280 = vmatpush1.bf16.msra.mxu0 %v5257
        %5281 = vmatprep.subr.bf16.mxu0 0
        %5282 = vmatpush1.bf16.msra.mxu0 %v5258
        %5283 = vmatprep.subr.bf16.mxu0 0
        %5284 = vmatpush1.bf16.msra.mxu0 0
        %5285 = vmatprep.subr.bf16.mxu0 0
        %5286 = vmatpush1.bf16.msra.mxu0 0
        %5287 = vmatprep.subr.bf16.mxu0 0
        %5288 = vmatpush1.bf16.msra.mxu0 0
        %5289 = vmatprep.subr.bf16.mxu0 0
        %5290 = vmatpush1.bf16.msra.mxu0 0
        %5291 = vmatprep.subr.bf16.mxu0 0
        %5292 = vmatpush1.bf16.msra.mxu0 0
        %5293 = vmatprep.subr.bf16.mxu0 0
        %5294 = vmatpush1.bf16.msra.mxu0 0
        %5295 = vmatprep.subr.bf16.mxu0 0
        %5296 = vmatpush1.bf16.msra.mxu0 0
        %5297 = vmatprep.subr.bf16.mxu0 0
        %5298 = vmatpush1.bf16.msra.mxu0 0
        %5299 = vmatprep.mubr.bf16.mxu0 0
        %5300 = vmatmul.mubr.bf16.gmra.mrb[0].mxu0 %v5198
        %v5301 = vpop.f32.mrb[0].mxu0
        %v5302 = vadd.f32 0.0, %v5301
        %v5303 = vpop.f32.mrb[0].mxu0
        %v5304 = vpop.f32.mrb[0].mxu0
        %v5305 = vadd.f32 0.0, %v5304
        %v5306 = vpop.f32.mrb[0].mxu0
        %5307 = vmatprep.mubr.bf16.mxu0 0
        %5308 = vmatmul.mubr.bf16.gmra.mrb[0].mxu0 %v5199
        %v5309 = vpop.f32.mrb[0].mxu0
        %v5310 = vadd.f32 0.0, %v5309
        %v5311 = vpop.f32.mrb[0].mxu0
        %v5312 = vpop.f32.mrb[0].mxu0
        %v5313 = vadd.f32 0.0, %v5312
        %v5314 = vpop.f32.mrb[0].mxu0
        %5315 = vmatprep.mubr.bf16.mxu0 0
        %5316 = vmatmul.mubr.bf16.gmra.mrb[0].mxu0 %v5200
        %v5317 = vpop.f32.mrb[0].mxu0
        %v5318 = vadd.f32 0.0, %v5317
        %v5319 = vpop.f32.mrb[0].mxu0
        %v5320 = vpop.f32.mrb[0].mxu0
        %v5321 = vadd.f32 0.0, %v5320
        %v5322 = vpop.f32.mrb[0].mxu0
        %5323 = vmatprep.mubr.bf16.mxu0 0
        %5324 = vmatmul.mubr.bf16.gmra.mrb[0].mxu0 %v5201
        %v5325 = vpop.f32.mrb[0].mxu0
        %v5326 = vadd.f32 0.0, %v5325
        %v5327 = vpop.f32.mrb[0].mxu0
        %v5328 = vpop.f32.mrb[0].mxu0
        %v5329 = vadd.f32 0.0, %v5328
        %v5330 = vpop.f32.mrb[0].mxu0
        %5331 = vdwg.mxu0
        %v5332 = vadd.f32 %v5190, %v5302
        %v5333 = vadd.f32 %v5191, %v5305
        %v5334 = vadd.f32 %v5192, %v5310
        %v5335 = vadd.f32 %v5193, %v5313
        %v5336 = vadd.f32 %v5194, %v5318
        %v5337 = vadd.f32 %v5195, %v5321
        %v5338 = vadd.f32 %v5196, %v5326
        %v5339 = vadd.f32 %v5197, %v5329
        %v5340 = vld [vmem:[#allocation6] sm:$0xff]
        %v5341 = vld [vmem:[#allocation6 + $0x8] sm:$0xff]
        %v5342 = vld [vmem:[#allocation6 + $0x10] sm:$0xff]
        %v5343 = vld [vmem:[#allocation6 + $0x18] sm:$0xff]
        %s5344 = scalar_lea.vmem [#allocation9], 640
        %v5345 = vld [vmem:[%s5344] sm:$0xf]
        %v5346 = vld [vmem:[%s5344 + $0x4] sm:$0xf]
        %v5347 = vld [vmem:[%s5344 + $0x8] sm:$0xf]
        %v5348 = vld [vmem:[%s5344 + $0xc] sm:$0xf]
        %v5349 = vld [vmem:[%s5344 + $0x10] sm:$0xf]
        %v5350 = vld [vmem:[%s5344 + $0x14] sm:$0xf]
        %v5351 = vld [vmem:[%s5344 + $0x18] sm:$0xf]
        %v5352 = vld [vmem:[%s5344 + $0x1c] sm:$0xf]
        %v5353 = vld [vmem:[%s5344 + $0x20] sm:$0xf]
        %v5354 = vld [vmem:[%s5344 + $0x24] sm:$0xf]
        %v5355 = vld [vmem:[%s5344 + $0x28] sm:$0xf]
        %v5356 = vld [vmem:[%s5344 + $0x2c] sm:$0xf]
        %v5357 = vld [vmem:[%s5344 + $0x30] sm:$0xf]
        %v5358 = vld [vmem:[%s5344 + $0x34] sm:$0xf]
        %v5359 = vld [vmem:[%s5344 + $0x38] sm:$0xf]
        %v5360 = vld [vmem:[%s5344 + $0x3c] sm:$0xf]
        %v5377 = vunpack.c.l.b16 %v5345
        %v5378 = vunpack.c.l.b16 %v5346
        %v5379 = vunpack.c.l.b16 %v5347
        %v5380 = vunpack.c.l.b16 %v5348
        %v5381 = vunpack.c.l.b16 %v5349
        %v5382 = vunpack.c.l.b16 %v5350
        %v5383 = vunpack.c.l.b16 %v5351
        %v5384 = vunpack.c.l.b16 %v5352
        %v5385 = vunpack.c.l.b16 %v5353
        %v5386 = vunpack.c.l.b16 %v5354
        %v5387 = vunpack.c.l.b16 %v5355
        %v5388 = vunpack.c.l.b16 %v5356
        %v5389 = vunpack.c.l.b16 %v5357
        %v5390 = vunpack.c.l.b16 %v5358
        %v5391 = vunpack.c.l.b16 %v5359
        %v5392 = vunpack.c.l.b16 %v5360
        %v5393 = vpack.c.b16 %v5378, %v5377
        %v5394 = vpack.c.b16 %v5380, %v5379
        %v5395 = vpack.c.b16 %v5382, %v5381
        %v5396 = vpack.c.b16 %v5384, %v5383
        %v5397 = vpack.c.b16 %v5386, %v5385
        %v5398 = vpack.c.b16 %v5388, %v5387
        %v5399 = vpack.c.b16 %v5390, %v5389
        %v5400 = vpack.c.b16 %v5392, %v5391
        %5409 = vmatprep.subr.bf16.mxu0 0
        %5410 = vmatpush1.bf16.msra.mxu0 %v5393
        %5411 = vmatprep.subr.bf16.mxu0 0
        %5412 = vmatpush1.bf16.msra.mxu0 %v5394
        %5413 = vmatprep.subr.bf16.mxu0 0
        %5414 = vmatpush1.bf16.msra.mxu0 %v5395
        %5415 = vmatprep.subr.bf16.mxu0 0
        %5416 = vmatpush1.bf16.msra.mxu0 %v5396
        %5417 = vmatprep.subr.bf16.mxu0 0
        %5418 = vmatpush1.bf16.msra.mxu0 %v5397
        %5419 = vmatprep.subr.bf16.mxu0 0
        %5420 = vmatpush1.bf16.msra.mxu0 %v5398
        %5421 = vmatprep.subr.bf16.mxu0 0
        %5422 = vmatpush1.bf16.msra.mxu0 %v5399
        %5423 = vmatprep.subr.bf16.mxu0 0
        %5424 = vmatpush1.bf16.msra.mxu0 %v5400
        %5425 = vmatprep.subr.bf16.mxu0 0
        %5426 = vmatpush1.bf16.msra.mxu0 0
        %5427 = vmatprep.subr.bf16.mxu0 0
        %5428 = vmatpush1.bf16.msra.mxu0 0
        %5429 = vmatprep.subr.bf16.mxu0 0
        %5430 = vmatpush1.bf16.msra.mxu0 0
        %5431 = vmatprep.subr.bf16.mxu0 0
        %5432 = vmatpush1.bf16.msra.mxu0 0
        %5433 = vmatprep.subr.bf16.mxu0 0
        %5434 = vmatpush1.bf16.msra.mxu0 0
        %5435 = vmatprep.subr.bf16.mxu0 0
        %5436 = vmatpush1.bf16.msra.mxu0 0
        %5437 = vmatprep.subr.bf16.mxu0 0
        %5438 = vmatpush1.bf16.msra.mxu0 0
        %5439 = vmatprep.subr.bf16.mxu0 0
        %5440 = vmatpush1.bf16.msra.mxu0 0
        %5441 = vmatprep.mubr.bf16.mxu0 0
        %5442 = vmatmul.mubr.bf16.gmra.mrb[0].mxu0 %v5340
        %v5443 = vpop.f32.mrb[0].mxu0
        %v5444 = vadd.f32 0.0, %v5443
        %v5445 = vpop.f32.mrb[0].mxu0
        %v5446 = vpop.f32.mrb[0].mxu0
        %v5447 = vadd.f32 0.0, %v5446
        %v5448 = vpop.f32.mrb[0].mxu0
        %5449 = vmatprep.mubr.bf16.mxu0 0
        %5450 = vmatmul.mubr.bf16.gmra.mrb[0].mxu0 %v5341
        %v5451 = vpop.f32.mrb[0].mxu0
        %v5452 = vadd.f32 0.0, %v5451
        %v5453 = vpop.f32.mrb[0].mxu0
        %v5454 = vpop.f32.mrb[0].mxu0
        %v5455 = vadd.f32 0.0, %v5454
        %v5456 = vpop.f32.mrb[0].mxu0
        %5457 = vmatprep.mubr.bf16.mxu0 0
        %5458 = vmatmul.mubr.bf16.gmra.mrb[0].mxu0 %v5342
        %v5459 = vpop.f32.mrb[0].mxu0
        %v5460 = vadd.f32 0.0, %v5459
        %v5461 = vpop.f32.mrb[0].mxu0
        %v5462 = vpop.f32.mrb[0].mxu0
        %v5463 = vadd.f32 0.0, %v5462
        %v5464 = vpop.f32.mrb[0].mxu0
        %5465 = vmatprep.mubr.bf16.mxu0 0
        %5466 = vmatmul.mubr.bf16.gmra.mrb[0].mxu0 %v5343
        %v5467 = vpop.f32.mrb[0].mxu0
        %v5468 = vadd.f32 0.0, %v5467
        %v5469 = vpop.f32.mrb[0].mxu0
        %v5470 = vpop.f32.mrb[0].mxu0
        %v5471 = vadd.f32 0.0, %v5470
        %v5472 = vpop.f32.mrb[0].mxu0
        %5473 = vdwg.mxu0
        %v5474 = vadd.f32 %v5332, %v5444
        %v5475 = vadd.f32 %v5333, %v5447
        %v5476 = vadd.f32 %v5334, %v5452
        %v5477 = vadd.f32 %v5335, %v5455
        %v5478 = vadd.f32 %v5336, %v5460
        %v5479 = vadd.f32 %v5337, %v5463
        %v5480 = vadd.f32 %v5338, %v5468
        %v5481 = vadd.f32 %v5339, %v5471
        %v5482 = vld [vmem:[#allocation8] sm:$0xff]
        %v5483 = vld [vmem:[#allocation8 + $0x8] sm:$0xff]
        %v5484 = vld [vmem:[#allocation8 + $0x10] sm:$0xff]
        %v5485 = vld [vmem:[#allocation8 + $0x18] sm:$0xff]
        %s5486 = scalar_lea.vmem [#allocation9], 704
        %v5487 = vld [vmem:[%s5486] sm:$0xf]
        %v5488 = vld [vmem:[%s5486 + $0x4] sm:$0xf]
        %v5489 = vld [vmem:[%s5486 + $0x8] sm:$0xf]
        %v5490 = vld [vmem:[%s5486 + $0xc] sm:$0xf]
        %v5491 = vld [vmem:[%s5486 + $0x10] sm:$0xf]
        %v5492 = vld [vmem:[%s5486 + $0x14] sm:$0xf]
        %v5493 = vld [vmem:[%s5486 + $0x18] sm:$0xf]
        %v5494 = vld [vmem:[%s5486 + $0x1c] sm:$0xf]
        %v5495 = vld [vmem:[%s5486 + $0x20] sm:$0xf]
        %v5496 = vld [vmem:[%s5486 + $0x24] sm:$0xf]
        %v5497 = vld [vmem:[%s5486 + $0x28] sm:$0xf]
        %v5498 = vld [vmem:[%s5486 + $0x2c] sm:$0xf]
        %v5499 = vld [vmem:[%s5486 + $0x30] sm:$0xf]
        %v5500 = vld [vmem:[%s5486 + $0x34] sm:$0xf]
        %v5501 = vld [vmem:[%s5486 + $0x38] sm:$0xf]
        %v5502 = vld [vmem:[%s5486 + $0x3c] sm:$0xf]
        %v5519 = vunpack.c.l.b16 %v5487
        %v5520 = vunpack.c.l.b16 %v5488
        %v5521 = vunpack.c.l.b16 %v5489
        %v5522 = vunpack.c.l.b16 %v5490
        %v5523 = vunpack.c.l.b16 %v5491
        %v5524 = vunpack.c.l.b16 %v5492
        %v5525 = vunpack.c.l.b16 %v5493
        %v5526 = vunpack.c.l.b16 %v5494
        %v5527 = vunpack.c.l.b16 %v5495
        %v5528 = vunpack.c.l.b16 %v5496
        %v5529 = vunpack.c.l.b16 %v5497
        %v5530 = vunpack.c.l.b16 %v5498
        %v5531 = vunpack.c.l.b16 %v5499
        %v5532 = vunpack.c.l.b16 %v5500
        %v5533 = vunpack.c.l.b16 %v5501
        %v5534 = vunpack.c.l.b16 %v5502
        %v5535 = vpack.c.b16 %v5520, %v5519
        %v5536 = vpack.c.b16 %v5522, %v5521
        %v5537 = vpack.c.b16 %v5524, %v5523
        %v5538 = vpack.c.b16 %v5526, %v5525
        %v5539 = vpack.c.b16 %v5528, %v5527
        %v5540 = vpack.c.b16 %v5530, %v5529
        %v5541 = vpack.c.b16 %v5532, %v5531
        %v5542 = vpack.c.b16 %v5534, %v5533
        %5551 = vmatprep.subr.bf16.mxu0 0
        %5552 = vmatpush1.bf16.msra.mxu0 %v5535
        %5553 = vmatprep.subr.bf16.mxu0 0
        %5554 = vmatpush1.bf16.msra.mxu0 %v5536
        %5555 = vmatprep.subr.bf16.mxu0 0
        %5556 = vmatpush1.bf16.msra.mxu0 %v5537
        %5557 = vmatprep.subr.bf16.mxu0 0
        %5558 = vmatpush1.bf16.msra.mxu0 %v5538
        %5559 = vmatprep.subr.bf16.mxu0 0
        %5560 = vmatpush1.bf16.msra.mxu0 %v5539
        %5561 = vmatprep.subr.bf16.mxu0 0
        %5562 = vmatpush1.bf16.msra.mxu0 %v5540
        %5563 = vmatprep.subr.bf16.mxu0 0
        %5564 = vmatpush1.bf16.msra.mxu0 %v5541
        %5565 = vmatprep.subr.bf16.mxu0 0
        %5566 = vmatpush1.bf16.msra.mxu0 %v5542
        %5567 = vmatprep.subr.bf16.mxu0 0
        %5568 = vmatpush1.bf16.msra.mxu0 0
        %5569 = vmatprep.subr.bf16.mxu0 0
        %5570 = vmatpush1.bf16.msra.mxu0 0
        %5571 = vmatprep.subr.bf16.mxu0 0
        %5572 = vmatpush1.bf16.msra.mxu0 0
        %5573 = vmatprep.subr.bf16.mxu0 0
        %5574 = vmatpush1.bf16.msra.mxu0 0
        %5575 = vmatprep.subr.bf16.mxu0 0
        %5576 = vmatpush1.bf16.msra.mxu0 0
        %5577 = vmatprep.subr.bf16.mxu0 0
        %5578 = vmatpush1.bf16.msra.mxu0 0
        %5579 = vmatprep.subr.bf16.mxu0 0
        %5580 = vmatpush1.bf16.msra.mxu0 0
        %5581 = vmatprep.subr.bf16.mxu0 0
        %5582 = vmatpush1.bf16.msra.mxu0 0
        %5583 = vmatprep.mubr.bf16.mxu0 0
        %5584 = vmatmul.mubr.bf16.gmra.mrb[0].mxu0 %v5482
        %v5585 = vpop.f32.mrb[0].mxu0
        %v5586 = vadd.f32 0.0, %v5585
        %v5587 = vpop.f32.mrb[0].mxu0
        %v5588 = vpop.f32.mrb[0].mxu0
        %v5589 = vadd.f32 0.0, %v5588
        %v5590 = vpop.f32.mrb[0].mxu0
        %5591 = vmatprep.mubr.bf16.mxu0 0
        %5592 = vmatmul.mubr.bf16.gmra.mrb[0].mxu0 %v5483
        %v5593 = vpop.f32.mrb[0].mxu0
        %v5594 = vadd.f32 0.0, %v5593
        %v5595 = vpop.f32.mrb[0].mxu0
        %v5596 = vpop.f32.mrb[0].mxu0
        %v5597 = vadd.f32 0.0, %v5596
        %v5598 = vpop.f32.mrb[0].mxu0
        %5599 = vmatprep.mubr.bf16.mxu0 0
        %5600 = vmatmul.mubr.bf16.gmra.mrb[0].mxu0 %v5484
        %v5601 = vpop.f32.mrb[0].mxu0
        %v5602 = vadd.f32 0.0, %v5601
        %v5603 = vpop.f32.mrb[0].mxu0
        %v5604 = vpop.f32.mrb[0].mxu0
        %v5605 = vadd.f32 0.0, %v5604
        %v5606 = vpop.f32.mrb[0].mxu0
        %5607 = vmatprep.mubr.bf16.mxu0 0
        %5608 = vmatmul.mubr.bf16.gmra.mrb[0].mxu0 %v5485
        %v5609 = vpop.f32.mrb[0].mxu0
        %v5610 = vadd.f32 0.0, %v5609
        %v5611 = vpop.f32.mrb[0].mxu0
        %v5612 = vpop.f32.mrb[0].mxu0
        %v5613 = vadd.f32 0.0, %v5612
        %v5614 = vpop.f32.mrb[0].mxu0
        %5615 = vdwg.mxu0
        %v5616 = vadd.f32 %v5474, %v5586
        %v5617 = vadd.f32 %v5475, %v5589
        %v5618 = vadd.f32 %v5476, %v5594
        %v5619 = vadd.f32 %v5477, %v5597
        %v5620 = vadd.f32 %v5478, %v5602
        %v5621 = vadd.f32 %v5479, %v5605
        %v5622 = vadd.f32 %v5480, %v5610
        %v5623 = vadd.f32 %v5481, %v5613
        %s5624 = scalar_lea.vmem [#allocation4], 96
        %v5625 = vld [vmem:[%s5624] sm:$0xff]
        %v5626 = vld [vmem:[%s5624 + $0x8] sm:$0xff]
        %v5627 = vld [vmem:[%s5624 + $0x10] sm:$0xff]
        %v5628 = vld [vmem:[%s5624 + $0x18] sm:$0xff]
        %s5629 = scalar_lea.vmem [#allocation9], 768
        %v5630 = vld [vmem:[%s5629] sm:$0xf]
        %v5631 = vld [vmem:[%s5629 + $0x4] sm:$0xf]
        %v5632 = vld [vmem:[%s5629 + $0x8] sm:$0xf]
        %v5633 = vld [vmem:[%s5629 + $0xc] sm:$0xf]
        %v5634 = vld [vmem:[%s5629 + $0x10] sm:$0xf]
        %v5635 = vld [vmem:[%s5629 + $0x14] sm:$0xf]
        %v5636 = vld [vmem:[%s5629 + $0x18] sm:$0xf]
        %v5637 = vld [vmem:[%s5629 + $0x1c] sm:$0xf]
        %v5638 = vld [vmem:[%s5629 + $0x20] sm:$0xf]
        %v5639 = vld [vmem:[%s5629 + $0x24] sm:$0xf]
        %v5640 = vld [vmem:[%s5629 + $0x28] sm:$0xf]
        %v5641 = vld [vmem:[%s5629 + $0x2c] sm:$0xf]
        %v5642 = vld [vmem:[%s5629 + $0x30] sm:$0xf]
        %v5643 = vld [vmem:[%s5629 + $0x34] sm:$0xf]
        %v5644 = vld [vmem:[%s5629 + $0x38] sm:$0xf]
        %v5645 = vld [vmem:[%s5629 + $0x3c] sm:$0xf]
        %v5662 = vunpack.c.l.b16 %v5630
        %v5663 = vunpack.c.l.b16 %v5631
        %v5664 = vunpack.c.l.b16 %v5632
        %v5665 = vunpack.c.l.b16 %v5633
        %v5666 = vunpack.c.l.b16 %v5634
        %v5667 = vunpack.c.l.b16 %v5635
        %v5668 = vunpack.c.l.b16 %v5636
        %v5669 = vunpack.c.l.b16 %v5637
        %v5670 = vunpack.c.l.b16 %v5638
        %v5671 = vunpack.c.l.b16 %v5639
        %v5672 = vunpack.c.l.b16 %v5640
        %v5673 = vunpack.c.l.b16 %v5641
        %v5674 = vunpack.c.l.b16 %v5642
        %v5675 = vunpack.c.l.b16 %v5643
        %v5676 = vunpack.c.l.b16 %v5644
        %v5677 = vunpack.c.l.b16 %v5645
        %v5678 = vpack.c.b16 %v5663, %v5662
        %v5679 = vpack.c.b16 %v5665, %v5664
        %v5680 = vpack.c.b16 %v5667, %v5666
        %v5681 = vpack.c.b16 %v5669, %v5668
        %v5682 = vpack.c.b16 %v5671, %v5670
        %v5683 = vpack.c.b16 %v5673, %v5672
        %v5684 = vpack.c.b16 %v5675, %v5674
        %v5685 = vpack.c.b16 %v5677, %v5676
        %5694 = vmatprep.subr.bf16.mxu0 0
        %5695 = vmatpush1.bf16.msra.mxu0 %v5678
        %5696 = vmatprep.subr.bf16.mxu0 0
        %5697 = vmatpush1.bf16.msra.mxu0 %v5679
        %5698 = vmatprep.subr.bf16.mxu0 0
        %5699 = vmatpush1.bf16.msra.mxu0 %v5680
        %5700 = vmatprep.subr.bf16.mxu0 0
        %5701 = vmatpush1.bf16.msra.mxu0 %v5681
        %5702 = vmatprep.subr.bf16.mxu0 0
        %5703 = vmatpush1.bf16.msra.mxu0 %v5682
        %5704 = vmatprep.subr.bf16.mxu0 0
        %5705 = vmatpush1.bf16.msra.mxu0 %v5683
        %5706 = vmatprep.subr.bf16.mxu0 0
        %5707 = vmatpush1.bf16.msra.mxu0 %v5684
        %5708 = vmatprep.subr.bf16.mxu0 0
        %5709 = vmatpush1.bf16.msra.mxu0 %v5685
        %5710 = vmatprep.subr.bf16.mxu0 0
        %5711 = vmatpush1.bf16.msra.mxu0 0
        %5712 = vmatprep.subr.bf16.mxu0 0
        %5713 = vmatpush1.bf16.msra.mxu0 0
        %5714 = vmatprep.subr.bf16.mxu0 0
        %5715 = vmatpush1.bf16.msra.mxu0 0
        %5716 = vmatprep.subr.bf16.mxu0 0
        %5717 = vmatpush1.bf16.msra.mxu0 0
        %5718 = vmatprep.subr.bf16.mxu0 0
        %5719 = vmatpush1.bf16.msra.mxu0 0
        %5720 = vmatprep.subr.bf16.mxu0 0
        %5721 = vmatpush1.bf16.msra.mxu0 0
        %5722 = vmatprep.subr.bf16.mxu0 0
        %5723 = vmatpush1.bf16.msra.mxu0 0
        %5724 = vmatprep.subr.bf16.mxu0 0
        %5725 = vmatpush1.bf16.msra.mxu0 0
        %5726 = vmatprep.mubr.bf16.mxu0 0
        %5727 = vmatmul.mubr.bf16.gmra.mrb[0].mxu0 %v5625
        %v5728 = vpop.f32.mrb[0].mxu0
        %v5729 = vadd.f32 0.0, %v5728
        %v5730 = vpop.f32.mrb[0].mxu0
        %v5731 = vpop.f32.mrb[0].mxu0
        %v5732 = vadd.f32 0.0, %v5731
        %v5733 = vpop.f32.mrb[0].mxu0
        %5734 = vmatprep.mubr.bf16.mxu0 0
        %5735 = vmatmul.mubr.bf16.gmra.mrb[0].mxu0 %v5626
        %v5736 = vpop.f32.mrb[0].mxu0
        %v5737 = vadd.f32 0.0, %v5736
        %v5738 = vpop.f32.mrb[0].mxu0
        %v5739 = vpop.f32.mrb[0].mxu0
        %v5740 = vadd.f32 0.0, %v5739
        %v5741 = vpop.f32.mrb[0].mxu0
        %5742 = vmatprep.mubr.bf16.mxu0 0
        %5743 = vmatmul.mubr.bf16.gmra.mrb[0].mxu0 %v5627
        %v5744 = vpop.f32.mrb[0].mxu0
        %v5745 = vadd.f32 0.0, %v5744
        %v5746 = vpop.f32.mrb[0].mxu0
        %v5747 = vpop.f32.mrb[0].mxu0
        %v5748 = vadd.f32 0.0, %v5747
        %v5749 = vpop.f32.mrb[0].mxu0
        %5750 = vmatprep.mubr.bf16.mxu0 0
        %5751 = vmatmul.mubr.bf16.gmra.mrb[0].mxu0 %v5628
        %v5752 = vpop.f32.mrb[0].mxu0
        %v5753 = vadd.f32 0.0, %v5752
        %v5754 = vpop.f32.mrb[0].mxu0
        %v5755 = vpop.f32.mrb[0].mxu0
        %v5756 = vadd.f32 0.0, %v5755
        %v5757 = vpop.f32.mrb[0].mxu0
        %5758 = vdwg.mxu0
        %v5759 = vadd.f32 %v5616, %v5729
        %v5760 = vadd.f32 %v5617, %v5732
        %v5761 = vadd.f32 %v5618, %v5737
        %v5762 = vadd.f32 %v5619, %v5740
        %v5763 = vadd.f32 %v5620, %v5745
        %v5764 = vadd.f32 %v5621, %v5748
        %v5765 = vadd.f32 %v5622, %v5753
        %v5766 = vadd.f32 %v5623, %v5756
        %s5767 = scalar_lea.vmem [#allocation9], 832
        %v5768 = vld [vmem:[%s5767] sm:$0xf]
        %v5769 = vld [vmem:[%s5767 + $0x4] sm:$0xf]
        %v5770 = vld [vmem:[%s5767 + $0x8] sm:$0xf]
        %v5771 = vld [vmem:[%s5767 + $0xc] sm:$0xf]
        %v5772 = vld [vmem:[%s5767 + $0x10] sm:$0xf]
        %v5773 = vld [vmem:[%s5767 + $0x14] sm:$0xf]
        %v5774 = vld [vmem:[%s5767 + $0x18] sm:$0xf]
        %v5775 = vld [vmem:[%s5767 + $0x1c] sm:$0xf]
        %v5776 = vld [vmem:[%s5767 + $0x20] sm:$0xf]
        %v5777 = vld [vmem:[%s5767 + $0x24] sm:$0xf]
        %v5778 = vld [vmem:[%s5767 + $0x28] sm:$0xf]
        %v5779 = vld [vmem:[%s5767 + $0x2c] sm:$0xf]
        %v5780 = vld [vmem:[%s5767 + $0x30] sm:$0xf]
        %v5781 = vld [vmem:[%s5767 + $0x34] sm:$0xf]
        %v5782 = vld [vmem:[%s5767 + $0x38] sm:$0xf]
        %v5783 = vld [vmem:[%s5767 + $0x3c] sm:$0xf]
        %v5800 = vunpack.c.l.b16 %v5768
        %v5801 = vunpack.c.l.b16 %v5769
        %v5802 = vunpack.c.l.b16 %v5770
        %v5803 = vunpack.c.l.b16 %v5771
        %v5804 = vunpack.c.l.b16 %v5772
        %v5805 = vunpack.c.l.b16 %v5773
        %v5806 = vunpack.c.l.b16 %v5774
        %v5807 = vunpack.c.l.b16 %v5775
        %v5808 = vunpack.c.l.b16 %v5776
        %v5809 = vunpack.c.l.b16 %v5777
        %v5810 = vunpack.c.l.b16 %v5778
        %v5811 = vunpack.c.l.b16 %v5779
        %v5812 = vunpack.c.l.b16 %v5780
        %v5813 = vunpack.c.l.b16 %v5781
        %v5814 = vunpack.c.l.b16 %v5782
        %v5815 = vunpack.c.l.b16 %v5783
        %v5816 = vpack.c.b16 %v5801, %v5800
        %v5817 = vpack.c.b16 %v5803, %v5802
        %v5818 = vpack.c.b16 %v5805, %v5804
        %v5819 = vpack.c.b16 %v5807, %v5806
        %v5820 = vpack.c.b16 %v5809, %v5808
        %v5821 = vpack.c.b16 %v5811, %v5810
        %v5822 = vpack.c.b16 %v5813, %v5812
        %v5823 = vpack.c.b16 %v5815, %v5814
        %5832 = vmatprep.subr.bf16.mxu0 0
        %5833 = vmatpush1.bf16.msra.mxu0 %v5816
        %5834 = vmatprep.subr.bf16.mxu0 0
        %5835 = vmatpush1.bf16.msra.mxu0 %v5817
        %5836 = vmatprep.subr.bf16.mxu0 0
        %5837 = vmatpush1.bf16.msra.mxu0 %v5818
        %5838 = vmatprep.subr.bf16.mxu0 0
        %5839 = vmatpush1.bf16.msra.mxu0 %v5819
        %5840 = vmatprep.subr.bf16.mxu0 0
        %5841 = vmatpush1.bf16.msra.mxu0 %v5820
        %5842 = vmatprep.subr.bf16.mxu0 0
        %5843 = vmatpush1.bf16.msra.mxu0 %v5821
        %5844 = vmatprep.subr.bf16.mxu0 0
        %5845 = vmatpush1.bf16.msra.mxu0 %v5822
        %5846 = vmatprep.subr.bf16.mxu0 0
        %5847 = vmatpush1.bf16.msra.mxu0 %v5823
        %5848 = vmatprep.subr.bf16.mxu0 0
        %5849 = vmatpush1.bf16.msra.mxu0 0
        %5850 = vmatprep.subr.bf16.mxu0 0
        %5851 = vmatpush1.bf16.msra.mxu0 0
        %5852 = vmatprep.subr.bf16.mxu0 0
        %5853 = vmatpush1.bf16.msra.mxu0 0
        %5854 = vmatprep.subr.bf16.mxu0 0
        %5855 = vmatpush1.bf16.msra.mxu0 0
        %5856 = vmatprep.subr.bf16.mxu0 0
        %5857 = vmatpush1.bf16.msra.mxu0 0
        %5858 = vmatprep.subr.bf16.mxu0 0
        %5859 = vmatpush1.bf16.msra.mxu0 0
        %5860 = vmatprep.subr.bf16.mxu0 0
        %5861 = vmatpush1.bf16.msra.mxu0 0
        %5862 = vmatprep.subr.bf16.mxu0 0
        %5863 = vmatpush1.bf16.msra.mxu0 0
        %5864 = vmatprep.mubr.bf16.mxu0 0
        %5865 = vmatmul.mubr.bf16.gmra.mrb[0].mxu0 %v4484
        %v5866 = vpop.f32.mrb[0].mxu0
        %v5867 = vadd.f32 0.0, %v5866
        %v5868 = vpop.f32.mrb[0].mxu0
        %v5869 = vpop.f32.mrb[0].mxu0
        %v5870 = vadd.f32 0.0, %v5869
        %v5871 = vpop.f32.mrb[0].mxu0
        %5872 = vmatprep.mubr.bf16.mxu0 0
        %5873 = vmatmul.mubr.bf16.gmra.mrb[0].mxu0 %v4485
        %v5874 = vpop.f32.mrb[0].mxu0
        %v5875 = vadd.f32 0.0, %v5874
        %v5876 = vpop.f32.mrb[0].mxu0
        %v5877 = vpop.f32.mrb[0].mxu0
        %v5878 = vadd.f32 0.0, %v5877
        %v5879 = vpop.f32.mrb[0].mxu0
        %5880 = vmatprep.mubr.bf16.mxu0 0
        %5881 = vmatmul.mubr.bf16.gmra.mrb[0].mxu0 %v4486
        %v5882 = vpop.f32.mrb[0].mxu0
        %v5883 = vadd.f32 0.0, %v5882
        %v5884 = vpop.f32.mrb[0].mxu0
        %v5885 = vpop.f32.mrb[0].mxu0
        %v5886 = vadd.f32 0.0, %v5885
        %v5887 = vpop.f32.mrb[0].mxu0
        %5888 = vmatprep.mubr.bf16.mxu0 0
        %5889 = vmatmul.mubr.bf16.gmra.mrb[0].mxu0 %v4487
        %v5890 = vpop.f32.mrb[0].mxu0
        %v5891 = vadd.f32 0.0, %v5890
        %v5892 = vpop.f32.mrb[0].mxu0
        %v5893 = vpop.f32.mrb[0].mxu0
        %v5894 = vadd.f32 0.0, %v5893
        %v5895 = vpop.f32.mrb[0].mxu0
        %5896 = vdwg.mxu0
        %v5897 = vadd.f32 %v5759, %v5867
        %v5898 = vadd.f32 %v5760, %v5870
        %v5899 = vadd.f32 %v5761, %v5875
        %v5900 = vadd.f32 %v5762, %v5878
        %v5901 = vadd.f32 %v5763, %v5883
        %v5902 = vadd.f32 %v5764, %v5886
        %v5903 = vadd.f32 %v5765, %v5891
        %v5904 = vadd.f32 %v5766, %v5894
        %s5905 = scalar_lea.vmem [#allocation8], 96
        %v5906 = vld [vmem:[%s5905] sm:$0xff]
        %v5907 = vld [vmem:[%s5905 + $0x8] sm:$0xff]
        %v5908 = vld [vmem:[%s5905 + $0x10] sm:$0xff]
        %v5909 = vld [vmem:[%s5905 + $0x18] sm:$0xff]
        %s5910 = scalar_lea.vmem [#allocation9], 896
        %v5911 = vld [vmem:[%s5910] sm:$0xf]
        %v5912 = vld [vmem:[%s5910 + $0x4] sm:$0xf]
        %v5913 = vld [vmem:[%s5910 + $0x8] sm:$0xf]
        %v5914 = vld [vmem:[%s5910 + $0xc] sm:$0xf]
        %v5915 = vld [vmem:[%s5910 + $0x10] sm:$0xf]
        %v5916 = vld [vmem:[%s5910 + $0x14] sm:$0xf]
        %v5917 = vld [vmem:[%s5910 + $0x18] sm:$0xf]
        %v5918 = vld [vmem:[%s5910 + $0x1c] sm:$0xf]
        %v5919 = vld [vmem:[%s5910 + $0x20] sm:$0xf]
        %v5920 = vld [vmem:[%s5910 + $0x24] sm:$0xf]
        %v5921 = vld [vmem:[%s5910 + $0x28] sm:$0xf]
        %v5922 = vld [vmem:[%s5910 + $0x2c] sm:$0xf]
        %v5923 = vld [vmem:[%s5910 + $0x30] sm:$0xf]
        %v5924 = vld [vmem:[%s5910 + $0x34] sm:$0xf]
        %v5925 = vld [vmem:[%s5910 + $0x38] sm:$0xf]
        %v5926 = vld [vmem:[%s5910 + $0x3c] sm:$0xf]
        %v5943 = vunpack.c.l.b16 %v5911
        %v5944 = vunpack.c.l.b16 %v5912
        %v5945 = vunpack.c.l.b16 %v5913
        %v5946 = vunpack.c.l.b16 %v5914
        %v5947 = vunpack.c.l.b16 %v5915
        %v5948 = vunpack.c.l.b16 %v5916
        %v5949 = vunpack.c.l.b16 %v5917
        %v5950 = vunpack.c.l.b16 %v5918
        %v5951 = vunpack.c.l.b16 %v5919
        %v5952 = vunpack.c.l.b16 %v5920
        %v5953 = vunpack.c.l.b16 %v5921
        %v5954 = vunpack.c.l.b16 %v5922
        %v5955 = vunpack.c.l.b16 %v5923
        %v5956 = vunpack.c.l.b16 %v5924
        %v5957 = vunpack.c.l.b16 %v5925
        %v5958 = vunpack.c.l.b16 %v5926
        %v5959 = vpack.c.b16 %v5944, %v5943
        %v5960 = vpack.c.b16 %v5946, %v5945
        %v5961 = vpack.c.b16 %v5948, %v5947
        %v5962 = vpack.c.b16 %v5950, %v5949
        %v5963 = vpack.c.b16 %v5952, %v5951
        %v5964 = vpack.c.b16 %v5954, %v5953
        %v5965 = vpack.c.b16 %v5956, %v5955
        %v5966 = vpack.c.b16 %v5958, %v5957
        %5975 = vmatprep.subr.bf16.mxu0 0
        %5976 = vmatpush1.bf16.msra.mxu0 %v5959
        %5977 = vmatprep.subr.bf16.mxu0 0
        %5978 = vmatpush1.bf16.msra.mxu0 %v5960
        %5979 = vmatprep.subr.bf16.mxu0 0
        %5980 = vmatpush1.bf16.msra.mxu0 %v5961
        %5981 = vmatprep.subr.bf16.mxu0 0
        %5982 = vmatpush1.bf16.msra.mxu0 %v5962
        %5983 = vmatprep.subr.bf16.mxu0 0
        %5984 = vmatpush1.bf16.msra.mxu0 %v5963
        %5985 = vmatprep.subr.bf16.mxu0 0
        %5986 = vmatpush1.bf16.msra.mxu0 %v5964
        %5987 = vmatprep.subr.bf16.mxu0 0
        %5988 = vmatpush1.bf16.msra.mxu0 %v5965
        %5989 = vmatprep.subr.bf16.mxu0 0
        %5990 = vmatpush1.bf16.msra.mxu0 %v5966
        %5991 = vmatprep.subr.bf16.mxu0 0
        %5992 = vmatpush1.bf16.msra.mxu0 0
        %5993 = vmatprep.subr.bf16.mxu0 0
        %5994 = vmatpush1.bf16.msra.mxu0 0
        %5995 = vmatprep.subr.bf16.mxu0 0
        %5996 = vmatpush1.bf16.msra.mxu0 0
        %5997 = vmatprep.subr.bf16.mxu0 0
        %5998 = vmatpush1.bf16.msra.mxu0 0
        %5999 = vmatprep.subr.bf16.mxu0 0
        %6000 = vmatpush1.bf16.msra.mxu0 0
        %6001 = vmatprep.subr.bf16.mxu0 0
        %6002 = vmatpush1.bf16.msra.mxu0 0
        %6003 = vmatprep.subr.bf16.mxu0 0
        %6004 = vmatpush1.bf16.msra.mxu0 0
        %6005 = vmatprep.subr.bf16.mxu0 0
        %6006 = vmatpush1.bf16.msra.mxu0 0
        %6007 = vmatprep.mubr.bf16.mxu0 0
        %6008 = vmatmul.mubr.bf16.gmra.mrb[0].mxu0 %v5906
        %v6009 = vpop.f32.mrb[0].mxu0
        %v6010 = vadd.f32 0.0, %v6009
        %v6011 = vpop.f32.mrb[0].mxu0
        %v6012 = vpop.f32.mrb[0].mxu0
        %v6013 = vadd.f32 0.0, %v6012
        %v6014 = vpop.f32.mrb[0].mxu0
        %6015 = vmatprep.mubr.bf16.mxu0 0
        %6016 = vmatmul.mubr.bf16.gmra.mrb[0].mxu0 %v5907
        %v6017 = vpop.f32.mrb[0].mxu0
        %v6018 = vadd.f32 0.0, %v6017
        %v6019 = vpop.f32.mrb[0].mxu0
        %v6020 = vpop.f32.mrb[0].mxu0
        %v6021 = vadd.f32 0.0, %v6020
        %v6022 = vpop.f32.mrb[0].mxu0
        %6023 = vmatprep.mubr.bf16.mxu0 0
        %6024 = vmatmul.mubr.bf16.gmra.mrb[0].mxu0 %v5908
        %v6025 = vpop.f32.mrb[0].mxu0
        %v6026 = vadd.f32 0.0, %v6025
        %v6027 = vpop.f32.mrb[0].mxu0
        %v6028 = vpop.f32.mrb[0].mxu0
        %v6029 = vadd.f32 0.0, %v6028
        %v6030 = vpop.f32.mrb[0].mxu0
        %6031 = vmatprep.mubr.bf16.mxu0 0
        %6032 = vmatmul.mubr.bf16.gmra.mrb[0].mxu0 %v5909
        %v6033 = vpop.f32.mrb[0].mxu0
        %v6034 = vadd.f32 0.0, %v6033
        %v6035 = vpop.f32.mrb[0].mxu0
        %v6036 = vpop.f32.mrb[0].mxu0
        %v6037 = vadd.f32 0.0, %v6036
        %v6038 = vpop.f32.mrb[0].mxu0
        %6039 = vdwg.mxu0
        %v6040 = vadd.f32 %v5897, %v6010
        %v6041 = vadd.f32 %v5898, %v6013
        %v6042 = vadd.f32 %v5899, %v6018
        %v6043 = vadd.f32 %v5900, %v6021
        %v6044 = vadd.f32 %v5901, %v6026
        %v6045 = vadd.f32 %v5902, %v6029
        %v6046 = vadd.f32 %v5903, %v6034
        %v6047 = vadd.f32 %v5904, %v6037
        %s6048 = scalar_lea.vmem [#allocation4], 192
        %v6049 = vld [vmem:[%s6048] sm:$0xff]
        %v6050 = vld [vmem:[%s6048 + $0x8] sm:$0xff]
        %v6051 = vld [vmem:[%s6048 + $0x10] sm:$0xff]
        %v6052 = vld [vmem:[%s6048 + $0x18] sm:$0xff]
        %s6053 = scalar_lea.vmem [#allocation9], 960
        %v6054 = vld [vmem:[%s6053] sm:$0xf]
        %v6055 = vld [vmem:[%s6053 + $0x4] sm:$0xf]
        %v6056 = vld [vmem:[%s6053 + $0x8] sm:$0xf]
        %v6057 = vld [vmem:[%s6053 + $0xc] sm:$0xf]
        %v6058 = vld [vmem:[%s6053 + $0x10] sm:$0xf]
        %v6059 = vld [vmem:[%s6053 + $0x14] sm:$0xf]
        %v6060 = vld [vmem:[%s6053 + $0x18] sm:$0xf]
        %v6061 = vld [vmem:[%s6053 + $0x1c] sm:$0xf]
        %v6062 = vld [vmem:[%s6053 + $0x20] sm:$0xf]
        %v6063 = vld [vmem:[%s6053 + $0x24] sm:$0xf]
        %v6064 = vld [vmem:[%s6053 + $0x28] sm:$0xf]
        %v6065 = vld [vmem:[%s6053 + $0x2c] sm:$0xf]
        %v6066 = vld [vmem:[%s6053 + $0x30] sm:$0xf]
        %v6067 = vld [vmem:[%s6053 + $0x34] sm:$0xf]
        %v6068 = vld [vmem:[%s6053 + $0x38] sm:$0xf]
        %v6069 = vld [vmem:[%s6053 + $0x3c] sm:$0xf]
        %v6086 = vunpack.c.l.b16 %v6054
        %v6087 = vunpack.c.l.b16 %v6055
        %v6088 = vunpack.c.l.b16 %v6056
        %v6089 = vunpack.c.l.b16 %v6057
        %v6090 = vunpack.c.l.b16 %v6058
        %v6091 = vunpack.c.l.b16 %v6059
        %v6092 = vunpack.c.l.b16 %v6060
        %v6093 = vunpack.c.l.b16 %v6061
        %v6094 = vunpack.c.l.b16 %v6062
        %v6095 = vunpack.c.l.b16 %v6063
        %v6096 = vunpack.c.l.b16 %v6064
        %v6097 = vunpack.c.l.b16 %v6065
        %v6098 = vunpack.c.l.b16 %v6066
        %v6099 = vunpack.c.l.b16 %v6067
        %v6100 = vunpack.c.l.b16 %v6068
        %v6101 = vunpack.c.l.b16 %v6069
        %v6102 = vpack.c.b16 %v6087, %v6086
        %v6103 = vpack.c.b16 %v6089, %v6088
        %v6104 = vpack.c.b16 %v6091, %v6090
        %v6105 = vpack.c.b16 %v6093, %v6092
        %v6106 = vpack.c.b16 %v6095, %v6094
        %v6107 = vpack.c.b16 %v6097, %v6096
        %v6108 = vpack.c.b16 %v6099, %v6098
        %v6109 = vpack.c.b16 %v6101, %v6100
        %6118 = vmatprep.subr.bf16.mxu0 0
        %6119 = vmatpush1.bf16.msra.mxu0 %v6102
        %6120 = vmatprep.subr.bf16.mxu0 0
        %6121 = vmatpush1.bf16.msra.mxu0 %v6103
        %6122 = vmatprep.subr.bf16.mxu0 0
        %6123 = vmatpush1.bf16.msra.mxu0 %v6104
        %6124 = vmatprep.subr.bf16.mxu0 0
        %6125 = vmatpush1.bf16.msra.mxu0 %v6105
        %6126 = vmatprep.subr.bf16.mxu0 0
        %6127 = vmatpush1.bf16.msra.mxu0 %v6106
        %6128 = vmatprep.subr.bf16.mxu0 0
        %6129 = vmatpush1.bf16.msra.mxu0 %v6107
        %6130 = vmatprep.subr.bf16.mxu0 0
        %6131 = vmatpush1.bf16.msra.mxu0 %v6108
        %6132 = vmatprep.subr.bf16.mxu0 0
        %6133 = vmatpush1.bf16.msra.mxu0 %v6109
        %6134 = vmatprep.subr.bf16.mxu0 0
        %6135 = vmatpush1.bf16.msra.mxu0 0
        %6136 = vmatprep.subr.bf16.mxu0 0
        %6137 = vmatpush1.bf16.msra.mxu0 0
        %6138 = vmatprep.subr.bf16.mxu0 0
        %6139 = vmatpush1.bf16.msra.mxu0 0
        %6140 = vmatprep.subr.bf16.mxu0 0
        %6141 = vmatpush1.bf16.msra.mxu0 0
        %6142 = vmatprep.subr.bf16.mxu0 0
        %6143 = vmatpush1.bf16.msra.mxu0 0
        %6144 = vmatprep.subr.bf16.mxu0 0
        %6145 = vmatpush1.bf16.msra.mxu0 0
        %6146 = vmatprep.subr.bf16.mxu0 0
        %6147 = vmatpush1.bf16.msra.mxu0 0
        %6148 = vmatprep.subr.bf16.mxu0 0
        %6149 = vmatpush1.bf16.msra.mxu0 0
        %6150 = vmatprep.mubr.bf16.mxu0 0
        %6151 = vmatmul.mubr.bf16.gmra.mrb[0].mxu0 %v6049
        %v6152 = vpop.f32.mrb[0].mxu0
        %v6153 = vadd.f32 0.0, %v6152
        %v6154 = vpop.f32.mrb[0].mxu0
        %v6155 = vpop.f32.mrb[0].mxu0
        %v6156 = vadd.f32 0.0, %v6155
        %v6157 = vpop.f32.mrb[0].mxu0
        %6158 = vmatprep.mubr.bf16.mxu0 0
        %6159 = vmatmul.mubr.bf16.gmra.mrb[0].mxu0 %v6050
        %v6160 = vpop.f32.mrb[0].mxu0
        %v6161 = vadd.f32 0.0, %v6160
        %v6162 = vpop.f32.mrb[0].mxu0
        %v6163 = vpop.f32.mrb[0].mxu0
        %v6164 = vadd.f32 0.0, %v6163
        %v6165 = vpop.f32.mrb[0].mxu0
        %6166 = vmatprep.mubr.bf16.mxu0 0
        %6167 = vmatmul.mubr.bf16.gmra.mrb[0].mxu0 %v6051
        %v6168 = vpop.f32.mrb[0].mxu0
        %v6169 = vadd.f32 0.0, %v6168
        %v6170 = vpop.f32.mrb[0].mxu0
        %v6171 = vpop.f32.mrb[0].mxu0
        %v6172 = vadd.f32 0.0, %v6171
        %v6173 = vpop.f32.mrb[0].mxu0
        %6174 = vmatprep.mubr.bf16.mxu0 0
        %6175 = vmatmul.mubr.bf16.gmra.mrb[0].mxu0 %v6052
        %v6176 = vpop.f32.mrb[0].mxu0
        %v6177 = vadd.f32 0.0, %v6176
        %v6178 = vpop.f32.mrb[0].mxu0
        %v6179 = vpop.f32.mrb[0].mxu0
        %v6180 = vadd.f32 0.0, %v6179
        %v6181 = vpop.f32.mrb[0].mxu0
        %6182 = vdwg.mxu0
        %v6183 = vadd.f32 %v6040, %v6153
        %v6184 = vadd.f32 %v6041, %v6156
        %v6185 = vadd.f32 %v6042, %v6161
        %v6186 = vadd.f32 %v6043, %v6164
        %v6187 = vadd.f32 %v6044, %v6169
        %v6188 = vadd.f32 %v6045, %v6172
        %v6189 = vadd.f32 %v6046, %v6177
        %v6190 = vadd.f32 %v6047, %v6180
        %s6191 = scalar_lea.vmem [#allocation6], 192
        %v6192 = vld [vmem:[%s6191] sm:$0xff]
        %v6193 = vld [vmem:[%s6191 + $0x8] sm:$0xff]
        %v6194 = vld [vmem:[%s6191 + $0x10] sm:$0xff]
        %v6195 = vld [vmem:[%s6191 + $0x18] sm:$0xff]
        %s6196 = scalar_lea.vmem [#allocation9], 1024
        %v6197 = vld [vmem:[%s6196] sm:$0xf]
        %v6198 = vld [vmem:[%s6196 + $0x4] sm:$0xf]
        %v6199 = vld [vmem:[%s6196 + $0x8] sm:$0xf]
        %v6200 = vld [vmem:[%s6196 + $0xc] sm:$0xf]
        %v6201 = vld [vmem:[%s6196 + $0x10] sm:$0xf]
        %v6202 = vld [vmem:[%s6196 + $0x14] sm:$0xf]
        %v6203 = vld [vmem:[%s6196 + $0x18] sm:$0xf]
        %v6204 = vld [vmem:[%s6196 + $0x1c] sm:$0xf]
        %v6205 = vld [vmem:[%s6196 + $0x20] sm:$0xf]
        %v6206 = vld [vmem:[%s6196 + $0x24] sm:$0xf]
        %v6207 = vld [vmem:[%s6196 + $0x28] sm:$0xf]
        %v6208 = vld [vmem:[%s6196 + $0x2c] sm:$0xf]
        %v6209 = vld [vmem:[%s6196 + $0x30] sm:$0xf]
        %v6210 = vld [vmem:[%s6196 + $0x34] sm:$0xf]
        %v6211 = vld [vmem:[%s6196 + $0x38] sm:$0xf]
        %v6212 = vld [vmem:[%s6196 + $0x3c] sm:$0xf]
        %v6229 = vunpack.c.l.b16 %v6197
        %v6230 = vunpack.c.l.b16 %v6198
        %v6231 = vunpack.c.l.b16 %v6199
        %v6232 = vunpack.c.l.b16 %v6200
        %v6233 = vunpack.c.l.b16 %v6201
        %v6234 = vunpack.c.l.b16 %v6202
        %v6235 = vunpack.c.l.b16 %v6203
        %v6236 = vunpack.c.l.b16 %v6204
        %v6237 = vunpack.c.l.b16 %v6205
        %v6238 = vunpack.c.l.b16 %v6206
        %v6239 = vunpack.c.l.b16 %v6207
        %v6240 = vunpack.c.l.b16 %v6208
        %v6241 = vunpack.c.l.b16 %v6209
        %v6242 = vunpack.c.l.b16 %v6210
        %v6243 = vunpack.c.l.b16 %v6211
        %v6244 = vunpack.c.l.b16 %v6212
        %v6245 = vpack.c.b16 %v6230, %v6229
        %v6246 = vpack.c.b16 %v6232, %v6231
        %v6247 = vpack.c.b16 %v6234, %v6233
        %v6248 = vpack.c.b16 %v6236, %v6235
        %v6249 = vpack.c.b16 %v6238, %v6237
        %v6250 = vpack.c.b16 %v6240, %v6239
        %v6251 = vpack.c.b16 %v6242, %v6241
        %v6252 = vpack.c.b16 %v6244, %v6243
        %6261 = vmatprep.subr.bf16.mxu0 0
        %6262 = vmatpush1.bf16.msra.mxu0 %v6245
        %6263 = vmatprep.subr.bf16.mxu0 0
        %6264 = vmatpush1.bf16.msra.mxu0 %v6246
        %6265 = vmatprep.subr.bf16.mxu0 0
        %6266 = vmatpush1.bf16.msra.mxu0 %v6247
        %6267 = vmatprep.subr.bf16.mxu0 0
        %6268 = vmatpush1.bf16.msra.mxu0 %v6248
        %6269 = vmatprep.subr.bf16.mxu0 0
        %6270 = vmatpush1.bf16.msra.mxu0 %v6249
        %6271 = vmatprep.subr.bf16.mxu0 0
        %6272 = vmatpush1.bf16.msra.mxu0 %v6250
        %6273 = vmatprep.subr.bf16.mxu0 0
        %6274 = vmatpush1.bf16.msra.mxu0 %v6251
        %6275 = vmatprep.subr.bf16.mxu0 0
        %6276 = vmatpush1.bf16.msra.mxu0 %v6252
        %6277 = vmatprep.subr.bf16.mxu0 0
        %6278 = vmatpush1.bf16.msra.mxu0 0
        %6279 = vmatprep.subr.bf16.mxu0 0
        %6280 = vmatpush1.bf16.msra.mxu0 0
        %6281 = vmatprep.subr.bf16.mxu0 0
        %6282 = vmatpush1.bf16.msra.mxu0 0
        %6283 = vmatprep.subr.bf16.mxu0 0
        %6284 = vmatpush1.bf16.msra.mxu0 0
        %6285 = vmatprep.subr.bf16.mxu0 0
        %6286 = vmatpush1.bf16.msra.mxu0 0
        %6287 = vmatprep.subr.bf16.mxu0 0
        %6288 = vmatpush1.bf16.msra.mxu0 0
        %6289 = vmatprep.subr.bf16.mxu0 0
        %6290 = vmatpush1.bf16.msra.mxu0 0
        %6291 = vmatprep.subr.bf16.mxu0 0
        %6292 = vmatpush1.bf16.msra.mxu0 0
        %6293 = vmatprep.mubr.bf16.mxu0 0
        %6294 = vmatmul.mubr.bf16.gmra.mrb[0].mxu0 %v6192
        %v6295 = vpop.f32.mrb[0].mxu0
        %v6296 = vadd.f32 0.0, %v6295
        %v6297 = vpop.f32.mrb[0].mxu0
        %v6298 = vpop.f32.mrb[0].mxu0
        %v6299 = vadd.f32 0.0, %v6298
        %v6300 = vpop.f32.mrb[0].mxu0
        %6301 = vmatprep.mubr.bf16.mxu0 0
        %6302 = vmatmul.mubr.bf16.gmra.mrb[0].mxu0 %v6193
        %v6303 = vpop.f32.mrb[0].mxu0
        %v6304 = vadd.f32 0.0, %v6303
        %v6305 = vpop.f32.mrb[0].mxu0
        %v6306 = vpop.f32.mrb[0].mxu0
        %v6307 = vadd.f32 0.0, %v6306
        %v6308 = vpop.f32.mrb[0].mxu0
        %6309 = vmatprep.mubr.bf16.mxu0 0
        %6310 = vmatmul.mubr.bf16.gmra.mrb[0].mxu0 %v6194
        %v6311 = vpop.f32.mrb[0].mxu0
        %v6312 = vadd.f32 0.0, %v6311
        %v6313 = vpop.f32.mrb[0].mxu0
        %v6314 = vpop.f32.mrb[0].mxu0
        %v6315 = vadd.f32 0.0, %v6314
        %v6316 = vpop.f32.mrb[0].mxu0
        %6317 = vmatprep.mubr.bf16.mxu0 0
        %6318 = vmatmul.mubr.bf16.gmra.mrb[0].mxu0 %v6195
        %v6319 = vpop.f32.mrb[0].mxu0
        %v6320 = vadd.f32 0.0, %v6319
        %v6321 = vpop.f32.mrb[0].mxu0
        %v6322 = vpop.f32.mrb[0].mxu0
        %v6323 = vadd.f32 0.0, %v6322
        %v6324 = vpop.f32.mrb[0].mxu0
        %6325 = vdwg.mxu0
        %v6326 = vadd.f32 %v6183, %v6296
        %v6327 = vadd.f32 %v6184, %v6299
        %v6328 = vadd.f32 %v6185, %v6304
        %v6329 = vadd.f32 %v6186, %v6307
        %v6330 = vadd.f32 %v6187, %v6312
        %v6331 = vadd.f32 %v6188, %v6315
        %v6332 = vadd.f32 %v6189, %v6320
        %v6333 = vadd.f32 %v6190, %v6323
        %s6334 = scalar_lea.vmem [#allocation8], 192
        %v6335 = vld [vmem:[%s6334] sm:$0xff]
        %v6336 = vld [vmem:[%s6334 + $0x8] sm:$0xff]
        %v6337 = vld [vmem:[%s6334 + $0x10] sm:$0xff]
        %v6338 = vld [vmem:[%s6334 + $0x18] sm:$0xff]
        %s6339 = scalar_lea.vmem [#allocation9], 1088
        %v6340 = vld [vmem:[%s6339] sm:$0xf]
        %v6341 = vld [vmem:[%s6339 + $0x4] sm:$0xf]
        %v6342 = vld [vmem:[%s6339 + $0x8] sm:$0xf]
        %v6343 = vld [vmem:[%s6339 + $0xc] sm:$0xf]
        %v6344 = vld [vmem:[%s6339 + $0x10] sm:$0xf]
        %v6345 = vld [vmem:[%s6339 + $0x14] sm:$0xf]
        %v6346 = vld [vmem:[%s6339 + $0x18] sm:$0xf]
        %v6347 = vld [vmem:[%s6339 + $0x1c] sm:$0xf]
        %v6348 = vld [vmem:[%s6339 + $0x20] sm:$0xf]
        %v6349 = vld [vmem:[%s6339 + $0x24] sm:$0xf]
        %v6350 = vld [vmem:[%s6339 + $0x28] sm:$0xf]
        %v6351 = vld [vmem:[%s6339 + $0x2c] sm:$0xf]
        %v6352 = vld [vmem:[%s6339 + $0x30] sm:$0xf]
        %v6353 = vld [vmem:[%s6339 + $0x34] sm:$0xf]
        %v6354 = vld [vmem:[%s6339 + $0x38] sm:$0xf]
        %v6355 = vld [vmem:[%s6339 + $0x3c] sm:$0xf]
        %v6372 = vunpack.c.l.b16 %v6340
        %v6373 = vunpack.c.l.b16 %v6341
        %v6374 = vunpack.c.l.b16 %v6342
        %v6375 = vunpack.c.l.b16 %v6343
        %v6376 = vunpack.c.l.b16 %v6344
        %v6377 = vunpack.c.l.b16 %v6345
        %v6378 = vunpack.c.l.b16 %v6346
        %v6379 = vunpack.c.l.b16 %v6347
        %v6380 = vunpack.c.l.b16 %v6348
        %v6381 = vunpack.c.l.b16 %v6349
        %v6382 = vunpack.c.l.b16 %v6350
        %v6383 = vunpack.c.l.b16 %v6351
        %v6384 = vunpack.c.l.b16 %v6352
        %v6385 = vunpack.c.l.b16 %v6353
        %v6386 = vunpack.c.l.b16 %v6354
        %v6387 = vunpack.c.l.b16 %v6355
        %v6388 = vpack.c.b16 %v6373, %v6372
        %v6389 = vpack.c.b16 %v6375, %v6374
        %v6390 = vpack.c.b16 %v6377, %v6376
        %v6391 = vpack.c.b16 %v6379, %v6378
        %v6392 = vpack.c.b16 %v6381, %v6380
        %v6393 = vpack.c.b16 %v6383, %v6382
        %v6394 = vpack.c.b16 %v6385, %v6384
        %v6395 = vpack.c.b16 %v6387, %v6386
        %6404 = vmatprep.subr.bf16.mxu0 0
        %6405 = vmatpush1.bf16.msra.mxu0 %v6388
        %6406 = vmatprep.subr.bf16.mxu0 0
        %6407 = vmatpush1.bf16.msra.mxu0 %v6389
        %6408 = vmatprep.subr.bf16.mxu0 0
        %6409 = vmatpush1.bf16.msra.mxu0 %v6390
        %6410 = vmatprep.subr.bf16.mxu0 0
        %6411 = vmatpush1.bf16.msra.mxu0 %v6391
        %6412 = vmatprep.subr.bf16.mxu0 0
        %6413 = vmatpush1.bf16.msra.mxu0 %v6392
        %6414 = vmatprep.subr.bf16.mxu0 0
        %6415 = vmatpush1.bf16.msra.mxu0 %v6393
        %6416 = vmatprep.subr.bf16.mxu0 0
        %6417 = vmatpush1.bf16.msra.mxu0 %v6394
        %6418 = vmatprep.subr.bf16.mxu0 0
        %6419 = vmatpush1.bf16.msra.mxu0 %v6395
        %6420 = vmatprep.subr.bf16.mxu0 0
        %6421 = vmatpush1.bf16.msra.mxu0 0
        %6422 = vmatprep.subr.bf16.mxu0 0
        %6423 = vmatpush1.bf16.msra.mxu0 0
        %6424 = vmatprep.subr.bf16.mxu0 0
        %6425 = vmatpush1.bf16.msra.mxu0 0
        %6426 = vmatprep.subr.bf16.mxu0 0
        %6427 = vmatpush1.bf16.msra.mxu0 0
        %6428 = vmatprep.subr.bf16.mxu0 0
        %6429 = vmatpush1.bf16.msra.mxu0 0
        %6430 = vmatprep.subr.bf16.mxu0 0
        %6431 = vmatpush1.bf16.msra.mxu0 0
        %6432 = vmatprep.subr.bf16.mxu0 0
        %6433 = vmatpush1.bf16.msra.mxu0 0
        %6434 = vmatprep.subr.bf16.mxu0 0
        %6435 = vmatpush1.bf16.msra.mxu0 0
        %6436 = vmatprep.mubr.bf16.mxu0 0
        %6437 = vmatmul.mubr.bf16.gmra.mrb[0].mxu0 %v6335
        %v6438 = vpop.f32.mrb[0].mxu0
        %v6439 = vadd.f32 0.0, %v6438
        %v6440 = vpop.f32.mrb[0].mxu0
        %v6441 = vpop.f32.mrb[0].mxu0
        %v6442 = vadd.f32 0.0, %v6441
        %v6443 = vpop.f32.mrb[0].mxu0
        %6444 = vmatprep.mubr.bf16.mxu0 0
        %6445 = vmatmul.mubr.bf16.gmra.mrb[0].mxu0 %v6336
        %v6446 = vpop.f32.mrb[0].mxu0
        %v6447 = vadd.f32 0.0, %v6446
        %v6448 = vpop.f32.mrb[0].mxu0
        %v6449 = vpop.f32.mrb[0].mxu0
        %v6450 = vadd.f32 0.0, %v6449
        %v6451 = vpop.f32.mrb[0].mxu0
        %6452 = vmatprep.mubr.bf16.mxu0 0
        %6453 = vmatmul.mubr.bf16.gmra.mrb[0].mxu0 %v6337
        %v6454 = vpop.f32.mrb[0].mxu0
        %v6455 = vadd.f32 0.0, %v6454
        %v6456 = vpop.f32.mrb[0].mxu0
        %v6457 = vpop.f32.mrb[0].mxu0
        %v6458 = vadd.f32 0.0, %v6457
        %v6459 = vpop.f32.mrb[0].mxu0
        %6460 = vmatprep.mubr.bf16.mxu0 0
        %6461 = vmatmul.mubr.bf16.gmra.mrb[0].mxu0 %v6338
        %v6462 = vpop.f32.mrb[0].mxu0
        %v6463 = vadd.f32 0.0, %v6462
        %v6464 = vpop.f32.mrb[0].mxu0
        %v6465 = vpop.f32.mrb[0].mxu0
        %v6466 = vadd.f32 0.0, %v6465
        %v6467 = vpop.f32.mrb[0].mxu0
        %6468 = vdwg.mxu0
        %v6469 = vadd.f32 %v6326, %v6439
        %v6470 = vadd.f32 %v6327, %v6442
        %v6471 = vadd.f32 %v6328, %v6447
        %v6472 = vadd.f32 %v6329, %v6450
        %v6473 = vadd.f32 %v6330, %v6455
        %v6474 = vadd.f32 %v6331, %v6458
        %v6475 = vadd.f32 %v6332, %v6463
        %v6476 = vadd.f32 %v6333, %v6466
        %v6477 = vld [vmem:[%s2] sm:$0x1]
        %v6479 = vlaneseq
        %v6480 = vshrl.u32 %v6479, 7
        %v6481 = vsub.s32 0, %v6480
        %v6482 = vrot.slane %v6477, %v6481
        %v6484 = vadd.f32 %v6469, %v6482
        %v6485 = vadd.f32 %v6470, %v6482
        %v6486 = vadd.f32 %v6471, %v6482
        %v6487 = vadd.f32 %v6472, %v6482
        %v6488 = vadd.f32 %v6473, %v6482
        %v6489 = vadd.f32 %v6474, %v6482
        %v6490 = vadd.f32 %v6475, %v6482
        %v6491 = vadd.f32 %v6476, %v6482
        %v6492 = vpack.c.bf16 %v6485, %v6484
        %v6493 = vpack.c.bf16 %v6487, %v6486
        %v6494 = vpack.c.bf16 %v6489, %v6488
        %v6495 = vpack.c.bf16 %v6491, %v6490
        %v6500 = vunpack.c.l.b16 %v6492
        %v6501 = vunpack.c.h.b16 %v6492
        %v6502 = vunpack.c.l.b16 %v6493
        %v6503 = vunpack.c.h.b16 %v6493
        %v6504 = vunpack.c.l.b16 %v6494
        %v6505 = vunpack.c.h.b16 %v6494
        %v6506 = vunpack.c.l.b16 %v6495
        %v6507 = vunpack.c.h.b16 %v6495
        %v6508 = vpack.c.b16 %v6500, %v6500
        %v6509 = vpack.c.b16 %v6501, %v6501
        %v6510 = vpack.c.b16 %v6502, %v6502
        %v6511 = vpack.c.b16 %v6503, %v6503
        %v6512 = vpack.c.b16 %v6504, %v6504
        %v6513 = vpack.c.b16 %v6505, %v6505
        %v6514 = vpack.c.b16 %v6506, %v6506
        %v6515 = vpack.c.b16 %v6507, %v6507
        %6524 = vst [vmem:[%s151] sm:$0xf] %v6508
        %6525 = vst [vmem:[%s151 + $0x4] sm:$0xf] %v6509
        %6526 = vst [vmem:[%s151 + $0x8] sm:$0xf] %v6510
        %6527 = vst [vmem:[%s151 + $0xc] sm:$0xf] %v6511
        %6528 = vst [vmem:[%s151 + $0x10] sm:$0xf] %v6512
        %6529 = vst [vmem:[%s151 + $0x14] sm:$0xf] %v6513
        %6530 = vst [vmem:[%s151 + $0x18] sm:$0xf] %v6514
        %6531 = vst [vmem:[%s151 + $0x1c] sm:$0xf] %v6515
        %s6532 = sand.u32 %s82, 1
        %s6533 = scalar_lea.sflag [#allocation11], %s6532
        %s6534 = sand.u32 %s82, 1
        %s6535 = smul.addr %s6534, 32
        %s6536 = scalar_lea.vmem [#allocation12], %s6535
        // Predicated region
        $region57: #{tpu_custom_call.1} parent=27 // pred_check
          %p6537 = pneg %p92
        $region58: #{tpu_custom_call.1} parent=27 // pred_check_branch
          %6539 = sbr.rel (%p6537) target = $region60
        $region59: #{tpu_custom_call.1} parent=27 // pred_region
          %s6540 = smul.u32 4, %s23
          %s6542 = ssub.s32 512, 512
          %6543 = vsyncadd %s6533, %s6542
          %s6544 = smul.addr %s6540, 2
          %s6545 = smul.addr %s22, 32
          %s6546 = sadd.s32 %s6544, %s6545
          %s6547 = smul.addr %s6546, 64
          %s6548 = scalar_lea.hbm %s3, %s6547
          %s6549 = sshll.u32 %s6536, 4
          %s6550 = int_to_ptr.vmem [resolvable:$true] %s6549
          %6555 = dma.vmem_to_hbm [thread:$0]  %s6550, 512, %s6548, %s6533, 64, 64, 4
        $region60: #{tpu_custom_call.1} parent=27 // pred_fallthru
          _
      $region28: #{tpu_custom_call.1} parent=5 // pred_fallthru
        _
      %p6556 = scmp.le.s32.totalorder 2, %s13
      // Predicated region
      $region61: #{tpu_custom_call.1} parent=5 // pred_check
        %p6557 = pneg %p6556
      $region62: #{tpu_custom_call.1} parent=5 // pred_check_branch
        %6559 = sbr.rel (%p6557) target = $region64
      $region63: #{tpu_custom_call.1} parent=5 // pred_region
        %s6560 = ssub.s32 %s13, 2
        // Predicated region
        $region65: #{tpu_custom_call.1} parent=63 // pred_check
          %p6561 = pneg %p98
        $region66: #{tpu_custom_call.1} parent=63 // pred_check_branch
          %6563 = sbr.rel (%p6561) target = $region68
        $region67: #{tpu_custom_call.1} parent=63 // pred_region
          %s6564 = sand.u32 %s83, 1
          %s6565 = scalar_lea.sflag [#allocation11], %s6564
          %s6566 = sand.u32 %s83, 1
          %s6567 = smul.addr %s6566, 32
          %s6568 = scalar_lea.vmem [#allocation12], %s6567
          %6569 = dma.done %s6565, 512
        $region68: #{tpu_custom_call.1} parent=63 // pred_fallthru
          _
      $region64: #{tpu_custom_call.1} parent=5 // pred_fallthru
        _
    $region6: #{tpu_custom_call.1} parent=1 // loop_footer
      %s17 = sadd.s32 1, %s13
    $region7: #{tpu_custom_call.1} parent=1 // loop_footer_branch
      %12 = sbr.rel target = $region3
    $region8: #{tpu_custom_call.1} parent=1 // loop_exit
      _
    %6570 = vsyncpa [#allocation10], 1
    %s6571 = scalar_lea.sflag [#allocation10], 1
    %6572 = vsyncpa %s6571, 1
    %6573 = vsyncpa [#allocation11], 1
    %s6574 = scalar_lea.sflag [#allocation11], 1
    %6575 = vsyncpa %s6574, 1
  %6576 = vsyncmov [#allocation3]
  %s6577 = vpop.sfrf %6576
  %p6578 = scmp.eq.s32.totalorder %s6577, 0
  %p6579 = pneg %p6578
  %6581 = shalt.err (%p6579)
  %s6582 = scalar_lea.sflag [#allocation3], 1
  %6583 = vsyncmov %s6582
  %s6584 = vpop.sfrf %6583
  %p6585 = scmp.eq.s32.totalorder %s6584, 0
  %p6586 = pneg %p6585
  %6588 = shalt.err (%p6586)

</llo_original>
